<compile_context>
chip_gen: v7x
topology: tpu7x:2x2x1
jax: 0.10.0
libtpu: 0.0.40
codegen_flags: <defaults>
</compile_context>

<pallas_src>
import math
import functools
import itertools

import jax
import jax.numpy as jnp
from jax.experimental import pallas as pl
from jax.experimental.pallas import tpu as pltpu  # noqa: F401  (no TPU-specific params needed at this size)


_INPUT_PAD = 8  # pad the 3-wide (eos, dx, dy) input so the contraction dim is sublane-aligned


# ----------------------------------------------------------------------------
# Fused forward kernel: whole network in one pallas_call (everything in VMEM)
# ----------------------------------------------------------------------------
# Per-layer lane offsets inside w_ref (width 8E+F):
#   [0,3E)   self-attn packed QKV (Q pre-scaled)     [3E,4E)  self-attn Wo
#   [4E,5E)  cross-attn Wq (pre-scaled)              [5E,7E)  cross-attn Wk|Wv
#   [7E,8E)  cross-attn Wo                           [8E,8E+F) ff W1
# Per-layer lane offsets inside vec_ref (width 15E+F):
#   [0,3E) sa_bqkv  [3E,4E) sa_bo  [4E,7E) ca_bqkv  [7E,8E) ca_bo
#   [8E,8E+F) ff_b1  [8E+F,9E+F) ff_b2
#   then ln1_g, ln1_b, ln2_g, ln2_b, ln3_g, ln3_b (E lanes each).

def _fused_forward_kernel(
    x_in_ref,   # (BT, 8)        f32  zero-padded stroke inputs
    wp_ref,     # (8, E)         f32  input projection (rows 3.. are zero)
    add_ref,    # (BT, E)        f32  input-proj bias + positional encoding
    mem_ref,    # (BU, E)        f32  text embedding + positional encoding
    bias_ref,   # (BT, BT+BU)    f32  additive masks: [causal+block | block]
    w_ref,      # (L, E, 8E+F)   bf16 per-layer (E, .) weight matrices
    w2_ref,     # (L, F, E)      bf16 feed-forward second matmul
    vec_ref,    # (L, 15E+F)     f32  per-layer biases + LayerNorm params
    ow_ref,     # (E, Npad)      bf16 output projection (lane-padded)
    ob_ref,     # (1, Npad)      f32  output bias (lane-padded)
    y_ref,      # (BT, Npad)     f32  lane-dense output store
    *, num_heads, eps):
    f32 = jnp.float32
    bf16 = jnp.bfloat16
    E = wp_ref.shape[1]
    F = w2_ref.shape[1]
    L = w_ref.shape[0]
    BT = x_in_ref.shape[0]
    hd = E // num_heads

    def mm(a, b):
        # bf16 x bf16 MXU matmul with f32 accumulation
        return jnp.dot(a.astype(bf16), b.astype(bf16), preferred_element_type=f32)

    def layer_norm(z, g, b):
        mu = jnp.mean(z, axis=-1, keepdims=True)
        c = z - mu
        var = jnp.mean(c * c, axis=-1, keepdims=True)
        return c * jax.lax.rsqrt(var + eps) * g + b

    def attention(q, k, v, wo, bo, bias):
        # q: (Rq, E) f32, k/v: (Rk, E) f32, wo: (E, E) bf16, bias: (Rq, Rk).
        qb = q.astype(bf16)
        vb = v.astype(bf16)
        kT = jnp.transpose(k).astype(bf16)          # ONE transpose per attention
        heads = []
        for h in range(num_heads):
            lo, hi = h * hd, (h + 1) * hd
            # q @ k^T (1/sqrt(head_dim) already folded into the Q weights)
            s = jnp.dot(qb[:, lo:hi], kT[lo:hi, :], preferred_element_type=f32)
            s = s + bias
            s = s - jnp.max(s, axis=-1, keepdims=True)
            p = jnp.exp(s)
            # divide only the (Rq,1) denominator; approx reciprocal -> EUP slot
            p = p * pl.reciprocal(jnp.sum(p, axis=-1, keepdims=True), approx=True)
            heads.append(jnp.dot(p.astype(bf16), vb[:, lo:hi],
                                 preferred_element_type=f32))
        o = jnp.concatenate(heads, axis=-1)          # (Rq, E)
        return mm(o, wo) + bo                        # single Wo matmul

    # static-offset slicers into the consolidated per-layer buffers
    W = lambda l, off, width: w_ref[l, :, off:off + width]          # (E, width) bf16
    V = lambda l, off, width: vec_ref[l:l + 1, off:off + width]     # (1, width) f32

    # --- tgt = pos_encoding(input_proj(inputs))  (dropout == identity) -------
    x = jnp.dot(x_in_ref[...], wp_ref[...], preferred_element_type=f32) + add_ref[...]
    mem = mem_ref[...]
    self_bias = bias_ref[:, 0:BT]
    cross_bias = bias_ref[:, BT:]

    # --- decoder stack (post-norm, ReLU; PyTorch TransformerDecoderLayer) ----
    # TODO(synk): switch to lax.fori_loop over layers if n_layers grows large.
    for l in range(L):
        # self attention: one packed (E, 3E) QKV matmul
        qkv = mm(x, W(l, 0, 3 * E)) + V(l, 0, 3 * E)
        sa = attention(qkv[:, 0:E], qkv[:, E:2 * E], qkv[:, 2 * E:3 * E],
                       W(l, 3 * E, E), V(l, 3 * E, E), self_bias)
        x = layer_norm(x + sa, V(l, 9 * E + F, E), V(l, 10 * E + F, E))

        # cross attention: Q from decoder stream, packed KV from memory
        q = mm(x, W(l, 4 * E, E)) + V(l, 4 * E, E)
        kv = mm(mem, W(l, 5 * E, 2 * E)) + V(l, 5 * E, 2 * E)
        ca = attention(q, kv[:, 0:E], kv[:, E:2 * E],
                       W(l, 7 * E, E), V(l, 7 * E, E), cross_bias)
        x = layer_norm(x + ca, V(l, 11 * E + F, E), V(l, 12 * E + F, E))

        # feed forward (fused ReLU)
        h1 = jnp.maximum(mm(x, W(l, 8 * E, F)) + V(l, 8 * E, F), 0.0)
        ff = mm(h1, w2_ref[l]) + V(l, 8 * E + F, E)
        x = layer_norm(x + ff, V(l, 13 * E + F, E), V(l, 14 * E + F, E))

    # --- output projection (lane-dense, padded width) -------------------------
    y_ref[...] = mm(x, ow_ref[...]) + ob_ref[...]


# ----------------------------------------------------------------------------
# One-off parameter packing: consolidate weights, fold scales, cast to bf16
# ----------------------------------------------------------------------------

def pack_params(params):
    E = params["hidden_size"]
    H = params["nhead"]
    scale = 1.0 / math.sqrt(E // H)
    f32, bf16 = jnp.float32, jnp.bfloat16
    layers = params["layers"]

    def attn_w(p):   # packed (E, 3E); 1/sqrt(head_dim) folded into the Q slice
        return jnp.concatenate([p["wq"] * scale, p["wk"], p["wv"]], axis=1)

    def attn_b(p):
        return jnp.concatenate([p["bq"] * scale, p["bk"], p["bv"]])

    w_stack, w2_stack, vec_stack = [], [], []
    for lp in layers:
        sa, ca = lp["self_attn"], lp["cross_attn"]
        w_stack.append(jnp.concatenate(
            [attn_w(sa), sa["wo"], attn_w(ca), ca["wo"], lp["ff_w1"]], axis=1))
        w2_stack.append(lp["ff_w2"])
        vec_stack.append(jnp.concatenate(
            [attn_b(sa), sa["bo"], attn_b(ca), ca["bo"],
             lp["ff_b1"], lp["ff_b2"],
             lp["ln1_g"], lp["ln1_b"], lp["ln2_g"], lp["ln2_b"],
             lp["ln3_g"], lp["ln3_b"]]))

    # pad the final projection to a lane-dense (multiple of 128) store width
    n_out = params["output_size"]
    n_pad = ((n_out + 127) // 128) * 128
    out_w = jnp.zeros((E, n_pad), f32).at[:, :n_out].set(params["out_w"]).astype(bf16)
    out_b = jnp.zeros((1, n_pad), f32).at[:, :n_out].set(params["out_b"][None, :])

    # pad the 3->E input projection so the contraction dim is sublane aligned
    wp = jnp.zeros((_INPUT_PAD, E), f32).at[:3, :].set(params["input_proj_w"])

    return {
        "wp": wp,
        "bp": params["input_proj_b"],
        "w": jnp.stack(w_stack).astype(bf16),        # (L, E, 8E+F)
        "w2": jnp.stack(w2_stack).astype(bf16),      # (L, F, E)
        "vec": jnp.stack(vec_stack).astype(f32),     # (L, 15E+F)
        "out_w": out_w,                              # (E, n_pad) bf16
        "out_b": out_b,                              # (1, n_pad) f32
    }


# ----------------------------------------------------------------------------
# Forward factory (mirrors HandWritingSynthesisNet.forward, eval semantics)
# ----------------------------------------------------------------------------

def build_forward(params, B, T, U):
    """Packs parameters ONCE and returns a jitted forward(inputs, text, text_mask)
    that mirrors HandWritingSynthesisNet.forward (eval).  text_mask is accepted
    but unused, exactly like the reference.  Returns (y_hat, None, None, None)."""
    pk = pack_params(params)
    E = params["hidden_size"]
    H = params["nhead"]
    n_out = params["output_size"]
    n_pad = pk["out_w"].shape[1]
    pe = params["pe"]
    text_emb = params["text_emb"]

    # Constants for the static (B, T, U): positional encodings (input-proj bias
    # folded in) and the additive attention biases over the batch-stacked rows
    # (0 where attention is allowed: same batch, plus causal for self-attn;
    # -1e30 otherwise).  Baked into the jit executable, never recomputed.
    add_in = jnp.tile(pe[:T], (B, 1)) + pk["bp"][None, :]            # (B*T, E)
    pe_u = pe[:U]
    neg = jnp.float32(-1e30)
    r = jnp.arange(B * T)
    c = jnp.arange(B * U)
    same_b = (r[:, None] // T) == (r[None, :] // T)
    causal = (r[:, None] % T) >= (r[None, :] % T)
    self_bias = jnp.where(same_b & causal, 0.0, neg)
    cross_bias = jnp.where((r[:, None] // T) == (c[None, :] // U), 0.0, neg)
    bias_all = jnp.concatenate([self_bias, cross_bias], axis=1).astype(jnp.float32)
    # TODO(synk): for large B*T generate these masks in-kernel (broadcasted_iota)
    # instead of materializing the O((B*T)^2) bias, and add a parallel batch grid.

    kernel = functools.partial(_fused_forward_kernel, num_heads=H, eps=1e-5)

    @jax.jit
    def forward(inputs, text, text_mask=None):
        del text_mask  # unused, like the reference
        x_in = jnp.zeros((B * T, _INPUT_PAD), jnp.float32).at[:, :3].set(
            inputs.reshape(B * T, 3).astype(jnp.float32))
        mem = (jnp.take(text_emb, text, axis=0) + pe_u[None]).reshape(B * U, E)
        y_pad = pl.pallas_call(
            kernel,
            out_shape=jax.ShapeDtypeStruct((B * T, n_pad), jnp.float32),
            # No grid: whole-array VMEM blocks; total footprint ~1.3 MB.
        )(x_in, pk["wp"], add_in, mem, bias_all,
          pk["w"], pk["w2"], pk["vec"], pk["out_w"], pk["out_b"])
        y_hat = y_pad[:, :n_out].reshape(B, T, n_out)
        return y_hat, None, None, None

    return forward


# ----------------------------------------------------------------------------
# Deterministic parameter init (shapes mirror the PyTorch __init__)
# ----------------------------------------------------------------------------

def make_pos_encoding(max_len, d_model):
    position = jnp.arange(max_len, dtype=jnp.float32)[:, None]
    div_term = jnp.exp(
        jnp.arange(0, d_model, 2, dtype=jnp.float32) * (-math.log(10000.0) / d_model))
    pe = jnp.zeros((max_len, d_model), jnp.float32)
    pe = pe.at[:, 0::2].set(jnp.sin(position * div_term))
    n_odd = pe[:, 1::2].shape[1]
    pe = pe.at[:, 1::2].set(jnp.cos(position * div_term[:n_odd]))
    return pe


def _dense(key, shape, scale=0.05):
    return scale * jax.random.normal(key, shape, jnp.float32)


def init_params(key, hidden_size=128, n_layers=3, output_size=121,
                window_size=77, nhead=8, dim_ff=256, max_len=5000):
    counter = itertools.count()

    def nk():
        return jax.random.fold_in(key, next(counter))

    E = hidden_size

    def attn_params():
        return {
            "wq": _dense(nk(), (E, E)), "bq": _dense(nk(), (E,)),
            "wk": _dense(nk(), (E, E)), "bk": _dense(nk(), (E,)),
            "wv": _dense(nk(), (E, E)), "bv": _dense(nk(), (E,)),
            "wo": _dense(nk(), (E, E)), "bo": _dense(nk(), (E,)),
        }

    layers = []
    for _ in range(n_layers):
        layers.append({
            "self_attn": attn_params(),
            "cross_attn": attn_params(),
            "ln1_g": jnp.ones((E,), jnp.float32), "ln1_b": jnp.zeros((E,), jnp.float32),
            "ln2_g": jnp.ones((E,), jnp.float32), "ln2_b": jnp.zeros((E,), jnp.float32),
            "ln3_g": jnp.ones((E,), jnp.float32), "ln3_b": jnp.zeros((E,), jnp.float32),
            "ff_w1": _dense(nk(), (E, dim_ff)), "ff_b1": _dense(nk(), (dim_ff,)),
            "ff_w2": _dense(nk(), (dim_ff, E)), "ff_b2": _dense(nk(), (E,)),
        })

    return {
        "hidden_size": E,
        "nhead": nhead,
        "output_size": output_size,
        "input_proj_w": _dense(nk(), (3, E)),
        "input_proj_b": _dense(nk(), (E,)),
        "text_emb": _dense(nk(), (window_size, E)),
        "out_w": _dense(nk(), (E, output_size)),
        "out_b": _dense(nk(), (output_size,)),
        "pe": make_pos_encoding(max_len, E),
        "layers": layers,
    }
    # NOTE: self.text_encoder exists in the PyTorch __init__ but is never used by
    # forward(), so it is intentionally not materialized here.
    # TODO(synk): generate()/sample_batch_from_out_dist (autoregressive Bernoulli +
    # multinomial sampling loop) is not part of forward and is not implemented.


# ----------------------------------------------------------------------------

if __name__ == "__main__":
    key = jax.random.PRNGKey(0)
    k_params, k_inp, k_txt = jax.random.split(key, 3)

    B, T, U = 2, 8, 16            # batch, stroke sequence length, text length
    HIDDEN, NLAYERS, NHEAD = 128, 3, 8   # hidden_size = module default (lane-dense)
    OUT, VOCAB, DFF = 121, 77, 256

    params = init_params(k_params, hidden_size=HIDDEN, n_layers=NLAYERS,
                         output_size=OUT, window_size=VOCAB,
                         nhead=NHEAD, dim_ff=DFF)

    inputs = jax.random.normal(k_inp, (B, T, 3), jnp.float32)     # (eos, dx, dy)
    text = jax.random.randint(k_txt, (B, U), 0, VOCAB, dtype=jnp.int32)
    text_mask = jnp.ones((B, U), jnp.float32)                     # unused, like reference

    forward = build_forward(params, B, T, U)   # packs weights + jits ONCE
    y_hat, _, _, _ = forward(inputs, text, text_mask)
    y_hat = jax.block_until_ready(y_hat)

    assert y_hat.shape == (B, T, OUT)
    assert y_hat.dtype == jnp.float32
    assert bool(jnp.all(jnp.isfinite(y_hat)))
    print("KERNEL_OK")
</pallas_src>

<mosaic_0001>
module attributes {stable_mosaic.version = 11 : i64} {
  func.func @_fused_forward_kernel(%arg0: memref<16x8xf32, #tpu.memory_space<vmem>>, %arg1: memref<8x128xf32, #tpu.memory_space<vmem>>, %arg2: memref<16x128xf32, #tpu.memory_space<vmem>>, %arg3: memref<32x128xf32, #tpu.memory_space<vmem>>, %arg4: memref<16x48xf32, #tpu.memory_space<vmem>>, %arg5: memref<3x128x1280xbf16, #tpu.memory_space<vmem>>, %arg6: memref<3x256x128xbf16, #tpu.memory_space<vmem>>, %arg7: memref<3x2176xf32, #tpu.memory_space<vmem>>, %arg8: memref<128x128xbf16, #tpu.memory_space<vmem>>, %arg9: memref<1x128xf32, #tpu.memory_space<vmem>>, %arg10: memref<16x128xf32, #tpu.memory_space<vmem>>) attributes {dimension_semantics = [], scalar_prefetch = 0 : i64, scratch_operands = 0 : i64, tpu.core_type = #tpu.core_type<tc>} {
    %c0 = arith.constant 0 : index
    %c0_0 = arith.constant 0 : index
    %0 = vector.load %arg0[%c0, %c0_0] : memref<16x8xf32, #tpu.memory_space<vmem>>, vector<16x8xf32>
    %c0_1 = arith.constant 0 : index
    %c0_2 = arith.constant 0 : index
    %1 = vector.load %arg1[%c0_1, %c0_2] : memref<8x128xf32, #tpu.memory_space<vmem>>, vector<8x128xf32>
    %cst = arith.constant dense<0.000000e+00> : vector<16x128xf32>
    %2 = tpu.matmul %0, %1, %cst {dimension_numbers = #tpu.dot_dimension_numbers<[1], [0], [0], [1], [0, 0, 1, 1], [], []>} : vector<16x8xf32>, vector<8x128xf32>, vector<16x128xf32> -> vector<16x128xf32>
    %c0_3 = arith.constant 0 : index
    %c0_4 = arith.constant 0 : index
    %3 = vector.load %arg2[%c0_3, %c0_4] : memref<16x128xf32, #tpu.memory_space<vmem>>, vector<16x128xf32>
    %4 = arith.addf %2, %3 : vector<16x128xf32>
    %c0_5 = arith.constant 0 : index
    %c0_6 = arith.constant 0 : index
    %5 = vector.load %arg3[%c0_5, %c0_6] : memref<32x128xf32, #tpu.memory_space<vmem>>, vector<32x128xf32>
    %c0_7 = arith.constant 0 : index
    %c0_8 = arith.constant 0 : index
    %6 = vector.load %arg4[%c0_7, %c0_8] : memref<16x48xf32, #tpu.memory_space<vmem>>, vector<16x16xf32>
    %c0_9 = arith.constant 0 : index
    %c16 = arith.constant 16 : index
    %7 = vector.load %arg4[%c0_9, %c16] : memref<16x48xf32, #tpu.memory_space<vmem>>, vector<16x32xf32>
    %c0_10 = arith.constant 0 : index
    %c0_11 = arith.constant 0 : index
    %c0_12 = arith.constant 0 : index
    %8 = vector.load %arg5[%c0_10, %c0_11, %c0_12] : memref<3x128x1280xbf16, #tpu.memory_space<vmem>>, vector<1x128x384xbf16>
    %9 = vector.shape_cast %8 : vector<1x128x384xbf16> to vector<128x384xbf16>
    %10 = arith.truncf %4 : vector<16x128xf32> to vector<16x128xbf16>
    %cst_13 = arith.constant dense<0.000000e+00> : vector<16x384xf32>
    %11 = tpu.matmul %10, %9, %cst_13 {dimension_numbers = #tpu.dot_dimension_numbers<[1], [0], [0], [1], [0, 0, 1, 1], [], []>} : vector<16x128xbf16>, vector<128x384xbf16>, vector<16x384xf32> -> vector<16x384xf32>
    %c0_14 = arith.constant 0 : index
    %c0_15 = arith.constant 0 : index
    %12 = vector.load %arg7[%c0_14, %c0_15] : memref<3x2176xf32, #tpu.memory_space<vmem>>, vector<1x384xf32>
    %13 = vector.broadcast %12 : vector<1x384xf32> to vector<16x384xf32>
    %14 = arith.addf %11, %13 : vector<16x384xf32>
    %15 = vector.extract_strided_slice %14 {offsets = [0, 0], sizes = [16, 128], strides = [1, 1]} : vector<16x384xf32> to vector<16x128xf32>
    %16 = vector.extract_strided_slice %14 {offsets = [0, 128], sizes = [16, 128], strides = [1, 1]} : vector<16x384xf32> to vector<16x128xf32>
    %17 = vector.extract_strided_slice %14 {offsets = [0, 256], sizes = [16, 128], strides = [1, 1]} : vector<16x384xf32> to vector<16x128xf32>
    %c0_16 = arith.constant 0 : index
    %c0_17 = arith.constant 0 : index
    %c384 = arith.constant 384 : index
    %18 = vector.load %arg5[%c0_16, %c0_17, %c384] : memref<3x128x1280xbf16, #tpu.memory_space<vmem>>, vector<1x128x128xbf16>
    %19 = vector.shape_cast %18 : vector<1x128x128xbf16> to vector<128x128xbf16>
    %c0_18 = arith.constant 0 : index
    %c384_19 = arith.constant 384 : index
    %20 = vector.load %arg7[%c0_18, %c384_19] : memref<3x2176xf32, #tpu.memory_space<vmem>>, vector<1x128xf32>
    %21 = arith.truncf %15 : vector<16x128xf32> to vector<16x128xbf16>
    %22 = arith.truncf %17 : vector<16x128xf32> to vector<16x128xbf16>
    %23 = tpu.transpose %16, [1, 0] : vector<16x128xf32> -> vector<128x16xf32>
    %24 = arith.truncf %23 : vector<128x16xf32> to vector<128x16xbf16>
    %25 = vector.extract_strided_slice %21 {offsets = [0, 0], sizes = [16, 16], strides = [1, 1]} : vector<16x128xbf16> to vector<16x16xbf16>
    %26 = vector.extract_strided_slice %24 {offsets = [0, 0], sizes = [16, 16], strides = [1, 1]} : vector<128x16xbf16> to vector<16x16xbf16>
    %cst_20 = arith.constant dense<0.000000e+00> : vector<16x16xf32>
    %27 = tpu.matmul %25, %26, %cst_20 {dimension_numbers = #tpu.dot_dimension_numbers<[1], [0], [0], [1], [0, 0, 1, 1], [], []>} : vector<16x16xbf16>, vector<16x16xbf16>, vector<16x16xf32> -> vector<16x16xf32>
    %28 = arith.addf %27, %6 : vector<16x16xf32>
    %cst_21 = arith.constant dense<0xFF800000> : vector<16xf32>
    %29 = vector.multi_reduction <maximumf>, %28, %cst_21 [1] : vector<16x16xf32> to vector<16xf32>
    %30 = vector.shape_cast %29 : vector<16xf32> to vector<16x1xf32>
    %31 = vector.broadcast %30 : vector<16x1xf32> to vector<16x16xf32>
    %32 = arith.subf %28, %31 : vector<16x16xf32>
    %33 = math.exp %32 : vector<16x16xf32>
    %cst_22 = arith.constant dense<0.000000e+00> : vector<16xf32>
    %34 = vector.multi_reduction <add>, %33, %cst_22 [1] : vector<16x16xf32> to vector<16xf32>
    %35 = vector.shape_cast %34 : vector<16xf32> to vector<16x1xf32>
    %36 = tpu.reciprocal %35 {approx = true} : vector<16x1xf32> -> vector<16x1xf32>
    %37 = vector.broadcast %36 : vector<16x1xf32> to vector<16x16xf32>
    %38 = arith.mulf %33, %37 : vector<16x16xf32>
    %39 = arith.truncf %38 : vector<16x16xf32> to vector<16x16xbf16>
    %40 = vector.extract_strided_slice %22 {offsets = [0, 0], sizes = [16, 16], strides = [1, 1]} : vector<16x128xbf16> to vector<16x16xbf16>
    %cst_23 = arith.constant dense<0.000000e+00> : vector<16x16xf32>
    %41 = tpu.matmul %39, %40, %cst_23 {dimension_numbers = #tpu.dot_dimension_numbers<[1], [0], [0], [1], [0, 0, 1, 1], [], []>} : vector<16x16xbf16>, vector<16x16xbf16>, vector<16x16xf32> -> vector<16x16xf32>
    %42 = vector.extract_strided_slice %21 {offsets = [0, 16], sizes = [16, 16], strides = [1, 1]} : vector<16x128xbf16> to vector<16x16xbf16>
    %43 = vector.extract_strided_slice %24 {offsets = [16, 0], sizes = [16, 16], strides = [1, 1]} : vector<128x16xbf16> to vector<16x16xbf16>
    %cst_24 = arith.constant dense<0.000000e+00> : vector<16x16xf32>
    %44 = tpu.matmul %42, %43, %cst_24 {dimension_numbers = #tpu.dot_dimension_numbers<[1], [0], [0], [1], [0, 0, 1, 1], [], []>} : vector<16x16xbf16>, vector<16x16xbf16>, vector<16x16xf32> -> vector<16x16xf32>
    %45 = arith.addf %44, %6 : vector<16x16xf32>
    %cst_25 = arith.constant dense<0xFF800000> : vector<16xf32>
    %46 = vector.multi_reduction <maximumf>, %45, %cst_25 [1] : vector<16x16xf32> to vector<16xf32>
    %47 = vector.shape_cast %46 : vector<16xf32> to vector<16x1xf32>
    %48 = vector.broadcast %47 : vector<16x1xf32> to vector<16x16xf32>
    %49 = arith.subf %45, %48 : vector<16x16xf32>
    %50 = math.exp %49 : vector<16x16xf32>
    %cst_26 = arith.constant dense<0.000000e+00> : vector<16xf32>
    %51 = vector.multi_reduction <add>, %50, %cst_26 [1] : vector<16x16xf32> to vector<16xf32>
    %52 = vector.shape_cast %51 : vector<16xf32> to vector<16x1xf32>
    %53 = tpu.reciprocal %52 {approx = true} : vector<16x1xf32> -> vector<16x1xf32>
    %54 = vector.broadcast %53 : vector<16x1xf32> to vector<16x16xf32>
    %55 = arith.mulf %50, %54 : vector<16x16xf32>
    %56 = arith.truncf %55 : vector<16x16xf32> to vector<16x16xbf16>
    %57 = vector.extract_strided_slice %22 {offsets = [0, 16], sizes = [16, 16], strides = [1, 1]} : vector<16x128xbf16> to vector<16x16xbf16>
    %cst_27 = arith.constant dense<0.000000e+00> : vector<16x16xf32>
    %58 = tpu.matmul %56, %57, %cst_27 {dimension_numbers = #tpu.dot_dimension_numbers<[1], [0], [0], [1], [0, 0, 1, 1], [], []>} : vector<16x16xbf16>, vector<16x16xbf16>, vector<16x16xf32> -> vector<16x16xf32>
    %59 = vector.extract_strided_slice %21 {offsets = [0, 32], sizes = [16, 16], strides = [1, 1]} : vector<16x128xbf16> to vector<16x16xbf16>
    %60 = vector.extract_strided_slice %24 {offsets = [32, 0], sizes = [16, 16], strides = [1, 1]} : vector<128x16xbf16> to vector<16x16xbf16>
    %cst_28 = arith.constant dense<0.000000e+00> : vector<16x16xf32>
    %61 = tpu.matmul %59, %60, %cst_28 {dimension_numbers = #tpu.dot_dimension_numbers<[1], [0], [0], [1], [0, 0, 1, 1], [], []>} : vector<16x16xbf16>, vector<16x16xbf16>, vector<16x16xf32> -> vector<16x16xf32>
    %62 = arith.addf %61, %6 : vector<16x16xf32>
    %cst_29 = arith.constant dense<0xFF800000> : vector<16xf32>
    %63 = vector.multi_reduction <maximumf>, %62, %cst_29 [1] : vector<16x16xf32> to vector<16xf32>
    %64 = vector.shape_cast %63 : vector<16xf32> to vector<16x1xf32>
    %65 = vector.broadcast %64 : vector<16x1xf32> to vector<16x16xf32>
    %66 = arith.subf %62, %65 : vector<16x16xf32>
    %67 = math.exp %66 : vector<16x16xf32>
    %cst_30 = arith.constant dense<0.000000e+00> : vector<16xf32>
    %68 = vector.multi_reduction <add>, %67, %cst_30 [1] : vector<16x16xf32> to vector<16xf32>
    %69 = vector.shape_cast %68 : vector<16xf32> to vector<16x1xf32>
    %70 = tpu.reciprocal %69 {approx = true} : vector<16x1xf32> -> vector<16x1xf32>
    %71 = vector.broadcast %70 : vector<16x1xf32> to vector<16x16xf32>
    %72 = arith.mulf %67, %71 : vector<16x16xf32>
    %73 = arith.truncf %72 : vector<16x16xf32> to vector<16x16xbf16>
    %74 = vector.extract_strided_slice %22 {offsets = [0, 32], sizes = [16, 16], strides = [1, 1]} : vector<16x128xbf16> to vector<16x16xbf16>
    %cst_31 = arith.constant dense<0.000000e+00> : vector<16x16xf32>
    %75 = tpu.matmul %73, %74, %cst_31 {dimension_numbers = #tpu.dot_dimension_numbers<[1], [0], [0], [1], [0, 0, 1, 1], [], []>} : vector<16x16xbf16>, vector<16x16xbf16>, vector<16x16xf32> -> vector<16x16xf32>
    %76 = vector.extract_strided_slice %21 {offsets = [0, 48], sizes = [16, 16], strides = [1, 1]} : vector<16x128xbf16> to vector<16x16xbf16>
    %77 = vector.extract_strided_slice %24 {offsets = [48, 0], sizes = [16, 16], strides = [1, 1]} : vector<128x16xbf16> to vector<16x16xbf16>
    %cst_32 = arith.constant dense<0.000000e+00> : vector<16x16xf32>
    %78 = tpu.matmul %76, %77, %cst_32 {dimension_numbers = #tpu.dot_dimension_numbers<[1], [0], [0], [1], [0, 0, 1, 1], [], []>} : vector<16x16xbf16>, vector<16x16xbf16>, vector<16x16xf32> -> vector<16x16xf32>
    %79 = arith.addf %78, %6 : vector<16x16xf32>
    %cst_33 = arith.constant dense<0xFF800000> : vector<16xf32>
    %80 = vector.multi_reduction <maximumf>, %79, %cst_33 [1] : vector<16x16xf32> to vector<16xf32>
    %81 = vector.shape_cast %80 : vector<16xf32> to vector<16x1xf32>
    %82 = vector.broadcast %81 : vector<16x1xf32> to vector<16x16xf32>
    %83 = arith.subf %79, %82 : vector<16x16xf32>
    %84 = math.exp %83 : vector<16x16xf32>
    %cst_34 = arith.constant dense<0.000000e+00> : vector<16xf32>
    %85 = vector.multi_reduction <add>, %84, %cst_34 [1] : vector<16x16xf32> to vector<16xf32>
    %86 = vector.shape_cast %85 : vector<16xf32> to vector<16x1xf32>
    %87 = tpu.reciprocal %86 {approx = true} : vector<16x1xf32> -> vector<16x1xf32>
    %88 = vector.broadcast %87 : vector<16x1xf32> to vector<16x16xf32>
    %89 = arith.mulf %84, %88 : vector<16x16xf32>
    %90 = arith.truncf %89 : vector<16x16xf32> to vector<16x16xbf16>
    %91 = vector.extract_strided_slice %22 {offsets = [0, 48], sizes = [16, 16], strides = [1, 1]} : vector<16x128xbf16> to vector<16x16xbf16>
    %cst_35 = arith.constant dense<0.000000e+00> : vector<16x16xf32>
    %92 = tpu.matmul %90, %91, %cst_35 {dimension_numbers = #tpu.dot_dimension_numbers<[1], [0], [0], [1], [0, 0, 1, 1], [], []>} : vector<16x16xbf16>, vector<16x16xbf16>, vector<16x16xf32> -> vector<16x16xf32>
    %93 = vector.extract_strided_slice %21 {offsets = [0, 64], sizes = [16, 16], strides = [1, 1]} : vector<16x128xbf16> to vector<16x16xbf16>
    %94 = vector.extract_strided_slice %24 {offsets = [64, 0], sizes = [16, 16], strides = [1, 1]} : vector<128x16xbf16> to vector<16x16xbf16>
    %cst_36 = arith.constant dense<0.000000e+00> : vector<16x16xf32>
    %95 = tpu.matmul %93, %94, %cst_36 {dimension_numbers = #tpu.dot_dimension_numbers<[1], [0], [0], [1], [0, 0, 1, 1], [], []>} : vector<16x16xbf16>, vector<16x16xbf16>, vector<16x16xf32> -> vector<16x16xf32>
    %96 = arith.addf %95, %6 : vector<16x16xf32>
    %cst_37 = arith.constant dense<0xFF800000> : vector<16xf32>
    %97 = vector.multi_reduction <maximumf>, %96, %cst_37 [1] : vector<16x16xf32> to vector<16xf32>
    %98 = vector.shape_cast %97 : vector<16xf32> to vector<16x1xf32>
    %99 = vector.broadcast %98 : vector<16x1xf32> to vector<16x16xf32>
    %100 = arith.subf %96, %99 : vector<16x16xf32>
    %101 = math.exp %100 : vector<16x16xf32>
    %cst_38 = arith.constant dense<0.000000e+00> : vector<16xf32>
    %102 = vector.multi_reduction <add>, %101, %cst_38 [1] : vector<16x16xf32> to vector<16xf32>
    %103 = vector.shape_cast %102 : vector<16xf32> to vector<16x1xf32>
    %104 = tpu.reciprocal %103 {approx = true} : vector<16x1xf32> -> vector<16x1xf32>
    %105 = vector.broadcast %104 : vector<16x1xf32> to vector<16x16xf32>
    %106 = arith.mulf %101, %105 : vector<16x16xf32>
    %107 = arith.truncf %106 : vector<16x16xf32> to vector<16x16xbf16>
    %108 = vector.extract_strided_slice %22 {offsets = [0, 64], sizes = [16, 16], strides = [1, 1]} : vector<16x128xbf16> to vector<16x16xbf16>
    %cst_39 = arith.constant dense<0.000000e+00> : vector<16x16xf32>
    %109 = tpu.matmul %107, %108, %cst_39 {dimension_numbers = #tpu.dot_dimension_numbers<[1], [0], [0], [1], [0, 0, 1, 1], [], []>} : vector<16x16xbf16>, vector<16x16xbf16>, vector<16x16xf32> -> vector<16x16xf32>
    %110 = vector.extract_strided_slice %21 {offsets = [0, 80], sizes = [16, 16], strides = [1, 1]} : vector<16x128xbf16> to vector<16x16xbf16>
    %111 = vector.extract_strided_slice %24 {offsets = [80, 0], sizes = [16, 16], strides = [1, 1]} : vector<128x16xbf16> to vector<16x16xbf16>
    %cst_40 = arith.constant dense<0.000000e+00> : vector<16x16xf32>
    %112 = tpu.matmul %110, %111, %cst_40 {dimension_numbers = #tpu.dot_dimension_numbers<[1], [0], [0], [1], [0, 0, 1, 1], [], []>} : vector<16x16xbf16>, vector<16x16xbf16>, vector<16x16xf32> -> vector<16x16xf32>
    %113 = arith.addf %112, %6 : vector<16x16xf32>
    %cst_41 = arith.constant dense<0xFF800000> : vector<16xf32>
    %114 = vector.multi_reduction <maximumf>, %113, %cst_41 [1] : vector<16x16xf32> to vector<16xf32>
    %115 = vector.shape_cast %114 : vector<16xf32> to vector<16x1xf32>
    %116 = vector.broadcast %115 : vector<16x1xf32> to vector<16x16xf32>
    %117 = arith.subf %113, %116 : vector<16x16xf32>
    %118 = math.exp %117 : vector<16x16xf32>
    %cst_42 = arith.constant dense<0.000000e+00> : vector<16xf32>
    %119 = vector.multi_reduction <add>, %118, %cst_42 [1] : vector<16x16xf32> to vector<16xf32>
    %120 = vector.shape_cast %119 : vector<16xf32> to vector<16x1xf32>
    %121 = tpu.reciprocal %120 {approx = true} : vector<16x1xf32> -> vector<16x1xf32>
    %122 = vector.broadcast %121 : vector<16x1xf32> to vector<16x16xf32>
    %123 = arith.mulf %118, %122 : vector<16x16xf32>
    %124 = arith.truncf %123 : vector<16x16xf32> to vector<16x16xbf16>
    %125 = vector.extract_strided_slice %22 {offsets = [0, 80], sizes = [16, 16], strides = [1, 1]} : vector<16x128xbf16> to vector<16x16xbf16>
    %cst_43 = arith.constant dense<0.000000e+00> : vector<16x16xf32>
    %126 = tpu.matmul %124, %125, %cst_43 {dimension_numbers = #tpu.dot_dimension_numbers<[1], [0], [0], [1], [0, 0, 1, 1], [], []>} : vector<16x16xbf16>, vector<16x16xbf16>, vector<16x16xf32> -> vector<16x16xf32>
    %127 = vector.extract_strided_slice %21 {offsets = [0, 96], sizes = [16, 16], strides = [1, 1]} : vector<16x128xbf16> to vector<16x16xbf16>
    %128 = vector.extract_strided_slice %24 {offsets = [96, 0], sizes = [16, 16], strides = [1, 1]} : vector<128x16xbf16> to vector<16x16xbf16>
    %cst_44 = arith.constant dense<0.000000e+00> : vector<16x16xf32>
    %129 = tpu.matmul %127, %128, %cst_44 {dimension_numbers = #tpu.dot_dimension_numbers<[1], [0], [0], [1], [0, 0, 1, 1], [], []>} : vector<16x16xbf16>, vector<16x16xbf16>, vector<16x16xf32> -> vector<16x16xf32>
    %130 = arith.addf %129, %6 : vector<16x16xf32>
    %cst_45 = arith.constant dense<0xFF800000> : vector<16xf32>
    %131 = vector.multi_reduction <maximumf>, %130, %cst_45 [1] : vector<16x16xf32> to vector<16xf32>
    %132 = vector.shape_cast %131 : vector<16xf32> to vector<16x1xf32>
    %133 = vector.broadcast %132 : vector<16x1xf32> to vector<16x16xf32>
    %134 = arith.subf %130, %133 : vector<16x16xf32>
    %135 = math.exp %134 : vector<16x16xf32>
    %cst_46 = arith.constant dense<0.000000e+00> : vector<16xf32>
    %136 = vector.multi_reduction <add>, %135, %cst_46 [1] : vector<16x16xf32> to vector<16xf32>
    %137 = vector.shape_cast %136 : vector<16xf32> to vector<16x1xf32>
    %138 = tpu.reciprocal %137 {approx = true} : vector<16x1xf32> -> vector<16x1xf32>
    %139 = vector.broadcast %138 : vector<16x1xf32> to vector<16x16xf32>
    %140 = arith.mulf %135, %139 : vector<16x16xf32>
    %141 = arith.truncf %140 : vector<16x16xf32> to vector<16x16xbf16>
    %142 = vector.extract_strided_slice %22 {offsets = [0, 96], sizes = [16, 16], strides = [1, 1]} : vector<16x128xbf16> to vector<16x16xbf16>
    %cst_47 = arith.constant dense<0.000000e+00> : vector<16x16xf32>
    %143 = tpu.matmul %141, %142, %cst_47 {dimension_numbers = #tpu.dot_dimension_numbers<[1], [0], [0], [1], [0, 0, 1, 1], [], []>} : vector<16x16xbf16>, vector<16x16xbf16>, vector<16x16xf32> -> vector<16x16xf32>
    %144 = vector.extract_strided_slice %21 {offsets = [0, 112], sizes = [16, 16], strides = [1, 1]} : vector<16x128xbf16> to vector<16x16xbf16>
    %145 = vector.extract_strided_slice %24 {offsets = [112, 0], sizes = [16, 16], strides = [1, 1]} : vector<128x16xbf16> to vector<16x16xbf16>
    %cst_48 = arith.constant dense<0.000000e+00> : vector<16x16xf32>
    %146 = tpu.matmul %144, %145, %cst_48 {dimension_numbers = #tpu.dot_dimension_numbers<[1], [0], [0], [1], [0, 0, 1, 1], [], []>} : vector<16x16xbf16>, vector<16x16xbf16>, vector<16x16xf32> -> vector<16x16xf32>
    %147 = arith.addf %146, %6 : vector<16x16xf32>
    %cst_49 = arith.constant dense<0xFF800000> : vector<16xf32>
    %148 = vector.multi_reduction <maximumf>, %147, %cst_49 [1] : vector<16x16xf32> to vector<16xf32>
    %149 = vector.shape_cast %148 : vector<16xf32> to vector<16x1xf32>
    %150 = vector.broadcast %149 : vector<16x1xf32> to vector<16x16xf32>
    %151 = arith.subf %147, %150 : vector<16x16xf32>
    %152 = math.exp %151 : vector<16x16xf32>
    %cst_50 = arith.constant dense<0.000000e+00> : vector<16xf32>
    %153 = vector.multi_reduction <add>, %152, %cst_50 [1] : vector<16x16xf32> to vector<16xf32>
    %154 = vector.shape_cast %153 : vector<16xf32> to vector<16x1xf32>
    %155 = tpu.reciprocal %154 {approx = true} : vector<16x1xf32> -> vector<16x1xf32>
    %156 = vector.broadcast %155 : vector<16x1xf32> to vector<16x16xf32>
    %157 = arith.mulf %152, %156 : vector<16x16xf32>
    %158 = arith.truncf %157 : vector<16x16xf32> to vector<16x16xbf16>
    %159 = vector.extract_strided_slice %22 {offsets = [0, 112], sizes = [16, 16], strides = [1, 1]} : vector<16x128xbf16> to vector<16x16xbf16>
    %cst_51 = arith.constant dense<0.000000e+00> : vector<16x16xf32>
    %160 = tpu.matmul %158, %159, %cst_51 {dimension_numbers = #tpu.dot_dimension_numbers<[1], [0], [0], [1], [0, 0, 1, 1], [], []>} : vector<16x16xbf16>, vector<16x16xbf16>, vector<16x16xf32> -> vector<16x16xf32>
    %161 = tpu.concatenate %41, %58, %75, %92, %109, %126, %143, %160 in 1 : vector<16x16xf32>, vector<16x16xf32>, vector<16x16xf32>, vector<16x16xf32>, vector<16x16xf32>, vector<16x16xf32>, vector<16x16xf32>, vector<16x16xf32> -> vector<16x128xf32>
    %162 = arith.truncf %161 : vector<16x128xf32> to vector<16x128xbf16>
    %cst_52 = arith.constant dense<0.000000e+00> : vector<16x128xf32>
    %163 = tpu.matmul %162, %19, %cst_52 {dimension_numbers = #tpu.dot_dimension_numbers<[1], [0], [0], [1], [0, 0, 1, 1], [], []>} : vector<16x128xbf16>, vector<128x128xbf16>, vector<16x128xf32> -> vector<16x128xf32>
    %164 = vector.broadcast %20 : vector<1x128xf32> to vector<16x128xf32>
    %165 = arith.addf %163, %164 : vector<16x128xf32>
    %166 = arith.addf %4, %165 : vector<16x128xf32>
    %c0_53 = arith.constant 0 : index
    %c1408 = arith.constant 1408 : index
    %167 = vector.load %arg7[%c0_53, %c1408] : memref<3x2176xf32, #tpu.memory_space<vmem>>, vector<1x128xf32>
    %c0_54 = arith.constant 0 : index
    %c1536 = arith.constant 1536 : index
    %168 = vector.load %arg7[%c0_54, %c1536] : memref<3x2176xf32, #tpu.memory_space<vmem>>, vector<1x128xf32>
    %cst_55 = arith.constant dense<0.000000e+00> : vector<16xf32>
    %169 = vector.multi_reduction <add>, %166, %cst_55 [1] : vector<16x128xf32> to vector<16xf32>
    %170 = vector.shape_cast %169 : vector<16xf32> to vector<16x1xf32>
    %cst_56 = arith.constant 1.280000e+02 : f32
    %171 = vector.broadcast %cst_56 : f32 to vector<16x1xf32>
    %172 = arith.divf %170, %171 : vector<16x1xf32>
    %173 = vector.broadcast %172 : vector<16x1xf32> to vector<16x128xf32>
    %174 = arith.subf %166, %173 : vector<16x128xf32>
    %175 = arith.mulf %174, %174 : vector<16x128xf32>
    %cst_57 = arith.constant dense<0.000000e+00> : vector<16xf32>
    %176 = vector.multi_reduction <add>, %175, %cst_57 [1] : vector<16x128xf32> to vector<16xf32>
    %177 = vector.shape_cast %176 : vector<16xf32> to vector<16x1xf32>
    %cst_58 = arith.constant 1.280000e+02 : f32
    %178 = vector.broadcast %cst_58 : f32 to vector<16x1xf32>
    %179 = arith.divf %177, %178 : vector<16x1xf32>
    %cst_59 = arith.constant 9.99999974E-6 : f32
    %180 = vector.broadcast %cst_59 : f32 to vector<16x1xf32>
    %181 = arith.addf %179, %180 : vector<16x1xf32>
    %182 = math.rsqrt %181 : vector<16x1xf32>
    %183 = vector.broadcast %182 : vector<16x1xf32> to vector<16x128xf32>
    %184 = arith.mulf %174, %183 : vector<16x128xf32>
    %185 = vector.broadcast %167 : vector<1x128xf32> to vector<16x128xf32>
    %186 = arith.mulf %184, %185 : vector<16x128xf32>
    %187 = vector.broadcast %168 : vector<1x128xf32> to vector<16x128xf32>
    %188 = arith.addf %186, %187 : vector<16x128xf32>
    %c0_60 = arith.constant 0 : index
    %c0_61 = arith.constant 0 : index
    %c512 = arith.constant 512 : index
    %189 = vector.load %arg5[%c0_60, %c0_61, %c512] : memref<3x128x1280xbf16, #tpu.memory_space<vmem>>, vector<1x128x128xbf16>
    %190 = vector.shape_cast %189 : vector<1x128x128xbf16> to vector<128x128xbf16>
    %191 = arith.truncf %188 : vector<16x128xf32> to vector<16x128xbf16>
    %cst_62 = arith.constant dense<0.000000e+00> : vector<16x128xf32>
    %192 = tpu.matmul %191, %190, %cst_62 {dimension_numbers = #tpu.dot_dimension_numbers<[1], [0], [0], [1], [0, 0, 1, 1], [], []>} : vector<16x128xbf16>, vector<128x128xbf16>, vector<16x128xf32> -> vector<16x128xf32>
    %c0_63 = arith.constant 0 : index
    %c512_64 = arith.constant 512 : index
    %193 = vector.load %arg7[%c0_63, %c512_64] : memref<3x2176xf32, #tpu.memory_space<vmem>>, vector<1x128xf32>
    %194 = vector.broadcast %193 : vector<1x128xf32> to vector<16x128xf32>
    %195 = arith.addf %192, %194 : vector<16x128xf32>
    %c0_65 = arith.constant 0 : index
    %c0_66 = arith.constant 0 : index
    %c640 = arith.constant 640 : index
    %196 = vector.load %arg5[%c0_65, %c0_66, %c640] : memref<3x128x1280xbf16, #tpu.memory_space<vmem>>, vector<1x128x256xbf16>
    %197 = vector.shape_cast %196 : vector<1x128x256xbf16> to vector<128x256xbf16>
    %198 = arith.truncf %5 : vector<32x128xf32> to vector<32x128xbf16>
    %cst_67 = arith.constant dense<0.000000e+00> : vector<32x256xf32>
    %199 = tpu.matmul %198, %197, %cst_67 {dimension_numbers = #tpu.dot_dimension_numbers<[1], [0], [0], [1], [0, 0, 1, 1], [], []>} : vector<32x128xbf16>, vector<128x256xbf16>, vector<32x256xf32> -> vector<32x256xf32>
    %c0_68 = arith.constant 0 : index
    %c640_69 = arith.constant 640 : index
    %200 = vector.load %arg7[%c0_68, %c640_69] : memref<3x2176xf32, #tpu.memory_space<vmem>>, vector<1x256xf32>
    %201 = vector.broadcast %200 : vector<1x256xf32> to vector<32x256xf32>
    %202 = arith.addf %199, %201 : vector<32x256xf32>
    %203 = vector.extract_strided_slice %202 {offsets = [0, 0], sizes = [32, 128], strides = [1, 1]} : vector<32x256xf32> to vector<32x128xf32>
    %204 = vector.extract_strided_slice %202 {offsets = [0, 128], sizes = [32, 128], strides = [1, 1]} : vector<32x256xf32> to vector<32x128xf32>
    %c0_70 = arith.constant 0 : index
    %c0_71 = arith.constant 0 : index
    %c896 = arith.constant 896 : index
    %205 = vector.load %arg5[%c0_70, %c0_71, %c896] : memref<3x128x1280xbf16, #tpu.memory_space<vmem>>, vector<1x128x128xbf16>
    %206 = vector.shape_cast %205 : vector<1x128x128xbf16> to vector<128x128xbf16>
    %c0_72 = arith.constant 0 : index
    %c896_73 = arith.constant 896 : index
    %207 = vector.load %arg7[%c0_72, %c896_73] : memref<3x2176xf32, #tpu.memory_space<vmem>>, vector<1x128xf32>
    %208 = arith.truncf %195 : vector<16x128xf32> to vector<16x128xbf16>
    %209 = arith.truncf %204 : vector<32x128xf32> to vector<32x128xbf16>
    %210 = tpu.transpose %203, [1, 0] : vector<32x128xf32> -> vector<128x32xf32>
    %211 = arith.truncf %210 : vector<128x32xf32> to vector<128x32xbf16>
    %212 = vector.extract_strided_slice %208 {offsets = [0, 0], sizes = [16, 16], strides = [1, 1]} : vector<16x128xbf16> to vector<16x16xbf16>
    %213 = vector.extract_strided_slice %211 {offsets = [0, 0], sizes = [16, 32], strides = [1, 1]} : vector<128x32xbf16> to vector<16x32xbf16>
    %cst_74 = arith.constant dense<0.000000e+00> : vector<16x32xf32>
    %214 = tpu.matmul %212, %213, %cst_74 {dimension_numbers = #tpu.dot_dimension_numbers<[1], [0], [0], [1], [0, 0, 1, 1], [], []>} : vector<16x16xbf16>, vector<16x32xbf16>, vector<16x32xf32> -> vector<16x32xf32>
    %215 = arith.addf %214, %7 : vector<16x32xf32>
    %cst_75 = arith.constant dense<0xFF800000> : vector<16xf32>
    %216 = vector.multi_reduction <maximumf>, %215, %cst_75 [1] : vector<16x32xf32> to vector<16xf32>
    %217 = vector.shape_cast %216 : vector<16xf32> to vector<16x1xf32>
    %218 = vector.broadcast %217 : vector<16x1xf32> to vector<16x32xf32>
    %219 = arith.subf %215, %218 : vector<16x32xf32>
    %220 = math.exp %219 : vector<16x32xf32>
    %cst_76 = arith.constant dense<0.000000e+00> : vector<16xf32>
    %221 = vector.multi_reduction <add>, %220, %cst_76 [1] : vector<16x32xf32> to vector<16xf32>
    %222 = vector.shape_cast %221 : vector<16xf32> to vector<16x1xf32>
    %223 = tpu.reciprocal %222 {approx = true} : vector<16x1xf32> -> vector<16x1xf32>
    %224 = vector.broadcast %223 : vector<16x1xf32> to vector<16x32xf32>
    %225 = arith.mulf %220, %224 : vector<16x32xf32>
    %226 = arith.truncf %225 : vector<16x32xf32> to vector<16x32xbf16>
    %227 = vector.extract_strided_slice %209 {offsets = [0, 0], sizes = [32, 16], strides = [1, 1]} : vector<32x128xbf16> to vector<32x16xbf16>
    %cst_77 = arith.constant dense<0.000000e+00> : vector<16x16xf32>
    %228 = tpu.matmul %226, %227, %cst_77 {dimension_numbers = #tpu.dot_dimension_numbers<[1], [0], [0], [1], [0, 0, 1, 1], [], []>} : vector<16x32xbf16>, vector<32x16xbf16>, vector<16x16xf32> -> vector<16x16xf32>
    %229 = vector.extract_strided_slice %208 {offsets = [0, 16], sizes = [16, 16], strides = [1, 1]} : vector<16x128xbf16> to vector<16x16xbf16>
    %230 = vector.extract_strided_slice %211 {offsets = [16, 0], sizes = [16, 32], strides = [1, 1]} : vector<128x32xbf16> to vector<16x32xbf16>
    %cst_78 = arith.constant dense<0.000000e+00> : vector<16x32xf32>
    %231 = tpu.matmul %229, %230, %cst_78 {dimension_numbers = #tpu.dot_dimension_numbers<[1], [0], [0], [1], [0, 0, 1, 1], [], []>} : vector<16x16xbf16>, vector<16x32xbf16>, vector<16x32xf32> -> vector<16x32xf32>
    %232 = arith.addf %231, %7 : vector<16x32xf32>
    %cst_79 = arith.constant dense<0xFF800000> : vector<16xf32>
    %233 = vector.multi_reduction <maximumf>, %232, %cst_79 [1] : vector<16x32xf32> to vector<16xf32>
    %234 = vector.shape_cast %233 : vector<16xf32> to vector<16x1xf32>
    %235 = vector.broadcast %234 : vector<16x1xf32> to vector<16x32xf32>
    %236 = arith.subf %232, %235 : vector<16x32xf32>
    %237 = math.exp %236 : vector<16x32xf32>
    %cst_80 = arith.constant dense<0.000000e+00> : vector<16xf32>
    %238 = vector.multi_reduction <add>, %237, %cst_80 [1] : vector<16x32xf32> to vector<16xf32>
    %239 = vector.shape_cast %238 : vector<16xf32> to vector<16x1xf32>
    %240 = tpu.reciprocal %239 {approx = true} : vector<16x1xf32> -> vector<16x1xf32>
    %241 = vector.broadcast %240 : vector<16x1xf32> to vector<16x32xf32>
    %242 = arith.mulf %237, %241 : vector<16x32xf32>
    %243 = arith.truncf %242 : vector<16x32xf32> to vector<16x32xbf16>
    %244 = vector.extract_strided_slice %209 {offsets = [0, 16], sizes = [32, 16], strides = [1, 1]} : vector<32x128xbf16> to vector<32x16xbf16>
    %cst_81 = arith.constant dense<0.000000e+00> : vector<16x16xf32>
    %245 = tpu.matmul %243, %244, %cst_81 {dimension_numbers = #tpu.dot_dimension_numbers<[1], [0], [0], [1], [0, 0, 1, 1], [], []>} : vector<16x32xbf16>, vector<32x16xbf16>, vector<16x16xf32> -> vector<16x16xf32>
    %246 = vector.extract_strided_slice %208 {offsets = [0, 32], sizes = [16, 16], strides = [1, 1]} : vector<16x128xbf16> to vector<16x16xbf16>
    %247 = vector.extract_strided_slice %211 {offsets = [32, 0], sizes = [16, 32], strides = [1, 1]} : vector<128x32xbf16> to vector<16x32xbf16>
    %cst_82 = arith.constant dense<0.000000e+00> : vector<16x32xf32>
    %248 = tpu.matmul %246, %247, %cst_82 {dimension_numbers = #tpu.dot_dimension_numbers<[1], [0], [0], [1], [0, 0, 1, 1], [], []>} : vector<16x16xbf16>, vector<16x32xbf16>, vector<16x32xf32> -> vector<16x32xf32>
    %249 = arith.addf %248, %7 : vector<16x32xf32>
    %cst_83 = arith.constant dense<0xFF800000> : vector<16xf32>
    %250 = vector.multi_reduction <maximumf>, %249, %cst_83 [1] : vector<16x32xf32> to vector<16xf32>
    %251 = vector.shape_cast %250 : vector<16xf32> to vector<16x1xf32>
    %252 = vector.broadcast %251 : vector<16x1xf32> to vector<16x32xf32>
    %253 = arith.subf %249, %252 : vector<16x32xf32>
    %254 = math.exp %253 : vector<16x32xf32>
    %cst_84 = arith.constant dense<0.000000e+00> : vector<16xf32>
    %255 = vector.multi_reduction <add>, %254, %cst_84 [1] : vector<16x32xf32> to vector<16xf32>
    %256 = vector.shape_cast %255 : vector<16xf32> to vector<16x1xf32>
    %257 = tpu.reciprocal %256 {approx = true} : vector<16x1xf32> -> vector<16x1xf32>
    %258 = vector.broadcast %257 : vector<16x1xf32> to vector<16x32xf32>
    %259 = arith.mulf %254, %258 : vector<16x32xf32>
    %260 = arith.truncf %259 : vector<16x32xf32> to vector<16x32xbf16>
    %261 = vector.extract_strided_slice %209 {offsets = [0, 32], sizes = [32, 16], strides = [1, 1]} : vector<32x128xbf16> to vector<32x16xbf16>
    %cst_85 = arith.constant dense<0.000000e+00> : vector<16x16xf32>
    %262 = tpu.matmul %260, %261, %cst_85 {dimension_numbers = #tpu.dot_dimension_numbers<[1], [0], [0], [1], [0, 0, 1, 1], [], []>} : vector<16x32xbf16>, vector<32x16xbf16>, vector<16x16xf32> -> vector<16x16xf32>
    %263 = vector.extract_strided_slice %208 {offsets = [0, 48], sizes = [16, 16], strides = [1, 1]} : vector<16x128xbf16> to vector<16x16xbf16>
    %264 = vector.extract_strided_slice %211 {offsets = [48, 0], sizes = [16, 32], strides = [1, 1]} : vector<128x32xbf16> to vector<16x32xbf16>
    %cst_86 = arith.constant dense<0.000000e+00> : vector<16x32xf32>
    %265 = tpu.matmul %263, %264, %cst_86 {dimension_numbers = #tpu.dot_dimension_numbers<[1], [0], [0], [1], [0, 0, 1, 1], [], []>} : vector<16x16xbf16>, vector<16x32xbf16>, vector<16x32xf32> -> vector<16x32xf32>
    %266 = arith.addf %265, %7 : vector<16x32xf32>
    %cst_87 = arith.constant dense<0xFF800000> : vector<16xf32>
    %267 = vector.multi_reduction <maximumf>, %266, %cst_87 [1] : vector<16x32xf32> to vector<16xf32>
    %268 = vector.shape_cast %267 : vector<16xf32> to vector<16x1xf32>
    %269 = vector.broadcast %268 : vector<16x1xf32> to vector<16x32xf32>
    %270 = arith.subf %266, %269 : vector<16x32xf32>
    %271 = math.exp %270 : vector<16x32xf32>
    %cst_88 = arith.constant dense<0.000000e+00> : vector<16xf32>
    %272 = vector.multi_reduction <add>, %271, %cst_88 [1] : vector<16x32xf32> to vector<16xf32>
    %273 = vector.shape_cast %272 : vector<16xf32> to vector<16x1xf32>
    %274 = tpu.reciprocal %273 {approx = true} : vector<16x1xf32> -> vector<16x1xf32>
    %275 = vector.broadcast %274 : vector<16x1xf32> to vector<16x32xf32>
    %276 = arith.mulf %271, %275 : vector<16x32xf32>
    %277 = arith.truncf %276 : vector<16x32xf32> to vector<16x32xbf16>
    %278 = vector.extract_strided_slice %209 {offsets = [0, 48], sizes = [32, 16], strides = [1, 1]} : vector<32x128xbf16> to vector<32x16xbf16>
    %cst_89 = arith.constant dense<0.000000e+00> : vector<16x16xf32>
    %279 = tpu.matmul %277, %278, %cst_89 {dimension_numbers = #tpu.dot_dimension_numbers<[1], [0], [0], [1], [0, 0, 1, 1], [], []>} : vector<16x32xbf16>, vector<32x16xbf16>, vector<16x16xf32> -> vector<16x16xf32>
    %280 = vector.extract_strided_slice %208 {offsets = [0, 64], sizes = [16, 16], strides = [1, 1]} : vector<16x128xbf16> to vector<16x16xbf16>
    %281 = vector.extract_strided_slice %211 {offsets = [64, 0], sizes = [16, 32], strides = [1, 1]} : vector<128x32xbf16> to vector<16x32xbf16>
    %cst_90 = arith.constant dense<0.000000e+00> : vector<16x32xf32>
    %282 = tpu.matmul %280, %281, %cst_90 {dimension_numbers = #tpu.dot_dimension_numbers<[1], [0], [0], [1], [0, 0, 1, 1], [], []>} : vector<16x16xbf16>, vector<16x32xbf16>, vector<16x32xf32> -> vector<16x32xf32>
    %283 = arith.addf %282, %7 : vector<16x32xf32>
    %cst_91 = arith.constant dense<0xFF800000> : vector<16xf32>
    %284 = vector.multi_reduction <maximumf>, %283, %cst_91 [1] : vector<16x32xf32> to vector<16xf32>
    %285 = vector.shape_cast %284 : vector<16xf32> to vector<16x1xf32>
    %286 = vector.broadcast %285 : vector<16x1xf32> to vector<16x32xf32>
    %287 = arith.subf %283, %286 : vector<16x32xf32>
    %288 = math.exp %287 : vector<16x32xf32>
    %cst_92 = arith.constant dense<0.000000e+00> : vector<16xf32>
    %289 = vector.multi_reduction <add>, %288, %cst_92 [1] : vector<16x32xf32> to vector<16xf32>
    %290 = vector.shape_cast %289 : vector<16xf32> to vector<16x1xf32>
    %291 = tpu.reciprocal %290 {approx = true} : vector<16x1xf32> -> vector<16x1xf32>
    %292 = vector.broadcast %291 : vector<16x1xf32> to vector<16x32xf32>
    %293 = arith.mulf %288, %292 : vector<16x32xf32>
    %294 = arith.truncf %293 : vector<16x32xf32> to vector<16x32xbf16>
    %295 = vector.extract_strided_slice %209 {offsets = [0, 64], sizes = [32, 16], strides = [1, 1]} : vector<32x128xbf16> to vector<32x16xbf16>
    %cst_93 = arith.constant dense<0.000000e+00> : vector<16x16xf32>
    %296 = tpu.matmul %294, %295, %cst_93 {dimension_numbers = #tpu.dot_dimension_numbers<[1], [0], [0], [1], [0, 0, 1, 1], [], []>} : vector<16x32xbf16>, vector<32x16xbf16>, vector<16x16xf32> -> vector<16x16xf32>
    %297 = vector.extract_strided_slice %208 {offsets = [0, 80], sizes = [16, 16], strides = [1, 1]} : vector<16x128xbf16> to vector<16x16xbf16>
    %298 = vector.extract_strided_slice %211 {offsets = [80, 0], sizes = [16, 32], strides = [1, 1]} : vector<128x32xbf16> to vector<16x32xbf16>
    %cst_94 = arith.constant dense<0.000000e+00> : vector<16x32xf32>
    %299 = tpu.matmul %297, %298, %cst_94 {dimension_numbers = #tpu.dot_dimension_numbers<[1], [0], [0], [1], [0, 0, 1, 1], [], []>} : vector<16x16xbf16>, vector<16x32xbf16>, vector<16x32xf32> -> vector<16x32xf32>
    %300 = arith.addf %299, %7 : vector<16x32xf32>
    %cst_95 = arith.constant dense<0xFF800000> : vector<16xf32>
    %301 = vector.multi_reduction <maximumf>, %300, %cst_95 [1] : vector<16x32xf32> to vector<16xf32>
    %302 = vector.shape_cast %301 : vector<16xf32> to vector<16x1xf32>
    %303 = vector.broadcast %302 : vector<16x1xf32> to vector<16x32xf32>
    %304 = arith.subf %300, %303 : vector<16x32xf32>
    %305 = math.exp %304 : vector<16x32xf32>
    %cst_96 = arith.constant dense<0.000000e+00> : vector<16xf32>
    %306 = vector.multi_reduction <add>, %305, %cst_96 [1] : vector<16x32xf32> to vector<16xf32>
    %307 = vector.shape_cast %306 : vector<16xf32> to vector<16x1xf32>
    %308 = tpu.reciprocal %307 {approx = true} : vector<16x1xf32> -> vector<16x1xf32>
    %309 = vector.broadcast %308 : vector<16x1xf32> to vector<16x32xf32>
    %310 = arith.mulf %305, %309 : vector<16x32xf32>
    %311 = arith.truncf %310 : vector<16x32xf32> to vector<16x32xbf16>
    %312 = vector.extract_strided_slice %209 {offsets = [0, 80], sizes = [32, 16], strides = [1, 1]} : vector<32x128xbf16> to vector<32x16xbf16>
    %cst_97 = arith.constant dense<0.000000e+00> : vector<16x16xf32>
    %313 = tpu.matmul %311, %312, %cst_97 {dimension_numbers = #tpu.dot_dimension_numbers<[1], [0], [0], [1], [0, 0, 1, 1], [], []>} : vector<16x32xbf16>, vector<32x16xbf16>, vector<16x16xf32> -> vector<16x16xf32>
    %314 = vector.extract_strided_slice %208 {offsets = [0, 96], sizes = [16, 16], strides = [1, 1]} : vector<16x128xbf16> to vector<16x16xbf16>
    %315 = vector.extract_strided_slice %211 {offsets = [96, 0], sizes = [16, 32], strides = [1, 1]} : vector<128x32xbf16> to vector<16x32xbf16>
    %cst_98 = arith.constant dense<0.000000e+00> : vector<16x32xf32>
    %316 = tpu.matmul %314, %315, %cst_98 {dimension_numbers = #tpu.dot_dimension_numbers<[1], [0], [0], [1], [0, 0, 1, 1], [], []>} : vector<16x16xbf16>, vector<16x32xbf16>, vector<16x32xf32> -> vector<16x32xf32>
    %317 = arith.addf %316, %7 : vector<16x32xf32>
    %cst_99 = arith.constant dense<0xFF800000> : vector<16xf32>
    %318 = vector.multi_reduction <maximumf>, %317, %cst_99 [1] : vector<16x32xf32> to vector<16xf32>
    %319 = vector.shape_cast %318 : vector<16xf32> to vector<16x1xf32>
    %320 = vector.broadcast %319 : vector<16x1xf32> to vector<16x32xf32>
    %321 = arith.subf %317, %320 : vector<16x32xf32>
    %322 = math.exp %321 : vector<16x32xf32>
    %cst_100 = arith.constant dense<0.000000e+00> : vector<16xf32>
    %323 = vector.multi_reduction <add>, %322, %cst_100 [1] : vector<16x32xf32> to vector<16xf32>
    %324 = vector.shape_cast %323 : vector<16xf32> to vector<16x1xf32>
    %325 = tpu.reciprocal %324 {approx = true} : vector<16x1xf32> -> vector<16x1xf32>
    %326 = vector.broadcast %325 : vector<16x1xf32> to vector<16x32xf32>
    %327 = arith.mulf %322, %326 : vector<16x32xf32>
    %328 = arith.truncf %327 : vector<16x32xf32> to vector<16x32xbf16>
    %329 = vector.extract_strided_slice %209 {offsets = [0, 96], sizes = [32, 16], strides = [1, 1]} : vector<32x128xbf16> to vector<32x16xbf16>
    %cst_101 = arith.constant dense<0.000000e+00> : vector<16x16xf32>
    %330 = tpu.matmul %328, %329, %cst_101 {dimension_numbers = #tpu.dot_dimension_numbers<[1], [0], [0], [1], [0, 0, 1, 1], [], []>} : vector<16x32xbf16>, vector<32x16xbf16>, vector<16x16xf32> -> vector<16x16xf32>
    %331 = vector.extract_strided_slice %208 {offsets = [0, 112], sizes = [16, 16], strides = [1, 1]} : vector<16x128xbf16> to vector<16x16xbf16>
    %332 = vector.extract_strided_slice %211 {offsets = [112, 0], sizes = [16, 32], strides = [1, 1]} : vector<128x32xbf16> to vector<16x32xbf16>
    %cst_102 = arith.constant dense<0.000000e+00> : vector<16x32xf32>
    %333 = tpu.matmul %331, %332, %cst_102 {dimension_numbers = #tpu.dot_dimension_numbers<[1], [0], [0], [1], [0, 0, 1, 1], [], []>} : vector<16x16xbf16>, vector<16x32xbf16>, vector<16x32xf32> -> vector<16x32xf32>
    %334 = arith.addf %333, %7 : vector<16x32xf32>
    %cst_103 = arith.constant dense<0xFF800000> : vector<16xf32>
    %335 = vector.multi_reduction <maximumf>, %334, %cst_103 [1] : vector<16x32xf32> to vector<16xf32>
    %336 = vector.shape_cast %335 : vector<16xf32> to vector<16x1xf32>
    %337 = vector.broadcast %336 : vector<16x1xf32> to vector<16x32xf32>
    %338 = arith.subf %334, %337 : vector<16x32xf32>
    %339 = math.exp %338 : vector<16x32xf32>
    %cst_104 = arith.constant dense<0.000000e+00> : vector<16xf32>
    %340 = vector.multi_reduction <add>, %339, %cst_104 [1] : vector<16x32xf32> to vector<16xf32>
    %341 = vector.shape_cast %340 : vector<16xf32> to vector<16x1xf32>
    %342 = tpu.reciprocal %341 {approx = true} : vector<16x1xf32> -> vector<16x1xf32>
    %343 = vector.broadcast %342 : vector<16x1xf32> to vector<16x32xf32>
    %344 = arith.mulf %339, %343 : vector<16x32xf32>
    %345 = arith.truncf %344 : vector<16x32xf32> to vector<16x32xbf16>
    %346 = vector.extract_strided_slice %209 {offsets = [0, 112], sizes = [32, 16], strides = [1, 1]} : vector<32x128xbf16> to vector<32x16xbf16>
    %cst_105 = arith.constant dense<0.000000e+00> : vector<16x16xf32>
    %347 = tpu.matmul %345, %346, %cst_105 {dimension_numbers = #tpu.dot_dimension_numbers<[1], [0], [0], [1], [0, 0, 1, 1], [], []>} : vector<16x32xbf16>, vector<32x16xbf16>, vector<16x16xf32> -> vector<16x16xf32>
    %348 = tpu.concatenate %228, %245, %262, %279, %296, %313, %330, %347 in 1 : vector<16x16xf32>, vector<16x16xf32>, vector<16x16xf32>, vector<16x16xf32>, vector<16x16xf32>, vector<16x16xf32>, vector<16x16xf32>, vector<16x16xf32> -> vector<16x128xf32>
    %349 = arith.truncf %348 : vector<16x128xf32> to vector<16x128xbf16>
    %cst_106 = arith.constant dense<0.000000e+00> : vector<16x128xf32>
    %350 = tpu.matmul %349, %206, %cst_106 {dimension_numbers = #tpu.dot_dimension_numbers<[1], [0], [0], [1], [0, 0, 1, 1], [], []>} : vector<16x128xbf16>, vector<128x128xbf16>, vector<16x128xf32> -> vector<16x128xf32>
    %351 = vector.broadcast %207 : vector<1x128xf32> to vector<16x128xf32>
    %352 = arith.addf %350, %351 : vector<16x128xf32>
    %353 = arith.addf %188, %352 : vector<16x128xf32>
    %c0_107 = arith.constant 0 : index
    %c1664 = arith.constant 1664 : index
    %354 = vector.load %arg7[%c0_107, %c1664] : memref<3x2176xf32, #tpu.memory_space<vmem>>, vector<1x128xf32>
    %c0_108 = arith.constant 0 : index
    %c1792 = arith.constant 1792 : index
    %355 = vector.load %arg7[%c0_108, %c1792] : memref<3x2176xf32, #tpu.memory_space<vmem>>, vector<1x128xf32>
    %cst_109 = arith.constant dense<0.000000e+00> : vector<16xf32>
    %356 = vector.multi_reduction <add>, %353, %cst_109 [1] : vector<16x128xf32> to vector<16xf32>
    %357 = vector.shape_cast %356 : vector<16xf32> to vector<16x1xf32>
    %cst_110 = arith.constant 1.280000e+02 : f32
    %358 = vector.broadcast %cst_110 : f32 to vector<16x1xf32>
    %359 = arith.divf %357, %358 : vector<16x1xf32>
    %360 = vector.broadcast %359 : vector<16x1xf32> to vector<16x128xf32>
    %361 = arith.subf %353, %360 : vector<16x128xf32>
    %362 = arith.mulf %361, %361 : vector<16x128xf32>
    %cst_111 = arith.constant dense<0.000000e+00> : vector<16xf32>
    %363 = vector.multi_reduction <add>, %362, %cst_111 [1] : vector<16x128xf32> to vector<16xf32>
    %364 = vector.shape_cast %363 : vector<16xf32> to vector<16x1xf32>
    %cst_112 = arith.constant 1.280000e+02 : f32
    %365 = vector.broadcast %cst_112 : f32 to vector<16x1xf32>
    %366 = arith.divf %364, %365 : vector<16x1xf32>
    %cst_113 = arith.constant 9.99999974E-6 : f32
    %367 = vector.broadcast %cst_113 : f32 to vector<16x1xf32>
    %368 = arith.addf %366, %367 : vector<16x1xf32>
    %369 = math.rsqrt %368 : vector<16x1xf32>
    %370 = vector.broadcast %369 : vector<16x1xf32> to vector<16x128xf32>
    %371 = arith.mulf %361, %370 : vector<16x128xf32>
    %372 = vector.broadcast %354 : vector<1x128xf32> to vector<16x128xf32>
    %373 = arith.mulf %371, %372 : vector<16x128xf32>
    %374 = vector.broadcast %355 : vector<1x128xf32> to vector<16x128xf32>
    %375 = arith.addf %373, %374 : vector<16x128xf32>
    %c0_114 = arith.constant 0 : index
    %c0_115 = arith.constant 0 : index
    %c1024 = arith.constant 1024 : index
    %376 = vector.load %arg5[%c0_114, %c0_115, %c1024] : memref<3x128x1280xbf16, #tpu.memory_space<vmem>>, vector<1x128x256xbf16>
    %377 = vector.shape_cast %376 : vector<1x128x256xbf16> to vector<128x256xbf16>
    %378 = arith.truncf %375 : vector<16x128xf32> to vector<16x128xbf16>
    %cst_116 = arith.constant dense<0.000000e+00> : vector<16x256xf32>
    %379 = tpu.matmul %378, %377, %cst_116 {dimension_numbers = #tpu.dot_dimension_numbers<[1], [0], [0], [1], [0, 0, 1, 1], [], []>} : vector<16x128xbf16>, vector<128x256xbf16>, vector<16x256xf32> -> vector<16x256xf32>
    %c0_117 = arith.constant 0 : index
    %c1024_118 = arith.constant 1024 : index
    %380 = vector.load %arg7[%c0_117, %c1024_118] : memref<3x2176xf32, #tpu.memory_space<vmem>>, vector<1x256xf32>
    %381 = vector.broadcast %380 : vector<1x256xf32> to vector<16x256xf32>
    %382 = arith.addf %379, %381 : vector<16x256xf32>
    %cst_119 = arith.constant 0.000000e+00 : f32
    %383 = vector.broadcast %cst_119 : f32 to vector<16x256xf32>
    %384 = arith.maximumf %382, %383 : vector<16x256xf32>
    %c0_120 = arith.constant 0 : index
    %c0_121 = arith.constant 0 : index
    %c0_122 = arith.constant 0 : index
    %385 = vector.load %arg6[%c0_120, %c0_121, %c0_122] : memref<3x256x128xbf16, #tpu.memory_space<vmem>>, vector<1x256x128xbf16>
    %386 = vector.shape_cast %385 : vector<1x256x128xbf16> to vector<256x128xbf16>
    %387 = arith.truncf %384 : vector<16x256xf32> to vector<16x256xbf16>
    %cst_123 = arith.constant dense<0.000000e+00> : vector<16x128xf32>
    %388 = tpu.matmul %387, %386, %cst_123 {dimension_numbers = #tpu.dot_dimension_numbers<[1], [0], [0], [1], [0, 0, 1, 1], [], []>} : vector<16x256xbf16>, vector<256x128xbf16>, vector<16x128xf32> -> vector<16x128xf32>
    %c0_124 = arith.constant 0 : index
    %c1280 = arith.constant 1280 : index
    %389 = vector.load %arg7[%c0_124, %c1280] : memref<3x2176xf32, #tpu.memory_space<vmem>>, vector<1x128xf32>
    %390 = vector.broadcast %389 : vector<1x128xf32> to vector<16x128xf32>
    %391 = arith.addf %388, %390 : vector<16x128xf32>
    %392 = arith.addf %375, %391 : vector<16x128xf32>
    %c0_125 = arith.constant 0 : index
    %c1920 = arith.constant 1920 : index
    %393 = vector.load %arg7[%c0_125, %c1920] : memref<3x2176xf32, #tpu.memory_space<vmem>>, vector<1x128xf32>
    %c0_126 = arith.constant 0 : index
    %c2048 = arith.constant 2048 : index
    %394 = vector.load %arg7[%c0_126, %c2048] : memref<3x2176xf32, #tpu.memory_space<vmem>>, vector<1x128xf32>
    %cst_127 = arith.constant dense<0.000000e+00> : vector<16xf32>
    %395 = vector.multi_reduction <add>, %392, %cst_127 [1] : vector<16x128xf32> to vector<16xf32>
    %396 = vector.shape_cast %395 : vector<16xf32> to vector<16x1xf32>
    %cst_128 = arith.constant 1.280000e+02 : f32
    %397 = vector.broadcast %cst_128 : f32 to vector<16x1xf32>
    %398 = arith.divf %396, %397 : vector<16x1xf32>
    %399 = vector.broadcast %398 : vector<16x1xf32> to vector<16x128xf32>
    %400 = arith.subf %392, %399 : vector<16x128xf32>
    %401 = arith.mulf %400, %400 : vector<16x128xf32>
    %cst_129 = arith.constant dense<0.000000e+00> : vector<16xf32>
    %402 = vector.multi_reduction <add>, %401, %cst_129 [1] : vector<16x128xf32> to vector<16xf32>
    %403 = vector.shape_cast %402 : vector<16xf32> to vector<16x1xf32>
    %cst_130 = arith.constant 1.280000e+02 : f32
    %404 = vector.broadcast %cst_130 : f32 to vector<16x1xf32>
    %405 = arith.divf %403, %404 : vector<16x1xf32>
    %cst_131 = arith.constant 9.99999974E-6 : f32
    %406 = vector.broadcast %cst_131 : f32 to vector<16x1xf32>
    %407 = arith.addf %405, %406 : vector<16x1xf32>
    %408 = math.rsqrt %407 : vector<16x1xf32>
    %409 = vector.broadcast %408 : vector<16x1xf32> to vector<16x128xf32>
    %410 = arith.mulf %400, %409 : vector<16x128xf32>
    %411 = vector.broadcast %393 : vector<1x128xf32> to vector<16x128xf32>
    %412 = arith.mulf %410, %411 : vector<16x128xf32>
    %413 = vector.broadcast %394 : vector<1x128xf32> to vector<16x128xf32>
    %414 = arith.addf %412, %413 : vector<16x128xf32>
    %c1 = arith.constant 1 : index
    %c0_132 = arith.constant 0 : index
    %c0_133 = arith.constant 0 : index
    %415 = vector.load %arg5[%c1, %c0_132, %c0_133] : memref<3x128x1280xbf16, #tpu.memory_space<vmem>>, vector<1x128x384xbf16>
    %416 = vector.shape_cast %415 : vector<1x128x384xbf16> to vector<128x384xbf16>
    %417 = arith.truncf %414 : vector<16x128xf32> to vector<16x128xbf16>
    %cst_134 = arith.constant dense<0.000000e+00> : vector<16x384xf32>
    %418 = tpu.matmul %417, %416, %cst_134 {dimension_numbers = #tpu.dot_dimension_numbers<[1], [0], [0], [1], [0, 0, 1, 1], [], []>} : vector<16x128xbf16>, vector<128x384xbf16>, vector<16x384xf32> -> vector<16x384xf32>
    %c1_135 = arith.constant 1 : index
    %c0_136 = arith.constant 0 : index
    %419 = vector.load %arg7[%c1_135, %c0_136] : memref<3x2176xf32, #tpu.memory_space<vmem>>, vector<1x384xf32>
    %420 = vector.broadcast %419 : vector<1x384xf32> to vector<16x384xf32>
    %421 = arith.addf %418, %420 : vector<16x384xf32>
    %422 = vector.extract_strided_slice %421 {offsets = [0, 0], sizes = [16, 128], strides = [1, 1]} : vector<16x384xf32> to vector<16x128xf32>
    %423 = vector.extract_strided_slice %421 {offsets = [0, 128], sizes = [16, 128], strides = [1, 1]} : vector<16x384xf32> to vector<16x128xf32>
    %424 = vector.extract_strided_slice %421 {offsets = [0, 256], sizes = [16, 128], strides = [1, 1]} : vector<16x384xf32> to vector<16x128xf32>
    %c1_137 = arith.constant 1 : index
    %c0_138 = arith.constant 0 : index
    %c384_139 = arith.constant 384 : index
    %425 = vector.load %arg5[%c1_137, %c0_138, %c384_139] : memref<3x128x1280xbf16, #tpu.memory_space<vmem>>, vector<1x128x128xbf16>
    %426 = vector.shape_cast %425 : vector<1x128x128xbf16> to vector<128x128xbf16>
    %c1_140 = arith.constant 1 : index
    %c384_141 = arith.constant 384 : index
    %427 = vector.load %arg7[%c1_140, %c384_141] : memref<3x2176xf32, #tpu.memory_space<vmem>>, vector<1x128xf32>
    %428 = arith.truncf %422 : vector<16x128xf32> to vector<16x128xbf16>
    %429 = arith.truncf %424 : vector<16x128xf32> to vector<16x128xbf16>
    %430 = tpu.transpose %423, [1, 0] : vector<16x128xf32> -> vector<128x16xf32>
    %431 = arith.truncf %430 : vector<128x16xf32> to vector<128x16xbf16>
    %432 = vector.extract_strided_slice %428 {offsets = [0, 0], sizes = [16, 16], strides = [1, 1]} : vector<16x128xbf16> to vector<16x16xbf16>
    %433 = vector.extract_strided_slice %431 {offsets = [0, 0], sizes = [16, 16], strides = [1, 1]} : vector<128x16xbf16> to vector<16x16xbf16>
    %cst_142 = arith.constant dense<0.000000e+00> : vector<16x16xf32>
    %434 = tpu.matmul %432, %433, %cst_142 {dimension_numbers = #tpu.dot_dimension_numbers<[1], [0], [0], [1], [0, 0, 1, 1], [], []>} : vector<16x16xbf16>, vector<16x16xbf16>, vector<16x16xf32> -> vector<16x16xf32>
    %435 = arith.addf %434, %6 : vector<16x16xf32>
    %cst_143 = arith.constant dense<0xFF800000> : vector<16xf32>
    %436 = vector.multi_reduction <maximumf>, %435, %cst_143 [1] : vector<16x16xf32> to vector<16xf32>
    %437 = vector.shape_cast %436 : vector<16xf32> to vector<16x1xf32>
    %438 = vector.broadcast %437 : vector<16x1xf32> to vector<16x16xf32>
    %439 = arith.subf %435, %438 : vector<16x16xf32>
    %440 = math.exp %439 : vector<16x16xf32>
    %cst_144 = arith.constant dense<0.000000e+00> : vector<16xf32>
    %441 = vector.multi_reduction <add>, %440, %cst_144 [1] : vector<16x16xf32> to vector<16xf32>
    %442 = vector.shape_cast %441 : vector<16xf32> to vector<16x1xf32>
    %443 = tpu.reciprocal %442 {approx = true} : vector<16x1xf32> -> vector<16x1xf32>
    %444 = vector.broadcast %443 : vector<16x1xf32> to vector<16x16xf32>
    %445 = arith.mulf %440, %444 : vector<16x16xf32>
    %446 = arith.truncf %445 : vector<16x16xf32> to vector<16x16xbf16>
    %447 = vector.extract_strided_slice %429 {offsets = [0, 0], sizes = [16, 16], strides = [1, 1]} : vector<16x128xbf16> to vector<16x16xbf16>
    %cst_145 = arith.constant dense<0.000000e+00> : vector<16x16xf32>
    %448 = tpu.matmul %446, %447, %cst_145 {dimension_numbers = #tpu.dot_dimension_numbers<[1], [0], [0], [1], [0, 0, 1, 1], [], []>} : vector<16x16xbf16>, vector<16x16xbf16>, vector<16x16xf32> -> vector<16x16xf32>
    %449 = vector.extract_strided_slice %428 {offsets = [0, 16], sizes = [16, 16], strides = [1, 1]} : vector<16x128xbf16> to vector<16x16xbf16>
    %450 = vector.extract_strided_slice %431 {offsets = [16, 0], sizes = [16, 16], strides = [1, 1]} : vector<128x16xbf16> to vector<16x16xbf16>
    %cst_146 = arith.constant dense<0.000000e+00> : vector<16x16xf32>
    %451 = tpu.matmul %449, %450, %cst_146 {dimension_numbers = #tpu.dot_dimension_numbers<[1], [0], [0], [1], [0, 0, 1, 1], [], []>} : vector<16x16xbf16>, vector<16x16xbf16>, vector<16x16xf32> -> vector<16x16xf32>
    %452 = arith.addf %451, %6 : vector<16x16xf32>
    %cst_147 = arith.constant dense<0xFF800000> : vector<16xf32>
    %453 = vector.multi_reduction <maximumf>, %452, %cst_147 [1] : vector<16x16xf32> to vector<16xf32>
    %454 = vector.shape_cast %453 : vector<16xf32> to vector<16x1xf32>
    %455 = vector.broadcast %454 : vector<16x1xf32> to vector<16x16xf32>
    %456 = arith.subf %452, %455 : vector<16x16xf32>
    %457 = math.exp %456 : vector<16x16xf32>
    %cst_148 = arith.constant dense<0.000000e+00> : vector<16xf32>
    %458 = vector.multi_reduction <add>, %457, %cst_148 [1] : vector<16x16xf32> to vector<16xf32>
    %459 = vector.shape_cast %458 : vector<16xf32> to vector<16x1xf32>
    %460 = tpu.reciprocal %459 {approx = true} : vector<16x1xf32> -> vector<16x1xf32>
    %461 = vector.broadcast %460 : vector<16x1xf32> to vector<16x16xf32>
    %462 = arith.mulf %457, %461 : vector<16x16xf32>
    %463 = arith.truncf %462 : vector<16x16xf32> to vector<16x16xbf16>
    %464 = vector.extract_strided_slice %429 {offsets = [0, 16], sizes = [16, 16], strides = [1, 1]} : vector<16x128xbf16> to vector<16x16xbf16>
    %cst_149 = arith.constant dense<0.000000e+00> : vector<16x16xf32>
    %465 = tpu.matmul %463, %464, %cst_149 {dimension_numbers = #tpu.dot_dimension_numbers<[1], [0], [0], [1], [0, 0, 1, 1], [], []>} : vector<16x16xbf16>, vector<16x16xbf16>, vector<16x16xf32> -> vector<16x16xf32>
    %466 = vector.extract_strided_slice %428 {offsets = [0, 32], sizes = [16, 16], strides = [1, 1]} : vector<16x128xbf16> to vector<16x16xbf16>
    %467 = vector.extract_strided_slice %431 {offsets = [32, 0], sizes = [16, 16], strides = [1, 1]} : vector<128x16xbf16> to vector<16x16xbf16>
    %cst_150 = arith.constant dense<0.000000e+00> : vector<16x16xf32>
    %468 = tpu.matmul %466, %467, %cst_150 {dimension_numbers = #tpu.dot_dimension_numbers<[1], [0], [0], [1], [0, 0, 1, 1], [], []>} : vector<16x16xbf16>, vector<16x16xbf16>, vector<16x16xf32> -> vector<16x16xf32>
    %469 = arith.addf %468, %6 : vector<16x16xf32>
    %cst_151 = arith.constant dense<0xFF800000> : vector<16xf32>
    %470 = vector.multi_reduction <maximumf>, %469, %cst_151 [1] : vector<16x16xf32> to vector<16xf32>
    %471 = vector.shape_cast %470 : vector<16xf32> to vector<16x1xf32>
    %472 = vector.broadcast %471 : vector<16x1xf32> to vector<16x16xf32>
    %473 = arith.subf %469, %472 : vector<16x16xf32>
    %474 = math.exp %473 : vector<16x16xf32>
    %cst_152 = arith.constant dense<0.000000e+00> : vector<16xf32>
    %475 = vector.multi_reduction <add>, %474, %cst_152 [1] : vector<16x16xf32> to vector<16xf32>
    %476 = vector.shape_cast %475 : vector<16xf32> to vector<16x1xf32>
    %477 = tpu.reciprocal %476 {approx = true} : vector<16x1xf32> -> vector<16x1xf32>
    %478 = vector.broadcast %477 : vector<16x1xf32> to vector<16x16xf32>
    %479 = arith.mulf %474, %478 : vector<16x16xf32>
    %480 = arith.truncf %479 : vector<16x16xf32> to vector<16x16xbf16>
    %481 = vector.extract_strided_slice %429 {offsets = [0, 32], sizes = [16, 16], strides = [1, 1]} : vector<16x128xbf16> to vector<16x16xbf16>
    %cst_153 = arith.constant dense<0.000000e+00> : vector<16x16xf32>
    %482 = tpu.matmul %480, %481, %cst_153 {dimension_numbers = #tpu.dot_dimension_numbers<[1], [0], [0], [1], [0, 0, 1, 1], [], []>} : vector<16x16xbf16>, vector<16x16xbf16>, vector<16x16xf32> -> vector<16x16xf32>
    %483 = vector.extract_strided_slice %428 {offsets = [0, 48], sizes = [16, 16], strides = [1, 1]} : vector<16x128xbf16> to vector<16x16xbf16>
    %484 = vector.extract_strided_slice %431 {offsets = [48, 0], sizes = [16, 16], strides = [1, 1]} : vector<128x16xbf16> to vector<16x16xbf16>
    %cst_154 = arith.constant dense<0.000000e+00> : vector<16x16xf32>
    %485 = tpu.matmul %483, %484, %cst_154 {dimension_numbers = #tpu.dot_dimension_numbers<[1], [0], [0], [1], [0, 0, 1, 1], [], []>} : vector<16x16xbf16>, vector<16x16xbf16>, vector<16x16xf32> -> vector<16x16xf32>
    %486 = arith.addf %485, %6 : vector<16x16xf32>
    %cst_155 = arith.constant dense<0xFF800000> : vector<16xf32>
    %487 = vector.multi_reduction <maximumf>, %486, %cst_155 [1] : vector<16x16xf32> to vector<16xf32>
    %488 = vector.shape_cast %487 : vector<16xf32> to vector<16x1xf32>
    %489 = vector.broadcast %488 : vector<16x1xf32> to vector<16x16xf32>
    %490 = arith.subf %486, %489 : vector<16x16xf32>
    %491 = math.exp %490 : vector<16x16xf32>
    %cst_156 = arith.constant dense<0.000000e+00> : vector<16xf32>
    %492 = vector.multi_reduction <add>, %491, %cst_156 [1] : vector<16x16xf32> to vector<16xf32>
    %493 = vector.shape_cast %492 : vector<16xf32> to vector<16x1xf32>
    %494 = tpu.reciprocal %493 {approx = true} : vector<16x1xf32> -> vector<16x1xf32>
    %495 = vector.broadcast %494 : vector<16x1xf32> to vector<16x16xf32>
    %496 = arith.mulf %491, %495 : vector<16x16xf32>
    %497 = arith.truncf %496 : vector<16x16xf32> to vector<16x16xbf16>
    %498 = vector.extract_strided_slice %429 {offsets = [0, 48], sizes = [16, 16], strides = [1, 1]} : vector<16x128xbf16> to vector<16x16xbf16>
    %cst_157 = arith.constant dense<0.000000e+00> : vector<16x16xf32>
    %499 = tpu.matmul %497, %498, %cst_157 {dimension_numbers = #tpu.dot_dimension_numbers<[1], [0], [0], [1], [0, 0, 1, 1], [], []>} : vector<16x16xbf16>, vector<16x16xbf16>, vector<16x16xf32> -> vector<16x16xf32>
    %500 = vector.extract_strided_slice %428 {offsets = [0, 64], sizes = [16, 16], strides = [1, 1]} : vector<16x128xbf16> to vector<16x16xbf16>
    %501 = vector.extract_strided_slice %431 {offsets = [64, 0], sizes = [16, 16], strides = [1, 1]} : vector<128x16xbf16> to vector<16x16xbf16>
    %cst_158 = arith.constant dense<0.000000e+00> : vector<16x16xf32>
    %502 = tpu.matmul %500, %501, %cst_158 {dimension_numbers = #tpu.dot_dimension_numbers<[1], [0], [0], [1], [0, 0, 1, 1], [], []>} : vector<16x16xbf16>, vector<16x16xbf16>, vector<16x16xf32> -> vector<16x16xf32>
    %503 = arith.addf %502, %6 : vector<16x16xf32>
    %cst_159 = arith.constant dense<0xFF800000> : vector<16xf32>
    %504 = vector.multi_reduction <maximumf>, %503, %cst_159 [1] : vector<16x16xf32> to vector<16xf32>
    %505 = vector.shape_cast %504 : vector<16xf32> to vector<16x1xf32>
    %506 = vector.broadcast %505 : vector<16x1xf32> to vector<16x16xf32>
    %507 = arith.subf %503, %506 : vector<16x16xf32>
    %508 = math.exp %507 : vector<16x16xf32>
    %cst_160 = arith.constant dense<0.000000e+00> : vector<16xf32>
    %509 = vector.multi_reduction <add>, %508, %cst_160 [1] : vector<16x16xf32> to vector<16xf32>
    %510 = vector.shape_cast %509 : vector<16xf32> to vector<16x1xf32>
    %511 = tpu.reciprocal %510 {approx = true} : vector<16x1xf32> -> vector<16x1xf32>
    %512 = vector.broadcast %511 : vector<16x1xf32> to vector<16x16xf32>
    %513 = arith.mulf %508, %512 : vector<16x16xf32>
    %514 = arith.truncf %513 : vector<16x16xf32> to vector<16x16xbf16>
    %515 = vector.extract_strided_slice %429 {offsets = [0, 64], sizes = [16, 16], strides = [1, 1]} : vector<16x128xbf16> to vector<16x16xbf16>
    %cst_161 = arith.constant dense<0.000000e+00> : vector<16x16xf32>
    %516 = tpu.matmul %514, %515, %cst_161 {dimension_numbers = #tpu.dot_dimension_numbers<[1], [0], [0], [1], [0, 0, 1, 1], [], []>} : vector<16x16xbf16>, vector<16x16xbf16>, vector<16x16xf32> -> vector<16x16xf32>
    %517 = vector.extract_strided_slice %428 {offsets = [0, 80], sizes = [16, 16], strides = [1, 1]} : vector<16x128xbf16> to vector<16x16xbf16>
    %518 = vector.extract_strided_slice %431 {offsets = [80, 0], sizes = [16, 16], strides = [1, 1]} : vector<128x16xbf16> to vector<16x16xbf16>
    %cst_162 = arith.constant dense<0.000000e+00> : vector<16x16xf32>
    %519 = tpu.matmul %517, %518, %cst_162 {dimension_numbers = #tpu.dot_dimension_numbers<[1], [0], [0], [1], [0, 0, 1, 1], [], []>} : vector<16x16xbf16>, vector<16x16xbf16>, vector<16x16xf32> -> vector<16x16xf32>
    %520 = arith.addf %519, %6 : vector<16x16xf32>
    %cst_163 = arith.constant dense<0xFF800000> : vector<16xf32>
    %521 = vector.multi_reduction <maximumf>, %520, %cst_163 [1] : vector<16x16xf32> to vector<16xf32>
    %522 = vector.shape_cast %521 : vector<16xf32> to vector<16x1xf32>
    %523 = vector.broadcast %522 : vector<16x1xf32> to vector<16x16xf32>
    %524 = arith.subf %520, %523 : vector<16x16xf32>
    %525 = math.exp %524 : vector<16x16xf32>
    %cst_164 = arith.constant dense<0.000000e+00> : vector<16xf32>
    %526 = vector.multi_reduction <add>, %525, %cst_164 [1] : vector<16x16xf32> to vector<16xf32>
    %527 = vector.shape_cast %526 : vector<16xf32> to vector<16x1xf32>
    %528 = tpu.reciprocal %527 {approx = true} : vector<16x1xf32> -> vector<16x1xf32>
    %529 = vector.broadcast %528 : vector<16x1xf32> to vector<16x16xf32>
    %530 = arith.mulf %525, %529 : vector<16x16xf32>
    %531 = arith.truncf %530 : vector<16x16xf32> to vector<16x16xbf16>
    %532 = vector.extract_strided_slice %429 {offsets = [0, 80], sizes = [16, 16], strides = [1, 1]} : vector<16x128xbf16> to vector<16x16xbf16>
    %cst_165 = arith.constant dense<0.000000e+00> : vector<16x16xf32>
    %533 = tpu.matmul %531, %532, %cst_165 {dimension_numbers = #tpu.dot_dimension_numbers<[1], [0], [0], [1], [0, 0, 1, 1], [], []>} : vector<16x16xbf16>, vector<16x16xbf16>, vector<16x16xf32> -> vector<16x16xf32>
    %534 = vector.extract_strided_slice %428 {offsets = [0, 96], sizes = [16, 16], strides = [1, 1]} : vector<16x128xbf16> to vector<16x16xbf16>
    %535 = vector.extract_strided_slice %431 {offsets = [96, 0], sizes = [16, 16], strides = [1, 1]} : vector<128x16xbf16> to vector<16x16xbf16>
    %cst_166 = arith.constant dense<0.000000e+00> : vector<16x16xf32>
    %536 = tpu.matmul %534, %535, %cst_166 {dimension_numbers = #tpu.dot_dimension_numbers<[1], [0], [0], [1], [0, 0, 1, 1], [], []>} : vector<16x16xbf16>, vector<16x16xbf16>, vector<16x16xf32> -> vector<16x16xf32>
    %537 = arith.addf %536, %6 : vector<16x16xf32>
    %cst_167 = arith.constant dense<0xFF800000> : vector<16xf32>
    %538 = vector.multi_reduction <maximumf>, %537, %cst_167 [1] : vector<16x16xf32> to vector<16xf32>
    %539 = vector.shape_cast %538 : vector<16xf32> to vector<16x1xf32>
    %540 = vector.broadcast %539 : vector<16x1xf32> to vector<16x16xf32>
    %541 = arith.subf %537, %540 : vector<16x16xf32>
    %542 = math.exp %541 : vector<16x16xf32>
    %cst_168 = arith.constant dense<0.000000e+00> : vector<16xf32>
    %543 = vector.multi_reduction <add>, %542, %cst_168 [1] : vector<16x16xf32> to vector<16xf32>
    %544 = vector.shape_cast %543 : vector<16xf32> to vector<16x1xf32>
    %545 = tpu.reciprocal %544 {approx = true} : vector<16x1xf32> -> vector<16x1xf32>
    %546 = vector.broadcast %545 : vector<16x1xf32> to vector<16x16xf32>
    %547 = arith.mulf %542, %546 : vector<16x16xf32>
    %548 = arith.truncf %547 : vector<16x16xf32> to vector<16x16xbf16>
    %549 = vector.extract_strided_slice %429 {offsets = [0, 96], sizes = [16, 16], strides = [1, 1]} : vector<16x128xbf16> to vector<16x16xbf16>
    %cst_169 = arith.constant dense<0.000000e+00> : vector<16x16xf32>
    %550 = tpu.matmul %548, %549, %cst_169 {dimension_numbers = #tpu.dot_dimension_numbers<[1], [0], [0], [1], [0, 0, 1, 1], [], []>} : vector<16x16xbf16>, vector<16x16xbf16>, vector<16x16xf32> -> vector<16x16xf32>
    %551 = vector.extract_strided_slice %428 {offsets = [0, 112], sizes = [16, 16], strides = [1, 1]} : vector<16x128xbf16> to vector<16x16xbf16>
    %552 = vector.extract_strided_slice %431 {offsets = [112, 0], sizes = [16, 16], strides = [1, 1]} : vector<128x16xbf16> to vector<16x16xbf16>
    %cst_170 = arith.constant dense<0.000000e+00> : vector<16x16xf32>
    %553 = tpu.matmul %551, %552, %cst_170 {dimension_numbers = #tpu.dot_dimension_numbers<[1], [0], [0], [1], [0, 0, 1, 1], [], []>} : vector<16x16xbf16>, vector<16x16xbf16>, vector<16x16xf32> -> vector<16x16xf32>
    %554 = arith.addf %553, %6 : vector<16x16xf32>
    %cst_171 = arith.constant dense<0xFF800000> : vector<16xf32>
    %555 = vector.multi_reduction <maximumf>, %554, %cst_171 [1] : vector<16x16xf32> to vector<16xf32>
    %556 = vector.shape_cast %555 : vector<16xf32> to vector<16x1xf32>
    %557 = vector.broadcast %556 : vector<16x1xf32> to vector<16x16xf32>
    %558 = arith.subf %554, %557 : vector<16x16xf32>
    %559 = math.exp %558 : vector<16x16xf32>
    %cst_172 = arith.constant dense<0.000000e+00> : vector<16xf32>
    %560 = vector.multi_reduction <add>, %559, %cst_172 [1] : vector<16x16xf32> to vector<16xf32>
    %561 = vector.shape_cast %560 : vector<16xf32> to vector<16x1xf32>
    %562 = tpu.reciprocal %561 {approx = true} : vector<16x1xf32> -> vector<16x1xf32>
    %563 = vector.broadcast %562 : vector<16x1xf32> to vector<16x16xf32>
    %564 = arith.mulf %559, %563 : vector<16x16xf32>
    %565 = arith.truncf %564 : vector<16x16xf32> to vector<16x16xbf16>
    %566 = vector.extract_strided_slice %429 {offsets = [0, 112], sizes = [16, 16], strides = [1, 1]} : vector<16x128xbf16> to vector<16x16xbf16>
    %cst_173 = arith.constant dense<0.000000e+00> : vector<16x16xf32>
    %567 = tpu.matmul %565, %566, %cst_173 {dimension_numbers = #tpu.dot_dimension_numbers<[1], [0], [0], [1], [0, 0, 1, 1], [], []>} : vector<16x16xbf16>, vector<16x16xbf16>, vector<16x16xf32> -> vector<16x16xf32>
    %568 = tpu.concatenate %448, %465, %482, %499, %516, %533, %550, %567 in 1 : vector<16x16xf32>, vector<16x16xf32>, vector<16x16xf32>, vector<16x16xf32>, vector<16x16xf32>, vector<16x16xf32>, vector<16x16xf32>, vector<16x16xf32> -> vector<16x128xf32>
    %569 = arith.truncf %568 : vector<16x128xf32> to vector<16x128xbf16>
    %cst_174 = arith.constant dense<0.000000e+00> : vector<16x128xf32>
    %570 = tpu.matmul %569, %426, %cst_174 {dimension_numbers = #tpu.dot_dimension_numbers<[1], [0], [0], [1], [0, 0, 1, 1], [], []>} : vector<16x128xbf16>, vector<128x128xbf16>, vector<16x128xf32> -> vector<16x128xf32>
    %571 = vector.broadcast %427 : vector<1x128xf32> to vector<16x128xf32>
    %572 = arith.addf %570, %571 : vector<16x128xf32>
    %573 = arith.addf %414, %572 : vector<16x128xf32>
    %c1_175 = arith.constant 1 : index
    %c1408_176 = arith.constant 1408 : index
    %574 = vector.load %arg7[%c1_175, %c1408_176] : memref<3x2176xf32, #tpu.memory_space<vmem>>, vector<1x128xf32>
    %c1_177 = arith.constant 1 : index
    %c1536_178 = arith.constant 1536 : index
    %575 = vector.load %arg7[%c1_177, %c1536_178] : memref<3x2176xf32, #tpu.memory_space<vmem>>, vector<1x128xf32>
    %cst_179 = arith.constant dense<0.000000e+00> : vector<16xf32>
    %576 = vector.multi_reduction <add>, %573, %cst_179 [1] : vector<16x128xf32> to vector<16xf32>
    %577 = vector.shape_cast %576 : vector<16xf32> to vector<16x1xf32>
    %cst_180 = arith.constant 1.280000e+02 : f32
    %578 = vector.broadcast %cst_180 : f32 to vector<16x1xf32>
    %579 = arith.divf %577, %578 : vector<16x1xf32>
    %580 = vector.broadcast %579 : vector<16x1xf32> to vector<16x128xf32>
    %581 = arith.subf %573, %580 : vector<16x128xf32>
    %582 = arith.mulf %581, %581 : vector<16x128xf32>
    %cst_181 = arith.constant dense<0.000000e+00> : vector<16xf32>
    %583 = vector.multi_reduction <add>, %582, %cst_181 [1] : vector<16x128xf32> to vector<16xf32>
    %584 = vector.shape_cast %583 : vector<16xf32> to vector<16x1xf32>
    %cst_182 = arith.constant 1.280000e+02 : f32
    %585 = vector.broadcast %cst_182 : f32 to vector<16x1xf32>
    %586 = arith.divf %584, %585 : vector<16x1xf32>
    %cst_183 = arith.constant 9.99999974E-6 : f32
    %587 = vector.broadcast %cst_183 : f32 to vector<16x1xf32>
    %588 = arith.addf %586, %587 : vector<16x1xf32>
    %589 = math.rsqrt %588 : vector<16x1xf32>
    %590 = vector.broadcast %589 : vector<16x1xf32> to vector<16x128xf32>
    %591 = arith.mulf %581, %590 : vector<16x128xf32>
    %592 = vector.broadcast %574 : vector<1x128xf32> to vector<16x128xf32>
    %593 = arith.mulf %591, %592 : vector<16x128xf32>
    %594 = vector.broadcast %575 : vector<1x128xf32> to vector<16x128xf32>
    %595 = arith.addf %593, %594 : vector<16x128xf32>
    %c1_184 = arith.constant 1 : index
    %c0_185 = arith.constant 0 : index
    %c512_186 = arith.constant 512 : index
    %596 = vector.load %arg5[%c1_184, %c0_185, %c512_186] : memref<3x128x1280xbf16, #tpu.memory_space<vmem>>, vector<1x128x128xbf16>
    %597 = vector.shape_cast %596 : vector<1x128x128xbf16> to vector<128x128xbf16>
    %598 = arith.truncf %595 : vector<16x128xf32> to vector<16x128xbf16>
    %cst_187 = arith.constant dense<0.000000e+00> : vector<16x128xf32>
    %599 = tpu.matmul %598, %597, %cst_187 {dimension_numbers = #tpu.dot_dimension_numbers<[1], [0], [0], [1], [0, 0, 1, 1], [], []>} : vector<16x128xbf16>, vector<128x128xbf16>, vector<16x128xf32> -> vector<16x128xf32>
    %c1_188 = arith.constant 1 : index
    %c512_189 = arith.constant 512 : index
    %600 = vector.load %arg7[%c1_188, %c512_189] : memref<3x2176xf32, #tpu.memory_space<vmem>>, vector<1x128xf32>
    %601 = vector.broadcast %600 : vector<1x128xf32> to vector<16x128xf32>
    %602 = arith.addf %599, %601 : vector<16x128xf32>
    %c1_190 = arith.constant 1 : index
    %c0_191 = arith.constant 0 : index
    %c640_192 = arith.constant 640 : index
    %603 = vector.load %arg5[%c1_190, %c0_191, %c640_192] : memref<3x128x1280xbf16, #tpu.memory_space<vmem>>, vector<1x128x256xbf16>
    %604 = vector.shape_cast %603 : vector<1x128x256xbf16> to vector<128x256xbf16>
    %605 = arith.truncf %5 : vector<32x128xf32> to vector<32x128xbf16>
    %cst_193 = arith.constant dense<0.000000e+00> : vector<32x256xf32>
    %606 = tpu.matmul %605, %604, %cst_193 {dimension_numbers = #tpu.dot_dimension_numbers<[1], [0], [0], [1], [0, 0, 1, 1], [], []>} : vector<32x128xbf16>, vector<128x256xbf16>, vector<32x256xf32> -> vector<32x256xf32>
    %c1_194 = arith.constant 1 : index
    %c640_195 = arith.constant 640 : index
    %607 = vector.load %arg7[%c1_194, %c640_195] : memref<3x2176xf32, #tpu.memory_space<vmem>>, vector<1x256xf32>
    %608 = vector.broadcast %607 : vector<1x256xf32> to vector<32x256xf32>
    %609 = arith.addf %606, %608 : vector<32x256xf32>
    %610 = vector.extract_strided_slice %609 {offsets = [0, 0], sizes = [32, 128], strides = [1, 1]} : vector<32x256xf32> to vector<32x128xf32>
    %611 = vector.extract_strided_slice %609 {offsets = [0, 128], sizes = [32, 128], strides = [1, 1]} : vector<32x256xf32> to vector<32x128xf32>
    %c1_196 = arith.constant 1 : index
    %c0_197 = arith.constant 0 : index
    %c896_198 = arith.constant 896 : index
    %612 = vector.load %arg5[%c1_196, %c0_197, %c896_198] : memref<3x128x1280xbf16, #tpu.memory_space<vmem>>, vector<1x128x128xbf16>
    %613 = vector.shape_cast %612 : vector<1x128x128xbf16> to vector<128x128xbf16>
    %c1_199 = arith.constant 1 : index
    %c896_200 = arith.constant 896 : index
    %614 = vector.load %arg7[%c1_199, %c896_200] : memref<3x2176xf32, #tpu.memory_space<vmem>>, vector<1x128xf32>
    %615 = arith.truncf %602 : vector<16x128xf32> to vector<16x128xbf16>
    %616 = arith.truncf %611 : vector<32x128xf32> to vector<32x128xbf16>
    %617 = tpu.transpose %610, [1, 0] : vector<32x128xf32> -> vector<128x32xf32>
    %618 = arith.truncf %617 : vector<128x32xf32> to vector<128x32xbf16>
    %619 = vector.extract_strided_slice %615 {offsets = [0, 0], sizes = [16, 16], strides = [1, 1]} : vector<16x128xbf16> to vector<16x16xbf16>
    %620 = vector.extract_strided_slice %618 {offsets = [0, 0], sizes = [16, 32], strides = [1, 1]} : vector<128x32xbf16> to vector<16x32xbf16>
    %cst_201 = arith.constant dense<0.000000e+00> : vector<16x32xf32>
    %621 = tpu.matmul %619, %620, %cst_201 {dimension_numbers = #tpu.dot_dimension_numbers<[1], [0], [0], [1], [0, 0, 1, 1], [], []>} : vector<16x16xbf16>, vector<16x32xbf16>, vector<16x32xf32> -> vector<16x32xf32>
    %622 = arith.addf %621, %7 : vector<16x32xf32>
    %cst_202 = arith.constant dense<0xFF800000> : vector<16xf32>
    %623 = vector.multi_reduction <maximumf>, %622, %cst_202 [1] : vector<16x32xf32> to vector<16xf32>
    %624 = vector.shape_cast %623 : vector<16xf32> to vector<16x1xf32>
    %625 = vector.broadcast %624 : vector<16x1xf32> to vector<16x32xf32>
    %626 = arith.subf %622, %625 : vector<16x32xf32>
    %627 = math.exp %626 : vector<16x32xf32>
    %cst_203 = arith.constant dense<0.000000e+00> : vector<16xf32>
    %628 = vector.multi_reduction <add>, %627, %cst_203 [1] : vector<16x32xf32> to vector<16xf32>
    %629 = vector.shape_cast %628 : vector<16xf32> to vector<16x1xf32>
    %630 = tpu.reciprocal %629 {approx = true} : vector<16x1xf32> -> vector<16x1xf32>
    %631 = vector.broadcast %630 : vector<16x1xf32> to vector<16x32xf32>
    %632 = arith.mulf %627, %631 : vector<16x32xf32>
    %633 = arith.truncf %632 : vector<16x32xf32> to vector<16x32xbf16>
    %634 = vector.extract_strided_slice %616 {offsets = [0, 0], sizes = [32, 16], strides = [1, 1]} : vector<32x128xbf16> to vector<32x16xbf16>
    %cst_204 = arith.constant dense<0.000000e+00> : vector<16x16xf32>
    %635 = tpu.matmul %633, %634, %cst_204 {dimension_numbers = #tpu.dot_dimension_numbers<[1], [0], [0], [1], [0, 0, 1, 1], [], []>} : vector<16x32xbf16>, vector<32x16xbf16>, vector<16x16xf32> -> vector<16x16xf32>
    %636 = vector.extract_strided_slice %615 {offsets = [0, 16], sizes = [16, 16], strides = [1, 1]} : vector<16x128xbf16> to vector<16x16xbf16>
    %637 = vector.extract_strided_slice %618 {offsets = [16, 0], sizes = [16, 32], strides = [1, 1]} : vector<128x32xbf16> to vector<16x32xbf16>
    %cst_205 = arith.constant dense<0.000000e+00> : vector<16x32xf32>
    %638 = tpu.matmul %636, %637, %cst_205 {dimension_numbers = #tpu.dot_dimension_numbers<[1], [0], [0], [1], [0, 0, 1, 1], [], []>} : vector<16x16xbf16>, vector<16x32xbf16>, vector<16x32xf32> -> vector<16x32xf32>
    %639 = arith.addf %638, %7 : vector<16x32xf32>
    %cst_206 = arith.constant dense<0xFF800000> : vector<16xf32>
    %640 = vector.multi_reduction <maximumf>, %639, %cst_206 [1] : vector<16x32xf32> to vector<16xf32>
    %641 = vector.shape_cast %640 : vector<16xf32> to vector<16x1xf32>
    %642 = vector.broadcast %641 : vector<16x1xf32> to vector<16x32xf32>
    %643 = arith.subf %639, %642 : vector<16x32xf32>
    %644 = math.exp %643 : vector<16x32xf32>
    %cst_207 = arith.constant dense<0.000000e+00> : vector<16xf32>
    %645 = vector.multi_reduction <add>, %644, %cst_207 [1] : vector<16x32xf32> to vector<16xf32>
    %646 = vector.shape_cast %645 : vector<16xf32> to vector<16x1xf32>
    %647 = tpu.reciprocal %646 {approx = true} : vector<16x1xf32> -> vector<16x1xf32>
    %648 = vector.broadcast %647 : vector<16x1xf32> to vector<16x32xf32>
    %649 = arith.mulf %644, %648 : vector<16x32xf32>
    %650 = arith.truncf %649 : vector<16x32xf32> to vector<16x32xbf16>
    %651 = vector.extract_strided_slice %616 {offsets = [0, 16], sizes = [32, 16], strides = [1, 1]} : vector<32x128xbf16> to vector<32x16xbf16>
    %cst_208 = arith.constant dense<0.000000e+00> : vector<16x16xf32>
    %652 = tpu.matmul %650, %651, %cst_208 {dimension_numbers = #tpu.dot_dimension_numbers<[1], [0], [0], [1], [0, 0, 1, 1], [], []>} : vector<16x32xbf16>, vector<32x16xbf16>, vector<16x16xf32> -> vector<16x16xf32>
    %653 = vector.extract_strided_slice %615 {offsets = [0, 32], sizes = [16, 16], strides = [1, 1]} : vector<16x128xbf16> to vector<16x16xbf16>
    %654 = vector.extract_strided_slice %618 {offsets = [32, 0], sizes = [16, 32], strides = [1, 1]} : vector<128x32xbf16> to vector<16x32xbf16>
    %cst_209 = arith.constant dense<0.000000e+00> : vector<16x32xf32>
    %655 = tpu.matmul %653, %654, %cst_209 {dimension_numbers = #tpu.dot_dimension_numbers<[1], [0], [0], [1], [0, 0, 1, 1], [], []>} : vector<16x16xbf16>, vector<16x32xbf16>, vector<16x32xf32> -> vector<16x32xf32>
    %656 = arith.addf %655, %7 : vector<16x32xf32>
    %cst_210 = arith.constant dense<0xFF800000> : vector<16xf32>
    %657 = vector.multi_reduction <maximumf>, %656, %cst_210 [1] : vector<16x32xf32> to vector<16xf32>
    %658 = vector.shape_cast %657 : vector<16xf32> to vector<16x1xf32>
    %659 = vector.broadcast %658 : vector<16x1xf32> to vector<16x32xf32>
    %660 = arith.subf %656, %659 : vector<16x32xf32>
    %661 = math.exp %660 : vector<16x32xf32>
    %cst_211 = arith.constant dense<0.000000e+00> : vector<16xf32>
    %662 = vector.multi_reduction <add>, %661, %cst_211 [1] : vector<16x32xf32> to vector<16xf32>
    %663 = vector.shape_cast %662 : vector<16xf32> to vector<16x1xf32>
    %664 = tpu.reciprocal %663 {approx = true} : vector<16x1xf32> -> vector<16x1xf32>
    %665 = vector.broadcast %664 : vector<16x1xf32> to vector<16x32xf32>
    %666 = arith.mulf %661, %665 : vector<16x32xf32>
    %667 = arith.truncf %666 : vector<16x32xf32> to vector<16x32xbf16>
    %668 = vector.extract_strided_slice %616 {offsets = [0, 32], sizes = [32, 16], strides = [1, 1]} : vector<32x128xbf16> to vector<32x16xbf16>
    %cst_212 = arith.constant dense<0.000000e+00> : vector<16x16xf32>
    %669 = tpu.matmul %667, %668, %cst_212 {dimension_numbers = #tpu.dot_dimension_numbers<[1], [0], [0], [1], [0, 0, 1, 1], [], []>} : vector<16x32xbf16>, vector<32x16xbf16>, vector<16x16xf32> -> vector<16x16xf32>
    %670 = vector.extract_strided_slice %615 {offsets = [0, 48], sizes = [16, 16], strides = [1, 1]} : vector<16x128xbf16> to vector<16x16xbf16>
    %671 = vector.extract_strided_slice %618 {offsets = [48, 0], sizes = [16, 32], strides = [1, 1]} : vector<128x32xbf16> to vector<16x32xbf16>
    %cst_213 = arith.constant dense<0.000000e+00> : vector<16x32xf32>
    %672 = tpu.matmul %670, %671, %cst_213 {dimension_numbers = #tpu.dot_dimension_numbers<[1], [0], [0], [1], [0, 0, 1, 1], [], []>} : vector<16x16xbf16>, vector<16x32xbf16>, vector<16x32xf32> -> vector<16x32xf32>
    %673 = arith.addf %672, %7 : vector<16x32xf32>
    %cst_214 = arith.constant dense<0xFF800000> : vector<16xf32>
    %674 = vector.multi_reduction <maximumf>, %673, %cst_214 [1] : vector<16x32xf32> to vector<16xf32>
    %675 = vector.shape_cast %674 : vector<16xf32> to vector<16x1xf32>
    %676 = vector.broadcast %675 : vector<16x1xf32> to vector<16x32xf32>
    %677 = arith.subf %673, %676 : vector<16x32xf32>
    %678 = math.exp %677 : vector<16x32xf32>
    %cst_215 = arith.constant dense<0.000000e+00> : vector<16xf32>
    %679 = vector.multi_reduction <add>, %678, %cst_215 [1] : vector<16x32xf32> to vector<16xf32>
    %680 = vector.shape_cast %679 : vector<16xf32> to vector<16x1xf32>
    %681 = tpu.reciprocal %680 {approx = true} : vector<16x1xf32> -> vector<16x1xf32>
    %682 = vector.broadcast %681 : vector<16x1xf32> to vector<16x32xf32>
    %683 = arith.mulf %678, %682 : vector<16x32xf32>
    %684 = arith.truncf %683 : vector<16x32xf32> to vector<16x32xbf16>
    %685 = vector.extract_strided_slice %616 {offsets = [0, 48], sizes = [32, 16], strides = [1, 1]} : vector<32x128xbf16> to vector<32x16xbf16>
    %cst_216 = arith.constant dense<0.000000e+00> : vector<16x16xf32>
    %686 = tpu.matmul %684, %685, %cst_216 {dimension_numbers = #tpu.dot_dimension_numbers<[1], [0], [0], [1], [0, 0, 1, 1], [], []>} : vector<16x32xbf16>, vector<32x16xbf16>, vector<16x16xf32> -> vector<16x16xf32>
    %687 = vector.extract_strided_slice %615 {offsets = [0, 64], sizes = [16, 16], strides = [1, 1]} : vector<16x128xbf16> to vector<16x16xbf16>
    %688 = vector.extract_strided_slice %618 {offsets = [64, 0], sizes = [16, 32], strides = [1, 1]} : vector<128x32xbf16> to vector<16x32xbf16>
    %cst_217 = arith.constant dense<0.000000e+00> : vector<16x32xf32>
    %689 = tpu.matmul %687, %688, %cst_217 {dimension_numbers = #tpu.dot_dimension_numbers<[1], [0], [0], [1], [0, 0, 1, 1], [], []>} : vector<16x16xbf16>, vector<16x32xbf16>, vector<16x32xf32> -> vector<16x32xf32>
    %690 = arith.addf %689, %7 : vector<16x32xf32>
    %cst_218 = arith.constant dense<0xFF800000> : vector<16xf32>
    %691 = vector.multi_reduction <maximumf>, %690, %cst_218 [1] : vector<16x32xf32> to vector<16xf32>
    %692 = vector.shape_cast %691 : vector<16xf32> to vector<16x1xf32>
    %693 = vector.broadcast %692 : vector<16x1xf32> to vector<16x32xf32>
    %694 = arith.subf %690, %693 : vector<16x32xf32>
    %695 = math.exp %694 : vector<16x32xf32>
    %cst_219 = arith.constant dense<0.000000e+00> : vector<16xf32>
    %696 = vector.multi_reduction <add>, %695, %cst_219 [1] : vector<16x32xf32> to vector<16xf32>
    %697 = vector.shape_cast %696 : vector<16xf32> to vector<16x1xf32>
    %698 = tpu.reciprocal %697 {approx = true} : vector<16x1xf32> -> vector<16x1xf32>
    %699 = vector.broadcast %698 : vector<16x1xf32> to vector<16x32xf32>
    %700 = arith.mulf %695, %699 : vector<16x32xf32>
    %701 = arith.truncf %700 : vector<16x32xf32> to vector<16x32xbf16>
    %702 = vector.extract_strided_slice %616 {offsets = [0, 64], sizes = [32, 16], strides = [1, 1]} : vector<32x128xbf16> to vector<32x16xbf16>
    %cst_220 = arith.constant dense<0.000000e+00> : vector<16x16xf32>
    %703 = tpu.matmul %701, %702, %cst_220 {dimension_numbers = #tpu.dot_dimension_numbers<[1], [0], [0], [1], [0, 0, 1, 1], [], []>} : vector<16x32xbf16>, vector<32x16xbf16>, vector<16x16xf32> -> vector<16x16xf32>
    %704 = vector.extract_strided_slice %615 {offsets = [0, 80], sizes = [16, 16], strides = [1, 1]} : vector<16x128xbf16> to vector<16x16xbf16>
    %705 = vector.extract_strided_slice %618 {offsets = [80, 0], sizes = [16, 32], strides = [1, 1]} : vector<128x32xbf16> to vector<16x32xbf16>
    %cst_221 = arith.constant dense<0.000000e+00> : vector<16x32xf32>
    %706 = tpu.matmul %704, %705, %cst_221 {dimension_numbers = #tpu.dot_dimension_numbers<[1], [0], [0], [1], [0, 0, 1, 1], [], []>} : vector<16x16xbf16>, vector<16x32xbf16>, vector<16x32xf32> -> vector<16x32xf32>
    %707 = arith.addf %706, %7 : vector<16x32xf32>
    %cst_222 = arith.constant dense<0xFF800000> : vector<16xf32>
    %708 = vector.multi_reduction <maximumf>, %707, %cst_222 [1] : vector<16x32xf32> to vector<16xf32>
    %709 = vector.shape_cast %708 : vector<16xf32> to vector<16x1xf32>
    %710 = vector.broadcast %709 : vector<16x1xf32> to vector<16x32xf32>
    %711 = arith.subf %707, %710 : vector<16x32xf32>
    %712 = math.exp %711 : vector<16x32xf32>
    %cst_223 = arith.constant dense<0.000000e+00> : vector<16xf32>
    %713 = vector.multi_reduction <add>, %712, %cst_223 [1] : vector<16x32xf32> to vector<16xf32>
    %714 = vector.shape_cast %713 : vector<16xf32> to vector<16x1xf32>
    %715 = tpu.reciprocal %714 {approx = true} : vector<16x1xf32> -> vector<16x1xf32>
    %716 = vector.broadcast %715 : vector<16x1xf32> to vector<16x32xf32>
    %717 = arith.mulf %712, %716 : vector<16x32xf32>
    %718 = arith.truncf %717 : vector<16x32xf32> to vector<16x32xbf16>
    %719 = vector.extract_strided_slice %616 {offsets = [0, 80], sizes = [32, 16], strides = [1, 1]} : vector<32x128xbf16> to vector<32x16xbf16>
    %cst_224 = arith.constant dense<0.000000e+00> : vector<16x16xf32>
    %720 = tpu.matmul %718, %719, %cst_224 {dimension_numbers = #tpu.dot_dimension_numbers<[1], [0], [0], [1], [0, 0, 1, 1], [], []>} : vector<16x32xbf16>, vector<32x16xbf16>, vector<16x16xf32> -> vector<16x16xf32>
    %721 = vector.extract_strided_slice %615 {offsets = [0, 96], sizes = [16, 16], strides = [1, 1]} : vector<16x128xbf16> to vector<16x16xbf16>
    %722 = vector.extract_strided_slice %618 {offsets = [96, 0], sizes = [16, 32], strides = [1, 1]} : vector<128x32xbf16> to vector<16x32xbf16>
    %cst_225 = arith.constant dense<0.000000e+00> : vector<16x32xf32>
    %723 = tpu.matmul %721, %722, %cst_225 {dimension_numbers = #tpu.dot_dimension_numbers<[1], [0], [0], [1], [0, 0, 1, 1], [], []>} : vector<16x16xbf16>, vector<16x32xbf16>, vector<16x32xf32> -> vector<16x32xf32>
    %724 = arith.addf %723, %7 : vector<16x32xf32>
    %cst_226 = arith.constant dense<0xFF800000> : vector<16xf32>
    %725 = vector.multi_reduction <maximumf>, %724, %cst_226 [1] : vector<16x32xf32> to vector<16xf32>
    %726 = vector.shape_cast %725 : vector<16xf32> to vector<16x1xf32>
    %727 = vector.broadcast %726 : vector<16x1xf32> to vector<16x32xf32>
    %728 = arith.subf %724, %727 : vector<16x32xf32>
    %729 = math.exp %728 : vector<16x32xf32>
    %cst_227 = arith.constant dense<0.000000e+00> : vector<16xf32>
    %730 = vector.multi_reduction <add>, %729, %cst_227 [1] : vector<16x32xf32> to vector<16xf32>
    %731 = vector.shape_cast %730 : vector<16xf32> to vector<16x1xf32>
    %732 = tpu.reciprocal %731 {approx = true} : vector<16x1xf32> -> vector<16x1xf32>
    %733 = vector.broadcast %732 : vector<16x1xf32> to vector<16x32xf32>
    %734 = arith.mulf %729, %733 : vector<16x32xf32>
    %735 = arith.truncf %734 : vector<16x32xf32> to vector<16x32xbf16>
    %736 = vector.extract_strided_slice %616 {offsets = [0, 96], sizes = [32, 16], strides = [1, 1]} : vector<32x128xbf16> to vector<32x16xbf16>
    %cst_228 = arith.constant dense<0.000000e+00> : vector<16x16xf32>
    %737 = tpu.matmul %735, %736, %cst_228 {dimension_numbers = #tpu.dot_dimension_numbers<[1], [0], [0], [1], [0, 0, 1, 1], [], []>} : vector<16x32xbf16>, vector<32x16xbf16>, vector<16x16xf32> -> vector<16x16xf32>
    %738 = vector.extract_strided_slice %615 {offsets = [0, 112], sizes = [16, 16], strides = [1, 1]} : vector<16x128xbf16> to vector<16x16xbf16>
    %739 = vector.extract_strided_slice %618 {offsets = [112, 0], sizes = [16, 32], strides = [1, 1]} : vector<128x32xbf16> to vector<16x32xbf16>
    %cst_229 = arith.constant dense<0.000000e+00> : vector<16x32xf32>
    %740 = tpu.matmul %738, %739, %cst_229 {dimension_numbers = #tpu.dot_dimension_numbers<[1], [0], [0], [1], [0, 0, 1, 1], [], []>} : vector<16x16xbf16>, vector<16x32xbf16>, vector<16x32xf32> -> vector<16x32xf32>
    %741 = arith.addf %740, %7 : vector<16x32xf32>
    %cst_230 = arith.constant dense<0xFF800000> : vector<16xf32>
    %742 = vector.multi_reduction <maximumf>, %741, %cst_230 [1] : vector<16x32xf32> to vector<16xf32>
    %743 = vector.shape_cast %742 : vector<16xf32> to vector<16x1xf32>
    %744 = vector.broadcast %743 : vector<16x1xf32> to vector<16x32xf32>
    %745 = arith.subf %741, %744 : vector<16x32xf32>
    %746 = math.exp %745 : vector<16x32xf32>
    %cst_231 = arith.constant dense<0.000000e+00> : vector<16xf32>
    %747 = vector.multi_reduction <add>, %746, %cst_231 [1] : vector<16x32xf32> to vector<16xf32>
    %748 = vector.shape_cast %747 : vector<16xf32> to vector<16x1xf32>
    %749 = tpu.reciprocal %748 {approx = true} : vector<16x1xf32> -> vector<16x1xf32>
    %750 = vector.broadcast %749 : vector<16x1xf32> to vector<16x32xf32>
    %751 = arith.mulf %746, %750 : vector<16x32xf32>
    %752 = arith.truncf %751 : vector<16x32xf32> to vector<16x32xbf16>
    %753 = vector.extract_strided_slice %616 {offsets = [0, 112], sizes = [32, 16], strides = [1, 1]} : vector<32x128xbf16> to vector<32x16xbf16>
    %cst_232 = arith.constant dense<0.000000e+00> : vector<16x16xf32>
    %754 = tpu.matmul %752, %753, %cst_232 {dimension_numbers = #tpu.dot_dimension_numbers<[1], [0], [0], [1], [0, 0, 1, 1], [], []>} : vector<16x32xbf16>, vector<32x16xbf16>, vector<16x16xf32> -> vector<16x16xf32>
    %755 = tpu.concatenate %635, %652, %669, %686, %703, %720, %737, %754 in 1 : vector<16x16xf32>, vector<16x16xf32>, vector<16x16xf32>, vector<16x16xf32>, vector<16x16xf32>, vector<16x16xf32>, vector<16x16xf32>, vector<16x16xf32> -> vector<16x128xf32>
    %756 = arith.truncf %755 : vector<16x128xf32> to vector<16x128xbf16>
    %cst_233 = arith.constant dense<0.000000e+00> : vector<16x128xf32>
    %757 = tpu.matmul %756, %613, %cst_233 {dimension_numbers = #tpu.dot_dimension_numbers<[1], [0], [0], [1], [0, 0, 1, 1], [], []>} : vector<16x128xbf16>, vector<128x128xbf16>, vector<16x128xf32> -> vector<16x128xf32>
    %758 = vector.broadcast %614 : vector<1x128xf32> to vector<16x128xf32>
    %759 = arith.addf %757, %758 : vector<16x128xf32>
    %760 = arith.addf %595, %759 : vector<16x128xf32>
    %c1_234 = arith.constant 1 : index
    %c1664_235 = arith.constant 1664 : index
    %761 = vector.load %arg7[%c1_234, %c1664_235] : memref<3x2176xf32, #tpu.memory_space<vmem>>, vector<1x128xf32>
    %c1_236 = arith.constant 1 : index
    %c1792_237 = arith.constant 1792 : index
    %762 = vector.load %arg7[%c1_236, %c1792_237] : memref<3x2176xf32, #tpu.memory_space<vmem>>, vector<1x128xf32>
    %cst_238 = arith.constant dense<0.000000e+00> : vector<16xf32>
    %763 = vector.multi_reduction <add>, %760, %cst_238 [1] : vector<16x128xf32> to vector<16xf32>
    %764 = vector.shape_cast %763 : vector<16xf32> to vector<16x1xf32>
    %cst_239 = arith.constant 1.280000e+02 : f32
    %765 = vector.broadcast %cst_239 : f32 to vector<16x1xf32>
    %766 = arith.divf %764, %765 : vector<16x1xf32>
    %767 = vector.broadcast %766 : vector<16x1xf32> to vector<16x128xf32>
    %768 = arith.subf %760, %767 : vector<16x128xf32>
    %769 = arith.mulf %768, %768 : vector<16x128xf32>
    %cst_240 = arith.constant dense<0.000000e+00> : vector<16xf32>
    %770 = vector.multi_reduction <add>, %769, %cst_240 [1] : vector<16x128xf32> to vector<16xf32>
    %771 = vector.shape_cast %770 : vector<16xf32> to vector<16x1xf32>
    %cst_241 = arith.constant 1.280000e+02 : f32
    %772 = vector.broadcast %cst_241 : f32 to vector<16x1xf32>
    %773 = arith.divf %771, %772 : vector<16x1xf32>
    %cst_242 = arith.constant 9.99999974E-6 : f32
    %774 = vector.broadcast %cst_242 : f32 to vector<16x1xf32>
    %775 = arith.addf %773, %774 : vector<16x1xf32>
    %776 = math.rsqrt %775 : vector<16x1xf32>
    %777 = vector.broadcast %776 : vector<16x1xf32> to vector<16x128xf32>
    %778 = arith.mulf %768, %777 : vector<16x128xf32>
    %779 = vector.broadcast %761 : vector<1x128xf32> to vector<16x128xf32>
    %780 = arith.mulf %778, %779 : vector<16x128xf32>
    %781 = vector.broadcast %762 : vector<1x128xf32> to vector<16x128xf32>
    %782 = arith.addf %780, %781 : vector<16x128xf32>
    %c1_243 = arith.constant 1 : index
    %c0_244 = arith.constant 0 : index
    %c1024_245 = arith.constant 1024 : index
    %783 = vector.load %arg5[%c1_243, %c0_244, %c1024_245] : memref<3x128x1280xbf16, #tpu.memory_space<vmem>>, vector<1x128x256xbf16>
    %784 = vector.shape_cast %783 : vector<1x128x256xbf16> to vector<128x256xbf16>
    %785 = arith.truncf %782 : vector<16x128xf32> to vector<16x128xbf16>
    %cst_246 = arith.constant dense<0.000000e+00> : vector<16x256xf32>
    %786 = tpu.matmul %785, %784, %cst_246 {dimension_numbers = #tpu.dot_dimension_numbers<[1], [0], [0], [1], [0, 0, 1, 1], [], []>} : vector<16x128xbf16>, vector<128x256xbf16>, vector<16x256xf32> -> vector<16x256xf32>
    %c1_247 = arith.constant 1 : index
    %c1024_248 = arith.constant 1024 : index
    %787 = vector.load %arg7[%c1_247, %c1024_248] : memref<3x2176xf32, #tpu.memory_space<vmem>>, vector<1x256xf32>
    %788 = vector.broadcast %787 : vector<1x256xf32> to vector<16x256xf32>
    %789 = arith.addf %786, %788 : vector<16x256xf32>
    %cst_249 = arith.constant 0.000000e+00 : f32
    %790 = vector.broadcast %cst_249 : f32 to vector<16x256xf32>
    %791 = arith.maximumf %789, %790 : vector<16x256xf32>
    %c1_250 = arith.constant 1 : index
    %c0_251 = arith.constant 0 : index
    %c0_252 = arith.constant 0 : index
    %792 = vector.load %arg6[%c1_250, %c0_251, %c0_252] : memref<3x256x128xbf16, #tpu.memory_space<vmem>>, vector<1x256x128xbf16>
    %793 = vector.shape_cast %792 : vector<1x256x128xbf16> to vector<256x128xbf16>
    %794 = arith.truncf %791 : vector<16x256xf32> to vector<16x256xbf16>
    %cst_253 = arith.constant dense<0.000000e+00> : vector<16x128xf32>
    %795 = tpu.matmul %794, %793, %cst_253 {dimension_numbers = #tpu.dot_dimension_numbers<[1], [0], [0], [1], [0, 0, 1, 1], [], []>} : vector<16x256xbf16>, vector<256x128xbf16>, vector<16x128xf32> -> vector<16x128xf32>
    %c1_254 = arith.constant 1 : index
    %c1280_255 = arith.constant 1280 : index
    %796 = vector.load %arg7[%c1_254, %c1280_255] : memref<3x2176xf32, #tpu.memory_space<vmem>>, vector<1x128xf32>
    %797 = vector.broadcast %796 : vector<1x128xf32> to vector<16x128xf32>
    %798 = arith.addf %795, %797 : vector<16x128xf32>
    %799 = arith.addf %782, %798 : vector<16x128xf32>
    %c1_256 = arith.constant 1 : index
    %c1920_257 = arith.constant 1920 : index
    %800 = vector.load %arg7[%c1_256, %c1920_257] : memref<3x2176xf32, #tpu.memory_space<vmem>>, vector<1x128xf32>
    %c1_258 = arith.constant 1 : index
    %c2048_259 = arith.constant 2048 : index
    %801 = vector.load %arg7[%c1_258, %c2048_259] : memref<3x2176xf32, #tpu.memory_space<vmem>>, vector<1x128xf32>
    %cst_260 = arith.constant dense<0.000000e+00> : vector<16xf32>
    %802 = vector.multi_reduction <add>, %799, %cst_260 [1] : vector<16x128xf32> to vector<16xf32>
    %803 = vector.shape_cast %802 : vector<16xf32> to vector<16x1xf32>
    %cst_261 = arith.constant 1.280000e+02 : f32
    %804 = vector.broadcast %cst_261 : f32 to vector<16x1xf32>
    %805 = arith.divf %803, %804 : vector<16x1xf32>
    %806 = vector.broadcast %805 : vector<16x1xf32> to vector<16x128xf32>
    %807 = arith.subf %799, %806 : vector<16x128xf32>
    %808 = arith.mulf %807, %807 : vector<16x128xf32>
    %cst_262 = arith.constant dense<0.000000e+00> : vector<16xf32>
    %809 = vector.multi_reduction <add>, %808, %cst_262 [1] : vector<16x128xf32> to vector<16xf32>
    %810 = vector.shape_cast %809 : vector<16xf32> to vector<16x1xf32>
    %cst_263 = arith.constant 1.280000e+02 : f32
    %811 = vector.broadcast %cst_263 : f32 to vector<16x1xf32>
    %812 = arith.divf %810, %811 : vector<16x1xf32>
    %cst_264 = arith.constant 9.99999974E-6 : f32
    %813 = vector.broadcast %cst_264 : f32 to vector<16x1xf32>
    %814 = arith.addf %812, %813 : vector<16x1xf32>
    %815 = math.rsqrt %814 : vector<16x1xf32>
    %816 = vector.broadcast %815 : vector<16x1xf32> to vector<16x128xf32>
    %817 = arith.mulf %807, %816 : vector<16x128xf32>
    %818 = vector.broadcast %800 : vector<1x128xf32> to vector<16x128xf32>
    %819 = arith.mulf %817, %818 : vector<16x128xf32>
    %820 = vector.broadcast %801 : vector<1x128xf32> to vector<16x128xf32>
    %821 = arith.addf %819, %820 : vector<16x128xf32>
    %c2 = arith.constant 2 : index
    %c0_265 = arith.constant 0 : index
    %c0_266 = arith.constant 0 : index
    %822 = vector.load %arg5[%c2, %c0_265, %c0_266] : memref<3x128x1280xbf16, #tpu.memory_space<vmem>>, vector<1x128x384xbf16>
    %823 = vector.shape_cast %822 : vector<1x128x384xbf16> to vector<128x384xbf16>
    %824 = arith.truncf %821 : vector<16x128xf32> to vector<16x128xbf16>
    %cst_267 = arith.constant dense<0.000000e+00> : vector<16x384xf32>
    %825 = tpu.matmul %824, %823, %cst_267 {dimension_numbers = #tpu.dot_dimension_numbers<[1], [0], [0], [1], [0, 0, 1, 1], [], []>} : vector<16x128xbf16>, vector<128x384xbf16>, vector<16x384xf32> -> vector<16x384xf32>
    %c2_268 = arith.constant 2 : index
    %c0_269 = arith.constant 0 : index
    %826 = vector.load %arg7[%c2_268, %c0_269] : memref<3x2176xf32, #tpu.memory_space<vmem>>, vector<1x384xf32>
    %827 = vector.broadcast %826 : vector<1x384xf32> to vector<16x384xf32>
    %828 = arith.addf %825, %827 : vector<16x384xf32>
    %829 = vector.extract_strided_slice %828 {offsets = [0, 0], sizes = [16, 128], strides = [1, 1]} : vector<16x384xf32> to vector<16x128xf32>
    %830 = vector.extract_strided_slice %828 {offsets = [0, 128], sizes = [16, 128], strides = [1, 1]} : vector<16x384xf32> to vector<16x128xf32>
    %831 = vector.extract_strided_slice %828 {offsets = [0, 256], sizes = [16, 128], strides = [1, 1]} : vector<16x384xf32> to vector<16x128xf32>
    %c2_270 = arith.constant 2 : index
    %c0_271 = arith.constant 0 : index
    %c384_272 = arith.constant 384 : index
    %832 = vector.load %arg5[%c2_270, %c0_271, %c384_272] : memref<3x128x1280xbf16, #tpu.memory_space<vmem>>, vector<1x128x128xbf16>
    %833 = vector.shape_cast %832 : vector<1x128x128xbf16> to vector<128x128xbf16>
    %c2_273 = arith.constant 2 : index
    %c384_274 = arith.constant 384 : index
    %834 = vector.load %arg7[%c2_273, %c384_274] : memref<3x2176xf32, #tpu.memory_space<vmem>>, vector<1x128xf32>
    %835 = arith.truncf %829 : vector<16x128xf32> to vector<16x128xbf16>
    %836 = arith.truncf %831 : vector<16x128xf32> to vector<16x128xbf16>
    %837 = tpu.transpose %830, [1, 0] : vector<16x128xf32> -> vector<128x16xf32>
    %838 = arith.truncf %837 : vector<128x16xf32> to vector<128x16xbf16>
    %839 = vector.extract_strided_slice %835 {offsets = [0, 0], sizes = [16, 16], strides = [1, 1]} : vector<16x128xbf16> to vector<16x16xbf16>
    %840 = vector.extract_strided_slice %838 {offsets = [0, 0], sizes = [16, 16], strides = [1, 1]} : vector<128x16xbf16> to vector<16x16xbf16>
    %cst_275 = arith.constant dense<0.000000e+00> : vector<16x16xf32>
    %841 = tpu.matmul %839, %840, %cst_275 {dimension_numbers = #tpu.dot_dimension_numbers<[1], [0], [0], [1], [0, 0, 1, 1], [], []>} : vector<16x16xbf16>, vector<16x16xbf16>, vector<16x16xf32> -> vector<16x16xf32>
    %842 = arith.addf %841, %6 : vector<16x16xf32>
    %cst_276 = arith.constant dense<0xFF800000> : vector<16xf32>
    %843 = vector.multi_reduction <maximumf>, %842, %cst_276 [1] : vector<16x16xf32> to vector<16xf32>
    %844 = vector.shape_cast %843 : vector<16xf32> to vector<16x1xf32>
    %845 = vector.broadcast %844 : vector<16x1xf32> to vector<16x16xf32>
    %846 = arith.subf %842, %845 : vector<16x16xf32>
    %847 = math.exp %846 : vector<16x16xf32>
    %cst_277 = arith.constant dense<0.000000e+00> : vector<16xf32>
    %848 = vector.multi_reduction <add>, %847, %cst_277 [1] : vector<16x16xf32> to vector<16xf32>
    %849 = vector.shape_cast %848 : vector<16xf32> to vector<16x1xf32>
    %850 = tpu.reciprocal %849 {approx = true} : vector<16x1xf32> -> vector<16x1xf32>
    %851 = vector.broadcast %850 : vector<16x1xf32> to vector<16x16xf32>
    %852 = arith.mulf %847, %851 : vector<16x16xf32>
    %853 = arith.truncf %852 : vector<16x16xf32> to vector<16x16xbf16>
    %854 = vector.extract_strided_slice %836 {offsets = [0, 0], sizes = [16, 16], strides = [1, 1]} : vector<16x128xbf16> to vector<16x16xbf16>
    %cst_278 = arith.constant dense<0.000000e+00> : vector<16x16xf32>
    %855 = tpu.matmul %853, %854, %cst_278 {dimension_numbers = #tpu.dot_dimension_numbers<[1], [0], [0], [1], [0, 0, 1, 1], [], []>} : vector<16x16xbf16>, vector<16x16xbf16>, vector<16x16xf32> -> vector<16x16xf32>
    %856 = vector.extract_strided_slice %835 {offsets = [0, 16], sizes = [16, 16], strides = [1, 1]} : vector<16x128xbf16> to vector<16x16xbf16>
    %857 = vector.extract_strided_slice %838 {offsets = [16, 0], sizes = [16, 16], strides = [1, 1]} : vector<128x16xbf16> to vector<16x16xbf16>
    %cst_279 = arith.constant dense<0.000000e+00> : vector<16x16xf32>
    %858 = tpu.matmul %856, %857, %cst_279 {dimension_numbers = #tpu.dot_dimension_numbers<[1], [0], [0], [1], [0, 0, 1, 1], [], []>} : vector<16x16xbf16>, vector<16x16xbf16>, vector<16x16xf32> -> vector<16x16xf32>
    %859 = arith.addf %858, %6 : vector<16x16xf32>
    %cst_280 = arith.constant dense<0xFF800000> : vector<16xf32>
    %860 = vector.multi_reduction <maximumf>, %859, %cst_280 [1] : vector<16x16xf32> to vector<16xf32>
    %861 = vector.shape_cast %860 : vector<16xf32> to vector<16x1xf32>
    %862 = vector.broadcast %861 : vector<16x1xf32> to vector<16x16xf32>
    %863 = arith.subf %859, %862 : vector<16x16xf32>
    %864 = math.exp %863 : vector<16x16xf32>
    %cst_281 = arith.constant dense<0.000000e+00> : vector<16xf32>
    %865 = vector.multi_reduction <add>, %864, %cst_281 [1] : vector<16x16xf32> to vector<16xf32>
    %866 = vector.shape_cast %865 : vector<16xf32> to vector<16x1xf32>
    %867 = tpu.reciprocal %866 {approx = true} : vector<16x1xf32> -> vector<16x1xf32>
    %868 = vector.broadcast %867 : vector<16x1xf32> to vector<16x16xf32>
    %869 = arith.mulf %864, %868 : vector<16x16xf32>
    %870 = arith.truncf %869 : vector<16x16xf32> to vector<16x16xbf16>
    %871 = vector.extract_strided_slice %836 {offsets = [0, 16], sizes = [16, 16], strides = [1, 1]} : vector<16x128xbf16> to vector<16x16xbf16>
    %cst_282 = arith.constant dense<0.000000e+00> : vector<16x16xf32>
    %872 = tpu.matmul %870, %871, %cst_282 {dimension_numbers = #tpu.dot_dimension_numbers<[1], [0], [0], [1], [0, 0, 1, 1], [], []>} : vector<16x16xbf16>, vector<16x16xbf16>, vector<16x16xf32> -> vector<16x16xf32>
    %873 = vector.extract_strided_slice %835 {offsets = [0, 32], sizes = [16, 16], strides = [1, 1]} : vector<16x128xbf16> to vector<16x16xbf16>
    %874 = vector.extract_strided_slice %838 {offsets = [32, 0], sizes = [16, 16], strides = [1, 1]} : vector<128x16xbf16> to vector<16x16xbf16>
    %cst_283 = arith.constant dense<0.000000e+00> : vector<16x16xf32>
    %875 = tpu.matmul %873, %874, %cst_283 {dimension_numbers = #tpu.dot_dimension_numbers<[1], [0], [0], [1], [0, 0, 1, 1], [], []>} : vector<16x16xbf16>, vector<16x16xbf16>, vector<16x16xf32> -> vector<16x16xf32>
    %876 = arith.addf %875, %6 : vector<16x16xf32>
    %cst_284 = arith.constant dense<0xFF800000> : vector<16xf32>
    %877 = vector.multi_reduction <maximumf>, %876, %cst_284 [1] : vector<16x16xf32> to vector<16xf32>
    %878 = vector.shape_cast %877 : vector<16xf32> to vector<16x1xf32>
    %879 = vector.broadcast %878 : vector<16x1xf32> to vector<16x16xf32>
    %880 = arith.subf %876, %879 : vector<16x16xf32>
    %881 = math.exp %880 : vector<16x16xf32>
    %cst_285 = arith.constant dense<0.000000e+00> : vector<16xf32>
    %882 = vector.multi_reduction <add>, %881, %cst_285 [1] : vector<16x16xf32> to vector<16xf32>
    %883 = vector.shape_cast %882 : vector<16xf32> to vector<16x1xf32>
    %884 = tpu.reciprocal %883 {approx = true} : vector<16x1xf32> -> vector<16x1xf32>
    %885 = vector.broadcast %884 : vector<16x1xf32> to vector<16x16xf32>
    %886 = arith.mulf %881, %885 : vector<16x16xf32>
    %887 = arith.truncf %886 : vector<16x16xf32> to vector<16x16xbf16>
    %888 = vector.extract_strided_slice %836 {offsets = [0, 32], sizes = [16, 16], strides = [1, 1]} : vector<16x128xbf16> to vector<16x16xbf16>
    %cst_286 = arith.constant dense<0.000000e+00> : vector<16x16xf32>
    %889 = tpu.matmul %887, %888, %cst_286 {dimension_numbers = #tpu.dot_dimension_numbers<[1], [0], [0], [1], [0, 0, 1, 1], [], []>} : vector<16x16xbf16>, vector<16x16xbf16>, vector<16x16xf32> -> vector<16x16xf32>
    %890 = vector.extract_strided_slice %835 {offsets = [0, 48], sizes = [16, 16], strides = [1, 1]} : vector<16x128xbf16> to vector<16x16xbf16>
    %891 = vector.extract_strided_slice %838 {offsets = [48, 0], sizes = [16, 16], strides = [1, 1]} : vector<128x16xbf16> to vector<16x16xbf16>
    %cst_287 = arith.constant dense<0.000000e+00> : vector<16x16xf32>
    %892 = tpu.matmul %890, %891, %cst_287 {dimension_numbers = #tpu.dot_dimension_numbers<[1], [0], [0], [1], [0, 0, 1, 1], [], []>} : vector<16x16xbf16>, vector<16x16xbf16>, vector<16x16xf32> -> vector<16x16xf32>
    %893 = arith.addf %892, %6 : vector<16x16xf32>
    %cst_288 = arith.constant dense<0xFF800000> : vector<16xf32>
    %894 = vector.multi_reduction <maximumf>, %893, %cst_288 [1] : vector<16x16xf32> to vector<16xf32>
    %895 = vector.shape_cast %894 : vector<16xf32> to vector<16x1xf32>
    %896 = vector.broadcast %895 : vector<16x1xf32> to vector<16x16xf32>
    %897 = arith.subf %893, %896 : vector<16x16xf32>
    %898 = math.exp %897 : vector<16x16xf32>
    %cst_289 = arith.constant dense<0.000000e+00> : vector<16xf32>
    %899 = vector.multi_reduction <add>, %898, %cst_289 [1] : vector<16x16xf32> to vector<16xf32>
    %900 = vector.shape_cast %899 : vector<16xf32> to vector<16x1xf32>
    %901 = tpu.reciprocal %900 {approx = true} : vector<16x1xf32> -> vector<16x1xf32>
    %902 = vector.broadcast %901 : vector<16x1xf32> to vector<16x16xf32>
    %903 = arith.mulf %898, %902 : vector<16x16xf32>
    %904 = arith.truncf %903 : vector<16x16xf32> to vector<16x16xbf16>
    %905 = vector.extract_strided_slice %836 {offsets = [0, 48], sizes = [16, 16], strides = [1, 1]} : vector<16x128xbf16> to vector<16x16xbf16>
    %cst_290 = arith.constant dense<0.000000e+00> : vector<16x16xf32>
    %906 = tpu.matmul %904, %905, %cst_290 {dimension_numbers = #tpu.dot_dimension_numbers<[1], [0], [0], [1], [0, 0, 1, 1], [], []>} : vector<16x16xbf16>, vector<16x16xbf16>, vector<16x16xf32> -> vector<16x16xf32>
    %907 = vector.extract_strided_slice %835 {offsets = [0, 64], sizes = [16, 16], strides = [1, 1]} : vector<16x128xbf16> to vector<16x16xbf16>
    %908 = vector.extract_strided_slice %838 {offsets = [64, 0], sizes = [16, 16], strides = [1, 1]} : vector<128x16xbf16> to vector<16x16xbf16>
    %cst_291 = arith.constant dense<0.000000e+00> : vector<16x16xf32>
    %909 = tpu.matmul %907, %908, %cst_291 {dimension_numbers = #tpu.dot_dimension_numbers<[1], [0], [0], [1], [0, 0, 1, 1], [], []>} : vector<16x16xbf16>, vector<16x16xbf16>, vector<16x16xf32> -> vector<16x16xf32>
    %910 = arith.addf %909, %6 : vector<16x16xf32>
    %cst_292 = arith.constant dense<0xFF800000> : vector<16xf32>
    %911 = vector.multi_reduction <maximumf>, %910, %cst_292 [1] : vector<16x16xf32> to vector<16xf32>
    %912 = vector.shape_cast %911 : vector<16xf32> to vector<16x1xf32>
    %913 = vector.broadcast %912 : vector<16x1xf32> to vector<16x16xf32>
    %914 = arith.subf %910, %913 : vector<16x16xf32>
    %915 = math.exp %914 : vector<16x16xf32>
    %cst_293 = arith.constant dense<0.000000e+00> : vector<16xf32>
    %916 = vector.multi_reduction <add>, %915, %cst_293 [1] : vector<16x16xf32> to vector<16xf32>
    %917 = vector.shape_cast %916 : vector<16xf32> to vector<16x1xf32>
    %918 = tpu.reciprocal %917 {approx = true} : vector<16x1xf32> -> vector<16x1xf32>
    %919 = vector.broadcast %918 : vector<16x1xf32> to vector<16x16xf32>
    %920 = arith.mulf %915, %919 : vector<16x16xf32>
    %921 = arith.truncf %920 : vector<16x16xf32> to vector<16x16xbf16>
    %922 = vector.extract_strided_slice %836 {offsets = [0, 64], sizes = [16, 16], strides = [1, 1]} : vector<16x128xbf16> to vector<16x16xbf16>
    %cst_294 = arith.constant dense<0.000000e+00> : vector<16x16xf32>
    %923 = tpu.matmul %921, %922, %cst_294 {dimension_numbers = #tpu.dot_dimension_numbers<[1], [0], [0], [1], [0, 0, 1, 1], [], []>} : vector<16x16xbf16>, vector<16x16xbf16>, vector<16x16xf32> -> vector<16x16xf32>
    %924 = vector.extract_strided_slice %835 {offsets = [0, 80], sizes = [16, 16], strides = [1, 1]} : vector<16x128xbf16> to vector<16x16xbf16>
    %925 = vector.extract_strided_slice %838 {offsets = [80, 0], sizes = [16, 16], strides = [1, 1]} : vector<128x16xbf16> to vector<16x16xbf16>
    %cst_295 = arith.constant dense<0.000000e+00> : vector<16x16xf32>
    %926 = tpu.matmul %924, %925, %cst_295 {dimension_numbers = #tpu.dot_dimension_numbers<[1], [0], [0], [1], [0, 0, 1, 1], [], []>} : vector<16x16xbf16>, vector<16x16xbf16>, vector<16x16xf32> -> vector<16x16xf32>
    %927 = arith.addf %926, %6 : vector<16x16xf32>
    %cst_296 = arith.constant dense<0xFF800000> : vector<16xf32>
    %928 = vector.multi_reduction <maximumf>, %927, %cst_296 [1] : vector<16x16xf32> to vector<16xf32>
    %929 = vector.shape_cast %928 : vector<16xf32> to vector<16x1xf32>
    %930 = vector.broadcast %929 : vector<16x1xf32> to vector<16x16xf32>
    %931 = arith.subf %927, %930 : vector<16x16xf32>
    %932 = math.exp %931 : vector<16x16xf32>
    %cst_297 = arith.constant dense<0.000000e+00> : vector<16xf32>
    %933 = vector.multi_reduction <add>, %932, %cst_297 [1] : vector<16x16xf32> to vector<16xf32>
    %934 = vector.shape_cast %933 : vector<16xf32> to vector<16x1xf32>
    %935 = tpu.reciprocal %934 {approx = true} : vector<16x1xf32> -> vector<16x1xf32>
    %936 = vector.broadcast %935 : vector<16x1xf32> to vector<16x16xf32>
    %937 = arith.mulf %932, %936 : vector<16x16xf32>
    %938 = arith.truncf %937 : vector<16x16xf32> to vector<16x16xbf16>
    %939 = vector.extract_strided_slice %836 {offsets = [0, 80], sizes = [16, 16], strides = [1, 1]} : vector<16x128xbf16> to vector<16x16xbf16>
    %cst_298 = arith.constant dense<0.000000e+00> : vector<16x16xf32>
    %940 = tpu.matmul %938, %939, %cst_298 {dimension_numbers = #tpu.dot_dimension_numbers<[1], [0], [0], [1], [0, 0, 1, 1], [], []>} : vector<16x16xbf16>, vector<16x16xbf16>, vector<16x16xf32> -> vector<16x16xf32>
    %941 = vector.extract_strided_slice %835 {offsets = [0, 96], sizes = [16, 16], strides = [1, 1]} : vector<16x128xbf16> to vector<16x16xbf16>
    %942 = vector.extract_strided_slice %838 {offsets = [96, 0], sizes = [16, 16], strides = [1, 1]} : vector<128x16xbf16> to vector<16x16xbf16>
    %cst_299 = arith.constant dense<0.000000e+00> : vector<16x16xf32>
    %943 = tpu.matmul %941, %942, %cst_299 {dimension_numbers = #tpu.dot_dimension_numbers<[1], [0], [0], [1], [0, 0, 1, 1], [], []>} : vector<16x16xbf16>, vector<16x16xbf16>, vector<16x16xf32> -> vector<16x16xf32>
    %944 = arith.addf %943, %6 : vector<16x16xf32>
    %cst_300 = arith.constant dense<0xFF800000> : vector<16xf32>
    %945 = vector.multi_reduction <maximumf>, %944, %cst_300 [1] : vector<16x16xf32> to vector<16xf32>
    %946 = vector.shape_cast %945 : vector<16xf32> to vector<16x1xf32>
    %947 = vector.broadcast %946 : vector<16x1xf32> to vector<16x16xf32>
    %948 = arith.subf %944, %947 : vector<16x16xf32>
    %949 = math.exp %948 : vector<16x16xf32>
    %cst_301 = arith.constant dense<0.000000e+00> : vector<16xf32>
    %950 = vector.multi_reduction <add>, %949, %cst_301 [1] : vector<16x16xf32> to vector<16xf32>
    %951 = vector.shape_cast %950 : vector<16xf32> to vector<16x1xf32>
    %952 = tpu.reciprocal %951 {approx = true} : vector<16x1xf32> -> vector<16x1xf32>
    %953 = vector.broadcast %952 : vector<16x1xf32> to vector<16x16xf32>
    %954 = arith.mulf %949, %953 : vector<16x16xf32>
    %955 = arith.truncf %954 : vector<16x16xf32> to vector<16x16xbf16>
    %956 = vector.extract_strided_slice %836 {offsets = [0, 96], sizes = [16, 16], strides = [1, 1]} : vector<16x128xbf16> to vector<16x16xbf16>
    %cst_302 = arith.constant dense<0.000000e+00> : vector<16x16xf32>
    %957 = tpu.matmul %955, %956, %cst_302 {dimension_numbers = #tpu.dot_dimension_numbers<[1], [0], [0], [1], [0, 0, 1, 1], [], []>} : vector<16x16xbf16>, vector<16x16xbf16>, vector<16x16xf32> -> vector<16x16xf32>
    %958 = vector.extract_strided_slice %835 {offsets = [0, 112], sizes = [16, 16], strides = [1, 1]} : vector<16x128xbf16> to vector<16x16xbf16>
    %959 = vector.extract_strided_slice %838 {offsets = [112, 0], sizes = [16, 16], strides = [1, 1]} : vector<128x16xbf16> to vector<16x16xbf16>
    %cst_303 = arith.constant dense<0.000000e+00> : vector<16x16xf32>
    %960 = tpu.matmul %958, %959, %cst_303 {dimension_numbers = #tpu.dot_dimension_numbers<[1], [0], [0], [1], [0, 0, 1, 1], [], []>} : vector<16x16xbf16>, vector<16x16xbf16>, vector<16x16xf32> -> vector<16x16xf32>
    %961 = arith.addf %960, %6 : vector<16x16xf32>
    %cst_304 = arith.constant dense<0xFF800000> : vector<16xf32>
    %962 = vector.multi_reduction <maximumf>, %961, %cst_304 [1] : vector<16x16xf32> to vector<16xf32>
    %963 = vector.shape_cast %962 : vector<16xf32> to vector<16x1xf32>
    %964 = vector.broadcast %963 : vector<16x1xf32> to vector<16x16xf32>
    %965 = arith.subf %961, %964 : vector<16x16xf32>
    %966 = math.exp %965 : vector<16x16xf32>
    %cst_305 = arith.constant dense<0.000000e+00> : vector<16xf32>
    %967 = vector.multi_reduction <add>, %966, %cst_305 [1] : vector<16x16xf32> to vector<16xf32>
    %968 = vector.shape_cast %967 : vector<16xf32> to vector<16x1xf32>
    %969 = tpu.reciprocal %968 {approx = true} : vector<16x1xf32> -> vector<16x1xf32>
    %970 = vector.broadcast %969 : vector<16x1xf32> to vector<16x16xf32>
    %971 = arith.mulf %966, %970 : vector<16x16xf32>
    %972 = arith.truncf %971 : vector<16x16xf32> to vector<16x16xbf16>
    %973 = vector.extract_strided_slice %836 {offsets = [0, 112], sizes = [16, 16], strides = [1, 1]} : vector<16x128xbf16> to vector<16x16xbf16>
    %cst_306 = arith.constant dense<0.000000e+00> : vector<16x16xf32>
    %974 = tpu.matmul %972, %973, %cst_306 {dimension_numbers = #tpu.dot_dimension_numbers<[1], [0], [0], [1], [0, 0, 1, 1], [], []>} : vector<16x16xbf16>, vector<16x16xbf16>, vector<16x16xf32> -> vector<16x16xf32>
    %975 = tpu.concatenate %855, %872, %889, %906, %923, %940, %957, %974 in 1 : vector<16x16xf32>, vector<16x16xf32>, vector<16x16xf32>, vector<16x16xf32>, vector<16x16xf32>, vector<16x16xf32>, vector<16x16xf32>, vector<16x16xf32> -> vector<16x128xf32>
    %976 = arith.truncf %975 : vector<16x128xf32> to vector<16x128xbf16>
    %cst_307 = arith.constant dense<0.000000e+00> : vector<16x128xf32>
    %977 = tpu.matmul %976, %833, %cst_307 {dimension_numbers = #tpu.dot_dimension_numbers<[1], [0], [0], [1], [0, 0, 1, 1], [], []>} : vector<16x128xbf16>, vector<128x128xbf16>, vector<16x128xf32> -> vector<16x128xf32>
    %978 = vector.broadcast %834 : vector<1x128xf32> to vector<16x128xf32>
    %979 = arith.addf %977, %978 : vector<16x128xf32>
    %980 = arith.addf %821, %979 : vector<16x128xf32>
    %c2_308 = arith.constant 2 : index
    %c1408_309 = arith.constant 1408 : index
    %981 = vector.load %arg7[%c2_308, %c1408_309] : memref<3x2176xf32, #tpu.memory_space<vmem>>, vector<1x128xf32>
    %c2_310 = arith.constant 2 : index
    %c1536_311 = arith.constant 1536 : index
    %982 = vector.load %arg7[%c2_310, %c1536_311] : memref<3x2176xf32, #tpu.memory_space<vmem>>, vector<1x128xf32>
    %cst_312 = arith.constant dense<0.000000e+00> : vector<16xf32>
    %983 = vector.multi_reduction <add>, %980, %cst_312 [1] : vector<16x128xf32> to vector<16xf32>
    %984 = vector.shape_cast %983 : vector<16xf32> to vector<16x1xf32>
    %cst_313 = arith.constant 1.280000e+02 : f32
    %985 = vector.broadcast %cst_313 : f32 to vector<16x1xf32>
    %986 = arith.divf %984, %985 : vector<16x1xf32>
    %987 = vector.broadcast %986 : vector<16x1xf32> to vector<16x128xf32>
    %988 = arith.subf %980, %987 : vector<16x128xf32>
    %989 = arith.mulf %988, %988 : vector<16x128xf32>
    %cst_314 = arith.constant dense<0.000000e+00> : vector<16xf32>
    %990 = vector.multi_reduction <add>, %989, %cst_314 [1] : vector<16x128xf32> to vector<16xf32>
    %991 = vector.shape_cast %990 : vector<16xf32> to vector<16x1xf32>
    %cst_315 = arith.constant 1.280000e+02 : f32
    %992 = vector.broadcast %cst_315 : f32 to vector<16x1xf32>
    %993 = arith.divf %991, %992 : vector<16x1xf32>
    %cst_316 = arith.constant 9.99999974E-6 : f32
    %994 = vector.broadcast %cst_316 : f32 to vector<16x1xf32>
    %995 = arith.addf %993, %994 : vector<16x1xf32>
    %996 = math.rsqrt %995 : vector<16x1xf32>
    %997 = vector.broadcast %996 : vector<16x1xf32> to vector<16x128xf32>
    %998 = arith.mulf %988, %997 : vector<16x128xf32>
    %999 = vector.broadcast %981 : vector<1x128xf32> to vector<16x128xf32>
    %1000 = arith.mulf %998, %999 : vector<16x128xf32>
    %1001 = vector.broadcast %982 : vector<1x128xf32> to vector<16x128xf32>
    %1002 = arith.addf %1000, %1001 : vector<16x128xf32>
    %c2_317 = arith.constant 2 : index
    %c0_318 = arith.constant 0 : index
    %c512_319 = arith.constant 512 : index
    %1003 = vector.load %arg5[%c2_317, %c0_318, %c512_319] : memref<3x128x1280xbf16, #tpu.memory_space<vmem>>, vector<1x128x128xbf16>
    %1004 = vector.shape_cast %1003 : vector<1x128x128xbf16> to vector<128x128xbf16>
    %1005 = arith.truncf %1002 : vector<16x128xf32> to vector<16x128xbf16>
    %cst_320 = arith.constant dense<0.000000e+00> : vector<16x128xf32>
    %1006 = tpu.matmul %1005, %1004, %cst_320 {dimension_numbers = #tpu.dot_dimension_numbers<[1], [0], [0], [1], [0, 0, 1, 1], [], []>} : vector<16x128xbf16>, vector<128x128xbf16>, vector<16x128xf32> -> vector<16x128xf32>
    %c2_321 = arith.constant 2 : index
    %c512_322 = arith.constant 512 : index
    %1007 = vector.load %arg7[%c2_321, %c512_322] : memref<3x2176xf32, #tpu.memory_space<vmem>>, vector<1x128xf32>
    %1008 = vector.broadcast %1007 : vector<1x128xf32> to vector<16x128xf32>
    %1009 = arith.addf %1006, %1008 : vector<16x128xf32>
    %c2_323 = arith.constant 2 : index
    %c0_324 = arith.constant 0 : index
    %c640_325 = arith.constant 640 : index
    %1010 = vector.load %arg5[%c2_323, %c0_324, %c640_325] : memref<3x128x1280xbf16, #tpu.memory_space<vmem>>, vector<1x128x256xbf16>
    %1011 = vector.shape_cast %1010 : vector<1x128x256xbf16> to vector<128x256xbf16>
    %1012 = arith.truncf %5 : vector<32x128xf32> to vector<32x128xbf16>
    %cst_326 = arith.constant dense<0.000000e+00> : vector<32x256xf32>
    %1013 = tpu.matmul %1012, %1011, %cst_326 {dimension_numbers = #tpu.dot_dimension_numbers<[1], [0], [0], [1], [0, 0, 1, 1], [], []>} : vector<32x128xbf16>, vector<128x256xbf16>, vector<32x256xf32> -> vector<32x256xf32>
    %c2_327 = arith.constant 2 : index
    %c640_328 = arith.constant 640 : index
    %1014 = vector.load %arg7[%c2_327, %c640_328] : memref<3x2176xf32, #tpu.memory_space<vmem>>, vector<1x256xf32>
    %1015 = vector.broadcast %1014 : vector<1x256xf32> to vector<32x256xf32>
    %1016 = arith.addf %1013, %1015 : vector<32x256xf32>
    %1017 = vector.extract_strided_slice %1016 {offsets = [0, 0], sizes = [32, 128], strides = [1, 1]} : vector<32x256xf32> to vector<32x128xf32>
    %1018 = vector.extract_strided_slice %1016 {offsets = [0, 128], sizes = [32, 128], strides = [1, 1]} : vector<32x256xf32> to vector<32x128xf32>
    %c2_329 = arith.constant 2 : index
    %c0_330 = arith.constant 0 : index
    %c896_331 = arith.constant 896 : index
    %1019 = vector.load %arg5[%c2_329, %c0_330, %c896_331] : memref<3x128x1280xbf16, #tpu.memory_space<vmem>>, vector<1x128x128xbf16>
    %1020 = vector.shape_cast %1019 : vector<1x128x128xbf16> to vector<128x128xbf16>
    %c2_332 = arith.constant 2 : index
    %c896_333 = arith.constant 896 : index
    %1021 = vector.load %arg7[%c2_332, %c896_333] : memref<3x2176xf32, #tpu.memory_space<vmem>>, vector<1x128xf32>
    %1022 = arith.truncf %1009 : vector<16x128xf32> to vector<16x128xbf16>
    %1023 = arith.truncf %1018 : vector<32x128xf32> to vector<32x128xbf16>
    %1024 = tpu.transpose %1017, [1, 0] : vector<32x128xf32> -> vector<128x32xf32>
    %1025 = arith.truncf %1024 : vector<128x32xf32> to vector<128x32xbf16>
    %1026 = vector.extract_strided_slice %1022 {offsets = [0, 0], sizes = [16, 16], strides = [1, 1]} : vector<16x128xbf16> to vector<16x16xbf16>
    %1027 = vector.extract_strided_slice %1025 {offsets = [0, 0], sizes = [16, 32], strides = [1, 1]} : vector<128x32xbf16> to vector<16x32xbf16>
    %cst_334 = arith.constant dense<0.000000e+00> : vector<16x32xf32>
    %1028 = tpu.matmul %1026, %1027, %cst_334 {dimension_numbers = #tpu.dot_dimension_numbers<[1], [0], [0], [1], [0, 0, 1, 1], [], []>} : vector<16x16xbf16>, vector<16x32xbf16>, vector<16x32xf32> -> vector<16x32xf32>
    %1029 = arith.addf %1028, %7 : vector<16x32xf32>
    %cst_335 = arith.constant dense<0xFF800000> : vector<16xf32>
    %1030 = vector.multi_reduction <maximumf>, %1029, %cst_335 [1] : vector<16x32xf32> to vector<16xf32>
    %1031 = vector.shape_cast %1030 : vector<16xf32> to vector<16x1xf32>
    %1032 = vector.broadcast %1031 : vector<16x1xf32> to vector<16x32xf32>
    %1033 = arith.subf %1029, %1032 : vector<16x32xf32>
    %1034 = math.exp %1033 : vector<16x32xf32>
    %cst_336 = arith.constant dense<0.000000e+00> : vector<16xf32>
    %1035 = vector.multi_reduction <add>, %1034, %cst_336 [1] : vector<16x32xf32> to vector<16xf32>
    %1036 = vector.shape_cast %1035 : vector<16xf32> to vector<16x1xf32>
    %1037 = tpu.reciprocal %1036 {approx = true} : vector<16x1xf32> -> vector<16x1xf32>
    %1038 = vector.broadcast %1037 : vector<16x1xf32> to vector<16x32xf32>
    %1039 = arith.mulf %1034, %1038 : vector<16x32xf32>
    %1040 = arith.truncf %1039 : vector<16x32xf32> to vector<16x32xbf16>
    %1041 = vector.extract_strided_slice %1023 {offsets = [0, 0], sizes = [32, 16], strides = [1, 1]} : vector<32x128xbf16> to vector<32x16xbf16>
    %cst_337 = arith.constant dense<0.000000e+00> : vector<16x16xf32>
    %1042 = tpu.matmul %1040, %1041, %cst_337 {dimension_numbers = #tpu.dot_dimension_numbers<[1], [0], [0], [1], [0, 0, 1, 1], [], []>} : vector<16x32xbf16>, vector<32x16xbf16>, vector<16x16xf32> -> vector<16x16xf32>
    %1043 = vector.extract_strided_slice %1022 {offsets = [0, 16], sizes = [16, 16], strides = [1, 1]} : vector<16x128xbf16> to vector<16x16xbf16>
    %1044 = vector.extract_strided_slice %1025 {offsets = [16, 0], sizes = [16, 32], strides = [1, 1]} : vector<128x32xbf16> to vector<16x32xbf16>
    %cst_338 = arith.constant dense<0.000000e+00> : vector<16x32xf32>
    %1045 = tpu.matmul %1043, %1044, %cst_338 {dimension_numbers = #tpu.dot_dimension_numbers<[1], [0], [0], [1], [0, 0, 1, 1], [], []>} : vector<16x16xbf16>, vector<16x32xbf16>, vector<16x32xf32> -> vector<16x32xf32>
    %1046 = arith.addf %1045, %7 : vector<16x32xf32>
    %cst_339 = arith.constant dense<0xFF800000> : vector<16xf32>
    %1047 = vector.multi_reduction <maximumf>, %1046, %cst_339 [1] : vector<16x32xf32> to vector<16xf32>
    %1048 = vector.shape_cast %1047 : vector<16xf32> to vector<16x1xf32>
    %1049 = vector.broadcast %1048 : vector<16x1xf32> to vector<16x32xf32>
    %1050 = arith.subf %1046, %1049 : vector<16x32xf32>
    %1051 = math.exp %1050 : vector<16x32xf32>
    %cst_340 = arith.constant dense<0.000000e+00> : vector<16xf32>
    %1052 = vector.multi_reduction <add>, %1051, %cst_340 [1] : vector<16x32xf32> to vector<16xf32>
    %1053 = vector.shape_cast %1052 : vector<16xf32> to vector<16x1xf32>
    %1054 = tpu.reciprocal %1053 {approx = true} : vector<16x1xf32> -> vector<16x1xf32>
    %1055 = vector.broadcast %1054 : vector<16x1xf32> to vector<16x32xf32>
    %1056 = arith.mulf %1051, %1055 : vector<16x32xf32>
    %1057 = arith.truncf %1056 : vector<16x32xf32> to vector<16x32xbf16>
    %1058 = vector.extract_strided_slice %1023 {offsets = [0, 16], sizes = [32, 16], strides = [1, 1]} : vector<32x128xbf16> to vector<32x16xbf16>
    %cst_341 = arith.constant dense<0.000000e+00> : vector<16x16xf32>
    %1059 = tpu.matmul %1057, %1058, %cst_341 {dimension_numbers = #tpu.dot_dimension_numbers<[1], [0], [0], [1], [0, 0, 1, 1], [], []>} : vector<16x32xbf16>, vector<32x16xbf16>, vector<16x16xf32> -> vector<16x16xf32>
    %1060 = vector.extract_strided_slice %1022 {offsets = [0, 32], sizes = [16, 16], strides = [1, 1]} : vector<16x128xbf16> to vector<16x16xbf16>
    %1061 = vector.extract_strided_slice %1025 {offsets = [32, 0], sizes = [16, 32], strides = [1, 1]} : vector<128x32xbf16> to vector<16x32xbf16>
    %cst_342 = arith.constant dense<0.000000e+00> : vector<16x32xf32>
    %1062 = tpu.matmul %1060, %1061, %cst_342 {dimension_numbers = #tpu.dot_dimension_numbers<[1], [0], [0], [1], [0, 0, 1, 1], [], []>} : vector<16x16xbf16>, vector<16x32xbf16>, vector<16x32xf32> -> vector<16x32xf32>
    %1063 = arith.addf %1062, %7 : vector<16x32xf32>
    %cst_343 = arith.constant dense<0xFF800000> : vector<16xf32>
    %1064 = vector.multi_reduction <maximumf>, %1063, %cst_343 [1] : vector<16x32xf32> to vector<16xf32>
    %1065 = vector.shape_cast %1064 : vector<16xf32> to vector<16x1xf32>
    %1066 = vector.broadcast %1065 : vector<16x1xf32> to vector<16x32xf32>
    %1067 = arith.subf %1063, %1066 : vector<16x32xf32>
    %1068 = math.exp %1067 : vector<16x32xf32>
    %cst_344 = arith.constant dense<0.000000e+00> : vector<16xf32>
    %1069 = vector.multi_reduction <add>, %1068, %cst_344 [1] : vector<16x32xf32> to vector<16xf32>
    %1070 = vector.shape_cast %1069 : vector<16xf32> to vector<16x1xf32>
    %1071 = tpu.reciprocal %1070 {approx = true} : vector<16x1xf32> -> vector<16x1xf32>
    %1072 = vector.broadcast %1071 : vector<16x1xf32> to vector<16x32xf32>
    %1073 = arith.mulf %1068, %1072 : vector<16x32xf32>
    %1074 = arith.truncf %1073 : vector<16x32xf32> to vector<16x32xbf16>
    %1075 = vector.extract_strided_slice %1023 {offsets = [0, 32], sizes = [32, 16], strides = [1, 1]} : vector<32x128xbf16> to vector<32x16xbf16>
    %cst_345 = arith.constant dense<0.000000e+00> : vector<16x16xf32>
    %1076 = tpu.matmul %1074, %1075, %cst_345 {dimension_numbers = #tpu.dot_dimension_numbers<[1], [0], [0], [1], [0, 0, 1, 1], [], []>} : vector<16x32xbf16>, vector<32x16xbf16>, vector<16x16xf32> -> vector<16x16xf32>
    %1077 = vector.extract_strided_slice %1022 {offsets = [0, 48], sizes = [16, 16], strides = [1, 1]} : vector<16x128xbf16> to vector<16x16xbf16>
    %1078 = vector.extract_strided_slice %1025 {offsets = [48, 0], sizes = [16, 32], strides = [1, 1]} : vector<128x32xbf16> to vector<16x32xbf16>
    %cst_346 = arith.constant dense<0.000000e+00> : vector<16x32xf32>
    %1079 = tpu.matmul %1077, %1078, %cst_346 {dimension_numbers = #tpu.dot_dimension_numbers<[1], [0], [0], [1], [0, 0, 1, 1], [], []>} : vector<16x16xbf16>, vector<16x32xbf16>, vector<16x32xf32> -> vector<16x32xf32>
    %1080 = arith.addf %1079, %7 : vector<16x32xf32>
    %cst_347 = arith.constant dense<0xFF800000> : vector<16xf32>
    %1081 = vector.multi_reduction <maximumf>, %1080, %cst_347 [1] : vector<16x32xf32> to vector<16xf32>
    %1082 = vector.shape_cast %1081 : vector<16xf32> to vector<16x1xf32>
    %1083 = vector.broadcast %1082 : vector<16x1xf32> to vector<16x32xf32>
    %1084 = arith.subf %1080, %1083 : vector<16x32xf32>
    %1085 = math.exp %1084 : vector<16x32xf32>
    %cst_348 = arith.constant dense<0.000000e+00> : vector<16xf32>
    %1086 = vector.multi_reduction <add>, %1085, %cst_348 [1] : vector<16x32xf32> to vector<16xf32>
    %1087 = vector.shape_cast %1086 : vector<16xf32> to vector<16x1xf32>
    %1088 = tpu.reciprocal %1087 {approx = true} : vector<16x1xf32> -> vector<16x1xf32>
    %1089 = vector.broadcast %1088 : vector<16x1xf32> to vector<16x32xf32>
    %1090 = arith.mulf %1085, %1089 : vector<16x32xf32>
    %1091 = arith.truncf %1090 : vector<16x32xf32> to vector<16x32xbf16>
    %1092 = vector.extract_strided_slice %1023 {offsets = [0, 48], sizes = [32, 16], strides = [1, 1]} : vector<32x128xbf16> to vector<32x16xbf16>
    %cst_349 = arith.constant dense<0.000000e+00> : vector<16x16xf32>
    %1093 = tpu.matmul %1091, %1092, %cst_349 {dimension_numbers = #tpu.dot_dimension_numbers<[1], [0], [0], [1], [0, 0, 1, 1], [], []>} : vector<16x32xbf16>, vector<32x16xbf16>, vector<16x16xf32> -> vector<16x16xf32>
    %1094 = vector.extract_strided_slice %1022 {offsets = [0, 64], sizes = [16, 16], strides = [1, 1]} : vector<16x128xbf16> to vector<16x16xbf16>
    %1095 = vector.extract_strided_slice %1025 {offsets = [64, 0], sizes = [16, 32], strides = [1, 1]} : vector<128x32xbf16> to vector<16x32xbf16>
    %cst_350 = arith.constant dense<0.000000e+00> : vector<16x32xf32>
    %1096 = tpu.matmul %1094, %1095, %cst_350 {dimension_numbers = #tpu.dot_dimension_numbers<[1], [0], [0], [1], [0, 0, 1, 1], [], []>} : vector<16x16xbf16>, vector<16x32xbf16>, vector<16x32xf32> -> vector<16x32xf32>
    %1097 = arith.addf %1096, %7 : vector<16x32xf32>
    %cst_351 = arith.constant dense<0xFF800000> : vector<16xf32>
    %1098 = vector.multi_reduction <maximumf>, %1097, %cst_351 [1] : vector<16x32xf32> to vector<16xf32>
    %1099 = vector.shape_cast %1098 : vector<16xf32> to vector<16x1xf32>
    %1100 = vector.broadcast %1099 : vector<16x1xf32> to vector<16x32xf32>
    %1101 = arith.subf %1097, %1100 : vector<16x32xf32>
    %1102 = math.exp %1101 : vector<16x32xf32>
    %cst_352 = arith.constant dense<0.000000e+00> : vector<16xf32>
    %1103 = vector.multi_reduction <add>, %1102, %cst_352 [1] : vector<16x32xf32> to vector<16xf32>
    %1104 = vector.shape_cast %1103 : vector<16xf32> to vector<16x1xf32>
    %1105 = tpu.reciprocal %1104 {approx = true} : vector<16x1xf32> -> vector<16x1xf32>
    %1106 = vector.broadcast %1105 : vector<16x1xf32> to vector<16x32xf32>
    %1107 = arith.mulf %1102, %1106 : vector<16x32xf32>
    %1108 = arith.truncf %1107 : vector<16x32xf32> to vector<16x32xbf16>
    %1109 = vector.extract_strided_slice %1023 {offsets = [0, 64], sizes = [32, 16], strides = [1, 1]} : vector<32x128xbf16> to vector<32x16xbf16>
    %cst_353 = arith.constant dense<0.000000e+00> : vector<16x16xf32>
    %1110 = tpu.matmul %1108, %1109, %cst_353 {dimension_numbers = #tpu.dot_dimension_numbers<[1], [0], [0], [1], [0, 0, 1, 1], [], []>} : vector<16x32xbf16>, vector<32x16xbf16>, vector<16x16xf32> -> vector<16x16xf32>
    %1111 = vector.extract_strided_slice %1022 {offsets = [0, 80], sizes = [16, 16], strides = [1, 1]} : vector<16x128xbf16> to vector<16x16xbf16>
    %1112 = vector.extract_strided_slice %1025 {offsets = [80, 0], sizes = [16, 32], strides = [1, 1]} : vector<128x32xbf16> to vector<16x32xbf16>
    %cst_354 = arith.constant dense<0.000000e+00> : vector<16x32xf32>
    %1113 = tpu.matmul %1111, %1112, %cst_354 {dimension_numbers = #tpu.dot_dimension_numbers<[1], [0], [0], [1], [0, 0, 1, 1], [], []>} : vector<16x16xbf16>, vector<16x32xbf16>, vector<16x32xf32> -> vector<16x32xf32>
    %1114 = arith.addf %1113, %7 : vector<16x32xf32>
    %cst_355 = arith.constant dense<0xFF800000> : vector<16xf32>
    %1115 = vector.multi_reduction <maximumf>, %1114, %cst_355 [1] : vector<16x32xf32> to vector<16xf32>
    %1116 = vector.shape_cast %1115 : vector<16xf32> to vector<16x1xf32>
    %1117 = vector.broadcast %1116 : vector<16x1xf32> to vector<16x32xf32>
    %1118 = arith.subf %1114, %1117 : vector<16x32xf32>
    %1119 = math.exp %1118 : vector<16x32xf32>
    %cst_356 = arith.constant dense<0.000000e+00> : vector<16xf32>
    %1120 = vector.multi_reduction <add>, %1119, %cst_356 [1] : vector<16x32xf32> to vector<16xf32>
    %1121 = vector.shape_cast %1120 : vector<16xf32> to vector<16x1xf32>
    %1122 = tpu.reciprocal %1121 {approx = true} : vector<16x1xf32> -> vector<16x1xf32>
    %1123 = vector.broadcast %1122 : vector<16x1xf32> to vector<16x32xf32>
    %1124 = arith.mulf %1119, %1123 : vector<16x32xf32>
    %1125 = arith.truncf %1124 : vector<16x32xf32> to vector<16x32xbf16>
    %1126 = vector.extract_strided_slice %1023 {offsets = [0, 80], sizes = [32, 16], strides = [1, 1]} : vector<32x128xbf16> to vector<32x16xbf16>
    %cst_357 = arith.constant dense<0.000000e+00> : vector<16x16xf32>
    %1127 = tpu.matmul %1125, %1126, %cst_357 {dimension_numbers = #tpu.dot_dimension_numbers<[1], [0], [0], [1], [0, 0, 1, 1], [], []>} : vector<16x32xbf16>, vector<32x16xbf16>, vector<16x16xf32> -> vector<16x16xf32>
    %1128 = vector.extract_strided_slice %1022 {offsets = [0, 96], sizes = [16, 16], strides = [1, 1]} : vector<16x128xbf16> to vector<16x16xbf16>
    %1129 = vector.extract_strided_slice %1025 {offsets = [96, 0], sizes = [16, 32], strides = [1, 1]} : vector<128x32xbf16> to vector<16x32xbf16>
    %cst_358 = arith.constant dense<0.000000e+00> : vector<16x32xf32>
    %1130 = tpu.matmul %1128, %1129, %cst_358 {dimension_numbers = #tpu.dot_dimension_numbers<[1], [0], [0], [1], [0, 0, 1, 1], [], []>} : vector<16x16xbf16>, vector<16x32xbf16>, vector<16x32xf32> -> vector<16x32xf32>
    %1131 = arith.addf %1130, %7 : vector<16x32xf32>
    %cst_359 = arith.constant dense<0xFF800000> : vector<16xf32>
    %1132 = vector.multi_reduction <maximumf>, %1131, %cst_359 [1] : vector<16x32xf32> to vector<16xf32>
    %1133 = vector.shape_cast %1132 : vector<16xf32> to vector<16x1xf32>
    %1134 = vector.broadcast %1133 : vector<16x1xf32> to vector<16x32xf32>
    %1135 = arith.subf %1131, %1134 : vector<16x32xf32>
    %1136 = math.exp %1135 : vector<16x32xf32>
    %cst_360 = arith.constant dense<0.000000e+00> : vector<16xf32>
    %1137 = vector.multi_reduction <add>, %1136, %cst_360 [1] : vector<16x32xf32> to vector<16xf32>
    %1138 = vector.shape_cast %1137 : vector<16xf32> to vector<16x1xf32>
    %1139 = tpu.reciprocal %1138 {approx = true} : vector<16x1xf32> -> vector<16x1xf32>
    %1140 = vector.broadcast %1139 : vector<16x1xf32> to vector<16x32xf32>
    %1141 = arith.mulf %1136, %1140 : vector<16x32xf32>
    %1142 = arith.truncf %1141 : vector<16x32xf32> to vector<16x32xbf16>
    %1143 = vector.extract_strided_slice %1023 {offsets = [0, 96], sizes = [32, 16], strides = [1, 1]} : vector<32x128xbf16> to vector<32x16xbf16>
    %cst_361 = arith.constant dense<0.000000e+00> : vector<16x16xf32>
    %1144 = tpu.matmul %1142, %1143, %cst_361 {dimension_numbers = #tpu.dot_dimension_numbers<[1], [0], [0], [1], [0, 0, 1, 1], [], []>} : vector<16x32xbf16>, vector<32x16xbf16>, vector<16x16xf32> -> vector<16x16xf32>
    %1145 = vector.extract_strided_slice %1022 {offsets = [0, 112], sizes = [16, 16], strides = [1, 1]} : vector<16x128xbf16> to vector<16x16xbf16>
    %1146 = vector.extract_strided_slice %1025 {offsets = [112, 0], sizes = [16, 32], strides = [1, 1]} : vector<128x32xbf16> to vector<16x32xbf16>
    %cst_362 = arith.constant dense<0.000000e+00> : vector<16x32xf32>
    %1147 = tpu.matmul %1145, %1146, %cst_362 {dimension_numbers = #tpu.dot_dimension_numbers<[1], [0], [0], [1], [0, 0, 1, 1], [], []>} : vector<16x16xbf16>, vector<16x32xbf16>, vector<16x32xf32> -> vector<16x32xf32>
    %1148 = arith.addf %1147, %7 : vector<16x32xf32>
    %cst_363 = arith.constant dense<0xFF800000> : vector<16xf32>
    %1149 = vector.multi_reduction <maximumf>, %1148, %cst_363 [1] : vector<16x32xf32> to vector<16xf32>
    %1150 = vector.shape_cast %1149 : vector<16xf32> to vector<16x1xf32>
    %1151 = vector.broadcast %1150 : vector<16x1xf32> to vector<16x32xf32>
    %1152 = arith.subf %1148, %1151 : vector<16x32xf32>
    %1153 = math.exp %1152 : vector<16x32xf32>
    %cst_364 = arith.constant dense<0.000000e+00> : vector<16xf32>
    %1154 = vector.multi_reduction <add>, %1153, %cst_364 [1] : vector<16x32xf32> to vector<16xf32>
    %1155 = vector.shape_cast %1154 : vector<16xf32> to vector<16x1xf32>
    %1156 = tpu.reciprocal %1155 {approx = true} : vector<16x1xf32> -> vector<16x1xf32>
    %1157 = vector.broadcast %1156 : vector<16x1xf32> to vector<16x32xf32>
    %1158 = arith.mulf %1153, %1157 : vector<16x32xf32>
    %1159 = arith.truncf %1158 : vector<16x32xf32> to vector<16x32xbf16>
    %1160 = vector.extract_strided_slice %1023 {offsets = [0, 112], sizes = [32, 16], strides = [1, 1]} : vector<32x128xbf16> to vector<32x16xbf16>
    %cst_365 = arith.constant dense<0.000000e+00> : vector<16x16xf32>
    %1161 = tpu.matmul %1159, %1160, %cst_365 {dimension_numbers = #tpu.dot_dimension_numbers<[1], [0], [0], [1], [0, 0, 1, 1], [], []>} : vector<16x32xbf16>, vector<32x16xbf16>, vector<16x16xf32> -> vector<16x16xf32>
    %1162 = tpu.concatenate %1042, %1059, %1076, %1093, %1110, %1127, %1144, %1161 in 1 : vector<16x16xf32>, vector<16x16xf32>, vector<16x16xf32>, vector<16x16xf32>, vector<16x16xf32>, vector<16x16xf32>, vector<16x16xf32>, vector<16x16xf32> -> vector<16x128xf32>
    %1163 = arith.truncf %1162 : vector<16x128xf32> to vector<16x128xbf16>
    %cst_366 = arith.constant dense<0.000000e+00> : vector<16x128xf32>
    %1164 = tpu.matmul %1163, %1020, %cst_366 {dimension_numbers = #tpu.dot_dimension_numbers<[1], [0], [0], [1], [0, 0, 1, 1], [], []>} : vector<16x128xbf16>, vector<128x128xbf16>, vector<16x128xf32> -> vector<16x128xf32>
    %1165 = vector.broadcast %1021 : vector<1x128xf32> to vector<16x128xf32>
    %1166 = arith.addf %1164, %1165 : vector<16x128xf32>
    %1167 = arith.addf %1002, %1166 : vector<16x128xf32>
    %c2_367 = arith.constant 2 : index
    %c1664_368 = arith.constant 1664 : index
    %1168 = vector.load %arg7[%c2_367, %c1664_368] : memref<3x2176xf32, #tpu.memory_space<vmem>>, vector<1x128xf32>
    %c2_369 = arith.constant 2 : index
    %c1792_370 = arith.constant 1792 : index
    %1169 = vector.load %arg7[%c2_369, %c1792_370] : memref<3x2176xf32, #tpu.memory_space<vmem>>, vector<1x128xf32>
    %cst_371 = arith.constant dense<0.000000e+00> : vector<16xf32>
    %1170 = vector.multi_reduction <add>, %1167, %cst_371 [1] : vector<16x128xf32> to vector<16xf32>
    %1171 = vector.shape_cast %1170 : vector<16xf32> to vector<16x1xf32>
    %cst_372 = arith.constant 1.280000e+02 : f32
    %1172 = vector.broadcast %cst_372 : f32 to vector<16x1xf32>
    %1173 = arith.divf %1171, %1172 : vector<16x1xf32>
    %1174 = vector.broadcast %1173 : vector<16x1xf32> to vector<16x128xf32>
    %1175 = arith.subf %1167, %1174 : vector<16x128xf32>
    %1176 = arith.mulf %1175, %1175 : vector<16x128xf32>
    %cst_373 = arith.constant dense<0.000000e+00> : vector<16xf32>
    %1177 = vector.multi_reduction <add>, %1176, %cst_373 [1] : vector<16x128xf32> to vector<16xf32>
    %1178 = vector.shape_cast %1177 : vector<16xf32> to vector<16x1xf32>
    %cst_374 = arith.constant 1.280000e+02 : f32
    %1179 = vector.broadcast %cst_374 : f32 to vector<16x1xf32>
    %1180 = arith.divf %1178, %1179 : vector<16x1xf32>
    %cst_375 = arith.constant 9.99999974E-6 : f32
    %1181 = vector.broadcast %cst_375 : f32 to vector<16x1xf32>
    %1182 = arith.addf %1180, %1181 : vector<16x1xf32>
    %1183 = math.rsqrt %1182 : vector<16x1xf32>
    %1184 = vector.broadcast %1183 : vector<16x1xf32> to vector<16x128xf32>
    %1185 = arith.mulf %1175, %1184 : vector<16x128xf32>
    %1186 = vector.broadcast %1168 : vector<1x128xf32> to vector<16x128xf32>
    %1187 = arith.mulf %1185, %1186 : vector<16x128xf32>
    %1188 = vector.broadcast %1169 : vector<1x128xf32> to vector<16x128xf32>
    %1189 = arith.addf %1187, %1188 : vector<16x128xf32>
    %c2_376 = arith.constant 2 : index
    %c0_377 = arith.constant 0 : index
    %c1024_378 = arith.constant 1024 : index
    %1190 = vector.load %arg5[%c2_376, %c0_377, %c1024_378] : memref<3x128x1280xbf16, #tpu.memory_space<vmem>>, vector<1x128x256xbf16>
    %1191 = vector.shape_cast %1190 : vector<1x128x256xbf16> to vector<128x256xbf16>
    %1192 = arith.truncf %1189 : vector<16x128xf32> to vector<16x128xbf16>
    %cst_379 = arith.constant dense<0.000000e+00> : vector<16x256xf32>
    %1193 = tpu.matmul %1192, %1191, %cst_379 {dimension_numbers = #tpu.dot_dimension_numbers<[1], [0], [0], [1], [0, 0, 1, 1], [], []>} : vector<16x128xbf16>, vector<128x256xbf16>, vector<16x256xf32> -> vector<16x256xf32>
    %c2_380 = arith.constant 2 : index
    %c1024_381 = arith.constant 1024 : index
    %1194 = vector.load %arg7[%c2_380, %c1024_381] : memref<3x2176xf32, #tpu.memory_space<vmem>>, vector<1x256xf32>
    %1195 = vector.broadcast %1194 : vector<1x256xf32> to vector<16x256xf32>
    %1196 = arith.addf %1193, %1195 : vector<16x256xf32>
    %cst_382 = arith.constant 0.000000e+00 : f32
    %1197 = vector.broadcast %cst_382 : f32 to vector<16x256xf32>
    %1198 = arith.maximumf %1196, %1197 : vector<16x256xf32>
    %c2_383 = arith.constant 2 : index
    %c0_384 = arith.constant 0 : index
    %c0_385 = arith.constant 0 : index
    %1199 = vector.load %arg6[%c2_383, %c0_384, %c0_385] : memref<3x256x128xbf16, #tpu.memory_space<vmem>>, vector<1x256x128xbf16>
    %1200 = vector.shape_cast %1199 : vector<1x256x128xbf16> to vector<256x128xbf16>
    %1201 = arith.truncf %1198 : vector<16x256xf32> to vector<16x256xbf16>
    %cst_386 = arith.constant dense<0.000000e+00> : vector<16x128xf32>
    %1202 = tpu.matmul %1201, %1200, %cst_386 {dimension_numbers = #tpu.dot_dimension_numbers<[1], [0], [0], [1], [0, 0, 1, 1], [], []>} : vector<16x256xbf16>, vector<256x128xbf16>, vector<16x128xf32> -> vector<16x128xf32>
    %c2_387 = arith.constant 2 : index
    %c1280_388 = arith.constant 1280 : index
    %1203 = vector.load %arg7[%c2_387, %c1280_388] : memref<3x2176xf32, #tpu.memory_space<vmem>>, vector<1x128xf32>
    %1204 = vector.broadcast %1203 : vector<1x128xf32> to vector<16x128xf32>
    %1205 = arith.addf %1202, %1204 : vector<16x128xf32>
    %1206 = arith.addf %1189, %1205 : vector<16x128xf32>
    %c2_389 = arith.constant 2 : index
    %c1920_390 = arith.constant 1920 : index
    %1207 = vector.load %arg7[%c2_389, %c1920_390] : memref<3x2176xf32, #tpu.memory_space<vmem>>, vector<1x128xf32>
    %c2_391 = arith.constant 2 : index
    %c2048_392 = arith.constant 2048 : index
    %1208 = vector.load %arg7[%c2_391, %c2048_392] : memref<3x2176xf32, #tpu.memory_space<vmem>>, vector<1x128xf32>
    %cst_393 = arith.constant dense<0.000000e+00> : vector<16xf32>
    %1209 = vector.multi_reduction <add>, %1206, %cst_393 [1] : vector<16x128xf32> to vector<16xf32>
    %1210 = vector.shape_cast %1209 : vector<16xf32> to vector<16x1xf32>
    %cst_394 = arith.constant 1.280000e+02 : f32
    %1211 = vector.broadcast %cst_394 : f32 to vector<16x1xf32>
    %1212 = arith.divf %1210, %1211 : vector<16x1xf32>
    %1213 = vector.broadcast %1212 : vector<16x1xf32> to vector<16x128xf32>
    %1214 = arith.subf %1206, %1213 : vector<16x128xf32>
    %1215 = arith.mulf %1214, %1214 : vector<16x128xf32>
    %cst_395 = arith.constant dense<0.000000e+00> : vector<16xf32>
    %1216 = vector.multi_reduction <add>, %1215, %cst_395 [1] : vector<16x128xf32> to vector<16xf32>
    %1217 = vector.shape_cast %1216 : vector<16xf32> to vector<16x1xf32>
    %cst_396 = arith.constant 1.280000e+02 : f32
    %1218 = vector.broadcast %cst_396 : f32 to vector<16x1xf32>
    %1219 = arith.divf %1217, %1218 : vector<16x1xf32>
    %cst_397 = arith.constant 9.99999974E-6 : f32
    %1220 = vector.broadcast %cst_397 : f32 to vector<16x1xf32>
    %1221 = arith.addf %1219, %1220 : vector<16x1xf32>
    %1222 = math.rsqrt %1221 : vector<16x1xf32>
    %1223 = vector.broadcast %1222 : vector<16x1xf32> to vector<16x128xf32>
    %1224 = arith.mulf %1214, %1223 : vector<16x128xf32>
    %1225 = vector.broadcast %1207 : vector<1x128xf32> to vector<16x128xf32>
    %1226 = arith.mulf %1224, %1225 : vector<16x128xf32>
    %1227 = vector.broadcast %1208 : vector<1x128xf32> to vector<16x128xf32>
    %1228 = arith.addf %1226, %1227 : vector<16x128xf32>
    %c0_398 = arith.constant 0 : index
    %c0_399 = arith.constant 0 : index
    %1229 = vector.load %arg8[%c0_398, %c0_399] : memref<128x128xbf16, #tpu.memory_space<vmem>>, vector<128x128xbf16>
    %1230 = arith.truncf %1228 : vector<16x128xf32> to vector<16x128xbf16>
    %cst_400 = arith.constant dense<0.000000e+00> : vector<16x128xf32>
    %1231 = tpu.matmul %1230, %1229, %cst_400 {dimension_numbers = #tpu.dot_dimension_numbers<[1], [0], [0], [1], [0, 0, 1, 1], [], []>} : vector<16x128xbf16>, vector<128x128xbf16>, vector<16x128xf32> -> vector<16x128xf32>
    %c0_401 = arith.constant 0 : index
    %c0_402 = arith.constant 0 : index
    %1232 = vector.load %arg9[%c0_401, %c0_402] : memref<1x128xf32, #tpu.memory_space<vmem>>, vector<1x128xf32>
    %1233 = vector.broadcast %1232 : vector<1x128xf32> to vector<16x128xf32>
    %1234 = arith.addf %1231, %1233 : vector<16x128xf32>
    %c0_403 = arith.constant 0 : index
    %c0_404 = arith.constant 0 : index
    %1235 = vector.load %arg10[%c0_403, %c0_404] : memref<16x128xf32, #tpu.memory_space<vmem>>, vector<16x128xf32>
    tpu.vector_store %arg10[%c0_403, %c0_404], %1234 {strides = array<i32>} : memref<16x128xf32, #tpu.memory_space<vmem>>, vector<16x128xf32>,
    return
  }
}

</mosaic_0001>

<llo_original>
// kernel: forward.1
$region0: #{forward.1}
  #allocation0 [shape = 'u32[]', space=smem, size = 0x4, offset = 0x4, fixed_abs, tag = 'smem constant byte address 0x4 - core index']
  #allocation1 [shape = 'u32[144,128]{1,0:T(1,128)}', space=vmem, size = 0x12000, scoped, tag = 'internal scratch']
  %s0 = inlined_call_operand.vmem [shape: f32[16,8], index: 0, kind: input, shape index: {}]
  %s1 = inlined_call_operand.vmem [shape: f32[8,128], index: 1, kind: input, shape index: {}]
  %s2 = inlined_call_operand.vmem [shape: f32[16,128], index: 2, kind: input, shape index: {}]
  %s3 = inlined_call_operand.vmem [shape: f32[32,128], index: 3, kind: input, shape index: {}]
  %s4 = inlined_call_operand.vmem [shape: f32[16,48], index: 4, kind: input, shape index: {}]
  %s5 = inlined_call_operand.vmem [shape: bf16[3,128,1280], index: 5, kind: input, shape index: {}]
  %s6 = inlined_call_operand.vmem [shape: bf16[3,256,128], index: 6, kind: input, shape index: {}]
  %s7 = inlined_call_operand.vmem [shape: f32[3,2176], index: 7, kind: input, shape index: {}]
  %s8 = inlined_call_operand.vmem [shape: bf16[128,128], index: 8, kind: input, shape index: {}]
  %s9 = inlined_call_operand.vmem [shape: f32[1,128], index: 9, kind: input, shape index: {}]
  %s10 = inlined_call_operand.vmem [shape: f32[16,128], index: 10, kind: output, shape index: {}]
  %s11 = sld [smem:[#allocation0]]
  $region50: #{forward.1} parent=0
    _
  %s13 = ssub.s32 1, %s11
  %s14 = scalar_select 0, %s13, %s11
  // Predicated region
  $region2: #{forward.1} parent=0 // pred_check
    _
  $region3: #{forward.1} parent=0 // pred_check_branch
    %16 = sbr.rel (0) target = $region5
  $region4: #{forward.1} parent=0 // pred_region
    _
  $region5: #{forward.1} parent=0 // pred_fallthru
    _
  // Predicated region
  $region6: #{forward.1} parent=0 // pred_check
    _
  $region7: #{forward.1} parent=0 // pred_check_branch
    %18 = sbr.rel (0) target = $region9
  $region8: #{forward.1} parent=0 // pred_region
    _
  $region9: #{forward.1} parent=0 // pred_fallthru
    _
  // Predicated region
  $region10: #{forward.1} parent=0 // pred_check
    _
  $region11: #{forward.1} parent=0 // pred_check_branch
    %20 = sbr.rel (0) target = $region13
  $region12: #{forward.1} parent=0 // pred_region
    _
  $region13: #{forward.1} parent=0 // pred_fallthru
    _
  // Predicated region
  $region14: #{forward.1} parent=0 // pred_check
    _
  $region15: #{forward.1} parent=0 // pred_check_branch
    %22 = sbr.rel (0) target = $region17
  $region16: #{forward.1} parent=0 // pred_region
    _
  $region17: #{forward.1} parent=0 // pred_fallthru
    _
  // Predicated region
  $region18: #{forward.1} parent=0 // pred_check
    _
  $region19: #{forward.1} parent=0 // pred_check_branch
    %24 = sbr.rel (0) target = $region21
  $region20: #{forward.1} parent=0 // pred_region
    _
  $region21: #{forward.1} parent=0 // pred_fallthru
    _
  // Predicated region
  $region22: #{forward.1} parent=0 // pred_check
    _
  $region23: #{forward.1} parent=0 // pred_check_branch
    %26 = sbr.rel (0) target = $region25
  $region24: #{forward.1} parent=0 // pred_region
    _
  $region25: #{forward.1} parent=0 // pred_fallthru
    _
  // Predicated region
  $region26: #{forward.1} parent=0 // pred_check
    _
  $region27: #{forward.1} parent=0 // pred_check_branch
    %28 = sbr.rel (0) target = $region29
  $region28: #{forward.1} parent=0 // pred_region
    _
  $region29: #{forward.1} parent=0 // pred_fallthru
    _
  // Predicated region
  $region30: #{forward.1} parent=0 // pred_check
    _
  $region31: #{forward.1} parent=0 // pred_check_branch
    %30 = sbr.rel (0) target = $region33
  $region32: #{forward.1} parent=0 // pred_region
    _
  $region33: #{forward.1} parent=0 // pred_fallthru
    _
  // Predicated region
  $region34: #{forward.1} parent=0 // pred_check
    _
  $region35: #{forward.1} parent=0 // pred_check_branch
    %32 = sbr.rel (0) target = $region37
  $region36: #{forward.1} parent=0 // pred_region
    _
  $region37: #{forward.1} parent=0 // pred_fallthru
    _
  // Predicated region
  $region38: #{forward.1} parent=0 // pred_check
    _
  $region39: #{forward.1} parent=0 // pred_check_branch
    %34 = sbr.rel (0) target = $region41
  $region40: #{forward.1} parent=0 // pred_region
    _
  $region41: #{forward.1} parent=0 // pred_fallthru
    _
  %v36 = vld [vmem:[%s0] sm:$0xff]
  %v37 = vld [vmem:[%s0 + $0x8] sm:$0xff]
  %v38 = vld [vmem:[%s1] sm:$0xff]
  %v39 = vld [vmem:[%s2] sm:$0xff]
  %v40 = vld [vmem:[%s2 + $0x8] sm:$0xff]
  %vm41 = vcmask 64512
  %v43 = vsel %vm41, %v36, 0
  %v46 = vsel %vm41, %v37, 0
  %48 = vmatprep.subr.mxu0 0.0
  %49 = vmatpush1.msra.mxu0 %v38
  %50 = vmatprep.subr.mxu0 0.0
  %51 = vmatpush1.msra.mxu0 0.0
  %52 = vmatprep.subr.mxu0 0.0
  %53 = vmatpush1.msra.mxu0 0.0
  %54 = vmatprep.subr.mxu0 0.0
  %55 = vmatpush1.msra.mxu0 0.0
  %56 = vmatprep.subr.mxu0 0.0
  %57 = vmatpush1.msra.mxu0 0.0
  %58 = vmatprep.subr.mxu0 0.0
  %59 = vmatpush1.msra.mxu0 0.0
  %60 = vmatprep.subr.mxu0 0.0
  %61 = vmatpush1.msra.mxu0 0.0
  %62 = vmatprep.subr.mxu0 0.0
  %63 = vmatpush1.msra.mxu0 0.0
  %64 = vmatprep.subr.mxu0 0.0
  %65 = vmatpush1.msra.mxu0 0.0
  %66 = vmatprep.subr.mxu0 0.0
  %67 = vmatpush1.msra.mxu0 0.0
  %68 = vmatprep.subr.mxu0 0.0
  %69 = vmatpush1.msra.mxu0 0.0
  %70 = vmatprep.subr.mxu0 0.0
  %71 = vmatpush1.msra.mxu0 0.0
  %72 = vmatprep.subr.mxu0 0.0
  %73 = vmatpush1.msra.mxu0 0.0
  %74 = vmatprep.subr.mxu0 0.0
  %75 = vmatpush1.msra.mxu0 0.0
  %76 = vmatprep.subr.mxu0 0.0
  %77 = vmatpush1.msra.mxu0 0.0
  %78 = vmatprep.subr.mxu0 0.0
  %79 = vmatpush1.msra.mxu0 0.0
  %80 = vmatprep.subr.mxu0 0.0
  %81 = vmatpush1.msra.mxu0 0.0
  %82 = vmatprep.subr.mxu0 0.0
  %83 = vmatpush1.msra.mxu0 0.0
  %84 = vmatprep.subr.mxu0 0.0
  %85 = vmatpush1.msra.mxu0 0.0
  %86 = vmatprep.subr.mxu0 0.0
  %87 = vmatpush1.msra.mxu0 0.0
  %88 = vmatprep.subr.mxu0 0.0
  %89 = vmatpush1.msra.mxu0 0.0
  %90 = vmatprep.subr.mxu0 0.0
  %91 = vmatpush1.msra.mxu0 0.0
  %92 = vmatprep.subr.mxu0 0.0
  %93 = vmatpush1.msra.mxu0 0.0
  %94 = vmatprep.subr.mxu0 0.0
  %95 = vmatpush1.msra.mxu0 0.0
  %96 = vmatprep.subr.mxu0 0.0
  %97 = vmatpush1.msra.mxu0 0.0
  %98 = vmatprep.subr.mxu0 0.0
  %99 = vmatpush1.msra.mxu0 0.0
  %100 = vmatprep.subr.mxu0 0.0
  %101 = vmatpush1.msra.mxu0 0.0
  %102 = vmatprep.subr.mxu0 0.0
  %103 = vmatpush1.msra.mxu0 0.0
  %104 = vmatprep.subr.mxu0 0.0
  %105 = vmatpush1.msra.mxu0 0.0
  %106 = vmatprep.subr.mxu0 0.0
  %107 = vmatpush1.msra.mxu0 0.0
  %108 = vmatprep.subr.mxu0 0.0
  %109 = vmatpush1.msra.mxu0 0.0
  %110 = vmatprep.subr.mxu0 0.0
  %111 = vmatpush1.msra.mxu0 0.0
  %112 = vmatprep.mubr.f32.mxu0 0.0
  %113 = vmatmul.mubr.f32.gmra.mrb[0].mxu0 %v43
  %v114 = vpop.f32.mrb[0].mxu0
  %v115 = vadd.f32 %v39, %v114
  %v116 = vpop.f32.mrb[0].mxu0
  %117 = vmatprep.mubr.f32.mxu0 0.0
  %118 = vmatmul.mubr.f32.gmra.mrb[0].mxu0 %v46
  %v119 = vpop.f32.mrb[0].mxu0
  %v120 = vadd.f32 %v40, %v119
  %v121 = vpop.f32.mrb[0].mxu0
  %122 = vdwg.mxu0
  %v123 = vld [vmem:[%s3] sm:$0xff]
  %v124 = vld [vmem:[%s3 + $0x8] sm:$0xff]
  %v125 = vld [vmem:[%s3 + $0x10] sm:$0xff]
  %v126 = vld [vmem:[%s3 + $0x18] sm:$0xff]
  %v127 = vld [vmem:[%s4] sm:$0xff]
  %v128 = vld [vmem:[%s4 + $0x8] sm:$0xff]
  %v129 = vld [vmem:[%s5] sm:$0xff]
  %v130 = vld [vmem:[%s5 + $0x8] sm:$0xf]
  %v131 = vld [vmem:[%s5 + $0x28] sm:$0xff]
  %v132 = vld [vmem:[%s5 + $0x30] sm:$0xf]
  %v133 = vld [vmem:[%s5 + $0x50] sm:$0xff]
  %v134 = vld [vmem:[%s5 + $0x58] sm:$0xf]
  %v135 = vld [vmem:[%s5 + $0x78] sm:$0xff]
  %v136 = vld [vmem:[%s5 + $0x80] sm:$0xf]
  %v137 = vld [vmem:[%s5 + $0xa0] sm:$0xff]
  %v138 = vld [vmem:[%s5 + $0xa8] sm:$0xf]
  %v139 = vld [vmem:[%s5 + $0xc8] sm:$0xff]
  %v140 = vld [vmem:[%s5 + $0xd0] sm:$0xf]
  %v141 = vld [vmem:[%s5 + $0xf0] sm:$0xff]
  %v142 = vld [vmem:[%s5 + $0xf8] sm:$0xf]
  %v143 = vld [vmem:[%s5 + $0x118] sm:$0xff]
  %v144 = vld [vmem:[%s5 + $0x120] sm:$0xf]
  %v145 = vld [vmem:[%s5 + $0x140] sm:$0xff]
  %v146 = vld [vmem:[%s5 + $0x148] sm:$0xf]
  %v147 = vld [vmem:[%s5 + $0x168] sm:$0xff]
  %v148 = vld [vmem:[%s5 + $0x170] sm:$0xf]
  %v149 = vld [vmem:[%s5 + $0x190] sm:$0xff]
  %v150 = vld [vmem:[%s5 + $0x198] sm:$0xf]
  %v151 = vld [vmem:[%s5 + $0x1b8] sm:$0xff]
  %v152 = vld [vmem:[%s5 + $0x1c0] sm:$0xf]
  %v153 = vld [vmem:[%s5 + $0x1e0] sm:$0xff]
  %v154 = vld [vmem:[%s5 + $0x1e8] sm:$0xf]
  %v155 = vld [vmem:[%s5 + $0x208] sm:$0xff]
  %v156 = vld [vmem:[%s5 + $0x210] sm:$0xf]
  %v157 = vld [vmem:[%s5 + $0x230] sm:$0xff]
  %v158 = vld [vmem:[%s5 + $0x238] sm:$0xf]
  %v159 = vld [vmem:[%s5 + $0x258] sm:$0xff]
  %v160 = vld [vmem:[%s5 + $0x260] sm:$0xf]
  %v161 = vpack.c.bf16 %v120, %v115
  %v162 = vld [vmem:[%s7] ss:$4 sm:$0x7]
  %v164 = vlaneseq
  %v165 = vshrl.u32 %v164, 7
  %v166 = vsub.s32 0, %v165
  %v167 = vrot.slane %v162, %v166
  %v168 = vlaneseq
  %v169 = vshrl.u32 %v168, 7
  %v170 = vsub.s32 1, %v169
  %v171 = vrot.slane %v162, %v170
  %v172 = vlaneseq
  %v173 = vshrl.u32 %v172, 7
  %v174 = vsub.s32 2, %v173
  %v175 = vrot.slane %v162, %v174
  %v211 = vunpack.c.l.b16 %v129
  %v212 = vunpack.c.h.b16 %v129
  %v213 = vunpack.c.l.b16 %v130
  %v214 = vunpack.c.l.b16 %v131
  %v215 = vunpack.c.h.b16 %v131
  %v216 = vunpack.c.l.b16 %v132
  %v217 = vunpack.c.l.b16 %v133
  %v218 = vunpack.c.h.b16 %v133
  %v219 = vunpack.c.l.b16 %v134
  %v220 = vunpack.c.l.b16 %v135
  %v221 = vunpack.c.h.b16 %v135
  %v222 = vunpack.c.l.b16 %v136
  %v223 = vunpack.c.l.b16 %v137
  %v224 = vunpack.c.h.b16 %v137
  %v225 = vunpack.c.l.b16 %v138
  %v226 = vunpack.c.l.b16 %v139
  %v227 = vunpack.c.h.b16 %v139
  %v228 = vunpack.c.l.b16 %v140
  %v229 = vunpack.c.l.b16 %v141
  %v230 = vunpack.c.h.b16 %v141
  %v231 = vunpack.c.l.b16 %v142
  %v232 = vunpack.c.l.b16 %v143
  %v233 = vunpack.c.h.b16 %v143
  %v234 = vunpack.c.l.b16 %v144
  %v235 = vunpack.c.l.b16 %v145
  %v236 = vunpack.c.h.b16 %v145
  %v237 = vunpack.c.l.b16 %v146
  %v238 = vunpack.c.l.b16 %v147
  %v239 = vunpack.c.h.b16 %v147
  %v240 = vunpack.c.l.b16 %v148
  %v241 = vunpack.c.l.b16 %v149
  %v242 = vunpack.c.h.b16 %v149
  %v243 = vunpack.c.l.b16 %v150
  %v244 = vunpack.c.l.b16 %v151
  %v245 = vunpack.c.h.b16 %v151
  %v246 = vunpack.c.l.b16 %v152
  %v247 = vunpack.c.l.b16 %v153
  %v248 = vunpack.c.h.b16 %v153
  %v249 = vunpack.c.l.b16 %v154
  %v250 = vunpack.c.l.b16 %v155
  %v251 = vunpack.c.h.b16 %v155
  %v252 = vunpack.c.l.b16 %v156
  %v253 = vunpack.c.l.b16 %v157
  %v254 = vunpack.c.h.b16 %v157
  %v255 = vunpack.c.l.b16 %v158
  %v256 = vunpack.c.l.b16 %v159
  %v257 = vunpack.c.h.b16 %v159
  %v258 = vunpack.c.l.b16 %v160
  %v259 = vpack.c.b16 %v214, %v211
  %v260 = vpack.c.b16 %v215, %v212
  %v261 = vpack.c.b16 %v216, %v213
  %v262 = vpack.c.b16 %v220, %v217
  %v263 = vpack.c.b16 %v221, %v218
  %v264 = vpack.c.b16 %v222, %v219
  %v265 = vpack.c.b16 %v226, %v223
  %v266 = vpack.c.b16 %v227, %v224
  %v267 = vpack.c.b16 %v228, %v225
  %v268 = vpack.c.b16 %v232, %v229
  %v269 = vpack.c.b16 %v233, %v230
  %v270 = vpack.c.b16 %v234, %v231
  %v271 = vpack.c.b16 %v238, %v235
  %v272 = vpack.c.b16 %v239, %v236
  %v273 = vpack.c.b16 %v240, %v237
  %v274 = vpack.c.b16 %v244, %v241
  %v275 = vpack.c.b16 %v245, %v242
  %v276 = vpack.c.b16 %v246, %v243
  %v277 = vpack.c.b16 %v250, %v247
  %v278 = vpack.c.b16 %v251, %v248
  %v279 = vpack.c.b16 %v252, %v249
  %v280 = vpack.c.b16 %v256, %v253
  %v281 = vpack.c.b16 %v257, %v254
  %v282 = vpack.c.b16 %v258, %v255
  %307 = vmatprep.subr.bf16.mxu0 %v260
  %308 = vmatpush1.bf16.msra.mxu0 %v259
  %309 = vmatprep.subr.bf16.mxu0 %v263
  %310 = vmatpush1.bf16.msra.mxu0 %v262
  %311 = vmatprep.subr.bf16.mxu0 %v266
  %312 = vmatpush1.bf16.msra.mxu0 %v265
  %313 = vmatprep.subr.bf16.mxu0 %v269
  %314 = vmatpush1.bf16.msra.mxu0 %v268
  %315 = vmatprep.subr.bf16.mxu0 %v272
  %316 = vmatpush1.bf16.msra.mxu0 %v271
  %317 = vmatprep.subr.bf16.mxu0 %v275
  %318 = vmatpush1.bf16.msra.mxu0 %v274
  %319 = vmatprep.subr.bf16.mxu0 %v278
  %320 = vmatpush1.bf16.msra.mxu0 %v277
  %321 = vmatprep.subr.bf16.mxu0 %v281
  %322 = vmatpush1.bf16.msra.mxu0 %v280
  %323 = vmatprep.subr.bf16.mxu0 0
  %324 = vmatpush1.bf16.msra.mxu0 0
  %325 = vmatprep.subr.bf16.mxu0 0
  %326 = vmatpush1.bf16.msra.mxu0 0
  %327 = vmatprep.subr.bf16.mxu0 0
  %328 = vmatpush1.bf16.msra.mxu0 0
  %329 = vmatprep.subr.bf16.mxu0 0
  %330 = vmatpush1.bf16.msra.mxu0 0
  %331 = vmatprep.subr.bf16.mxu0 0
  %332 = vmatpush1.bf16.msra.mxu0 0
  %333 = vmatprep.subr.bf16.mxu0 0
  %334 = vmatpush1.bf16.msra.mxu0 0
  %335 = vmatprep.subr.bf16.mxu0 0
  %336 = vmatpush1.bf16.msra.mxu0 0
  %337 = vmatprep.subr.bf16.mxu0 0
  %338 = vmatpush1.bf16.msra.mxu0 0
  %339 = vmatprep.mubr.bf16.mxu0 0
  %340 = vmatmul.mubr.bf16.gmra.mrb[0].mxu0 %v161
  %v341 = vpop.f32.mrb[0].mxu0
  %v342 = vadd.f32 %v167, %v341
  %v343 = vpop.f32.mrb[0].mxu0
  %v344 = vadd.f32 %v171, %v343
  %v345 = vpop.f32.mrb[0].mxu0
  %v346 = vadd.f32 %v167, %v345
  %v347 = vpop.f32.mrb[0].mxu0
  %v348 = vadd.f32 %v171, %v347
  %349 = vdwg.mxu0
  %350 = vmatprep.subr.bf16.mxu0 0
  %351 = vmatpush1.bf16.msra.mxu0 %v261
  %352 = vmatprep.subr.bf16.mxu0 0
  %353 = vmatpush1.bf16.msra.mxu0 %v264
  %354 = vmatprep.subr.bf16.mxu0 0
  %355 = vmatpush1.bf16.msra.mxu0 %v267
  %356 = vmatprep.subr.bf16.mxu0 0
  %357 = vmatpush1.bf16.msra.mxu0 %v270
  %358 = vmatprep.subr.bf16.mxu0 0
  %359 = vmatpush1.bf16.msra.mxu0 %v273
  %360 = vmatprep.subr.bf16.mxu0 0
  %361 = vmatpush1.bf16.msra.mxu0 %v276
  %362 = vmatprep.subr.bf16.mxu0 0
  %363 = vmatpush1.bf16.msra.mxu0 %v279
  %364 = vmatprep.subr.bf16.mxu0 0
  %365 = vmatpush1.bf16.msra.mxu0 %v282
  %366 = vmatprep.subr.bf16.mxu0 0
  %367 = vmatpush1.bf16.msra.mxu0 0
  %368 = vmatprep.subr.bf16.mxu0 0
  %369 = vmatpush1.bf16.msra.mxu0 0
  %370 = vmatprep.subr.bf16.mxu0 0
  %371 = vmatpush1.bf16.msra.mxu0 0
  %372 = vmatprep.subr.bf16.mxu0 0
  %373 = vmatpush1.bf16.msra.mxu0 0
  %374 = vmatprep.subr.bf16.mxu0 0
  %375 = vmatpush1.bf16.msra.mxu0 0
  %376 = vmatprep.subr.bf16.mxu0 0
  %377 = vmatpush1.bf16.msra.mxu0 0
  %378 = vmatprep.subr.bf16.mxu0 0
  %379 = vmatpush1.bf16.msra.mxu0 0
  %380 = vmatprep.subr.bf16.mxu0 0
  %381 = vmatpush1.bf16.msra.mxu0 0
  %382 = vmatprep.mubr.bf16.mxu0 0
  %383 = vmatmul.mubr.bf16.gmra.mrb[0].mxu0 %v161
  %v384 = vpop.f32.mrb[0].mxu0
  %v385 = vadd.f32 %v175, %v384
  %v386 = vpop.f32.mrb[0].mxu0
  %v387 = vpop.f32.mrb[0].mxu0
  %v388 = vadd.f32 %v175, %v387
  %v389 = vpop.f32.mrb[0].mxu0
  %390 = vdwg.mxu0
  %v391 = vld [vmem:[%s5 + $0xc] sm:$0xf]
  %v392 = vld [vmem:[%s5 + $0x34] sm:$0xf]
  %v393 = vld [vmem:[%s5 + $0x5c] sm:$0xf]
  %v394 = vld [vmem:[%s5 + $0x84] sm:$0xf]
  %v395 = vld [vmem:[%s5 + $0xac] sm:$0xf]
  %v396 = vld [vmem:[%s5 + $0xd4] sm:$0xf]
  %v397 = vld [vmem:[%s5 + $0xfc] sm:$0xf]
  %v398 = vld [vmem:[%s5 + $0x124] sm:$0xf]
  %v399 = vld [vmem:[%s5 + $0x14c] sm:$0xf]
  %v400 = vld [vmem:[%s5 + $0x174] sm:$0xf]
  %v401 = vld [vmem:[%s5 + $0x19c] sm:$0xf]
  %v402 = vld [vmem:[%s5 + $0x1c4] sm:$0xf]
  %v403 = vld [vmem:[%s5 + $0x1ec] sm:$0xf]
  %v404 = vld [vmem:[%s5 + $0x214] sm:$0xf]
  %v405 = vld [vmem:[%s5 + $0x23c] sm:$0xf]
  %v406 = vld [vmem:[%s5 + $0x264] sm:$0xf]
  %v407 = vld [vmem:[%s7 + $0xc] sm:$0x1]
  %v408 = vpack.c.bf16 %v346, %v342
  %v409 = vpack.c.bf16 %v388, %v385
  %410 = vxpose.xlu0.b32.start [1/16] %v344, 128
  %411 = vxpose.xlu0.b32.cont [2/16] %v348, 128
  %412 = vxpose.xlu0.b32.cont [3/16] 0.0, 128
  %413 = vxpose.xlu0.b32.cont [4/16] 0.0, 128
  %414 = vxpose.xlu0.b32.cont [5/16] 0.0, 128
  %415 = vxpose.xlu0.b32.cont [6/16] 0.0, 128
  %416 = vxpose.xlu0.b32.cont [7/16] 0.0, 128
  %417 = vxpose.xlu0.b32.cont [8/16] 0.0, 128
  %418 = vxpose.xlu0.b32.cont [9/16] 0.0, 128
  %419 = vxpose.xlu0.b32.cont [10/16] 0.0, 128
  %420 = vxpose.xlu0.b32.cont [11/16] 0.0, 128
  %421 = vxpose.xlu0.b32.cont [12/16] 0.0, 128
  %422 = vxpose.xlu0.b32.cont [13/16] 0.0, 128
  %423 = vxpose.xlu0.b32.cont [14/16] 0.0, 128
  %424 = vxpose.xlu0.b32.cont [15/16] 0.0, 128
  %425 = vxpose.xlu0.b32.end [16/16] 0.0, 128
  %v426 = vpop.trf.xlu0
  %v427 = vpop.trf.xlu0
  %v428 = vpop.trf.xlu0
  %v429 = vpop.trf.xlu0
  %v430 = vpop.trf.xlu0
  %v431 = vpop.trf.xlu0
  %v432 = vpop.trf.xlu0
  %v433 = vpop.trf.xlu0
  %v434 = vpop.trf.xlu0
  %v435 = vpop.trf.xlu0
  %v436 = vpop.trf.xlu0
  %v437 = vpop.trf.xlu0
  %v438 = vpop.trf.xlu0
  %v439 = vpop.trf.xlu0
  %v440 = vpop.trf.xlu0
  %v441 = vpop.trf.xlu0
  %v442 = vpack.c.bf16 %v427, %v426
  %v443 = vpack.c.bf16 %v429, %v428
  %v444 = vpack.c.bf16 %v431, %v430
  %v445 = vpack.c.bf16 %v433, %v432
  %v446 = vpack.c.bf16 %v435, %v434
  %v447 = vpack.c.bf16 %v437, %v436
  %v448 = vpack.c.bf16 %v439, %v438
  %v449 = vpack.c.bf16 %v441, %v440
  %vm450 = vcmask 130048
  %v452 = vsel %vm450, %v408, 0
  %454 = vmatprep.subr.bf16.mxu0 0
  %455 = vmatpush1.bf16.msra.mxu0 %v442
  %456 = vmatprep.subr.bf16.mxu0 0
  %457 = vmatpush1.bf16.msra.mxu0 0
  %458 = vmatprep.subr.bf16.mxu0 0
  %459 = vmatpush1.bf16.msra.mxu0 0
  %460 = vmatprep.subr.bf16.mxu0 0
  %461 = vmatpush1.bf16.msra.mxu0 0
  %462 = vmatprep.subr.bf16.mxu0 0
  %463 = vmatpush1.bf16.msra.mxu0 0
  %464 = vmatprep.subr.bf16.mxu0 0
  %465 = vmatpush1.bf16.msra.mxu0 0
  %466 = vmatprep.subr.bf16.mxu0 0
  %467 = vmatpush1.bf16.msra.mxu0 0
  %468 = vmatprep.subr.bf16.mxu0 0
  %469 = vmatpush1.bf16.msra.mxu0 0
  %470 = vmatprep.subr.bf16.mxu0 0
  %471 = vmatpush1.bf16.msra.mxu0 0
  %472 = vmatprep.subr.bf16.mxu0 0
  %473 = vmatpush1.bf16.msra.mxu0 0
  %474 = vmatprep.subr.bf16.mxu0 0
  %475 = vmatpush1.bf16.msra.mxu0 0
  %476 = vmatprep.subr.bf16.mxu0 0
  %477 = vmatpush1.bf16.msra.mxu0 0
  %478 = vmatprep.subr.bf16.mxu0 0
  %479 = vmatpush1.bf16.msra.mxu0 0
  %480 = vmatprep.subr.bf16.mxu0 0
  %481 = vmatpush1.bf16.msra.mxu0 0
  %482 = vmatprep.subr.bf16.mxu0 0
  %483 = vmatpush1.bf16.msra.mxu0 0
  %484 = vmatprep.subr.bf16.mxu0 0
  %485 = vmatpush1.bf16.msra.mxu0 0
  %486 = vmatprep.mubr.bf16.mxu0 0
  %487 = vmatmul.mubr.bf16.gmra.mrb[0].mxu0 %v452
  %v488 = vpop.f32.mrb[0].mxu0
  %v489 = vadd.f32 %v127, %v488
  %v490 = vpop.f32.mrb[0].mxu0
  %v491 = vpop.f32.mrb[0].mxu0
  %v492 = vadd.f32 %v128, %v491
  %v493 = vpop.f32.mrb[0].mxu0
  %494 = vdwg.mxu0
  %v495 = vsel %vm450, %v489, -inf
  %496 = vmax.xlane.f32.xlu0 %v495
  %v497 = vpop.xlane.xlu0 %496
  %v498 = vsel %vm450, %v492, -inf
  %499 = vmax.xlane.f32.xlu0 %v498
  %v500 = vpop.xlane.xlu0 %499
  %v501 = vsub.f32 %v489, %v497
  %v502 = vsub.f32 %v492, %v500
  %v503 = vmul.f32 %v501, 1.442695
  %v504 = vpow.pop %v503
  %v505 = vmul.f32 %v502, 1.442695
  %v506 = vpow.pop %v505
  %v507 = vsel %vm450, %v504, 0.0
  %508 = vadd.xlane.f32.xlu0 %v507
  %v509 = vpop.xlane.xlu0 %508
  %v510 = vsel %vm450, %v506, 0.0
  %511 = vadd.xlane.f32.xlu0 %v510
  %v512 = vpop.xlane.xlu0 %511
  %v513 = vrcp.pop %v509
  %v514 = vrcp.pop %v512
  %v515 = vmul.f32 %v504, %v513
  %v516 = vmul.f32 %v506, %v514
  %v517 = vpack.c.bf16 %v516, %v515
  %v519 = vsel %vm450, %v517, 0
  %521 = vmatprep.subr.bf16.mxu0 0
  %522 = vmatpush1.bf16.msra.mxu0 %v409
  %523 = vmatprep.subr.bf16.mxu0 0
  %524 = vmatpush1.bf16.msra.mxu0 0
  %525 = vmatprep.subr.bf16.mxu0 0
  %526 = vmatpush1.bf16.msra.mxu0 0
  %527 = vmatprep.subr.bf16.mxu0 0
  %528 = vmatpush1.bf16.msra.mxu0 0
  %529 = vmatprep.subr.bf16.mxu0 0
  %530 = vmatpush1.bf16.msra.mxu0 0
  %531 = vmatprep.subr.bf16.mxu0 0
  %532 = vmatpush1.bf16.msra.mxu0 0
  %533 = vmatprep.subr.bf16.mxu0 0
  %534 = vmatpush1.bf16.msra.mxu0 0
  %535 = vmatprep.subr.bf16.mxu0 0
  %536 = vmatpush1.bf16.msra.mxu0 0
  %537 = vmatprep.subr.bf16.mxu0 0
  %538 = vmatpush1.bf16.msra.mxu0 0
  %539 = vmatprep.subr.bf16.mxu0 0
  %540 = vmatpush1.bf16.msra.mxu0 0
  %541 = vmatprep.subr.bf16.mxu0 0
  %542 = vmatpush1.bf16.msra.mxu0 0
  %543 = vmatprep.subr.bf16.mxu0 0
  %544 = vmatpush1.bf16.msra.mxu0 0
  %545 = vmatprep.subr.bf16.mxu0 0
  %546 = vmatpush1.bf16.msra.mxu0 0
  %547 = vmatprep.subr.bf16.mxu0 0
  %548 = vmatpush1.bf16.msra.mxu0 0
  %549 = vmatprep.subr.bf16.mxu0 0
  %550 = vmatpush1.bf16.msra.mxu0 0
  %551 = vmatprep.subr.bf16.mxu0 0
  %552 = vmatpush1.bf16.msra.mxu0 0
  %553 = vmatprep.mubr.bf16.mxu0 0
  %554 = vmatmul.mubr.bf16.gmra.mrb[0].mxu0 %v519
  %v555 = vpop.f32.mrb[0].mxu0
  %v556 = vadd.f32 0.0, %v555
  %v557 = vpop.f32.mrb[0].mxu0
  %v558 = vpop.f32.mrb[0].mxu0
  %v559 = vadd.f32 0.0, %v558
  %v560 = vpop.f32.mrb[0].mxu0
  %561 = vdwg.mxu0
  %563 = vrot.lane.b32.xlu0 %v408, 112
  %v564 = vpop.permute.xlu0 %563
  %v566 = vsel %vm450, %v564, 0
  %568 = vmatprep.subr.bf16.mxu0 0
  %569 = vmatpush1.bf16.msra.mxu0 %v443
  %570 = vmatprep.subr.bf16.mxu0 0
  %571 = vmatpush1.bf16.msra.mxu0 0
  %572 = vmatprep.subr.bf16.mxu0 0
  %573 = vmatpush1.bf16.msra.mxu0 0
  %574 = vmatprep.subr.bf16.mxu0 0
  %575 = vmatpush1.bf16.msra.mxu0 0
  %576 = vmatprep.subr.bf16.mxu0 0
  %577 = vmatpush1.bf16.msra.mxu0 0
  %578 = vmatprep.subr.bf16.mxu0 0
  %579 = vmatpush1.bf16.msra.mxu0 0
  %580 = vmatprep.subr.bf16.mxu0 0
  %581 = vmatpush1.bf16.msra.mxu0 0
  %582 = vmatprep.subr.bf16.mxu0 0
  %583 = vmatpush1.bf16.msra.mxu0 0
  %584 = vmatprep.subr.bf16.mxu0 0
  %585 = vmatpush1.bf16.msra.mxu0 0
  %586 = vmatprep.subr.bf16.mxu0 0
  %587 = vmatpush1.bf16.msra.mxu0 0
  %588 = vmatprep.subr.bf16.mxu0 0
  %589 = vmatpush1.bf16.msra.mxu0 0
  %590 = vmatprep.subr.bf16.mxu0 0
  %591 = vmatpush1.bf16.msra.mxu0 0
  %592 = vmatprep.subr.bf16.mxu0 0
  %593 = vmatpush1.bf16.msra.mxu0 0
  %594 = vmatprep.subr.bf16.mxu0 0
  %595 = vmatpush1.bf16.msra.mxu0 0
  %596 = vmatprep.subr.bf16.mxu0 0
  %597 = vmatpush1.bf16.msra.mxu0 0
  %598 = vmatprep.subr.bf16.mxu0 0
  %599 = vmatpush1.bf16.msra.mxu0 0
  %600 = vmatprep.mubr.bf16.mxu0 0
  %601 = vmatmul.mubr.bf16.gmra.mrb[0].mxu0 %v566
  %v602 = vpop.f32.mrb[0].mxu0
  %v603 = vadd.f32 %v127, %v602
  %v604 = vpop.f32.mrb[0].mxu0
  %v605 = vpop.f32.mrb[0].mxu0
  %v606 = vadd.f32 %v128, %v605
  %v607 = vpop.f32.mrb[0].mxu0
  %608 = vdwg.mxu0
  %v609 = vsel %vm450, %v603, -inf
  %610 = vmax.xlane.f32.xlu0 %v609
  %v611 = vpop.xlane.xlu0 %610
  %v612 = vsel %vm450, %v606, -inf
  %613 = vmax.xlane.f32.xlu0 %v612
  %v614 = vpop.xlane.xlu0 %613
  %v615 = vsub.f32 %v603, %v611
  %v616 = vsub.f32 %v606, %v614
  %v617 = vmul.f32 %v615, 1.442695
  %v618 = vpow.pop %v617
  %v619 = vmul.f32 %v616, 1.442695
  %v620 = vpow.pop %v619
  %v621 = vsel %vm450, %v618, 0.0
  %622 = vadd.xlane.f32.xlu0 %v621
  %v623 = vpop.xlane.xlu0 %622
  %v624 = vsel %vm450, %v620, 0.0
  %625 = vadd.xlane.f32.xlu0 %v624
  %v626 = vpop.xlane.xlu0 %625
  %v627 = vrcp.pop %v623
  %v628 = vrcp.pop %v626
  %v629 = vmul.f32 %v618, %v627
  %v630 = vmul.f32 %v620, %v628
  %v631 = vpack.c.bf16 %v630, %v629
  %633 = vrot.lane.b32.xlu0 %v409, 112
  %v634 = vpop.permute.xlu0 %633
  %v637 = vsel %vm450, %v631, 0
  %639 = vmatprep.subr.bf16.mxu0 0
  %640 = vmatpush1.bf16.msra.mxu0 %v634
  %641 = vmatprep.subr.bf16.mxu0 0
  %642 = vmatpush1.bf16.msra.mxu0 0
  %643 = vmatprep.subr.bf16.mxu0 0
  %644 = vmatpush1.bf16.msra.mxu0 0
  %645 = vmatprep.subr.bf16.mxu0 0
  %646 = vmatpush1.bf16.msra.mxu0 0
  %647 = vmatprep.subr.bf16.mxu0 0
  %648 = vmatpush1.bf16.msra.mxu0 0
  %649 = vmatprep.subr.bf16.mxu0 0
  %650 = vmatpush1.bf16.msra.mxu0 0
  %651 = vmatprep.subr.bf16.mxu0 0
  %652 = vmatpush1.bf16.msra.mxu0 0
  %653 = vmatprep.subr.bf16.mxu0 0
  %654 = vmatpush1.bf16.msra.mxu0 0
  %655 = vmatprep.subr.bf16.mxu0 0
  %656 = vmatpush1.bf16.msra.mxu0 0
  %657 = vmatprep.subr.bf16.mxu0 0
  %658 = vmatpush1.bf16.msra.mxu0 0
  %659 = vmatprep.subr.bf16.mxu0 0
  %660 = vmatpush1.bf16.msra.mxu0 0
  %661 = vmatprep.subr.bf16.mxu0 0
  %662 = vmatpush1.bf16.msra.mxu0 0
  %663 = vmatprep.subr.bf16.mxu0 0
  %664 = vmatpush1.bf16.msra.mxu0 0
  %665 = vmatprep.subr.bf16.mxu0 0
  %666 = vmatpush1.bf16.msra.mxu0 0
  %667 = vmatprep.subr.bf16.mxu0 0
  %668 = vmatpush1.bf16.msra.mxu0 0
  %669 = vmatprep.subr.bf16.mxu0 0
  %670 = vmatpush1.bf16.msra.mxu0 0
  %671 = vmatprep.mubr.bf16.mxu0 0
  %672 = vmatmul.mubr.bf16.gmra.mrb[0].mxu0 %v637
  %v673 = vpop.f32.mrb[0].mxu0
  %v674 = vadd.f32 0.0, %v673
  %v675 = vpop.f32.mrb[0].mxu0
  %v676 = vpop.f32.mrb[0].mxu0
  %v677 = vadd.f32 0.0, %v676
  %v678 = vpop.f32.mrb[0].mxu0
  %679 = vdwg.mxu0
  %680 = vrot.lane.b32.xlu0 %v408, 96
  %v681 = vpop.permute.xlu0 %680
  %v683 = vsel %vm450, %v681, 0
  %685 = vmatprep.subr.bf16.mxu0 0
  %686 = vmatpush1.bf16.msra.mxu0 %v444
  %687 = vmatprep.subr.bf16.mxu0 0
  %688 = vmatpush1.bf16.msra.mxu0 0
  %689 = vmatprep.subr.bf16.mxu0 0
  %690 = vmatpush1.bf16.msra.mxu0 0
  %691 = vmatprep.subr.bf16.mxu0 0
  %692 = vmatpush1.bf16.msra.mxu0 0
  %693 = vmatprep.subr.bf16.mxu0 0
  %694 = vmatpush1.bf16.msra.mxu0 0
  %695 = vmatprep.subr.bf16.mxu0 0
  %696 = vmatpush1.bf16.msra.mxu0 0
  %697 = vmatprep.subr.bf16.mxu0 0
  %698 = vmatpush1.bf16.msra.mxu0 0
  %699 = vmatprep.subr.bf16.mxu0 0
  %700 = vmatpush1.bf16.msra.mxu0 0
  %701 = vmatprep.subr.bf16.mxu0 0
  %702 = vmatpush1.bf16.msra.mxu0 0
  %703 = vmatprep.subr.bf16.mxu0 0
  %704 = vmatpush1.bf16.msra.mxu0 0
  %705 = vmatprep.subr.bf16.mxu0 0
  %706 = vmatpush1.bf16.msra.mxu0 0
  %707 = vmatprep.subr.bf16.mxu0 0
  %708 = vmatpush1.bf16.msra.mxu0 0
  %709 = vmatprep.subr.bf16.mxu0 0
  %710 = vmatpush1.bf16.msra.mxu0 0
  %711 = vmatprep.subr.bf16.mxu0 0
  %712 = vmatpush1.bf16.msra.mxu0 0
  %713 = vmatprep.subr.bf16.mxu0 0
  %714 = vmatpush1.bf16.msra.mxu0 0
  %715 = vmatprep.subr.bf16.mxu0 0
  %716 = vmatpush1.bf16.msra.mxu0 0
  %717 = vmatprep.mubr.bf16.mxu0 0
  %718 = vmatmul.mubr.bf16.gmra.mrb[0].mxu0 %v683
  %v719 = vpop.f32.mrb[0].mxu0
  %v720 = vadd.f32 %v127, %v719
  %v721 = vpop.f32.mrb[0].mxu0
  %v722 = vpop.f32.mrb[0].mxu0
  %v723 = vadd.f32 %v128, %v722
  %v724 = vpop.f32.mrb[0].mxu0
  %725 = vdwg.mxu0
  %v726 = vsel %vm450, %v720, -inf
  %727 = vmax.xlane.f32.xlu0 %v726
  %v728 = vpop.xlane.xlu0 %727
  %v729 = vsel %vm450, %v723, -inf
  %730 = vmax.xlane.f32.xlu0 %v729
  %v731 = vpop.xlane.xlu0 %730
  %v732 = vsub.f32 %v720, %v728
  %v733 = vsub.f32 %v723, %v731
  %v734 = vmul.f32 %v732, 1.442695
  %v735 = vpow.pop %v734
  %v736 = vmul.f32 %v733, 1.442695
  %v737 = vpow.pop %v736
  %v738 = vsel %vm450, %v735, 0.0
  %739 = vadd.xlane.f32.xlu0 %v738
  %v740 = vpop.xlane.xlu0 %739
  %v741 = vsel %vm450, %v737, 0.0
  %742 = vadd.xlane.f32.xlu0 %v741
  %v743 = vpop.xlane.xlu0 %742
  %v744 = vrcp.pop %v740
  %v745 = vrcp.pop %v743
  %v746 = vmul.f32 %v735, %v744
  %v747 = vmul.f32 %v737, %v745
  %v748 = vpack.c.bf16 %v747, %v746
  %749 = vrot.lane.b32.xlu0 %v409, 96
  %v750 = vpop.permute.xlu0 %749
  %v753 = vsel %vm450, %v748, 0
  %755 = vmatprep.subr.bf16.mxu0 0
  %756 = vmatpush1.bf16.msra.mxu0 %v750
  %757 = vmatprep.subr.bf16.mxu0 0
  %758 = vmatpush1.bf16.msra.mxu0 0
  %759 = vmatprep.subr.bf16.mxu0 0
  %760 = vmatpush1.bf16.msra.mxu0 0
  %761 = vmatprep.subr.bf16.mxu0 0
  %762 = vmatpush1.bf16.msra.mxu0 0
  %763 = vmatprep.subr.bf16.mxu0 0
  %764 = vmatpush1.bf16.msra.mxu0 0
  %765 = vmatprep.subr.bf16.mxu0 0
  %766 = vmatpush1.bf16.msra.mxu0 0
  %767 = vmatprep.subr.bf16.mxu0 0
  %768 = vmatpush1.bf16.msra.mxu0 0
  %769 = vmatprep.subr.bf16.mxu0 0
  %770 = vmatpush1.bf16.msra.mxu0 0
  %771 = vmatprep.subr.bf16.mxu0 0
  %772 = vmatpush1.bf16.msra.mxu0 0
  %773 = vmatprep.subr.bf16.mxu0 0
  %774 = vmatpush1.bf16.msra.mxu0 0
  %775 = vmatprep.subr.bf16.mxu0 0
  %776 = vmatpush1.bf16.msra.mxu0 0
  %777 = vmatprep.subr.bf16.mxu0 0
  %778 = vmatpush1.bf16.msra.mxu0 0
  %779 = vmatprep.subr.bf16.mxu0 0
  %780 = vmatpush1.bf16.msra.mxu0 0
  %781 = vmatprep.subr.bf16.mxu0 0
  %782 = vmatpush1.bf16.msra.mxu0 0
  %783 = vmatprep.subr.bf16.mxu0 0
  %784 = vmatpush1.bf16.msra.mxu0 0
  %785 = vmatprep.subr.bf16.mxu0 0
  %786 = vmatpush1.bf16.msra.mxu0 0
  %787 = vmatprep.mubr.bf16.mxu0 0
  %788 = vmatmul.mubr.bf16.gmra.mrb[0].mxu0 %v753
  %v789 = vpop.f32.mrb[0].mxu0
  %v790 = vadd.f32 0.0, %v789
  %v791 = vpop.f32.mrb[0].mxu0
  %v792 = vpop.f32.mrb[0].mxu0
  %v793 = vadd.f32 0.0, %v792
  %v794 = vpop.f32.mrb[0].mxu0
  %795 = vdwg.mxu0
  %796 = vrot.lane.b32.xlu0 %v408, 80
  %v797 = vpop.permute.xlu0 %796
  %v799 = vsel %vm450, %v797, 0
  %801 = vmatprep.subr.bf16.mxu0 0
  %802 = vmatpush1.bf16.msra.mxu0 %v445
  %803 = vmatprep.subr.bf16.mxu0 0
  %804 = vmatpush1.bf16.msra.mxu0 0
  %805 = vmatprep.subr.bf16.mxu0 0
  %806 = vmatpush1.bf16.msra.mxu0 0
  %807 = vmatprep.subr.bf16.mxu0 0
  %808 = vmatpush1.bf16.msra.mxu0 0
  %809 = vmatprep.subr.bf16.mxu0 0
  %810 = vmatpush1.bf16.msra.mxu0 0
  %811 = vmatprep.subr.bf16.mxu0 0
  %812 = vmatpush1.bf16.msra.mxu0 0
  %813 = vmatprep.subr.bf16.mxu0 0
  %814 = vmatpush1.bf16.msra.mxu0 0
  %815 = vmatprep.subr.bf16.mxu0 0
  %816 = vmatpush1.bf16.msra.mxu0 0
  %817 = vmatprep.subr.bf16.mxu0 0
  %818 = vmatpush1.bf16.msra.mxu0 0
  %819 = vmatprep.subr.bf16.mxu0 0
  %820 = vmatpush1.bf16.msra.mxu0 0
  %821 = vmatprep.subr.bf16.mxu0 0
  %822 = vmatpush1.bf16.msra.mxu0 0
  %823 = vmatprep.subr.bf16.mxu0 0
  %824 = vmatpush1.bf16.msra.mxu0 0
  %825 = vmatprep.subr.bf16.mxu0 0
  %826 = vmatpush1.bf16.msra.mxu0 0
  %827 = vmatprep.subr.bf16.mxu0 0
  %828 = vmatpush1.bf16.msra.mxu0 0
  %829 = vmatprep.subr.bf16.mxu0 0
  %830 = vmatpush1.bf16.msra.mxu0 0
  %831 = vmatprep.subr.bf16.mxu0 0
  %832 = vmatpush1.bf16.msra.mxu0 0
  %833 = vmatprep.mubr.bf16.mxu0 0
  %834 = vmatmul.mubr.bf16.gmra.mrb[0].mxu0 %v799
  %v835 = vpop.f32.mrb[0].mxu0
  %v836 = vadd.f32 %v127, %v835
  %v837 = vpop.f32.mrb[0].mxu0
  %v838 = vpop.f32.mrb[0].mxu0
  %v839 = vadd.f32 %v128, %v838
  %v840 = vpop.f32.mrb[0].mxu0
  %841 = vdwg.mxu0
  %v842 = vsel %vm450, %v836, -inf
  %843 = vmax.xlane.f32.xlu0 %v842
  %v844 = vpop.xlane.xlu0 %843
  %v845 = vsel %vm450, %v839, -inf
  %846 = vmax.xlane.f32.xlu0 %v845
  %v847 = vpop.xlane.xlu0 %846
  %v848 = vsub.f32 %v836, %v844
  %v849 = vsub.f32 %v839, %v847
  %v850 = vmul.f32 %v848, 1.442695
  %v851 = vpow.pop %v850
  %v852 = vmul.f32 %v849, 1.442695
  %v853 = vpow.pop %v852
  %v854 = vsel %vm450, %v851, 0.0
  %855 = vadd.xlane.f32.xlu0 %v854
  %v856 = vpop.xlane.xlu0 %855
  %v857 = vsel %vm450, %v853, 0.0
  %858 = vadd.xlane.f32.xlu0 %v857
  %v859 = vpop.xlane.xlu0 %858
  %v860 = vrcp.pop %v856
  %v861 = vrcp.pop %v859
  %v862 = vmul.f32 %v851, %v860
  %v863 = vmul.f32 %v853, %v861
  %v864 = vpack.c.bf16 %v863, %v862
  %865 = vrot.lane.b32.xlu0 %v409, 80
  %v866 = vpop.permute.xlu0 %865
  %v869 = vsel %vm450, %v864, 0
  %871 = vmatprep.subr.bf16.mxu0 0
  %872 = vmatpush1.bf16.msra.mxu0 %v866
  %873 = vmatprep.subr.bf16.mxu0 0
  %874 = vmatpush1.bf16.msra.mxu0 0
  %875 = vmatprep.subr.bf16.mxu0 0
  %876 = vmatpush1.bf16.msra.mxu0 0
  %877 = vmatprep.subr.bf16.mxu0 0
  %878 = vmatpush1.bf16.msra.mxu0 0
  %879 = vmatprep.subr.bf16.mxu0 0
  %880 = vmatpush1.bf16.msra.mxu0 0
  %881 = vmatprep.subr.bf16.mxu0 0
  %882 = vmatpush1.bf16.msra.mxu0 0
  %883 = vmatprep.subr.bf16.mxu0 0
  %884 = vmatpush1.bf16.msra.mxu0 0
  %885 = vmatprep.subr.bf16.mxu0 0
  %886 = vmatpush1.bf16.msra.mxu0 0
  %887 = vmatprep.subr.bf16.mxu0 0
  %888 = vmatpush1.bf16.msra.mxu0 0
  %889 = vmatprep.subr.bf16.mxu0 0
  %890 = vmatpush1.bf16.msra.mxu0 0
  %891 = vmatprep.subr.bf16.mxu0 0
  %892 = vmatpush1.bf16.msra.mxu0 0
  %893 = vmatprep.subr.bf16.mxu0 0
  %894 = vmatpush1.bf16.msra.mxu0 0
  %895 = vmatprep.subr.bf16.mxu0 0
  %896 = vmatpush1.bf16.msra.mxu0 0
  %897 = vmatprep.subr.bf16.mxu0 0
  %898 = vmatpush1.bf16.msra.mxu0 0
  %899 = vmatprep.subr.bf16.mxu0 0
  %900 = vmatpush1.bf16.msra.mxu0 0
  %901 = vmatprep.subr.bf16.mxu0 0
  %902 = vmatpush1.bf16.msra.mxu0 0
  %903 = vmatprep.mubr.bf16.mxu0 0
  %904 = vmatmul.mubr.bf16.gmra.mrb[0].mxu0 %v869
  %v905 = vpop.f32.mrb[0].mxu0
  %v906 = vadd.f32 0.0, %v905
  %v907 = vpop.f32.mrb[0].mxu0
  %v908 = vpop.f32.mrb[0].mxu0
  %v909 = vadd.f32 0.0, %v908
  %v910 = vpop.f32.mrb[0].mxu0
  %911 = vdwg.mxu0
  %912 = vrot.lane.b32.xlu0 %v408, 64
  %v913 = vpop.permute.xlu0 %912
  %v915 = vsel %vm450, %v913, 0
  %917 = vmatprep.subr.bf16.mxu0 0
  %918 = vmatpush1.bf16.msra.mxu0 %v446
  %919 = vmatprep.subr.bf16.mxu0 0
  %920 = vmatpush1.bf16.msra.mxu0 0
  %921 = vmatprep.subr.bf16.mxu0 0
  %922 = vmatpush1.bf16.msra.mxu0 0
  %923 = vmatprep.subr.bf16.mxu0 0
  %924 = vmatpush1.bf16.msra.mxu0 0
  %925 = vmatprep.subr.bf16.mxu0 0
  %926 = vmatpush1.bf16.msra.mxu0 0
  %927 = vmatprep.subr.bf16.mxu0 0
  %928 = vmatpush1.bf16.msra.mxu0 0
  %929 = vmatprep.subr.bf16.mxu0 0
  %930 = vmatpush1.bf16.msra.mxu0 0
  %931 = vmatprep.subr.bf16.mxu0 0
  %932 = vmatpush1.bf16.msra.mxu0 0
  %933 = vmatprep.subr.bf16.mxu0 0
  %934 = vmatpush1.bf16.msra.mxu0 0
  %935 = vmatprep.subr.bf16.mxu0 0
  %936 = vmatpush1.bf16.msra.mxu0 0
  %937 = vmatprep.subr.bf16.mxu0 0
  %938 = vmatpush1.bf16.msra.mxu0 0
  %939 = vmatprep.subr.bf16.mxu0 0
  %940 = vmatpush1.bf16.msra.mxu0 0
  %941 = vmatprep.subr.bf16.mxu0 0
  %942 = vmatpush1.bf16.msra.mxu0 0
  %943 = vmatprep.subr.bf16.mxu0 0
  %944 = vmatpush1.bf16.msra.mxu0 0
  %945 = vmatprep.subr.bf16.mxu0 0
  %946 = vmatpush1.bf16.msra.mxu0 0
  %947 = vmatprep.subr.bf16.mxu0 0
  %948 = vmatpush1.bf16.msra.mxu0 0
  %949 = vmatprep.mubr.bf16.mxu0 0
  %950 = vmatmul.mubr.bf16.gmra.mrb[0].mxu0 %v915
  %v951 = vpop.f32.mrb[0].mxu0
  %v952 = vadd.f32 %v127, %v951
  %v953 = vpop.f32.mrb[0].mxu0
  %v954 = vpop.f32.mrb[0].mxu0
  %v955 = vadd.f32 %v128, %v954
  %v956 = vpop.f32.mrb[0].mxu0
  %957 = vdwg.mxu0
  %v958 = vsel %vm450, %v952, -inf
  %959 = vmax.xlane.f32.xlu0 %v958
  %v960 = vpop.xlane.xlu0 %959
  %v961 = vsel %vm450, %v955, -inf
  %962 = vmax.xlane.f32.xlu0 %v961
  %v963 = vpop.xlane.xlu0 %962
  %v964 = vsub.f32 %v952, %v960
  %v965 = vsub.f32 %v955, %v963
  %v966 = vmul.f32 %v964, 1.442695
  %v967 = vpow.pop %v966
  %v968 = vmul.f32 %v965, 1.442695
  %v969 = vpow.pop %v968
  %v970 = vsel %vm450, %v967, 0.0
  %971 = vadd.xlane.f32.xlu0 %v970
  %v972 = vpop.xlane.xlu0 %971
  %v973 = vsel %vm450, %v969, 0.0
  %974 = vadd.xlane.f32.xlu0 %v973
  %v975 = vpop.xlane.xlu0 %974
  %v976 = vrcp.pop %v972
  %v977 = vrcp.pop %v975
  %v978 = vmul.f32 %v967, %v976
  %v979 = vmul.f32 %v969, %v977
  %v980 = vpack.c.bf16 %v979, %v978
  %981 = vrot.lane.b32.xlu0 %v409, 64
  %v982 = vpop.permute.xlu0 %981
  %v985 = vsel %vm450, %v980, 0
  %987 = vmatprep.subr.bf16.mxu0 0
  %988 = vmatpush1.bf16.msra.mxu0 %v982
  %989 = vmatprep.subr.bf16.mxu0 0
  %990 = vmatpush1.bf16.msra.mxu0 0
  %991 = vmatprep.subr.bf16.mxu0 0
  %992 = vmatpush1.bf16.msra.mxu0 0
  %993 = vmatprep.subr.bf16.mxu0 0
  %994 = vmatpush1.bf16.msra.mxu0 0
  %995 = vmatprep.subr.bf16.mxu0 0
  %996 = vmatpush1.bf16.msra.mxu0 0
  %997 = vmatprep.subr.bf16.mxu0 0
  %998 = vmatpush1.bf16.msra.mxu0 0
  %999 = vmatprep.subr.bf16.mxu0 0
  %1000 = vmatpush1.bf16.msra.mxu0 0
  %1001 = vmatprep.subr.bf16.mxu0 0
  %1002 = vmatpush1.bf16.msra.mxu0 0
  %1003 = vmatprep.subr.bf16.mxu0 0
  %1004 = vmatpush1.bf16.msra.mxu0 0
  %1005 = vmatprep.subr.bf16.mxu0 0
  %1006 = vmatpush1.bf16.msra.mxu0 0
  %1007 = vmatprep.subr.bf16.mxu0 0
  %1008 = vmatpush1.bf16.msra.mxu0 0
  %1009 = vmatprep.subr.bf16.mxu0 0
  %1010 = vmatpush1.bf16.msra.mxu0 0
  %1011 = vmatprep.subr.bf16.mxu0 0
  %1012 = vmatpush1.bf16.msra.mxu0 0
  %1013 = vmatprep.subr.bf16.mxu0 0
  %1014 = vmatpush1.bf16.msra.mxu0 0
  %1015 = vmatprep.subr.bf16.mxu0 0
  %1016 = vmatpush1.bf16.msra.mxu0 0
  %1017 = vmatprep.subr.bf16.mxu0 0
  %1018 = vmatpush1.bf16.msra.mxu0 0
  %1019 = vmatprep.mubr.bf16.mxu0 0
  %1020 = vmatmul.mubr.bf16.gmra.mrb[0].mxu0 %v985
  %v1021 = vpop.f32.mrb[0].mxu0
  %v1022 = vadd.f32 0.0, %v1021
  %v1023 = vpop.f32.mrb[0].mxu0
  %v1024 = vpop.f32.mrb[0].mxu0
  %v1025 = vadd.f32 0.0, %v1024
  %v1026 = vpop.f32.mrb[0].mxu0
  %1027 = vdwg.mxu0
  %1028 = vrot.lane.b32.xlu0 %v408, 48
  %v1029 = vpop.permute.xlu0 %1028
  %v1031 = vsel %vm450, %v1029, 0
  %1033 = vmatprep.subr.bf16.mxu0 0
  %1034 = vmatpush1.bf16.msra.mxu0 %v447
  %1035 = vmatprep.subr.bf16.mxu0 0
  %1036 = vmatpush1.bf16.msra.mxu0 0
  %1037 = vmatprep.subr.bf16.mxu0 0
  %1038 = vmatpush1.bf16.msra.mxu0 0
  %1039 = vmatprep.subr.bf16.mxu0 0
  %1040 = vmatpush1.bf16.msra.mxu0 0
  %1041 = vmatprep.subr.bf16.mxu0 0
  %1042 = vmatpush1.bf16.msra.mxu0 0
  %1043 = vmatprep.subr.bf16.mxu0 0
  %1044 = vmatpush1.bf16.msra.mxu0 0
  %1045 = vmatprep.subr.bf16.mxu0 0
  %1046 = vmatpush1.bf16.msra.mxu0 0
  %1047 = vmatprep.subr.bf16.mxu0 0
  %1048 = vmatpush1.bf16.msra.mxu0 0
  %1049 = vmatprep.subr.bf16.mxu0 0
  %1050 = vmatpush1.bf16.msra.mxu0 0
  %1051 = vmatprep.subr.bf16.mxu0 0
  %1052 = vmatpush1.bf16.msra.mxu0 0
  %1053 = vmatprep.subr.bf16.mxu0 0
  %1054 = vmatpush1.bf16.msra.mxu0 0
  %1055 = vmatprep.subr.bf16.mxu0 0
  %1056 = vmatpush1.bf16.msra.mxu0 0
  %1057 = vmatprep.subr.bf16.mxu0 0
  %1058 = vmatpush1.bf16.msra.mxu0 0
  %1059 = vmatprep.subr.bf16.mxu0 0
  %1060 = vmatpush1.bf16.msra.mxu0 0
  %1061 = vmatprep.subr.bf16.mxu0 0
  %1062 = vmatpush1.bf16.msra.mxu0 0
  %1063 = vmatprep.subr.bf16.mxu0 0
  %1064 = vmatpush1.bf16.msra.mxu0 0
  %1065 = vmatprep.mubr.bf16.mxu0 0
  %1066 = vmatmul.mubr.bf16.gmra.mrb[0].mxu0 %v1031
  %v1067 = vpop.f32.mrb[0].mxu0
  %v1068 = vadd.f32 %v127, %v1067
  %v1069 = vpop.f32.mrb[0].mxu0
  %v1070 = vpop.f32.mrb[0].mxu0
  %v1071 = vadd.f32 %v128, %v1070
  %v1072 = vpop.f32.mrb[0].mxu0
  %1073 = vdwg.mxu0
  %v1074 = vsel %vm450, %v1068, -inf
  %1075 = vmax.xlane.f32.xlu0 %v1074
  %v1076 = vpop.xlane.xlu0 %1075
  %v1077 = vsel %vm450, %v1071, -inf
  %1078 = vmax.xlane.f32.xlu0 %v1077
  %v1079 = vpop.xlane.xlu0 %1078
  %v1080 = vsub.f32 %v1068, %v1076
  %v1081 = vsub.f32 %v1071, %v1079
  %v1082 = vmul.f32 %v1080, 1.442695
  %v1083 = vpow.pop %v1082
  %v1084 = vmul.f32 %v1081, 1.442695
  %v1085 = vpow.pop %v1084
  %v1086 = vsel %vm450, %v1083, 0.0
  %1087 = vadd.xlane.f32.xlu0 %v1086
  %v1088 = vpop.xlane.xlu0 %1087
  %v1089 = vsel %vm450, %v1085, 0.0
  %1090 = vadd.xlane.f32.xlu0 %v1089
  %v1091 = vpop.xlane.xlu0 %1090
  %v1092 = vrcp.pop %v1088
  %v1093 = vrcp.pop %v1091
  %v1094 = vmul.f32 %v1083, %v1092
  %v1095 = vmul.f32 %v1085, %v1093
  %v1096 = vpack.c.bf16 %v1095, %v1094
  %1097 = vrot.lane.b32.xlu0 %v409, 48
  %v1098 = vpop.permute.xlu0 %1097
  %v1101 = vsel %vm450, %v1096, 0
  %1103 = vmatprep.subr.bf16.mxu0 0
  %1104 = vmatpush1.bf16.msra.mxu0 %v1098
  %1105 = vmatprep.subr.bf16.mxu0 0
  %1106 = vmatpush1.bf16.msra.mxu0 0
  %1107 = vmatprep.subr.bf16.mxu0 0
  %1108 = vmatpush1.bf16.msra.mxu0 0
  %1109 = vmatprep.subr.bf16.mxu0 0
  %1110 = vmatpush1.bf16.msra.mxu0 0
  %1111 = vmatprep.subr.bf16.mxu0 0
  %1112 = vmatpush1.bf16.msra.mxu0 0
  %1113 = vmatprep.subr.bf16.mxu0 0
  %1114 = vmatpush1.bf16.msra.mxu0 0
  %1115 = vmatprep.subr.bf16.mxu0 0
  %1116 = vmatpush1.bf16.msra.mxu0 0
  %1117 = vmatprep.subr.bf16.mxu0 0
  %1118 = vmatpush1.bf16.msra.mxu0 0
  %1119 = vmatprep.subr.bf16.mxu0 0
  %1120 = vmatpush1.bf16.msra.mxu0 0
  %1121 = vmatprep.subr.bf16.mxu0 0
  %1122 = vmatpush1.bf16.msra.mxu0 0
  %1123 = vmatprep.subr.bf16.mxu0 0
  %1124 = vmatpush1.bf16.msra.mxu0 0
  %1125 = vmatprep.subr.bf16.mxu0 0
  %1126 = vmatpush1.bf16.msra.mxu0 0
  %1127 = vmatprep.subr.bf16.mxu0 0
  %1128 = vmatpush1.bf16.msra.mxu0 0
  %1129 = vmatprep.subr.bf16.mxu0 0
  %1130 = vmatpush1.bf16.msra.mxu0 0
  %1131 = vmatprep.subr.bf16.mxu0 0
  %1132 = vmatpush1.bf16.msra.mxu0 0
  %1133 = vmatprep.subr.bf16.mxu0 0
  %1134 = vmatpush1.bf16.msra.mxu0 0
  %1135 = vmatprep.mubr.bf16.mxu0 0
  %1136 = vmatmul.mubr.bf16.gmra.mrb[0].mxu0 %v1101
  %v1137 = vpop.f32.mrb[0].mxu0
  %v1138 = vadd.f32 0.0, %v1137
  %v1139 = vpop.f32.mrb[0].mxu0
  %v1140 = vpop.f32.mrb[0].mxu0
  %v1141 = vadd.f32 0.0, %v1140
  %v1142 = vpop.f32.mrb[0].mxu0
  %1143 = vdwg.mxu0
  %1144 = vrot.lane.b32.xlu0 %v408, 32
  %v1145 = vpop.permute.xlu0 %1144
  %v1147 = vsel %vm450, %v1145, 0
  %1149 = vmatprep.subr.bf16.mxu0 0
  %1150 = vmatpush1.bf16.msra.mxu0 %v448
  %1151 = vmatprep.subr.bf16.mxu0 0
  %1152 = vmatpush1.bf16.msra.mxu0 0
  %1153 = vmatprep.subr.bf16.mxu0 0
  %1154 = vmatpush1.bf16.msra.mxu0 0
  %1155 = vmatprep.subr.bf16.mxu0 0
  %1156 = vmatpush1.bf16.msra.mxu0 0
  %1157 = vmatprep.subr.bf16.mxu0 0
  %1158 = vmatpush1.bf16.msra.mxu0 0
  %1159 = vmatprep.subr.bf16.mxu0 0
  %1160 = vmatpush1.bf16.msra.mxu0 0
  %1161 = vmatprep.subr.bf16.mxu0 0
  %1162 = vmatpush1.bf16.msra.mxu0 0
  %1163 = vmatprep.subr.bf16.mxu0 0
  %1164 = vmatpush1.bf16.msra.mxu0 0
  %1165 = vmatprep.subr.bf16.mxu0 0
  %1166 = vmatpush1.bf16.msra.mxu0 0
  %1167 = vmatprep.subr.bf16.mxu0 0
  %1168 = vmatpush1.bf16.msra.mxu0 0
  %1169 = vmatprep.subr.bf16.mxu0 0
  %1170 = vmatpush1.bf16.msra.mxu0 0
  %1171 = vmatprep.subr.bf16.mxu0 0
  %1172 = vmatpush1.bf16.msra.mxu0 0
  %1173 = vmatprep.subr.bf16.mxu0 0
  %1174 = vmatpush1.bf16.msra.mxu0 0
  %1175 = vmatprep.subr.bf16.mxu0 0
  %1176 = vmatpush1.bf16.msra.mxu0 0
  %1177 = vmatprep.subr.bf16.mxu0 0
  %1178 = vmatpush1.bf16.msra.mxu0 0
  %1179 = vmatprep.subr.bf16.mxu0 0
  %1180 = vmatpush1.bf16.msra.mxu0 0
  %1181 = vmatprep.mubr.bf16.mxu0 0
  %1182 = vmatmul.mubr.bf16.gmra.mrb[0].mxu0 %v1147
  %v1183 = vpop.f32.mrb[0].mxu0
  %v1184 = vadd.f32 %v127, %v1183
  %v1185 = vpop.f32.mrb[0].mxu0
  %v1186 = vpop.f32.mrb[0].mxu0
  %v1187 = vadd.f32 %v128, %v1186
  %v1188 = vpop.f32.mrb[0].mxu0
  %1189 = vdwg.mxu0
  %v1190 = vsel %vm450, %v1184, -inf
  %1191 = vmax.xlane.f32.xlu0 %v1190
  %v1192 = vpop.xlane.xlu0 %1191
  %v1193 = vsel %vm450, %v1187, -inf
  %1194 = vmax.xlane.f32.xlu0 %v1193
  %v1195 = vpop.xlane.xlu0 %1194
  %v1196 = vsub.f32 %v1184, %v1192
  %v1197 = vsub.f32 %v1187, %v1195
  %v1198 = vmul.f32 %v1196, 1.442695
  %v1199 = vpow.pop %v1198
  %v1200 = vmul.f32 %v1197, 1.442695
  %v1201 = vpow.pop %v1200
  %v1202 = vsel %vm450, %v1199, 0.0
  %1203 = vadd.xlane.f32.xlu0 %v1202
  %v1204 = vpop.xlane.xlu0 %1203
  %v1205 = vsel %vm450, %v1201, 0.0
  %1206 = vadd.xlane.f32.xlu0 %v1205
  %v1207 = vpop.xlane.xlu0 %1206
  %v1208 = vrcp.pop %v1204
  %v1209 = vrcp.pop %v1207
  %v1210 = vmul.f32 %v1199, %v1208
  %v1211 = vmul.f32 %v1201, %v1209
  %v1212 = vpack.c.bf16 %v1211, %v1210
  %1213 = vrot.lane.b32.xlu0 %v409, 32
  %v1214 = vpop.permute.xlu0 %1213
  %v1217 = vsel %vm450, %v1212, 0
  %1219 = vmatprep.subr.bf16.mxu0 0
  %1220 = vmatpush1.bf16.msra.mxu0 %v1214
  %1221 = vmatprep.subr.bf16.mxu0 0
  %1222 = vmatpush1.bf16.msra.mxu0 0
  %1223 = vmatprep.subr.bf16.mxu0 0
  %1224 = vmatpush1.bf16.msra.mxu0 0
  %1225 = vmatprep.subr.bf16.mxu0 0
  %1226 = vmatpush1.bf16.msra.mxu0 0
  %1227 = vmatprep.subr.bf16.mxu0 0
  %1228 = vmatpush1.bf16.msra.mxu0 0
  %1229 = vmatprep.subr.bf16.mxu0 0
  %1230 = vmatpush1.bf16.msra.mxu0 0
  %1231 = vmatprep.subr.bf16.mxu0 0
  %1232 = vmatpush1.bf16.msra.mxu0 0
  %1233 = vmatprep.subr.bf16.mxu0 0
  %1234 = vmatpush1.bf16.msra.mxu0 0
  %1235 = vmatprep.subr.bf16.mxu0 0
  %1236 = vmatpush1.bf16.msra.mxu0 0
  %1237 = vmatprep.subr.bf16.mxu0 0
  %1238 = vmatpush1.bf16.msra.mxu0 0
  %1239 = vmatprep.subr.bf16.mxu0 0
  %1240 = vmatpush1.bf16.msra.mxu0 0
  %1241 = vmatprep.subr.bf16.mxu0 0
  %1242 = vmatpush1.bf16.msra.mxu0 0
  %1243 = vmatprep.subr.bf16.mxu0 0
  %1244 = vmatpush1.bf16.msra.mxu0 0
  %1245 = vmatprep.subr.bf16.mxu0 0
  %1246 = vmatpush1.bf16.msra.mxu0 0
  %1247 = vmatprep.subr.bf16.mxu0 0
  %1248 = vmatpush1.bf16.msra.mxu0 0
  %1249 = vmatprep.subr.bf16.mxu0 0
  %1250 = vmatpush1.bf16.msra.mxu0 0
  %1251 = vmatprep.mubr.bf16.mxu0 0
  %1252 = vmatmul.mubr.bf16.gmra.mrb[0].mxu0 %v1217
  %v1253 = vpop.f32.mrb[0].mxu0
  %v1254 = vadd.f32 0.0, %v1253
  %v1255 = vpop.f32.mrb[0].mxu0
  %v1256 = vpop.f32.mrb[0].mxu0
  %v1257 = vadd.f32 0.0, %v1256
  %v1258 = vpop.f32.mrb[0].mxu0
  %1259 = vdwg.mxu0
  %1260 = vrot.lane.b32.xlu0 %v408, 16
  %v1261 = vpop.permute.xlu0 %1260
  %v1263 = vsel %vm450, %v1261, 0
  %1265 = vmatprep.subr.bf16.mxu0 0
  %1266 = vmatpush1.bf16.msra.mxu0 %v449
  %1267 = vmatprep.subr.bf16.mxu0 0
  %1268 = vmatpush1.bf16.msra.mxu0 0
  %1269 = vmatprep.subr.bf16.mxu0 0
  %1270 = vmatpush1.bf16.msra.mxu0 0
  %1271 = vmatprep.subr.bf16.mxu0 0
  %1272 = vmatpush1.bf16.msra.mxu0 0
  %1273 = vmatprep.subr.bf16.mxu0 0
  %1274 = vmatpush1.bf16.msra.mxu0 0
  %1275 = vmatprep.subr.bf16.mxu0 0
  %1276 = vmatpush1.bf16.msra.mxu0 0
  %1277 = vmatprep.subr.bf16.mxu0 0
  %1278 = vmatpush1.bf16.msra.mxu0 0
  %1279 = vmatprep.subr.bf16.mxu0 0
  %1280 = vmatpush1.bf16.msra.mxu0 0
  %1281 = vmatprep.subr.bf16.mxu0 0
  %1282 = vmatpush1.bf16.msra.mxu0 0
  %1283 = vmatprep.subr.bf16.mxu0 0
  %1284 = vmatpush1.bf16.msra.mxu0 0
  %1285 = vmatprep.subr.bf16.mxu0 0
  %1286 = vmatpush1.bf16.msra.mxu0 0
  %1287 = vmatprep.subr.bf16.mxu0 0
  %1288 = vmatpush1.bf16.msra.mxu0 0
  %1289 = vmatprep.subr.bf16.mxu0 0
  %1290 = vmatpush1.bf16.msra.mxu0 0
  %1291 = vmatprep.subr.bf16.mxu0 0
  %1292 = vmatpush1.bf16.msra.mxu0 0
  %1293 = vmatprep.subr.bf16.mxu0 0
  %1294 = vmatpush1.bf16.msra.mxu0 0
  %1295 = vmatprep.subr.bf16.mxu0 0
  %1296 = vmatpush1.bf16.msra.mxu0 0
  %1297 = vmatprep.mubr.bf16.mxu0 0
  %1298 = vmatmul.mubr.bf16.gmra.mrb[0].mxu0 %v1263
  %v1299 = vpop.f32.mrb[0].mxu0
  %v1300 = vadd.f32 %v127, %v1299
  %v1301 = vpop.f32.mrb[0].mxu0
  %v1302 = vpop.f32.mrb[0].mxu0
  %v1303 = vadd.f32 %v128, %v1302
  %v1304 = vpop.f32.mrb[0].mxu0
  %1305 = vdwg.mxu0
  %v1306 = vsel %vm450, %v1300, -inf
  %1307 = vmax.xlane.f32.xlu0 %v1306
  %v1308 = vpop.xlane.xlu0 %1307
  %v1309 = vsel %vm450, %v1303, -inf
  %1310 = vmax.xlane.f32.xlu0 %v1309
  %v1311 = vpop.xlane.xlu0 %1310
  %v1312 = vsub.f32 %v1300, %v1308
  %v1313 = vsub.f32 %v1303, %v1311
  %v1314 = vmul.f32 %v1312, 1.442695
  %v1315 = vpow.pop %v1314
  %v1316 = vmul.f32 %v1313, 1.442695
  %v1317 = vpow.pop %v1316
  %v1318 = vsel %vm450, %v1315, 0.0
  %1319 = vadd.xlane.f32.xlu0 %v1318
  %v1320 = vpop.xlane.xlu0 %1319
  %v1321 = vsel %vm450, %v1317, 0.0
  %1322 = vadd.xlane.f32.xlu0 %v1321
  %v1323 = vpop.xlane.xlu0 %1322
  %v1324 = vrcp.pop %v1320
  %v1325 = vrcp.pop %v1323
  %v1326 = vmul.f32 %v1315, %v1324
  %v1327 = vmul.f32 %v1317, %v1325
  %v1328 = vpack.c.bf16 %v1327, %v1326
  %1329 = vrot.lane.b32.xlu0 %v409, 16
  %v1330 = vpop.permute.xlu0 %1329
  %v1333 = vsel %vm450, %v1328, 0
  %1335 = vmatprep.subr.bf16.mxu0 0
  %1336 = vmatpush1.bf16.msra.mxu0 %v1330
  %1337 = vmatprep.subr.bf16.mxu0 0
  %1338 = vmatpush1.bf16.msra.mxu0 0
  %1339 = vmatprep.subr.bf16.mxu0 0
  %1340 = vmatpush1.bf16.msra.mxu0 0
  %1341 = vmatprep.subr.bf16.mxu0 0
  %1342 = vmatpush1.bf16.msra.mxu0 0
  %1343 = vmatprep.subr.bf16.mxu0 0
  %1344 = vmatpush1.bf16.msra.mxu0 0
  %1345 = vmatprep.subr.bf16.mxu0 0
  %1346 = vmatpush1.bf16.msra.mxu0 0
  %1347 = vmatprep.subr.bf16.mxu0 0
  %1348 = vmatpush1.bf16.msra.mxu0 0
  %1349 = vmatprep.subr.bf16.mxu0 0
  %1350 = vmatpush1.bf16.msra.mxu0 0
  %1351 = vmatprep.subr.bf16.mxu0 0
  %1352 = vmatpush1.bf16.msra.mxu0 0
  %1353 = vmatprep.subr.bf16.mxu0 0
  %1354 = vmatpush1.bf16.msra.mxu0 0
  %1355 = vmatprep.subr.bf16.mxu0 0
  %1356 = vmatpush1.bf16.msra.mxu0 0
  %1357 = vmatprep.subr.bf16.mxu0 0
  %1358 = vmatpush1.bf16.msra.mxu0 0
  %1359 = vmatprep.subr.bf16.mxu0 0
  %1360 = vmatpush1.bf16.msra.mxu0 0
  %1361 = vmatprep.subr.bf16.mxu0 0
  %1362 = vmatpush1.bf16.msra.mxu0 0
  %1363 = vmatprep.subr.bf16.mxu0 0
  %1364 = vmatpush1.bf16.msra.mxu0 0
  %1365 = vmatprep.subr.bf16.mxu0 0
  %1366 = vmatpush1.bf16.msra.mxu0 0
  %1367 = vmatprep.mubr.bf16.mxu0 0
  %1368 = vmatmul.mubr.bf16.gmra.mrb[0].mxu0 %v1333
  %v1369 = vpop.f32.mrb[0].mxu0
  %v1370 = vadd.f32 0.0, %v1369
  %v1371 = vpop.f32.mrb[0].mxu0
  %v1372 = vpop.f32.mrb[0].mxu0
  %v1373 = vadd.f32 0.0, %v1372
  %v1374 = vpop.f32.mrb[0].mxu0
  %1375 = vdwg.mxu0
  %1378 = vrot.lane.b32.xlu0 %v674, 16
  %v1379 = vpop.permute.xlu0 %1378
  %1380 = vrot.lane.b32.xlu0 %v677, 16
  %v1381 = vpop.permute.xlu0 %1380
  %1386 = vrot.lane.b32.xlu0 %v790, 32
  %v1387 = vpop.permute.xlu0 %1386
  %1388 = vrot.lane.b32.xlu0 %v793, 32
  %v1389 = vpop.permute.xlu0 %1388
  %1394 = vrot.lane.b32.xlu0 %v906, 48
  %v1395 = vpop.permute.xlu0 %1394
  %1396 = vrot.lane.b32.xlu0 %v909, 48
  %v1397 = vpop.permute.xlu0 %1396
  %1402 = vrot.lane.b32.xlu0 %v1022, 64
  %v1403 = vpop.permute.xlu0 %1402
  %1404 = vrot.lane.b32.xlu0 %v1025, 64
  %v1405 = vpop.permute.xlu0 %1404
  %1410 = vrot.lane.b32.xlu0 %v1138, 80
  %v1411 = vpop.permute.xlu0 %1410
  %1412 = vrot.lane.b32.xlu0 %v1141, 80
  %v1413 = vpop.permute.xlu0 %1412
  %1418 = vrot.lane.b32.xlu0 %v1254, 96
  %v1419 = vpop.permute.xlu0 %1418
  %1420 = vrot.lane.b32.xlu0 %v1257, 96
  %v1421 = vpop.permute.xlu0 %1420
  %1426 = vrot.lane.b32.xlu0 %v1370, 112
  %v1427 = vpop.permute.xlu0 %1426
  %1428 = vrot.lane.b32.xlu0 %v1373, 112
  %v1429 = vpop.permute.xlu0 %1428
  %v1432 = vsel %vm450, %v556, %v1379
  %v1433 = vsel %vm450, %v559, %v1381
  %vm1434 = vcmask 261120
  %v1435 = vsel %vm1434, %v1432, %v1387
  %v1436 = vsel %vm1434, %v1433, %v1389
  %vm1437 = vcmask 392192
  %v1438 = vsel %vm1437, %v1435, %v1395
  %v1439 = vsel %vm1437, %v1436, %v1397
  %vm1440 = vcmask 523264
  %v1441 = vsel %vm1440, %v1438, %v1403
  %v1442 = vsel %vm1440, %v1439, %v1405
  %vm1443 = vcmask 654336
  %v1444 = vsel %vm1443, %v1441, %v1411
  %v1445 = vsel %vm1443, %v1442, %v1413
  %vm1446 = vcmask 785408
  %v1447 = vsel %vm1446, %v1444, %v1419
  %v1448 = vsel %vm1446, %v1445, %v1421
  %vm1449 = vcmask 916480
  %v1450 = vsel %vm1449, %v1447, %v1427
  %v1451 = vsel %vm1449, %v1448, %v1429
  %v1452 = vpack.c.bf16 %v1451, %v1450
  %v1453 = vlaneseq
  %v1454 = vshrl.u32 %v1453, 7
  %v1455 = vsub.s32 0, %v1454
  %v1456 = vrot.slane %v407, %v1455
  %v1473 = vunpack.c.l.b16 %v391
  %v1474 = vunpack.c.l.b16 %v392
  %v1475 = vunpack.c.l.b16 %v393
  %v1476 = vunpack.c.l.b16 %v394
  %v1477 = vunpack.c.l.b16 %v395
  %v1478 = vunpack.c.l.b16 %v396
  %v1479 = vunpack.c.l.b16 %v397
  %v1480 = vunpack.c.l.b16 %v398
  %v1481 = vunpack.c.l.b16 %v399
  %v1482 = vunpack.c.l.b16 %v400
  %v1483 = vunpack.c.l.b16 %v401
  %v1484 = vunpack.c.l.b16 %v402
  %v1485 = vunpack.c.l.b16 %v403
  %v1486 = vunpack.c.l.b16 %v404
  %v1487 = vunpack.c.l.b16 %v405
  %v1488 = vunpack.c.l.b16 %v406
  %v1489 = vpack.c.b16 %v1474, %v1473
  %v1490 = vpack.c.b16 %v1476, %v1475
  %v1491 = vpack.c.b16 %v1478, %v1477
  %v1492 = vpack.c.b16 %v1480, %v1479
  %v1493 = vpack.c.b16 %v1482, %v1481
  %v1494 = vpack.c.b16 %v1484, %v1483
  %v1495 = vpack.c.b16 %v1486, %v1485
  %v1496 = vpack.c.b16 %v1488, %v1487
  %1505 = vmatprep.subr.bf16.mxu0 0
  %1506 = vmatpush1.bf16.msra.mxu0 %v1489
  %1507 = vmatprep.subr.bf16.mxu0 0
  %1508 = vmatpush1.bf16.msra.mxu0 %v1490
  %1509 = vmatprep.subr.bf16.mxu0 0
  %1510 = vmatpush1.bf16.msra.mxu0 %v1491
  %1511 = vmatprep.subr.bf16.mxu0 0
  %1512 = vmatpush1.bf16.msra.mxu0 %v1492
  %1513 = vmatprep.subr.bf16.mxu0 0
  %1514 = vmatpush1.bf16.msra.mxu0 %v1493
  %1515 = vmatprep.subr.bf16.mxu0 0
  %1516 = vmatpush1.bf16.msra.mxu0 %v1494
  %1517 = vmatprep.subr.bf16.mxu0 0
  %1518 = vmatpush1.bf16.msra.mxu0 %v1495
  %1519 = vmatprep.subr.bf16.mxu0 0
  %1520 = vmatpush1.bf16.msra.mxu0 %v1496
  %1521 = vmatprep.subr.bf16.mxu0 0
  %1522 = vmatpush1.bf16.msra.mxu0 0
  %1523 = vmatprep.subr.bf16.mxu0 0
  %1524 = vmatpush1.bf16.msra.mxu0 0
  %1525 = vmatprep.subr.bf16.mxu0 0
  %1526 = vmatpush1.bf16.msra.mxu0 0
  %1527 = vmatprep.subr.bf16.mxu0 0
  %1528 = vmatpush1.bf16.msra.mxu0 0
  %1529 = vmatprep.subr.bf16.mxu0 0
  %1530 = vmatpush1.bf16.msra.mxu0 0
  %1531 = vmatprep.subr.bf16.mxu0 0
  %1532 = vmatpush1.bf16.msra.mxu0 0
  %1533 = vmatprep.subr.bf16.mxu0 0
  %1534 = vmatpush1.bf16.msra.mxu0 0
  %1535 = vmatprep.subr.bf16.mxu0 0
  %1536 = vmatpush1.bf16.msra.mxu0 0
  %1537 = vmatprep.mubr.bf16.mxu0 0
  %1538 = vmatmul.mubr.bf16.gmra.mrb[0].mxu0 %v1452
  %v1539 = vpop.f32.mrb[0].mxu0
  %v1540 = vadd.f32 %v1456, %v1539
  %v1541 = vpop.f32.mrb[0].mxu0
  %v1542 = vpop.f32.mrb[0].mxu0
  %v1543 = vadd.f32 %v1456, %v1542
  %v1544 = vpop.f32.mrb[0].mxu0
  %1545 = vdwg.mxu0
  %v1546 = vadd.f32 %v115, %v1540
  %v1547 = vadd.f32 %v120, %v1543
  %v1548 = vld [vmem:[%s7 + $0x2c] sm:$0x1]
  %v1549 = vld [vmem:[%s7 + $0x30] sm:$0x1]
  %1550 = vadd.xlane.f32.xlu0 %v1546
  %v1551 = vpop.xlane.xlu0 %1550
  %1552 = vadd.xlane.f32.xlu0 %v1547
  %v1553 = vpop.xlane.xlu0 %1552
  %v1554 = vrcp.pop 128.0
  %v1555 = vmul.f32 %v1551, %v1554
  %v1556 = vmul.f32 %v1553, %v1554
  %v1557 = vsub.f32 %v1546, %v1555
  %v1558 = vsub.f32 %v1547, %v1556
  %v1559 = vmul.f32 %v1557, %v1557
  %v1560 = vmul.f32 %v1558, %v1558
  %1561 = vadd.xlane.f32.xlu0 %v1559
  %v1562 = vpop.xlane.xlu0 %1561
  %1563 = vadd.xlane.f32.xlu0 %v1560
  %v1564 = vpop.xlane.xlu0 %1563
  %v1565 = vmul.f32 %v1562, %v1554
  %v1566 = vmul.f32 %v1564, %v1554
  %v1567 = vadd.f32 %v1565, 1e-05
  %v1568 = vadd.f32 %v1566, 1e-05
  %v1569 = vrsqrt.pop %v1567
  %v1570 = vrsqrt.pop %v1568
  %v1571 = vmul.f32 %v1557, %v1569
  %v1572 = vmul.f32 %v1558, %v1570
  %v1573 = vlaneseq
  %v1574 = vshrl.u32 %v1573, 7
  %v1575 = vsub.s32 0, %v1574
  %v1576 = vrot.slane %v1548, %v1575
  %v1577 = vmul.f32 %v1571, %v1576
  %v1578 = vmul.f32 %v1572, %v1576
  %v1579 = vlaneseq
  %v1580 = vshrl.u32 %v1579, 7
  %v1581 = vsub.s32 0, %v1580
  %v1582 = vrot.slane %v1549, %v1581
  %v1583 = vadd.f32 %v1577, %v1582
  %v1584 = vadd.f32 %v1578, %v1582
  %v1585 = vld [vmem:[%s5 + $0x10] sm:$0xf]
  %v1586 = vld [vmem:[%s5 + $0x38] sm:$0xf]
  %v1587 = vld [vmem:[%s5 + $0x60] sm:$0xf]
  %v1588 = vld [vmem:[%s5 + $0x88] sm:$0xf]
  %v1589 = vld [vmem:[%s5 + $0xb0] sm:$0xf]
  %v1590 = vld [vmem:[%s5 + $0xd8] sm:$0xf]
  %v1591 = vld [vmem:[%s5 + $0x100] sm:$0xf]
  %v1592 = vld [vmem:[%s5 + $0x128] sm:$0xf]
  %v1593 = vld [vmem:[%s5 + $0x150] sm:$0xf]
  %v1594 = vld [vmem:[%s5 + $0x178] sm:$0xf]
  %v1595 = vld [vmem:[%s5 + $0x1a0] sm:$0xf]
  %v1596 = vld [vmem:[%s5 + $0x1c8] sm:$0xf]
  %v1597 = vld [vmem:[%s5 + $0x1f0] sm:$0xf]
  %v1598 = vld [vmem:[%s5 + $0x218] sm:$0xf]
  %v1599 = vld [vmem:[%s5 + $0x240] sm:$0xf]
  %v1600 = vld [vmem:[%s5 + $0x268] sm:$0xf]
  %v1601 = vpack.c.bf16 %v1584, %v1583
  %v1602 = vld [vmem:[%s7 + $0x10] sm:$0x1]
  %v1603 = vlaneseq
  %v1604 = vshrl.u32 %v1603, 7
  %v1605 = vsub.s32 0, %v1604
  %v1606 = vrot.slane %v1602, %v1605
  %v1623 = vunpack.c.l.b16 %v1585
  %v1624 = vunpack.c.l.b16 %v1586
  %v1625 = vunpack.c.l.b16 %v1587
  %v1626 = vunpack.c.l.b16 %v1588
  %v1627 = vunpack.c.l.b16 %v1589
  %v1628 = vunpack.c.l.b16 %v1590
  %v1629 = vunpack.c.l.b16 %v1591
  %v1630 = vunpack.c.l.b16 %v1592
  %v1631 = vunpack.c.l.b16 %v1593
  %v1632 = vunpack.c.l.b16 %v1594
  %v1633 = vunpack.c.l.b16 %v1595
  %v1634 = vunpack.c.l.b16 %v1596
  %v1635 = vunpack.c.l.b16 %v1597
  %v1636 = vunpack.c.l.b16 %v1598
  %v1637 = vunpack.c.l.b16 %v1599
  %v1638 = vunpack.c.l.b16 %v1600
  %v1639 = vpack.c.b16 %v1624, %v1623
  %v1640 = vpack.c.b16 %v1626, %v1625
  %v1641 = vpack.c.b16 %v1628, %v1627
  %v1642 = vpack.c.b16 %v1630, %v1629
  %v1643 = vpack.c.b16 %v1632, %v1631
  %v1644 = vpack.c.b16 %v1634, %v1633
  %v1645 = vpack.c.b16 %v1636, %v1635
  %v1646 = vpack.c.b16 %v1638, %v1637
  %1655 = vmatprep.subr.bf16.mxu0 0
  %1656 = vmatpush1.bf16.msra.mxu0 %v1639
  %1657 = vmatprep.subr.bf16.mxu0 0
  %1658 = vmatpush1.bf16.msra.mxu0 %v1640
  %1659 = vmatprep.subr.bf16.mxu0 0
  %1660 = vmatpush1.bf16.msra.mxu0 %v1641
  %1661 = vmatprep.subr.bf16.mxu0 0
  %1662 = vmatpush1.bf16.msra.mxu0 %v1642
  %1663 = vmatprep.subr.bf16.mxu0 0
  %1664 = vmatpush1.bf16.msra.mxu0 %v1643
  %1665 = vmatprep.subr.bf16.mxu0 0
  %1666 = vmatpush1.bf16.msra.mxu0 %v1644
  %1667 = vmatprep.subr.bf16.mxu0 0
  %1668 = vmatpush1.bf16.msra.mxu0 %v1645
  %1669 = vmatprep.subr.bf16.mxu0 0
  %1670 = vmatpush1.bf16.msra.mxu0 %v1646
  %1671 = vmatprep.subr.bf16.mxu0 0
  %1672 = vmatpush1.bf16.msra.mxu0 0
  %1673 = vmatprep.subr.bf16.mxu0 0
  %1674 = vmatpush1.bf16.msra.mxu0 0
  %1675 = vmatprep.subr.bf16.mxu0 0
  %1676 = vmatpush1.bf16.msra.mxu0 0
  %1677 = vmatprep.subr.bf16.mxu0 0
  %1678 = vmatpush1.bf16.msra.mxu0 0
  %1679 = vmatprep.subr.bf16.mxu0 0
  %1680 = vmatpush1.bf16.msra.mxu0 0
  %1681 = vmatprep.subr.bf16.mxu0 0
  %1682 = vmatpush1.bf16.msra.mxu0 0
  %1683 = vmatprep.subr.bf16.mxu0 0
  %1684 = vmatpush1.bf16.msra.mxu0 0
  %1685 = vmatprep.subr.bf16.mxu0 0
  %1686 = vmatpush1.bf16.msra.mxu0 0
  %1687 = vmatprep.mubr.bf16.mxu0 0
  %1688 = vmatmul.mubr.bf16.gmra.mrb[0].mxu0 %v1601
  %v1689 = vpop.f32.mrb[0].mxu0
  %v1690 = vadd.f32 %v1606, %v1689
  %v1691 = vpop.f32.mrb[0].mxu0
  %v1692 = vpop.f32.mrb[0].mxu0
  %v1693 = vadd.f32 %v1606, %v1692
  %v1694 = vpop.f32.mrb[0].mxu0
  %1695 = vdwg.mxu0
  %v1696 = vld [vmem:[%s5 + $0x14] sm:$0xff]
  %v1697 = vld [vmem:[%s5 + $0x3c] sm:$0xff]
  %v1698 = vld [vmem:[%s5 + $0x64] sm:$0xff]
  %v1699 = vld [vmem:[%s5 + $0x8c] sm:$0xff]
  %v1700 = vld [vmem:[%s5 + $0xb4] sm:$0xff]
  %v1701 = vld [vmem:[%s5 + $0xdc] sm:$0xff]
  %v1702 = vld [vmem:[%s5 + $0x104] sm:$0xff]
  %v1703 = vld [vmem:[%s5 + $0x12c] sm:$0xff]
  %v1704 = vld [vmem:[%s5 + $0x154] sm:$0xff]
  %v1705 = vld [vmem:[%s5 + $0x17c] sm:$0xff]
  %v1706 = vld [vmem:[%s5 + $0x1a4] sm:$0xff]
  %v1707 = vld [vmem:[%s5 + $0x1cc] sm:$0xff]
  %v1708 = vld [vmem:[%s5 + $0x1f4] sm:$0xff]
  %v1709 = vld [vmem:[%s5 + $0x21c] sm:$0xff]
  %v1710 = vld [vmem:[%s5 + $0x244] sm:$0xff]
  %v1711 = vld [vmem:[%s5 + $0x26c] sm:$0xff]
  %v1712 = vpack.c.bf16 %v124, %v123
  %v1713 = vpack.c.bf16 %v126, %v125
  %s1714 = scalar_lea.vmem %s7, 20
  %v1715 = vld [vmem:[%s1714] ss:$4 sm:$0x3]
  %v1717 = vlaneseq
  %v1718 = vshrl.u32 %v1717, 7
  %v1719 = vsub.s32 0, %v1718
  %v1720 = vrot.slane %v1715, %v1719
  %v1721 = vlaneseq
  %v1722 = vshrl.u32 %v1721, 7
  %v1723 = vsub.s32 1, %v1722
  %v1724 = vrot.slane %v1715, %v1723
  %v1743 = vunpack.c.l.b16 %v1696
  %v1744 = vunpack.c.h.b16 %v1696
  %v1745 = vunpack.c.l.b16 %v1697
  %v1746 = vunpack.c.h.b16 %v1697
  %v1747 = vunpack.c.l.b16 %v1698
  %v1748 = vunpack.c.h.b16 %v1698
  %v1749 = vunpack.c.l.b16 %v1699
  %v1750 = vunpack.c.h.b16 %v1699
  %v1751 = vunpack.c.l.b16 %v1700
  %v1752 = vunpack.c.h.b16 %v1700
  %v1753 = vunpack.c.l.b16 %v1701
  %v1754 = vunpack.c.h.b16 %v1701
  %v1755 = vunpack.c.l.b16 %v1702
  %v1756 = vunpack.c.h.b16 %v1702
  %v1757 = vunpack.c.l.b16 %v1703
  %v1758 = vunpack.c.h.b16 %v1703
  %v1759 = vunpack.c.l.b16 %v1704
  %v1760 = vunpack.c.h.b16 %v1704
  %v1761 = vunpack.c.l.b16 %v1705
  %v1762 = vunpack.c.h.b16 %v1705
  %v1763 = vunpack.c.l.b16 %v1706
  %v1764 = vunpack.c.h.b16 %v1706
  %v1765 = vunpack.c.l.b16 %v1707
  %v1766 = vunpack.c.h.b16 %v1707
  %v1767 = vunpack.c.l.b16 %v1708
  %v1768 = vunpack.c.h.b16 %v1708
  %v1769 = vunpack.c.l.b16 %v1709
  %v1770 = vunpack.c.h.b16 %v1709
  %v1771 = vunpack.c.l.b16 %v1710
  %v1772 = vunpack.c.h.b16 %v1710
  %v1773 = vunpack.c.l.b16 %v1711
  %v1774 = vunpack.c.h.b16 %v1711
  %v1775 = vpack.c.b16 %v1745, %v1743
  %v1776 = vpack.c.b16 %v1746, %v1744
  %v1777 = vpack.c.b16 %v1749, %v1747
  %v1778 = vpack.c.b16 %v1750, %v1748
  %v1779 = vpack.c.b16 %v1753, %v1751
  %v1780 = vpack.c.b16 %v1754, %v1752
  %v1781 = vpack.c.b16 %v1757, %v1755
  %v1782 = vpack.c.b16 %v1758, %v1756
  %v1783 = vpack.c.b16 %v1761, %v1759
  %v1784 = vpack.c.b16 %v1762, %v1760
  %v1785 = vpack.c.b16 %v1765, %v1763
  %v1786 = vpack.c.b16 %v1766, %v1764
  %v1787 = vpack.c.b16 %v1769, %v1767
  %v1788 = vpack.c.b16 %v1770, %v1768
  %v1789 = vpack.c.b16 %v1773, %v1771
  %v1790 = vpack.c.b16 %v1774, %v1772
  %1807 = vmatprep.subr.bf16.mxu0 %v1776
  %1808 = vmatpush1.bf16.msra.mxu0 %v1775
  %1809 = vmatprep.subr.bf16.mxu0 %v1778
  %1810 = vmatpush1.bf16.msra.mxu0 %v1777
  %1811 = vmatprep.subr.bf16.mxu0 %v1780
  %1812 = vmatpush1.bf16.msra.mxu0 %v1779
  %1813 = vmatprep.subr.bf16.mxu0 %v1782
  %1814 = vmatpush1.bf16.msra.mxu0 %v1781
  %1815 = vmatprep.subr.bf16.mxu0 %v1784
  %1816 = vmatpush1.bf16.msra.mxu0 %v1783
  %1817 = vmatprep.subr.bf16.mxu0 %v1786
  %1818 = vmatpush1.bf16.msra.mxu0 %v1785
  %1819 = vmatprep.subr.bf16.mxu0 %v1788
  %1820 = vmatpush1.bf16.msra.mxu0 %v1787
  %1821 = vmatprep.subr.bf16.mxu0 %v1790
  %1822 = vmatpush1.bf16.msra.mxu0 %v1789
  %1823 = vmatprep.subr.bf16.mxu0 0
  %1824 = vmatpush1.bf16.msra.mxu0 0
  %1825 = vmatprep.subr.bf16.mxu0 0
  %1826 = vmatpush1.bf16.msra.mxu0 0
  %1827 = vmatprep.subr.bf16.mxu0 0
  %1828 = vmatpush1.bf16.msra.mxu0 0
  %1829 = vmatprep.subr.bf16.mxu0 0
  %1830 = vmatpush1.bf16.msra.mxu0 0
  %1831 = vmatprep.subr.bf16.mxu0 0
  %1832 = vmatpush1.bf16.msra.mxu0 0
  %1833 = vmatprep.subr.bf16.mxu0 0
  %1834 = vmatpush1.bf16.msra.mxu0 0
  %1835 = vmatprep.subr.bf16.mxu0 0
  %1836 = vmatpush1.bf16.msra.mxu0 0
  %1837 = vmatprep.subr.bf16.mxu0 0
  %1838 = vmatpush1.bf16.msra.mxu0 0
  %1839 = vmatprep.mubr.bf16.mxu0 0
  %1840 = vmatmul.mubr.bf16.gmra.mrb[0].mxu0 %v1712
  %v1841 = vpop.f32.mrb[0].mxu0
  %v1842 = vadd.f32 %v1720, %v1841
  %v1843 = vpop.f32.mrb[0].mxu0
  %v1844 = vadd.f32 %v1724, %v1843
  %v1845 = vpop.f32.mrb[0].mxu0
  %v1846 = vadd.f32 %v1720, %v1845
  %v1847 = vpop.f32.mrb[0].mxu0
  %v1848 = vadd.f32 %v1724, %v1847
  %1849 = vmatprep.mubr.bf16.mxu0 0
  %1850 = vmatmul.mubr.bf16.gmra.mrb[0].mxu0 %v1713
  %v1851 = vpop.f32.mrb[0].mxu0
  %v1852 = vadd.f32 %v1720, %v1851
  %v1853 = vpop.f32.mrb[0].mxu0
  %v1854 = vadd.f32 %v1724, %v1853
  %v1855 = vpop.f32.mrb[0].mxu0
  %v1856 = vadd.f32 %v1720, %v1855
  %v1857 = vpop.f32.mrb[0].mxu0
  %v1858 = vadd.f32 %v1724, %v1857
  %1859 = vdwg.mxu0
  %v1860 = vld [vmem:[%s5 + $0x1c] sm:$0xf]
  %v1861 = vld [vmem:[%s5 + $0x44] sm:$0xf]
  %v1862 = vld [vmem:[%s5 + $0x6c] sm:$0xf]
  %v1863 = vld [vmem:[%s5 + $0x94] sm:$0xf]
  %v1864 = vld [vmem:[%s5 + $0xbc] sm:$0xf]
  %v1865 = vld [vmem:[%s5 + $0xe4] sm:$0xf]
  %v1866 = vld [vmem:[%s5 + $0x10c] sm:$0xf]
  %v1867 = vld [vmem:[%s5 + $0x134] sm:$0xf]
  %v1868 = vld [vmem:[%s5 + $0x15c] sm:$0xf]
  %v1869 = vld [vmem:[%s5 + $0x184] sm:$0xf]
  %v1870 = vld [vmem:[%s5 + $0x1ac] sm:$0xf]
  %v1871 = vld [vmem:[%s5 + $0x1d4] sm:$0xf]
  %v1872 = vld [vmem:[%s5 + $0x1fc] sm:$0xf]
  %v1873 = vld [vmem:[%s5 + $0x224] sm:$0xf]
  %v1874 = vld [vmem:[%s5 + $0x24c] sm:$0xf]
  %v1875 = vld [vmem:[%s5 + $0x274] sm:$0xf]
  %v1876 = vld [vmem:[%s7 + $0x1c] sm:$0x1]
  %v1877 = vpack.c.bf16 %v1693, %v1690
  %v1878 = vpack.c.bf16 %v1848, %v1844
  %v1879 = vpack.c.bf16 %v1858, %v1854
  %1880 = vxpose.xlu0.b32.start [1/16] %v1842, 128
  %1881 = vxpose.xlu0.b32.cont [2/16] %v1846, 128
  %1882 = vxpose.xlu0.b32.cont [3/16] %v1852, 128
  %1883 = vxpose.xlu0.b32.cont [4/16] %v1856, 128
  %1884 = vxpose.xlu0.b32.cont [5/16] 0.0, 128
  %1885 = vxpose.xlu0.b32.cont [6/16] 0.0, 128
  %1886 = vxpose.xlu0.b32.cont [7/16] 0.0, 128
  %1887 = vxpose.xlu0.b32.cont [8/16] 0.0, 128
  %1888 = vxpose.xlu0.b32.cont [9/16] 0.0, 128
  %1889 = vxpose.xlu0.b32.cont [10/16] 0.0, 128
  %1890 = vxpose.xlu0.b32.cont [11/16] 0.0, 128
  %1891 = vxpose.xlu0.b32.cont [12/16] 0.0, 128
  %1892 = vxpose.xlu0.b32.cont [13/16] 0.0, 128
  %1893 = vxpose.xlu0.b32.cont [14/16] 0.0, 128
  %1894 = vxpose.xlu0.b32.cont [15/16] 0.0, 128
  %1895 = vxpose.xlu0.b32.end [16/16] 0.0, 128
  %v1896 = vpop.trf.xlu0
  %v1897 = vpop.trf.xlu0
  %v1898 = vpop.trf.xlu0
  %v1899 = vpop.trf.xlu0
  %v1900 = vpop.trf.xlu0
  %v1901 = vpop.trf.xlu0
  %v1902 = vpop.trf.xlu0
  %v1903 = vpop.trf.xlu0
  %v1904 = vpop.trf.xlu0
  %v1905 = vpop.trf.xlu0
  %v1906 = vpop.trf.xlu0
  %v1907 = vpop.trf.xlu0
  %v1908 = vpop.trf.xlu0
  %v1909 = vpop.trf.xlu0
  %v1910 = vpop.trf.xlu0
  %v1911 = vpop.trf.xlu0
  %v1912 = vpack.c.bf16 %v1897, %v1896
  %v1913 = vpack.c.bf16 %v1899, %v1898
  %v1914 = vpack.c.bf16 %v1901, %v1900
  %v1915 = vpack.c.bf16 %v1903, %v1902
  %v1916 = vpack.c.bf16 %v1905, %v1904
  %v1917 = vpack.c.bf16 %v1907, %v1906
  %v1918 = vpack.c.bf16 %v1909, %v1908
  %v1919 = vpack.c.bf16 %v1911, %v1910
  %1922 = vrot.lane.b32.xlu0 %v127, 112
  %v1923 = vpop.permute.xlu0 %1922
  %1924 = vrot.lane.b32.xlu0 %v128, 112
  %v1925 = vpop.permute.xlu0 %1924
  %v1929 = vsel %vm450, %v1877, 0
  %1931 = vmatprep.subr.bf16.mxu0 0
  %1932 = vmatpush1.bf16.msra.mxu0 %v1912
  %1933 = vmatprep.subr.bf16.mxu0 0
  %1934 = vmatpush1.bf16.msra.mxu0 0
  %1935 = vmatprep.subr.bf16.mxu0 0
  %1936 = vmatpush1.bf16.msra.mxu0 0
  %1937 = vmatprep.subr.bf16.mxu0 0
  %1938 = vmatpush1.bf16.msra.mxu0 0
  %1939 = vmatprep.subr.bf16.mxu0 0
  %1940 = vmatpush1.bf16.msra.mxu0 0
  %1941 = vmatprep.subr.bf16.mxu0 0
  %1942 = vmatpush1.bf16.msra.mxu0 0
  %1943 = vmatprep.subr.bf16.mxu0 0
  %1944 = vmatpush1.bf16.msra.mxu0 0
  %1945 = vmatprep.subr.bf16.mxu0 0
  %1946 = vmatpush1.bf16.msra.mxu0 0
  %1947 = vmatprep.subr.bf16.mxu0 0
  %1948 = vmatpush1.bf16.msra.mxu0 0
  %1949 = vmatprep.subr.bf16.mxu0 0
  %1950 = vmatpush1.bf16.msra.mxu0 0
  %1951 = vmatprep.subr.bf16.mxu0 0
  %1952 = vmatpush1.bf16.msra.mxu0 0
  %1953 = vmatprep.subr.bf16.mxu0 0
  %1954 = vmatpush1.bf16.msra.mxu0 0
  %1955 = vmatprep.subr.bf16.mxu0 0
  %1956 = vmatpush1.bf16.msra.mxu0 0
  %1957 = vmatprep.subr.bf16.mxu0 0
  %1958 = vmatpush1.bf16.msra.mxu0 0
  %1959 = vmatprep.subr.bf16.mxu0 0
  %1960 = vmatpush1.bf16.msra.mxu0 0
  %1961 = vmatprep.subr.bf16.mxu0 0
  %1962 = vmatpush1.bf16.msra.mxu0 0
  %1963 = vmatprep.mubr.bf16.mxu0 0
  %1964 = vmatmul.mubr.bf16.gmra.mrb[0].mxu0 %v1929
  %v1965 = vpop.f32.mrb[0].mxu0
  %v1966 = vadd.f32 %v1923, %v1965
  %v1967 = vpop.f32.mrb[0].mxu0
  %v1968 = vpop.f32.mrb[0].mxu0
  %v1969 = vadd.f32 %v1925, %v1968
  %v1970 = vpop.f32.mrb[0].mxu0
  %1971 = vdwg.mxu0
  %v1972 = vsel %vm1434, %v1966, -inf
  %1973 = vmax.xlane.f32.xlu0 %v1972
  %v1974 = vpop.xlane.xlu0 %1973
  %v1975 = vsel %vm1434, %v1969, -inf
  %1976 = vmax.xlane.f32.xlu0 %v1975
  %v1977 = vpop.xlane.xlu0 %1976
  %v1978 = vsub.f32 %v1966, %v1974
  %v1979 = vsub.f32 %v1969, %v1977
  %v1980 = vmul.f32 %v1978, 1.442695
  %v1981 = vpow.pop %v1980
  %v1982 = vmul.f32 %v1979, 1.442695
  %v1983 = vpow.pop %v1982
  %v1984 = vsel %vm1434, %v1981, 0.0
  %1985 = vadd.xlane.f32.xlu0 %v1984
  %v1986 = vpop.xlane.xlu0 %1985
  %v1987 = vsel %vm1434, %v1983, 0.0
  %1988 = vadd.xlane.f32.xlu0 %v1987
  %v1989 = vpop.xlane.xlu0 %1988
  %v1990 = vrcp.pop %v1986
  %v1991 = vrcp.pop %v1989
  %v1992 = vmul.f32 %v1981, %v1990
  %v1993 = vmul.f32 %v1983, %v1991
  %v1994 = vpack.c.bf16 %v1993, %v1992
  %v1996 = vsel %vm1434, %v1994, 0
  %1998 = vmatprep.subr.bf16.mxu0 0
  %1999 = vmatpush1.bf16.msra.mxu0 %v1878
  %2000 = vmatprep.subr.bf16.mxu0 0
  %2001 = vmatpush1.bf16.msra.mxu0 %v1879
  %2002 = vmatprep.subr.bf16.mxu0 0
  %2003 = vmatpush1.bf16.msra.mxu0 0
  %2004 = vmatprep.subr.bf16.mxu0 0
  %2005 = vmatpush1.bf16.msra.mxu0 0
  %2006 = vmatprep.subr.bf16.mxu0 0
  %2007 = vmatpush1.bf16.msra.mxu0 0
  %2008 = vmatprep.subr.bf16.mxu0 0
  %2009 = vmatpush1.bf16.msra.mxu0 0
  %2010 = vmatprep.subr.bf16.mxu0 0
  %2011 = vmatpush1.bf16.msra.mxu0 0
  %2012 = vmatprep.subr.bf16.mxu0 0
  %2013 = vmatpush1.bf16.msra.mxu0 0
  %2014 = vmatprep.subr.bf16.mxu0 0
  %2015 = vmatpush1.bf16.msra.mxu0 0
  %2016 = vmatprep.subr.bf16.mxu0 0
  %2017 = vmatpush1.bf16.msra.mxu0 0
  %2018 = vmatprep.subr.bf16.mxu0 0
  %2019 = vmatpush1.bf16.msra.mxu0 0
  %2020 = vmatprep.subr.bf16.mxu0 0
  %2021 = vmatpush1.bf16.msra.mxu0 0
  %2022 = vmatprep.subr.bf16.mxu0 0
  %2023 = vmatpush1.bf16.msra.mxu0 0
  %2024 = vmatprep.subr.bf16.mxu0 0
  %2025 = vmatpush1.bf16.msra.mxu0 0
  %2026 = vmatprep.subr.bf16.mxu0 0
  %2027 = vmatpush1.bf16.msra.mxu0 0
  %2028 = vmatprep.subr.bf16.mxu0 0
  %2029 = vmatpush1.bf16.msra.mxu0 0
  %2030 = vmatprep.mubr.bf16.mxu0 0
  %2031 = vmatmul.mubr.bf16.gmra.mrb[0].mxu0 %v1996
  %v2032 = vpop.f32.mrb[0].mxu0
  %v2033 = vadd.f32 0.0, %v2032
  %v2034 = vpop.f32.mrb[0].mxu0
  %v2035 = vpop.f32.mrb[0].mxu0
  %v2036 = vadd.f32 0.0, %v2035
  %v2037 = vpop.f32.mrb[0].mxu0
  %2038 = vdwg.mxu0
  %2040 = vrot.lane.b32.xlu0 %v1877, 112
  %v2041 = vpop.permute.xlu0 %2040
  %v2043 = vsel %vm450, %v2041, 0
  %2045 = vmatprep.subr.bf16.mxu0 0
  %2046 = vmatpush1.bf16.msra.mxu0 %v1913
  %2047 = vmatprep.subr.bf16.mxu0 0
  %2048 = vmatpush1.bf16.msra.mxu0 0
  %2049 = vmatprep.subr.bf16.mxu0 0
  %2050 = vmatpush1.bf16.msra.mxu0 0
  %2051 = vmatprep.subr.bf16.mxu0 0
  %2052 = vmatpush1.bf16.msra.mxu0 0
  %2053 = vmatprep.subr.bf16.mxu0 0
  %2054 = vmatpush1.bf16.msra.mxu0 0
  %2055 = vmatprep.subr.bf16.mxu0 0
  %2056 = vmatpush1.bf16.msra.mxu0 0
  %2057 = vmatprep.subr.bf16.mxu0 0
  %2058 = vmatpush1.bf16.msra.mxu0 0
  %2059 = vmatprep.subr.bf16.mxu0 0
  %2060 = vmatpush1.bf16.msra.mxu0 0
  %2061 = vmatprep.subr.bf16.mxu0 0
  %2062 = vmatpush1.bf16.msra.mxu0 0
  %2063 = vmatprep.subr.bf16.mxu0 0
  %2064 = vmatpush1.bf16.msra.mxu0 0
  %2065 = vmatprep.subr.bf16.mxu0 0
  %2066 = vmatpush1.bf16.msra.mxu0 0
  %2067 = vmatprep.subr.bf16.mxu0 0
  %2068 = vmatpush1.bf16.msra.mxu0 0
  %2069 = vmatprep.subr.bf16.mxu0 0
  %2070 = vmatpush1.bf16.msra.mxu0 0
  %2071 = vmatprep.subr.bf16.mxu0 0
  %2072 = vmatpush1.bf16.msra.mxu0 0
  %2073 = vmatprep.subr.bf16.mxu0 0
  %2074 = vmatpush1.bf16.msra.mxu0 0
  %2075 = vmatprep.subr.bf16.mxu0 0
  %2076 = vmatpush1.bf16.msra.mxu0 0
  %2077 = vmatprep.mubr.bf16.mxu0 0
  %2078 = vmatmul.mubr.bf16.gmra.mrb[0].mxu0 %v2043
  %v2079 = vpop.f32.mrb[0].mxu0
  %v2080 = vadd.f32 %v1923, %v2079
  %v2081 = vpop.f32.mrb[0].mxu0
  %v2082 = vpop.f32.mrb[0].mxu0
  %v2083 = vadd.f32 %v1925, %v2082
  %v2084 = vpop.f32.mrb[0].mxu0
  %2085 = vdwg.mxu0
  %v2086 = vsel %vm1434, %v2080, -inf
  %2087 = vmax.xlane.f32.xlu0 %v2086
  %v2088 = vpop.xlane.xlu0 %2087
  %v2089 = vsel %vm1434, %v2083, -inf
  %2090 = vmax.xlane.f32.xlu0 %v2089
  %v2091 = vpop.xlane.xlu0 %2090
  %v2092 = vsub.f32 %v2080, %v2088
  %v2093 = vsub.f32 %v2083, %v2091
  %v2094 = vmul.f32 %v2092, 1.442695
  %v2095 = vpow.pop %v2094
  %v2096 = vmul.f32 %v2093, 1.442695
  %v2097 = vpow.pop %v2096
  %v2098 = vsel %vm1434, %v2095, 0.0
  %2099 = vadd.xlane.f32.xlu0 %v2098
  %v2100 = vpop.xlane.xlu0 %2099
  %v2101 = vsel %vm1434, %v2097, 0.0
  %2102 = vadd.xlane.f32.xlu0 %v2101
  %v2103 = vpop.xlane.xlu0 %2102
  %v2104 = vrcp.pop %v2100
  %v2105 = vrcp.pop %v2103
  %v2106 = vmul.f32 %v2095, %v2104
  %v2107 = vmul.f32 %v2097, %v2105
  %v2108 = vpack.c.bf16 %v2107, %v2106
  %2111 = vrot.lane.b32.xlu0 %v1878, 112
  %v2112 = vpop.permute.xlu0 %2111
  %2113 = vrot.lane.b32.xlu0 %v1879, 112
  %v2114 = vpop.permute.xlu0 %2113
  %v2118 = vsel %vm1434, %v2108, 0
  %2120 = vmatprep.subr.bf16.mxu0 0
  %2121 = vmatpush1.bf16.msra.mxu0 %v2112
  %2122 = vmatprep.subr.bf16.mxu0 0
  %2123 = vmatpush1.bf16.msra.mxu0 %v2114
  %2124 = vmatprep.subr.bf16.mxu0 0
  %2125 = vmatpush1.bf16.msra.mxu0 0
  %2126 = vmatprep.subr.bf16.mxu0 0
  %2127 = vmatpush1.bf16.msra.mxu0 0
  %2128 = vmatprep.subr.bf16.mxu0 0
  %2129 = vmatpush1.bf16.msra.mxu0 0
  %2130 = vmatprep.subr.bf16.mxu0 0
  %2131 = vmatpush1.bf16.msra.mxu0 0
  %2132 = vmatprep.subr.bf16.mxu0 0
  %2133 = vmatpush1.bf16.msra.mxu0 0
  %2134 = vmatprep.subr.bf16.mxu0 0
  %2135 = vmatpush1.bf16.msra.mxu0 0
  %2136 = vmatprep.subr.bf16.mxu0 0
  %2137 = vmatpush1.bf16.msra.mxu0 0
  %2138 = vmatprep.subr.bf16.mxu0 0
  %2139 = vmatpush1.bf16.msra.mxu0 0
  %2140 = vmatprep.subr.bf16.mxu0 0
  %2141 = vmatpush1.bf16.msra.mxu0 0
  %2142 = vmatprep.subr.bf16.mxu0 0
  %2143 = vmatpush1.bf16.msra.mxu0 0
  %2144 = vmatprep.subr.bf16.mxu0 0
  %2145 = vmatpush1.bf16.msra.mxu0 0
  %2146 = vmatprep.subr.bf16.mxu0 0
  %2147 = vmatpush1.bf16.msra.mxu0 0
  %2148 = vmatprep.subr.bf16.mxu0 0
  %2149 = vmatpush1.bf16.msra.mxu0 0
  %2150 = vmatprep.subr.bf16.mxu0 0
  %2151 = vmatpush1.bf16.msra.mxu0 0
  %2152 = vmatprep.mubr.bf16.mxu0 0
  %2153 = vmatmul.mubr.bf16.gmra.mrb[0].mxu0 %v2118
  %v2154 = vpop.f32.mrb[0].mxu0
  %v2155 = vadd.f32 0.0, %v2154
  %v2156 = vpop.f32.mrb[0].mxu0
  %v2157 = vpop.f32.mrb[0].mxu0
  %v2158 = vadd.f32 0.0, %v2157
  %v2159 = vpop.f32.mrb[0].mxu0
  %2160 = vdwg.mxu0
  %2161 = vrot.lane.b32.xlu0 %v1877, 96
  %v2162 = vpop.permute.xlu0 %2161
  %v2164 = vsel %vm450, %v2162, 0
  %2166 = vmatprep.subr.bf16.mxu0 0
  %2167 = vmatpush1.bf16.msra.mxu0 %v1914
  %2168 = vmatprep.subr.bf16.mxu0 0
  %2169 = vmatpush1.bf16.msra.mxu0 0
  %2170 = vmatprep.subr.bf16.mxu0 0
  %2171 = vmatpush1.bf16.msra.mxu0 0
  %2172 = vmatprep.subr.bf16.mxu0 0
  %2173 = vmatpush1.bf16.msra.mxu0 0
  %2174 = vmatprep.subr.bf16.mxu0 0
  %2175 = vmatpush1.bf16.msra.mxu0 0
  %2176 = vmatprep.subr.bf16.mxu0 0
  %2177 = vmatpush1.bf16.msra.mxu0 0
  %2178 = vmatprep.subr.bf16.mxu0 0
  %2179 = vmatpush1.bf16.msra.mxu0 0
  %2180 = vmatprep.subr.bf16.mxu0 0
  %2181 = vmatpush1.bf16.msra.mxu0 0
  %2182 = vmatprep.subr.bf16.mxu0 0
  %2183 = vmatpush1.bf16.msra.mxu0 0
  %2184 = vmatprep.subr.bf16.mxu0 0
  %2185 = vmatpush1.bf16.msra.mxu0 0
  %2186 = vmatprep.subr.bf16.mxu0 0
  %2187 = vmatpush1.bf16.msra.mxu0 0
  %2188 = vmatprep.subr.bf16.mxu0 0
  %2189 = vmatpush1.bf16.msra.mxu0 0
  %2190 = vmatprep.subr.bf16.mxu0 0
  %2191 = vmatpush1.bf16.msra.mxu0 0
  %2192 = vmatprep.subr.bf16.mxu0 0
  %2193 = vmatpush1.bf16.msra.mxu0 0
  %2194 = vmatprep.subr.bf16.mxu0 0
  %2195 = vmatpush1.bf16.msra.mxu0 0
  %2196 = vmatprep.subr.bf16.mxu0 0
  %2197 = vmatpush1.bf16.msra.mxu0 0
  %2198 = vmatprep.mubr.bf16.mxu0 0
  %2199 = vmatmul.mubr.bf16.gmra.mrb[0].mxu0 %v2164
  %v2200 = vpop.f32.mrb[0].mxu0
  %v2201 = vadd.f32 %v1923, %v2200
  %v2202 = vpop.f32.mrb[0].mxu0
  %v2203 = vpop.f32.mrb[0].mxu0
  %v2204 = vadd.f32 %v1925, %v2203
  %v2205 = vpop.f32.mrb[0].mxu0
  %2206 = vdwg.mxu0
  %v2207 = vsel %vm1434, %v2201, -inf
  %2208 = vmax.xlane.f32.xlu0 %v2207
  %v2209 = vpop.xlane.xlu0 %2208
  %v2210 = vsel %vm1434, %v2204, -inf
  %2211 = vmax.xlane.f32.xlu0 %v2210
  %v2212 = vpop.xlane.xlu0 %2211
  %v2213 = vsub.f32 %v2201, %v2209
  %v2214 = vsub.f32 %v2204, %v2212
  %v2215 = vmul.f32 %v2213, 1.442695
  %v2216 = vpow.pop %v2215
  %v2217 = vmul.f32 %v2214, 1.442695
  %v2218 = vpow.pop %v2217
  %v2219 = vsel %vm1434, %v2216, 0.0
  %2220 = vadd.xlane.f32.xlu0 %v2219
  %v2221 = vpop.xlane.xlu0 %2220
  %v2222 = vsel %vm1434, %v2218, 0.0
  %2223 = vadd.xlane.f32.xlu0 %v2222
  %v2224 = vpop.xlane.xlu0 %2223
  %v2225 = vrcp.pop %v2221
  %v2226 = vrcp.pop %v2224
  %v2227 = vmul.f32 %v2216, %v2225
  %v2228 = vmul.f32 %v2218, %v2226
  %v2229 = vpack.c.bf16 %v2228, %v2227
  %2230 = vrot.lane.b32.xlu0 %v1878, 96
  %v2231 = vpop.permute.xlu0 %2230
  %2232 = vrot.lane.b32.xlu0 %v1879, 96
  %v2233 = vpop.permute.xlu0 %2232
  %v2237 = vsel %vm1434, %v2229, 0
  %2239 = vmatprep.subr.bf16.mxu0 0
  %2240 = vmatpush1.bf16.msra.mxu0 %v2231
  %2241 = vmatprep.subr.bf16.mxu0 0
  %2242 = vmatpush1.bf16.msra.mxu0 %v2233
  %2243 = vmatprep.subr.bf16.mxu0 0
  %2244 = vmatpush1.bf16.msra.mxu0 0
  %2245 = vmatprep.subr.bf16.mxu0 0
  %2246 = vmatpush1.bf16.msra.mxu0 0
  %2247 = vmatprep.subr.bf16.mxu0 0
  %2248 = vmatpush1.bf16.msra.mxu0 0
  %2249 = vmatprep.subr.bf16.mxu0 0
  %2250 = vmatpush1.bf16.msra.mxu0 0
  %2251 = vmatprep.subr.bf16.mxu0 0
  %2252 = vmatpush1.bf16.msra.mxu0 0
  %2253 = vmatprep.subr.bf16.mxu0 0
  %2254 = vmatpush1.bf16.msra.mxu0 0
  %2255 = vmatprep.subr.bf16.mxu0 0
  %2256 = vmatpush1.bf16.msra.mxu0 0
  %2257 = vmatprep.subr.bf16.mxu0 0
  %2258 = vmatpush1.bf16.msra.mxu0 0
  %2259 = vmatprep.subr.bf16.mxu0 0
  %2260 = vmatpush1.bf16.msra.mxu0 0
  %2261 = vmatprep.subr.bf16.mxu0 0
  %2262 = vmatpush1.bf16.msra.mxu0 0
  %2263 = vmatprep.subr.bf16.mxu0 0
  %2264 = vmatpush1.bf16.msra.mxu0 0
  %2265 = vmatprep.subr.bf16.mxu0 0
  %2266 = vmatpush1.bf16.msra.mxu0 0
  %2267 = vmatprep.subr.bf16.mxu0 0
  %2268 = vmatpush1.bf16.msra.mxu0 0
  %2269 = vmatprep.subr.bf16.mxu0 0
  %2270 = vmatpush1.bf16.msra.mxu0 0
  %2271 = vmatprep.mubr.bf16.mxu0 0
  %2272 = vmatmul.mubr.bf16.gmra.mrb[0].mxu0 %v2237
  %v2273 = vpop.f32.mrb[0].mxu0
  %v2274 = vadd.f32 0.0, %v2273
  %v2275 = vpop.f32.mrb[0].mxu0
  %v2276 = vpop.f32.mrb[0].mxu0
  %v2277 = vadd.f32 0.0, %v2276
  %v2278 = vpop.f32.mrb[0].mxu0
  %2279 = vdwg.mxu0
  %2280 = vrot.lane.b32.xlu0 %v1877, 80
  %v2281 = vpop.permute.xlu0 %2280
  %v2283 = vsel %vm450, %v2281, 0
  %2285 = vmatprep.subr.bf16.mxu0 0
  %2286 = vmatpush1.bf16.msra.mxu0 %v1915
  %2287 = vmatprep.subr.bf16.mxu0 0
  %2288 = vmatpush1.bf16.msra.mxu0 0
  %2289 = vmatprep.subr.bf16.mxu0 0
  %2290 = vmatpush1.bf16.msra.mxu0 0
  %2291 = vmatprep.subr.bf16.mxu0 0
  %2292 = vmatpush1.bf16.msra.mxu0 0
  %2293 = vmatprep.subr.bf16.mxu0 0
  %2294 = vmatpush1.bf16.msra.mxu0 0
  %2295 = vmatprep.subr.bf16.mxu0 0
  %2296 = vmatpush1.bf16.msra.mxu0 0
  %2297 = vmatprep.subr.bf16.mxu0 0
  %2298 = vmatpush1.bf16.msra.mxu0 0
  %2299 = vmatprep.subr.bf16.mxu0 0
  %2300 = vmatpush1.bf16.msra.mxu0 0
  %2301 = vmatprep.subr.bf16.mxu0 0
  %2302 = vmatpush1.bf16.msra.mxu0 0
  %2303 = vmatprep.subr.bf16.mxu0 0
  %2304 = vmatpush1.bf16.msra.mxu0 0
  %2305 = vmatprep.subr.bf16.mxu0 0
  %2306 = vmatpush1.bf16.msra.mxu0 0
  %2307 = vmatprep.subr.bf16.mxu0 0
  %2308 = vmatpush1.bf16.msra.mxu0 0
  %2309 = vmatprep.subr.bf16.mxu0 0
  %2310 = vmatpush1.bf16.msra.mxu0 0
  %2311 = vmatprep.subr.bf16.mxu0 0
  %2312 = vmatpush1.bf16.msra.mxu0 0
  %2313 = vmatprep.subr.bf16.mxu0 0
  %2314 = vmatpush1.bf16.msra.mxu0 0
  %2315 = vmatprep.subr.bf16.mxu0 0
  %2316 = vmatpush1.bf16.msra.mxu0 0
  %2317 = vmatprep.mubr.bf16.mxu0 0
  %2318 = vmatmul.mubr.bf16.gmra.mrb[0].mxu0 %v2283
  %v2319 = vpop.f32.mrb[0].mxu0
  %v2320 = vadd.f32 %v1923, %v2319
  %v2321 = vpop.f32.mrb[0].mxu0
  %v2322 = vpop.f32.mrb[0].mxu0
  %v2323 = vadd.f32 %v1925, %v2322
  %v2324 = vpop.f32.mrb[0].mxu0
  %2325 = vdwg.mxu0
  %v2326 = vsel %vm1434, %v2320, -inf
  %2327 = vmax.xlane.f32.xlu0 %v2326
  %v2328 = vpop.xlane.xlu0 %2327
  %v2329 = vsel %vm1434, %v2323, -inf
  %2330 = vmax.xlane.f32.xlu0 %v2329
  %v2331 = vpop.xlane.xlu0 %2330
  %v2332 = vsub.f32 %v2320, %v2328
  %v2333 = vsub.f32 %v2323, %v2331
  %v2334 = vmul.f32 %v2332, 1.442695
  %v2335 = vpow.pop %v2334
  %v2336 = vmul.f32 %v2333, 1.442695
  %v2337 = vpow.pop %v2336
  %v2338 = vsel %vm1434, %v2335, 0.0
  %2339 = vadd.xlane.f32.xlu0 %v2338
  %v2340 = vpop.xlane.xlu0 %2339
  %v2341 = vsel %vm1434, %v2337, 0.0
  %2342 = vadd.xlane.f32.xlu0 %v2341
  %v2343 = vpop.xlane.xlu0 %2342
  %v2344 = vrcp.pop %v2340
  %v2345 = vrcp.pop %v2343
  %v2346 = vmul.f32 %v2335, %v2344
  %v2347 = vmul.f32 %v2337, %v2345
  %v2348 = vpack.c.bf16 %v2347, %v2346
  %2349 = vrot.lane.b32.xlu0 %v1878, 80
  %v2350 = vpop.permute.xlu0 %2349
  %2351 = vrot.lane.b32.xlu0 %v1879, 80
  %v2352 = vpop.permute.xlu0 %2351
  %v2356 = vsel %vm1434, %v2348, 0
  %2358 = vmatprep.subr.bf16.mxu0 0
  %2359 = vmatpush1.bf16.msra.mxu0 %v2350
  %2360 = vmatprep.subr.bf16.mxu0 0
  %2361 = vmatpush1.bf16.msra.mxu0 %v2352
  %2362 = vmatprep.subr.bf16.mxu0 0
  %2363 = vmatpush1.bf16.msra.mxu0 0
  %2364 = vmatprep.subr.bf16.mxu0 0
  %2365 = vmatpush1.bf16.msra.mxu0 0
  %2366 = vmatprep.subr.bf16.mxu0 0
  %2367 = vmatpush1.bf16.msra.mxu0 0
  %2368 = vmatprep.subr.bf16.mxu0 0
  %2369 = vmatpush1.bf16.msra.mxu0 0
  %2370 = vmatprep.subr.bf16.mxu0 0
  %2371 = vmatpush1.bf16.msra.mxu0 0
  %2372 = vmatprep.subr.bf16.mxu0 0
  %2373 = vmatpush1.bf16.msra.mxu0 0
  %2374 = vmatprep.subr.bf16.mxu0 0
  %2375 = vmatpush1.bf16.msra.mxu0 0
  %2376 = vmatprep.subr.bf16.mxu0 0
  %2377 = vmatpush1.bf16.msra.mxu0 0
  %2378 = vmatprep.subr.bf16.mxu0 0
  %2379 = vmatpush1.bf16.msra.mxu0 0
  %2380 = vmatprep.subr.bf16.mxu0 0
  %2381 = vmatpush1.bf16.msra.mxu0 0
  %2382 = vmatprep.subr.bf16.mxu0 0
  %2383 = vmatpush1.bf16.msra.mxu0 0
  %2384 = vmatprep.subr.bf16.mxu0 0
  %2385 = vmatpush1.bf16.msra.mxu0 0
  %2386 = vmatprep.subr.bf16.mxu0 0
  %2387 = vmatpush1.bf16.msra.mxu0 0
  %2388 = vmatprep.subr.bf16.mxu0 0
  %2389 = vmatpush1.bf16.msra.mxu0 0
  %2390 = vmatprep.mubr.bf16.mxu0 0
  %2391 = vmatmul.mubr.bf16.gmra.mrb[0].mxu0 %v2356
  %v2392 = vpop.f32.mrb[0].mxu0
  %v2393 = vadd.f32 0.0, %v2392
  %v2394 = vpop.f32.mrb[0].mxu0
  %v2395 = vpop.f32.mrb[0].mxu0
  %v2396 = vadd.f32 0.0, %v2395
  %v2397 = vpop.f32.mrb[0].mxu0
  %2398 = vdwg.mxu0
  %2399 = vrot.lane.b32.xlu0 %v1877, 64
  %v2400 = vpop.permute.xlu0 %2399
  %v2402 = vsel %vm450, %v2400, 0
  %2404 = vmatprep.subr.bf16.mxu0 0
  %2405 = vmatpush1.bf16.msra.mxu0 %v1916
  %2406 = vmatprep.subr.bf16.mxu0 0
  %2407 = vmatpush1.bf16.msra.mxu0 0
  %2408 = vmatprep.subr.bf16.mxu0 0
  %2409 = vmatpush1.bf16.msra.mxu0 0
  %2410 = vmatprep.subr.bf16.mxu0 0
  %2411 = vmatpush1.bf16.msra.mxu0 0
  %2412 = vmatprep.subr.bf16.mxu0 0
  %2413 = vmatpush1.bf16.msra.mxu0 0
  %2414 = vmatprep.subr.bf16.mxu0 0
  %2415 = vmatpush1.bf16.msra.mxu0 0
  %2416 = vmatprep.subr.bf16.mxu0 0
  %2417 = vmatpush1.bf16.msra.mxu0 0
  %2418 = vmatprep.subr.bf16.mxu0 0
  %2419 = vmatpush1.bf16.msra.mxu0 0
  %2420 = vmatprep.subr.bf16.mxu0 0
  %2421 = vmatpush1.bf16.msra.mxu0 0
  %2422 = vmatprep.subr.bf16.mxu0 0
  %2423 = vmatpush1.bf16.msra.mxu0 0
  %2424 = vmatprep.subr.bf16.mxu0 0
  %2425 = vmatpush1.bf16.msra.mxu0 0
  %2426 = vmatprep.subr.bf16.mxu0 0
  %2427 = vmatpush1.bf16.msra.mxu0 0
  %2428 = vmatprep.subr.bf16.mxu0 0
  %2429 = vmatpush1.bf16.msra.mxu0 0
  %2430 = vmatprep.subr.bf16.mxu0 0
  %2431 = vmatpush1.bf16.msra.mxu0 0
  %2432 = vmatprep.subr.bf16.mxu0 0
  %2433 = vmatpush1.bf16.msra.mxu0 0
  %2434 = vmatprep.subr.bf16.mxu0 0
  %2435 = vmatpush1.bf16.msra.mxu0 0
  %2436 = vmatprep.mubr.bf16.mxu0 0
  %2437 = vmatmul.mubr.bf16.gmra.mrb[0].mxu0 %v2402
  %v2438 = vpop.f32.mrb[0].mxu0
  %v2439 = vadd.f32 %v1923, %v2438
  %v2440 = vpop.f32.mrb[0].mxu0
  %v2441 = vpop.f32.mrb[0].mxu0
  %v2442 = vadd.f32 %v1925, %v2441
  %v2443 = vpop.f32.mrb[0].mxu0
  %2444 = vdwg.mxu0
  %v2445 = vsel %vm1434, %v2439, -inf
  %2446 = vmax.xlane.f32.xlu0 %v2445
  %v2447 = vpop.xlane.xlu0 %2446
  %v2448 = vsel %vm1434, %v2442, -inf
  %2449 = vmax.xlane.f32.xlu0 %v2448
  %v2450 = vpop.xlane.xlu0 %2449
  %v2451 = vsub.f32 %v2439, %v2447
  %v2452 = vsub.f32 %v2442, %v2450
  %v2453 = vmul.f32 %v2451, 1.442695
  %v2454 = vpow.pop %v2453
  %v2455 = vmul.f32 %v2452, 1.442695
  %v2456 = vpow.pop %v2455
  %v2457 = vsel %vm1434, %v2454, 0.0
  %2458 = vadd.xlane.f32.xlu0 %v2457
  %v2459 = vpop.xlane.xlu0 %2458
  %v2460 = vsel %vm1434, %v2456, 0.0
  %2461 = vadd.xlane.f32.xlu0 %v2460
  %v2462 = vpop.xlane.xlu0 %2461
  %v2463 = vrcp.pop %v2459
  %v2464 = vrcp.pop %v2462
  %v2465 = vmul.f32 %v2454, %v2463
  %v2466 = vmul.f32 %v2456, %v2464
  %v2467 = vpack.c.bf16 %v2466, %v2465
  %2468 = vrot.lane.b32.xlu0 %v1878, 64
  %v2469 = vpop.permute.xlu0 %2468
  %2470 = vrot.lane.b32.xlu0 %v1879, 64
  %v2471 = vpop.permute.xlu0 %2470
  %v2475 = vsel %vm1434, %v2467, 0
  %2477 = vmatprep.subr.bf16.mxu0 0
  %2478 = vmatpush1.bf16.msra.mxu0 %v2469
  %2479 = vmatprep.subr.bf16.mxu0 0
  %2480 = vmatpush1.bf16.msra.mxu0 %v2471
  %2481 = vmatprep.subr.bf16.mxu0 0
  %2482 = vmatpush1.bf16.msra.mxu0 0
  %2483 = vmatprep.subr.bf16.mxu0 0
  %2484 = vmatpush1.bf16.msra.mxu0 0
  %2485 = vmatprep.subr.bf16.mxu0 0
  %2486 = vmatpush1.bf16.msra.mxu0 0
  %2487 = vmatprep.subr.bf16.mxu0 0
  %2488 = vmatpush1.bf16.msra.mxu0 0
  %2489 = vmatprep.subr.bf16.mxu0 0
  %2490 = vmatpush1.bf16.msra.mxu0 0
  %2491 = vmatprep.subr.bf16.mxu0 0
  %2492 = vmatpush1.bf16.msra.mxu0 0
  %2493 = vmatprep.subr.bf16.mxu0 0
  %2494 = vmatpush1.bf16.msra.mxu0 0
  %2495 = vmatprep.subr.bf16.mxu0 0
  %2496 = vmatpush1.bf16.msra.mxu0 0
  %2497 = vmatprep.subr.bf16.mxu0 0
  %2498 = vmatpush1.bf16.msra.mxu0 0
  %2499 = vmatprep.subr.bf16.mxu0 0
  %2500 = vmatpush1.bf16.msra.mxu0 0
  %2501 = vmatprep.subr.bf16.mxu0 0
  %2502 = vmatpush1.bf16.msra.mxu0 0
  %2503 = vmatprep.subr.bf16.mxu0 0
  %2504 = vmatpush1.bf16.msra.mxu0 0
  %2505 = vmatprep.subr.bf16.mxu0 0
  %2506 = vmatpush1.bf16.msra.mxu0 0
  %2507 = vmatprep.subr.bf16.mxu0 0
  %2508 = vmatpush1.bf16.msra.mxu0 0
  %2509 = vmatprep.mubr.bf16.mxu0 0
  %2510 = vmatmul.mubr.bf16.gmra.mrb[0].mxu0 %v2475
  %v2511 = vpop.f32.mrb[0].mxu0
  %v2512 = vadd.f32 0.0, %v2511
  %v2513 = vpop.f32.mrb[0].mxu0
  %v2514 = vpop.f32.mrb[0].mxu0
  %v2515 = vadd.f32 0.0, %v2514
  %v2516 = vpop.f32.mrb[0].mxu0
  %2517 = vdwg.mxu0
  %2518 = vrot.lane.b32.xlu0 %v1877, 48
  %v2519 = vpop.permute.xlu0 %2518
  %v2521 = vsel %vm450, %v2519, 0
  %2523 = vmatprep.subr.bf16.mxu0 0
  %2524 = vmatpush1.bf16.msra.mxu0 %v1917
  %2525 = vmatprep.subr.bf16.mxu0 0
  %2526 = vmatpush1.bf16.msra.mxu0 0
  %2527 = vmatprep.subr.bf16.mxu0 0
  %2528 = vmatpush1.bf16.msra.mxu0 0
  %2529 = vmatprep.subr.bf16.mxu0 0
  %2530 = vmatpush1.bf16.msra.mxu0 0
  %2531 = vmatprep.subr.bf16.mxu0 0
  %2532 = vmatpush1.bf16.msra.mxu0 0
  %2533 = vmatprep.subr.bf16.mxu0 0
  %2534 = vmatpush1.bf16.msra.mxu0 0
  %2535 = vmatprep.subr.bf16.mxu0 0
  %2536 = vmatpush1.bf16.msra.mxu0 0
  %2537 = vmatprep.subr.bf16.mxu0 0
  %2538 = vmatpush1.bf16.msra.mxu0 0
  %2539 = vmatprep.subr.bf16.mxu0 0
  %2540 = vmatpush1.bf16.msra.mxu0 0
  %2541 = vmatprep.subr.bf16.mxu0 0
  %2542 = vmatpush1.bf16.msra.mxu0 0
  %2543 = vmatprep.subr.bf16.mxu0 0
  %2544 = vmatpush1.bf16.msra.mxu0 0
  %2545 = vmatprep.subr.bf16.mxu0 0
  %2546 = vmatpush1.bf16.msra.mxu0 0
  %2547 = vmatprep.subr.bf16.mxu0 0
  %2548 = vmatpush1.bf16.msra.mxu0 0
  %2549 = vmatprep.subr.bf16.mxu0 0
  %2550 = vmatpush1.bf16.msra.mxu0 0
  %2551 = vmatprep.subr.bf16.mxu0 0
  %2552 = vmatpush1.bf16.msra.mxu0 0
  %2553 = vmatprep.subr.bf16.mxu0 0
  %2554 = vmatpush1.bf16.msra.mxu0 0
  %2555 = vmatprep.mubr.bf16.mxu0 0
  %2556 = vmatmul.mubr.bf16.gmra.mrb[0].mxu0 %v2521
  %v2557 = vpop.f32.mrb[0].mxu0
  %v2558 = vadd.f32 %v1923, %v2557
  %v2559 = vpop.f32.mrb[0].mxu0
  %v2560 = vpop.f32.mrb[0].mxu0
  %v2561 = vadd.f32 %v1925, %v2560
  %v2562 = vpop.f32.mrb[0].mxu0
  %2563 = vdwg.mxu0
  %v2564 = vsel %vm1434, %v2558, -inf
  %2565 = vmax.xlane.f32.xlu0 %v2564
  %v2566 = vpop.xlane.xlu0 %2565
  %v2567 = vsel %vm1434, %v2561, -inf
  %2568 = vmax.xlane.f32.xlu0 %v2567
  %v2569 = vpop.xlane.xlu0 %2568
  %v2570 = vsub.f32 %v2558, %v2566
  %v2571 = vsub.f32 %v2561, %v2569
  %v2572 = vmul.f32 %v2570, 1.442695
  %v2573 = vpow.pop %v2572
  %v2574 = vmul.f32 %v2571, 1.442695
  %v2575 = vpow.pop %v2574
  %v2576 = vsel %vm1434, %v2573, 0.0
  %2577 = vadd.xlane.f32.xlu0 %v2576
  %v2578 = vpop.xlane.xlu0 %2577
  %v2579 = vsel %vm1434, %v2575, 0.0
  %2580 = vadd.xlane.f32.xlu0 %v2579
  %v2581 = vpop.xlane.xlu0 %2580
  %v2582 = vrcp.pop %v2578
  %v2583 = vrcp.pop %v2581
  %v2584 = vmul.f32 %v2573, %v2582
  %v2585 = vmul.f32 %v2575, %v2583
  %v2586 = vpack.c.bf16 %v2585, %v2584
  %2587 = vrot.lane.b32.xlu0 %v1878, 48
  %v2588 = vpop.permute.xlu0 %2587
  %2589 = vrot.lane.b32.xlu0 %v1879, 48
  %v2590 = vpop.permute.xlu0 %2589
  %v2594 = vsel %vm1434, %v2586, 0
  %2596 = vmatprep.subr.bf16.mxu0 0
  %2597 = vmatpush1.bf16.msra.mxu0 %v2588
  %2598 = vmatprep.subr.bf16.mxu0 0
  %2599 = vmatpush1.bf16.msra.mxu0 %v2590
  %2600 = vmatprep.subr.bf16.mxu0 0
  %2601 = vmatpush1.bf16.msra.mxu0 0
  %2602 = vmatprep.subr.bf16.mxu0 0
  %2603 = vmatpush1.bf16.msra.mxu0 0
  %2604 = vmatprep.subr.bf16.mxu0 0
  %2605 = vmatpush1.bf16.msra.mxu0 0
  %2606 = vmatprep.subr.bf16.mxu0 0
  %2607 = vmatpush1.bf16.msra.mxu0 0
  %2608 = vmatprep.subr.bf16.mxu0 0
  %2609 = vmatpush1.bf16.msra.mxu0 0
  %2610 = vmatprep.subr.bf16.mxu0 0
  %2611 = vmatpush1.bf16.msra.mxu0 0
  %2612 = vmatprep.subr.bf16.mxu0 0
  %2613 = vmatpush1.bf16.msra.mxu0 0
  %2614 = vmatprep.subr.bf16.mxu0 0
  %2615 = vmatpush1.bf16.msra.mxu0 0
  %2616 = vmatprep.subr.bf16.mxu0 0
  %2617 = vmatpush1.bf16.msra.mxu0 0
  %2618 = vmatprep.subr.bf16.mxu0 0
  %2619 = vmatpush1.bf16.msra.mxu0 0
  %2620 = vmatprep.subr.bf16.mxu0 0
  %2621 = vmatpush1.bf16.msra.mxu0 0
  %2622 = vmatprep.subr.bf16.mxu0 0
  %2623 = vmatpush1.bf16.msra.mxu0 0
  %2624 = vmatprep.subr.bf16.mxu0 0
  %2625 = vmatpush1.bf16.msra.mxu0 0
  %2626 = vmatprep.subr.bf16.mxu0 0
  %2627 = vmatpush1.bf16.msra.mxu0 0
  %2628 = vmatprep.mubr.bf16.mxu0 0
  %2629 = vmatmul.mubr.bf16.gmra.mrb[0].mxu0 %v2594
  %v2630 = vpop.f32.mrb[0].mxu0
  %v2631 = vadd.f32 0.0, %v2630
  %v2632 = vpop.f32.mrb[0].mxu0
  %v2633 = vpop.f32.mrb[0].mxu0
  %v2634 = vadd.f32 0.0, %v2633
  %v2635 = vpop.f32.mrb[0].mxu0
  %2636 = vdwg.mxu0
  %2637 = vrot.lane.b32.xlu0 %v1877, 32
  %v2638 = vpop.permute.xlu0 %2637
  %v2640 = vsel %vm450, %v2638, 0
  %2642 = vmatprep.subr.bf16.mxu0 0
  %2643 = vmatpush1.bf16.msra.mxu0 %v1918
  %2644 = vmatprep.subr.bf16.mxu0 0
  %2645 = vmatpush1.bf16.msra.mxu0 0
  %2646 = vmatprep.subr.bf16.mxu0 0
  %2647 = vmatpush1.bf16.msra.mxu0 0
  %2648 = vmatprep.subr.bf16.mxu0 0
  %2649 = vmatpush1.bf16.msra.mxu0 0
  %2650 = vmatprep.subr.bf16.mxu0 0
  %2651 = vmatpush1.bf16.msra.mxu0 0
  %2652 = vmatprep.subr.bf16.mxu0 0
  %2653 = vmatpush1.bf16.msra.mxu0 0
  %2654 = vmatprep.subr.bf16.mxu0 0
  %2655 = vmatpush1.bf16.msra.mxu0 0
  %2656 = vmatprep.subr.bf16.mxu0 0
  %2657 = vmatpush1.bf16.msra.mxu0 0
  %2658 = vmatprep.subr.bf16.mxu0 0
  %2659 = vmatpush1.bf16.msra.mxu0 0
  %2660 = vmatprep.subr.bf16.mxu0 0
  %2661 = vmatpush1.bf16.msra.mxu0 0
  %2662 = vmatprep.subr.bf16.mxu0 0
  %2663 = vmatpush1.bf16.msra.mxu0 0
  %2664 = vmatprep.subr.bf16.mxu0 0
  %2665 = vmatpush1.bf16.msra.mxu0 0
  %2666 = vmatprep.subr.bf16.mxu0 0
  %2667 = vmatpush1.bf16.msra.mxu0 0
  %2668 = vmatprep.subr.bf16.mxu0 0
  %2669 = vmatpush1.bf16.msra.mxu0 0
  %2670 = vmatprep.subr.bf16.mxu0 0
  %2671 = vmatpush1.bf16.msra.mxu0 0
  %2672 = vmatprep.subr.bf16.mxu0 0
  %2673 = vmatpush1.bf16.msra.mxu0 0
  %2674 = vmatprep.mubr.bf16.mxu0 0
  %2675 = vmatmul.mubr.bf16.gmra.mrb[0].mxu0 %v2640
  %v2676 = vpop.f32.mrb[0].mxu0
  %v2677 = vadd.f32 %v1923, %v2676
  %v2678 = vpop.f32.mrb[0].mxu0
  %v2679 = vpop.f32.mrb[0].mxu0
  %v2680 = vadd.f32 %v1925, %v2679
  %v2681 = vpop.f32.mrb[0].mxu0
  %2682 = vdwg.mxu0
  %v2683 = vsel %vm1434, %v2677, -inf
  %2684 = vmax.xlane.f32.xlu0 %v2683
  %v2685 = vpop.xlane.xlu0 %2684
  %v2686 = vsel %vm1434, %v2680, -inf
  %2687 = vmax.xlane.f32.xlu0 %v2686
  %v2688 = vpop.xlane.xlu0 %2687
  %v2689 = vsub.f32 %v2677, %v2685
  %v2690 = vsub.f32 %v2680, %v2688
  %v2691 = vmul.f32 %v2689, 1.442695
  %v2692 = vpow.pop %v2691
  %v2693 = vmul.f32 %v2690, 1.442695
  %v2694 = vpow.pop %v2693
  %v2695 = vsel %vm1434, %v2692, 0.0
  %2696 = vadd.xlane.f32.xlu0 %v2695
  %v2697 = vpop.xlane.xlu0 %2696
  %v2698 = vsel %vm1434, %v2694, 0.0
  %2699 = vadd.xlane.f32.xlu0 %v2698
  %v2700 = vpop.xlane.xlu0 %2699
  %v2701 = vrcp.pop %v2697
  %v2702 = vrcp.pop %v2700
  %v2703 = vmul.f32 %v2692, %v2701
  %v2704 = vmul.f32 %v2694, %v2702
  %v2705 = vpack.c.bf16 %v2704, %v2703
  %2706 = vrot.lane.b32.xlu0 %v1878, 32
  %v2707 = vpop.permute.xlu0 %2706
  %2708 = vrot.lane.b32.xlu0 %v1879, 32
  %v2709 = vpop.permute.xlu0 %2708
  %v2713 = vsel %vm1434, %v2705, 0
  %2715 = vmatprep.subr.bf16.mxu0 0
  %2716 = vmatpush1.bf16.msra.mxu0 %v2707
  %2717 = vmatprep.subr.bf16.mxu0 0
  %2718 = vmatpush1.bf16.msra.mxu0 %v2709
  %2719 = vmatprep.subr.bf16.mxu0 0
  %2720 = vmatpush1.bf16.msra.mxu0 0
  %2721 = vmatprep.subr.bf16.mxu0 0
  %2722 = vmatpush1.bf16.msra.mxu0 0
  %2723 = vmatprep.subr.bf16.mxu0 0
  %2724 = vmatpush1.bf16.msra.mxu0 0
  %2725 = vmatprep.subr.bf16.mxu0 0
  %2726 = vmatpush1.bf16.msra.mxu0 0
  %2727 = vmatprep.subr.bf16.mxu0 0
  %2728 = vmatpush1.bf16.msra.mxu0 0
  %2729 = vmatprep.subr.bf16.mxu0 0
  %2730 = vmatpush1.bf16.msra.mxu0 0
  %2731 = vmatprep.subr.bf16.mxu0 0
  %2732 = vmatpush1.bf16.msra.mxu0 0
  %2733 = vmatprep.subr.bf16.mxu0 0
  %2734 = vmatpush1.bf16.msra.mxu0 0
  %2735 = vmatprep.subr.bf16.mxu0 0
  %2736 = vmatpush1.bf16.msra.mxu0 0
  %2737 = vmatprep.subr.bf16.mxu0 0
  %2738 = vmatpush1.bf16.msra.mxu0 0
  %2739 = vmatprep.subr.bf16.mxu0 0
  %2740 = vmatpush1.bf16.msra.mxu0 0
  %2741 = vmatprep.subr.bf16.mxu0 0
  %2742 = vmatpush1.bf16.msra.mxu0 0
  %2743 = vmatprep.subr.bf16.mxu0 0
  %2744 = vmatpush1.bf16.msra.mxu0 0
  %2745 = vmatprep.subr.bf16.mxu0 0
  %2746 = vmatpush1.bf16.msra.mxu0 0
  %2747 = vmatprep.mubr.bf16.mxu0 0
  %2748 = vmatmul.mubr.bf16.gmra.mrb[0].mxu0 %v2713
  %v2749 = vpop.f32.mrb[0].mxu0
  %v2750 = vadd.f32 0.0, %v2749
  %v2751 = vpop.f32.mrb[0].mxu0
  %v2752 = vpop.f32.mrb[0].mxu0
  %v2753 = vadd.f32 0.0, %v2752
  %v2754 = vpop.f32.mrb[0].mxu0
  %2755 = vdwg.mxu0
  %2756 = vrot.lane.b32.xlu0 %v1877, 16
  %v2757 = vpop.permute.xlu0 %2756
  %v2759 = vsel %vm450, %v2757, 0
  %2761 = vmatprep.subr.bf16.mxu0 0
  %2762 = vmatpush1.bf16.msra.mxu0 %v1919
  %2763 = vmatprep.subr.bf16.mxu0 0
  %2764 = vmatpush1.bf16.msra.mxu0 0
  %2765 = vmatprep.subr.bf16.mxu0 0
  %2766 = vmatpush1.bf16.msra.mxu0 0
  %2767 = vmatprep.subr.bf16.mxu0 0
  %2768 = vmatpush1.bf16.msra.mxu0 0
  %2769 = vmatprep.subr.bf16.mxu0 0
  %2770 = vmatpush1.bf16.msra.mxu0 0
  %2771 = vmatprep.subr.bf16.mxu0 0
  %2772 = vmatpush1.bf16.msra.mxu0 0
  %2773 = vmatprep.subr.bf16.mxu0 0
  %2774 = vmatpush1.bf16.msra.mxu0 0
  %2775 = vmatprep.subr.bf16.mxu0 0
  %2776 = vmatpush1.bf16.msra.mxu0 0
  %2777 = vmatprep.subr.bf16.mxu0 0
  %2778 = vmatpush1.bf16.msra.mxu0 0
  %2779 = vmatprep.subr.bf16.mxu0 0
  %2780 = vmatpush1.bf16.msra.mxu0 0
  %2781 = vmatprep.subr.bf16.mxu0 0
  %2782 = vmatpush1.bf16.msra.mxu0 0
  %2783 = vmatprep.subr.bf16.mxu0 0
  %2784 = vmatpush1.bf16.msra.mxu0 0
  %2785 = vmatprep.subr.bf16.mxu0 0
  %2786 = vmatpush1.bf16.msra.mxu0 0
  %2787 = vmatprep.subr.bf16.mxu0 0
  %2788 = vmatpush1.bf16.msra.mxu0 0
  %2789 = vmatprep.subr.bf16.mxu0 0
  %2790 = vmatpush1.bf16.msra.mxu0 0
  %2791 = vmatprep.subr.bf16.mxu0 0
  %2792 = vmatpush1.bf16.msra.mxu0 0
  %2793 = vmatprep.mubr.bf16.mxu0 0
  %2794 = vmatmul.mubr.bf16.gmra.mrb[0].mxu0 %v2759
  %v2795 = vpop.f32.mrb[0].mxu0
  %v2796 = vadd.f32 %v1923, %v2795
  %v2797 = vpop.f32.mrb[0].mxu0
  %v2798 = vpop.f32.mrb[0].mxu0
  %v2799 = vadd.f32 %v1925, %v2798
  %v2800 = vpop.f32.mrb[0].mxu0
  %2801 = vdwg.mxu0
  %v2802 = vsel %vm1434, %v2796, -inf
  %2803 = vmax.xlane.f32.xlu0 %v2802
  %v2804 = vpop.xlane.xlu0 %2803
  %v2805 = vsel %vm1434, %v2799, -inf
  %2806 = vmax.xlane.f32.xlu0 %v2805
  %v2807 = vpop.xlane.xlu0 %2806
  %v2808 = vsub.f32 %v2796, %v2804
  %v2809 = vsub.f32 %v2799, %v2807
  %v2810 = vmul.f32 %v2808, 1.442695
  %v2811 = vpow.pop %v2810
  %v2812 = vmul.f32 %v2809, 1.442695
  %v2813 = vpow.pop %v2812
  %v2814 = vsel %vm1434, %v2811, 0.0
  %2815 = vadd.xlane.f32.xlu0 %v2814
  %v2816 = vpop.xlane.xlu0 %2815
  %v2817 = vsel %vm1434, %v2813, 0.0
  %2818 = vadd.xlane.f32.xlu0 %v2817
  %v2819 = vpop.xlane.xlu0 %2818
  %v2820 = vrcp.pop %v2816
  %v2821 = vrcp.pop %v2819
  %v2822 = vmul.f32 %v2811, %v2820
  %v2823 = vmul.f32 %v2813, %v2821
  %v2824 = vpack.c.bf16 %v2823, %v2822
  %2825 = vrot.lane.b32.xlu0 %v1878, 16
  %v2826 = vpop.permute.xlu0 %2825
  %2827 = vrot.lane.b32.xlu0 %v1879, 16
  %v2828 = vpop.permute.xlu0 %2827
  %v2832 = vsel %vm1434, %v2824, 0
  %2834 = vmatprep.subr.bf16.mxu0 0
  %2835 = vmatpush1.bf16.msra.mxu0 %v2826
  %2836 = vmatprep.subr.bf16.mxu0 0
  %2837 = vmatpush1.bf16.msra.mxu0 %v2828
  %2838 = vmatprep.subr.bf16.mxu0 0
  %2839 = vmatpush1.bf16.msra.mxu0 0
  %2840 = vmatprep.subr.bf16.mxu0 0
  %2841 = vmatpush1.bf16.msra.mxu0 0
  %2842 = vmatprep.subr.bf16.mxu0 0
  %2843 = vmatpush1.bf16.msra.mxu0 0
  %2844 = vmatprep.subr.bf16.mxu0 0
  %2845 = vmatpush1.bf16.msra.mxu0 0
  %2846 = vmatprep.subr.bf16.mxu0 0
  %2847 = vmatpush1.bf16.msra.mxu0 0
  %2848 = vmatprep.subr.bf16.mxu0 0
  %2849 = vmatpush1.bf16.msra.mxu0 0
  %2850 = vmatprep.subr.bf16.mxu0 0
  %2851 = vmatpush1.bf16.msra.mxu0 0
  %2852 = vmatprep.subr.bf16.mxu0 0
  %2853 = vmatpush1.bf16.msra.mxu0 0
  %2854 = vmatprep.subr.bf16.mxu0 0
  %2855 = vmatpush1.bf16.msra.mxu0 0
  %2856 = vmatprep.subr.bf16.mxu0 0
  %2857 = vmatpush1.bf16.msra.mxu0 0
  %2858 = vmatprep.subr.bf16.mxu0 0
  %2859 = vmatpush1.bf16.msra.mxu0 0
  %2860 = vmatprep.subr.bf16.mxu0 0
  %2861 = vmatpush1.bf16.msra.mxu0 0
  %2862 = vmatprep.subr.bf16.mxu0 0
  %2863 = vmatpush1.bf16.msra.mxu0 0
  %2864 = vmatprep.subr.bf16.mxu0 0
  %2865 = vmatpush1.bf16.msra.mxu0 0
  %2866 = vmatprep.mubr.bf16.mxu0 0
  %2867 = vmatmul.mubr.bf16.gmra.mrb[0].mxu0 %v2832
  %v2868 = vpop.f32.mrb[0].mxu0
  %v2869 = vadd.f32 0.0, %v2868
  %v2870 = vpop.f32.mrb[0].mxu0
  %v2871 = vpop.f32.mrb[0].mxu0
  %v2872 = vadd.f32 0.0, %v2871
  %v2873 = vpop.f32.mrb[0].mxu0
  %2874 = vdwg.mxu0
  %2877 = vrot.lane.b32.xlu0 %v2155, 16
  %v2878 = vpop.permute.xlu0 %2877
  %2879 = vrot.lane.b32.xlu0 %v2158, 16
  %v2880 = vpop.permute.xlu0 %2879
  %2885 = vrot.lane.b32.xlu0 %v2274, 32
  %v2886 = vpop.permute.xlu0 %2885
  %2887 = vrot.lane.b32.xlu0 %v2277, 32
  %v2888 = vpop.permute.xlu0 %2887
  %2893 = vrot.lane.b32.xlu0 %v2393, 48
  %v2894 = vpop.permute.xlu0 %2893
  %2895 = vrot.lane.b32.xlu0 %v2396, 48
  %v2896 = vpop.permute.xlu0 %2895
  %2901 = vrot.lane.b32.xlu0 %v2512, 64
  %v2902 = vpop.permute.xlu0 %2901
  %2903 = vrot.lane.b32.xlu0 %v2515, 64
  %v2904 = vpop.permute.xlu0 %2903
  %2909 = vrot.lane.b32.xlu0 %v2631, 80
  %v2910 = vpop.permute.xlu0 %2909
  %2911 = vrot.lane.b32.xlu0 %v2634, 80
  %v2912 = vpop.permute.xlu0 %2911
  %2917 = vrot.lane.b32.xlu0 %v2750, 96
  %v2918 = vpop.permute.xlu0 %2917
  %2919 = vrot.lane.b32.xlu0 %v2753, 96
  %v2920 = vpop.permute.xlu0 %2919
  %2925 = vrot.lane.b32.xlu0 %v2869, 112
  %v2926 = vpop.permute.xlu0 %2925
  %2927 = vrot.lane.b32.xlu0 %v2872, 112
  %v2928 = vpop.permute.xlu0 %2927
  %v2931 = vsel %vm450, %v2033, %v2878
  %v2932 = vsel %vm450, %v2036, %v2880
  %v2933 = vsel %vm1434, %v2931, %v2886
  %v2934 = vsel %vm1434, %v2932, %v2888
  %v2935 = vsel %vm1437, %v2933, %v2894
  %v2936 = vsel %vm1437, %v2934, %v2896
  %v2937 = vsel %vm1440, %v2935, %v2902
  %v2938 = vsel %vm1440, %v2936, %v2904
  %v2939 = vsel %vm1443, %v2937, %v2910
  %v2940 = vsel %vm1443, %v2938, %v2912
  %v2941 = vsel %vm1446, %v2939, %v2918
  %v2942 = vsel %vm1446, %v2940, %v2920
  %v2943 = vsel %vm1449, %v2941, %v2926
  %v2944 = vsel %vm1449, %v2942, %v2928
  %v2945 = vpack.c.bf16 %v2944, %v2943
  %v2946 = vlaneseq
  %v2947 = vshrl.u32 %v2946, 7
  %v2948 = vsub.s32 0, %v2947
  %v2949 = vrot.slane %v1876, %v2948
  %v2966 = vunpack.c.l.b16 %v1860
  %v2967 = vunpack.c.l.b16 %v1861
  %v2968 = vunpack.c.l.b16 %v1862
  %v2969 = vunpack.c.l.b16 %v1863
  %v2970 = vunpack.c.l.b16 %v1864
  %v2971 = vunpack.c.l.b16 %v1865
  %v2972 = vunpack.c.l.b16 %v1866
  %v2973 = vunpack.c.l.b16 %v1867
  %v2974 = vunpack.c.l.b16 %v1868
  %v2975 = vunpack.c.l.b16 %v1869
  %v2976 = vunpack.c.l.b16 %v1870
  %v2977 = vunpack.c.l.b16 %v1871
  %v2978 = vunpack.c.l.b16 %v1872
  %v2979 = vunpack.c.l.b16 %v1873
  %v2980 = vunpack.c.l.b16 %v1874
  %v2981 = vunpack.c.l.b16 %v1875
  %v2982 = vpack.c.b16 %v2967, %v2966
  %v2983 = vpack.c.b16 %v2969, %v2968
  %v2984 = vpack.c.b16 %v2971, %v2970
  %v2985 = vpack.c.b16 %v2973, %v2972
  %v2986 = vpack.c.b16 %v2975, %v2974
  %v2987 = vpack.c.b16 %v2977, %v2976
  %v2988 = vpack.c.b16 %v2979, %v2978
  %v2989 = vpack.c.b16 %v2981, %v2980
  %2998 = vmatprep.subr.bf16.mxu0 0
  %2999 = vmatpush1.bf16.msra.mxu0 %v2982
  %3000 = vmatprep.subr.bf16.mxu0 0
  %3001 = vmatpush1.bf16.msra.mxu0 %v2983
  %3002 = vmatprep.subr.bf16.mxu0 0
  %3003 = vmatpush1.bf16.msra.mxu0 %v2984
  %3004 = vmatprep.subr.bf16.mxu0 0
  %3005 = vmatpush1.bf16.msra.mxu0 %v2985
  %3006 = vmatprep.subr.bf16.mxu0 0
  %3007 = vmatpush1.bf16.msra.mxu0 %v2986
  %3008 = vmatprep.subr.bf16.mxu0 0
  %3009 = vmatpush1.bf16.msra.mxu0 %v2987
  %3010 = vmatprep.subr.bf16.mxu0 0
  %3011 = vmatpush1.bf16.msra.mxu0 %v2988
  %3012 = vmatprep.subr.bf16.mxu0 0
  %3013 = vmatpush1.bf16.msra.mxu0 %v2989
  %3014 = vmatprep.subr.bf16.mxu0 0
  %3015 = vmatpush1.bf16.msra.mxu0 0
  %3016 = vmatprep.subr.bf16.mxu0 0
  %3017 = vmatpush1.bf16.msra.mxu0 0
  %3018 = vmatprep.subr.bf16.mxu0 0
  %3019 = vmatpush1.bf16.msra.mxu0 0
  %3020 = vmatprep.subr.bf16.mxu0 0
  %3021 = vmatpush1.bf16.msra.mxu0 0
  %3022 = vmatprep.subr.bf16.mxu0 0
  %3023 = vmatpush1.bf16.msra.mxu0 0
  %3024 = vmatprep.subr.bf16.mxu0 0
  %3025 = vmatpush1.bf16.msra.mxu0 0
  %3026 = vmatprep.subr.bf16.mxu0 0
  %3027 = vmatpush1.bf16.msra.mxu0 0
  %3028 = vmatprep.subr.bf16.mxu0 0
  %3029 = vmatpush1.bf16.msra.mxu0 0
  %3030 = vmatprep.mubr.bf16.mxu0 0
  %3031 = vmatmul.mubr.bf16.gmra.mrb[0].mxu0 %v2945
  %v3032 = vpop.f32.mrb[0].mxu0
  %v3033 = vadd.f32 %v2949, %v3032
  %v3034 = vpop.f32.mrb[0].mxu0
  %v3035 = vpop.f32.mrb[0].mxu0
  %v3036 = vadd.f32 %v2949, %v3035
  %v3037 = vpop.f32.mrb[0].mxu0
  %3038 = vdwg.mxu0
  %v3039 = vadd.f32 %v1583, %v3033
  %v3040 = vadd.f32 %v1584, %v3036
  %v3041 = vld [vmem:[%s7 + $0x34] sm:$0x1]
  %v3042 = vld [vmem:[%s7 + $0x38] sm:$0x1]
  %3043 = vadd.xlane.f32.xlu0 %v3039
  %v3044 = vpop.xlane.xlu0 %3043
  %3045 = vadd.xlane.f32.xlu0 %v3040
  %v3046 = vpop.xlane.xlu0 %3045
  %v3047 = vmul.f32 %v3044, %v1554
  %v3048 = vmul.f32 %v3046, %v1554
  %v3049 = vsub.f32 %v3039, %v3047
  %v3050 = vsub.f32 %v3040, %v3048
  %v3051 = vmul.f32 %v3049, %v3049
  %v3052 = vmul.f32 %v3050, %v3050
  %3053 = vadd.xlane.f32.xlu0 %v3051
  %v3054 = vpop.xlane.xlu0 %3053
  %3055 = vadd.xlane.f32.xlu0 %v3052
  %v3056 = vpop.xlane.xlu0 %3055
  %v3057 = vmul.f32 %v3054, %v1554
  %v3058 = vmul.f32 %v3056, %v1554
  %v3059 = vadd.f32 %v3057, 1e-05
  %v3060 = vadd.f32 %v3058, 1e-05
  %v3061 = vrsqrt.pop %v3059
  %v3062 = vrsqrt.pop %v3060
  %v3063 = vmul.f32 %v3049, %v3061
  %v3064 = vmul.f32 %v3050, %v3062
  %v3065 = vlaneseq
  %v3066 = vshrl.u32 %v3065, 7
  %v3067 = vsub.s32 0, %v3066
  %v3068 = vrot.slane %v3041, %v3067
  %v3069 = vmul.f32 %v3063, %v3068
  %v3070 = vmul.f32 %v3064, %v3068
  %v3071 = vlaneseq
  %v3072 = vshrl.u32 %v3071, 7
  %v3073 = vsub.s32 0, %v3072
  %v3074 = vrot.slane %v3042, %v3073
  %v3075 = vadd.f32 %v3069, %v3074
  %v3076 = vadd.f32 %v3070, %v3074
  %v3077 = vld [vmem:[%s5 + $0x20] sm:$0xff]
  %v3078 = vld [vmem:[%s5 + $0x48] sm:$0xff]
  %v3079 = vld [vmem:[%s5 + $0x70] sm:$0xff]
  %v3080 = vld [vmem:[%s5 + $0x98] sm:$0xff]
  %v3081 = vld [vmem:[%s5 + $0xc0] sm:$0xff]
  %v3082 = vld [vmem:[%s5 + $0xe8] sm:$0xff]
  %v3083 = vld [vmem:[%s5 + $0x110] sm:$0xff]
  %v3084 = vld [vmem:[%s5 + $0x138] sm:$0xff]
  %v3085 = vld [vmem:[%s5 + $0x160] sm:$0xff]
  %v3086 = vld [vmem:[%s5 + $0x188] sm:$0xff]
  %v3087 = vld [vmem:[%s5 + $0x1b0] sm:$0xff]
  %v3088 = vld [vmem:[%s5 + $0x1d8] sm:$0xff]
  %v3089 = vld [vmem:[%s5 + $0x200] sm:$0xff]
  %v3090 = vld [vmem:[%s5 + $0x228] sm:$0xff]
  %v3091 = vld [vmem:[%s5 + $0x250] sm:$0xff]
  %v3092 = vld [vmem:[%s5 + $0x278] sm:$0xff]
  %v3093 = vpack.c.bf16 %v3076, %v3075
  %s3094 = scalar_lea.vmem %s7, 32
  %v3095 = vld [vmem:[%s3094] ss:$4 sm:$0x3]
  %v3097 = vlaneseq
  %v3098 = vshrl.u32 %v3097, 7
  %v3099 = vsub.s32 0, %v3098
  %v3100 = vrot.slane %v3095, %v3099
  %v3101 = vlaneseq
  %v3102 = vshrl.u32 %v3101, 7
  %v3103 = vsub.s32 1, %v3102
  %v3104 = vrot.slane %v3095, %v3103
  %v3123 = vunpack.c.l.b16 %v3077
  %v3124 = vunpack.c.h.b16 %v3077
  %v3125 = vunpack.c.l.b16 %v3078
  %v3126 = vunpack.c.h.b16 %v3078
  %v3127 = vunpack.c.l.b16 %v3079
  %v3128 = vunpack.c.h.b16 %v3079
  %v3129 = vunpack.c.l.b16 %v3080
  %v3130 = vunpack.c.h.b16 %v3080
  %v3131 = vunpack.c.l.b16 %v3081
  %v3132 = vunpack.c.h.b16 %v3081
  %v3133 = vunpack.c.l.b16 %v3082
  %v3134 = vunpack.c.h.b16 %v3082
  %v3135 = vunpack.c.l.b16 %v3083
  %v3136 = vunpack.c.h.b16 %v3083
  %v3137 = vunpack.c.l.b16 %v3084
  %v3138 = vunpack.c.h.b16 %v3084
  %v3139 = vunpack.c.l.b16 %v3085
  %v3140 = vunpack.c.h.b16 %v3085
  %v3141 = vunpack.c.l.b16 %v3086
  %v3142 = vunpack.c.h.b16 %v3086
  %v3143 = vunpack.c.l.b16 %v3087
  %v3144 = vunpack.c.h.b16 %v3087
  %v3145 = vunpack.c.l.b16 %v3088
  %v3146 = vunpack.c.h.b16 %v3088
  %v3147 = vunpack.c.l.b16 %v3089
  %v3148 = vunpack.c.h.b16 %v3089
  %v3149 = vunpack.c.l.b16 %v3090
  %v3150 = vunpack.c.h.b16 %v3090
  %v3151 = vunpack.c.l.b16 %v3091
  %v3152 = vunpack.c.h.b16 %v3091
  %v3153 = vunpack.c.l.b16 %v3092
  %v3154 = vunpack.c.h.b16 %v3092
  %v3155 = vpack.c.b16 %v3125, %v3123
  %v3156 = vpack.c.b16 %v3126, %v3124
  %v3157 = vpack.c.b16 %v3129, %v3127
  %v3158 = vpack.c.b16 %v3130, %v3128
  %v3159 = vpack.c.b16 %v3133, %v3131
  %v3160 = vpack.c.b16 %v3134, %v3132
  %v3161 = vpack.c.b16 %v3137, %v3135
  %v3162 = vpack.c.b16 %v3138, %v3136
  %v3163 = vpack.c.b16 %v3141, %v3139
  %v3164 = vpack.c.b16 %v3142, %v3140
  %v3165 = vpack.c.b16 %v3145, %v3143
  %v3166 = vpack.c.b16 %v3146, %v3144
  %v3167 = vpack.c.b16 %v3149, %v3147
  %v3168 = vpack.c.b16 %v3150, %v3148
  %v3169 = vpack.c.b16 %v3153, %v3151
  %v3170 = vpack.c.b16 %v3154, %v3152
  %3187 = vmatprep.subr.bf16.mxu0 %v3156
  %3188 = vmatpush1.bf16.msra.mxu0 %v3155
  %3189 = vmatprep.subr.bf16.mxu0 %v3158
  %3190 = vmatpush1.bf16.msra.mxu0 %v3157
  %3191 = vmatprep.subr.bf16.mxu0 %v3160
  %3192 = vmatpush1.bf16.msra.mxu0 %v3159
  %3193 = vmatprep.subr.bf16.mxu0 %v3162
  %3194 = vmatpush1.bf16.msra.mxu0 %v3161
  %3195 = vmatprep.subr.bf16.mxu0 %v3164
  %3196 = vmatpush1.bf16.msra.mxu0 %v3163
  %3197 = vmatprep.subr.bf16.mxu0 %v3166
  %3198 = vmatpush1.bf16.msra.mxu0 %v3165
  %3199 = vmatprep.subr.bf16.mxu0 %v3168
  %3200 = vmatpush1.bf16.msra.mxu0 %v3167
  %3201 = vmatprep.subr.bf16.mxu0 %v3170
  %3202 = vmatpush1.bf16.msra.mxu0 %v3169
  %3203 = vmatprep.subr.bf16.mxu0 0
  %3204 = vmatpush1.bf16.msra.mxu0 0
  %3205 = vmatprep.subr.bf16.mxu0 0
  %3206 = vmatpush1.bf16.msra.mxu0 0
  %3207 = vmatprep.subr.bf16.mxu0 0
  %3208 = vmatpush1.bf16.msra.mxu0 0
  %3209 = vmatprep.subr.bf16.mxu0 0
  %3210 = vmatpush1.bf16.msra.mxu0 0
  %3211 = vmatprep.subr.bf16.mxu0 0
  %3212 = vmatpush1.bf16.msra.mxu0 0
  %3213 = vmatprep.subr.bf16.mxu0 0
  %3214 = vmatpush1.bf16.msra.mxu0 0
  %3215 = vmatprep.subr.bf16.mxu0 0
  %3216 = vmatpush1.bf16.msra.mxu0 0
  %3217 = vmatprep.subr.bf16.mxu0 0
  %3218 = vmatpush1.bf16.msra.mxu0 0
  %3219 = vmatprep.mubr.bf16.mxu0 0
  %3220 = vmatmul.mubr.bf16.gmra.mrb[0].mxu0 %v3093
  %v3221 = vpop.f32.mrb[0].mxu0
  %v3222 = vadd.f32 %v3100, %v3221
  %v3223 = vpop.f32.mrb[0].mxu0
  %v3224 = vadd.f32 %v3104, %v3223
  %v3225 = vpop.f32.mrb[0].mxu0
  %v3226 = vadd.f32 %v3100, %v3225
  %v3227 = vpop.f32.mrb[0].mxu0
  %v3228 = vadd.f32 %v3104, %v3227
  %3229 = vdwg.mxu0
  %v3230 = vmax.f32 %v3222, 0.0
  %v3231 = vmax.f32 %v3224, 0.0
  %v3232 = vmax.f32 %v3226, 0.0
  %v3233 = vmax.f32 %v3228, 0.0
  %v3234 = vld [vmem:[%s6] sm:$0xf]
  %v3235 = vld [vmem:[%s6 + $0x4] sm:$0xf]
  %v3236 = vld [vmem:[%s6 + $0x8] sm:$0xf]
  %v3237 = vld [vmem:[%s6 + $0xc] sm:$0xf]
  %v3238 = vld [vmem:[%s6 + $0x10] sm:$0xf]
  %v3239 = vld [vmem:[%s6 + $0x14] sm:$0xf]
  %v3240 = vld [vmem:[%s6 + $0x18] sm:$0xf]
  %v3241 = vld [vmem:[%s6 + $0x1c] sm:$0xf]
  %v3242 = vld [vmem:[%s6 + $0x20] sm:$0xf]
  %v3243 = vld [vmem:[%s6 + $0x24] sm:$0xf]
  %v3244 = vld [vmem:[%s6 + $0x28] sm:$0xf]
  %v3245 = vld [vmem:[%s6 + $0x2c] sm:$0xf]
  %v3246 = vld [vmem:[%s6 + $0x30] sm:$0xf]
  %v3247 = vld [vmem:[%s6 + $0x34] sm:$0xf]
  %v3248 = vld [vmem:[%s6 + $0x38] sm:$0xf]
  %v3249 = vld [vmem:[%s6 + $0x3c] sm:$0xf]
  %v3250 = vld [vmem:[%s6 + $0x40] sm:$0xf]
  %v3251 = vld [vmem:[%s6 + $0x44] sm:$0xf]
  %v3252 = vld [vmem:[%s6 + $0x48] sm:$0xf]
  %v3253 = vld [vmem:[%s6 + $0x4c] sm:$0xf]
  %v3254 = vld [vmem:[%s6 + $0x50] sm:$0xf]
  %v3255 = vld [vmem:[%s6 + $0x54] sm:$0xf]
  %v3256 = vld [vmem:[%s6 + $0x58] sm:$0xf]
  %v3257 = vld [vmem:[%s6 + $0x5c] sm:$0xf]
  %v3258 = vld [vmem:[%s6 + $0x60] sm:$0xf]
  %v3259 = vld [vmem:[%s6 + $0x64] sm:$0xf]
  %v3260 = vld [vmem:[%s6 + $0x68] sm:$0xf]
  %v3261 = vld [vmem:[%s6 + $0x6c] sm:$0xf]
  %v3262 = vld [vmem:[%s6 + $0x70] sm:$0xf]
  %v3263 = vld [vmem:[%s6 + $0x74] sm:$0xf]
  %v3264 = vld [vmem:[%s6 + $0x78] sm:$0xf]
  %v3265 = vld [vmem:[%s6 + $0x7c] sm:$0xf]
  %v3266 = vpack.c.bf16 %v3232, %v3230
  %v3267 = vpack.c.bf16 %v3233, %v3231
  %v3268 = vld [vmem:[%s7 + $0x28] sm:$0x1]
  %v3269 = vlaneseq
  %v3270 = vshrl.u32 %v3269, 7
  %v3271 = vsub.s32 0, %v3270
  %v3272 = vrot.slane %v3268, %v3271
  %v3305 = vunpack.c.l.b16 %v3234
  %v3306 = vunpack.c.l.b16 %v3235
  %v3307 = vunpack.c.l.b16 %v3236
  %v3308 = vunpack.c.l.b16 %v3237
  %v3309 = vunpack.c.l.b16 %v3238
  %v3310 = vunpack.c.l.b16 %v3239
  %v3311 = vunpack.c.l.b16 %v3240
  %v3312 = vunpack.c.l.b16 %v3241
  %v3313 = vunpack.c.l.b16 %v3242
  %v3314 = vunpack.c.l.b16 %v3243
  %v3315 = vunpack.c.l.b16 %v3244
  %v3316 = vunpack.c.l.b16 %v3245
  %v3317 = vunpack.c.l.b16 %v3246
  %v3318 = vunpack.c.l.b16 %v3247
  %v3319 = vunpack.c.l.b16 %v3248
  %v3320 = vunpack.c.l.b16 %v3249
  %v3321 = vunpack.c.l.b16 %v3250
  %v3322 = vunpack.c.l.b16 %v3251
  %v3323 = vunpack.c.l.b16 %v3252
  %v3324 = vunpack.c.l.b16 %v3253
  %v3325 = vunpack.c.l.b16 %v3254
  %v3326 = vunpack.c.l.b16 %v3255
  %v3327 = vunpack.c.l.b16 %v3256
  %v3328 = vunpack.c.l.b16 %v3257
  %v3329 = vunpack.c.l.b16 %v3258
  %v3330 = vunpack.c.l.b16 %v3259
  %v3331 = vunpack.c.l.b16 %v3260
  %v3332 = vunpack.c.l.b16 %v3261
  %v3333 = vunpack.c.l.b16 %v3262
  %v3334 = vunpack.c.l.b16 %v3263
  %v3335 = vunpack.c.l.b16 %v3264
  %v3336 = vunpack.c.l.b16 %v3265
  %v3337 = vpack.c.b16 %v3306, %v3305
  %v3338 = vpack.c.b16 %v3308, %v3307
  %v3339 = vpack.c.b16 %v3310, %v3309
  %v3340 = vpack.c.b16 %v3312, %v3311
  %v3341 = vpack.c.b16 %v3314, %v3313
  %v3342 = vpack.c.b16 %v3316, %v3315
  %v3343 = vpack.c.b16 %v3318, %v3317
  %v3344 = vpack.c.b16 %v3320, %v3319
  %v3345 = vpack.c.b16 %v3322, %v3321
  %v3346 = vpack.c.b16 %v3324, %v3323
  %v3347 = vpack.c.b16 %v3326, %v3325
  %v3348 = vpack.c.b16 %v3328, %v3327
  %v3349 = vpack.c.b16 %v3330, %v3329
  %v3350 = vpack.c.b16 %v3332, %v3331
  %v3351 = vpack.c.b16 %v3334, %v3333
  %v3352 = vpack.c.b16 %v3336, %v3335
  %3369 = vmatprep.subr.bf16.mxu0 0
  %3370 = vmatpush1.bf16.msra.mxu0 %v3337
  %3371 = vmatprep.subr.bf16.mxu0 0
  %3372 = vmatpush1.bf16.msra.mxu0 %v3338
  %3373 = vmatprep.subr.bf16.mxu0 0
  %3374 = vmatpush1.bf16.msra.mxu0 %v3339
  %3375 = vmatprep.subr.bf16.mxu0 0
  %3376 = vmatpush1.bf16.msra.mxu0 %v3340
  %3377 = vmatprep.subr.bf16.mxu0 0
  %3378 = vmatpush1.bf16.msra.mxu0 %v3341
  %3379 = vmatprep.subr.bf16.mxu0 0
  %3380 = vmatpush1.bf16.msra.mxu0 %v3342
  %3381 = vmatprep.subr.bf16.mxu0 0
  %3382 = vmatpush1.bf16.msra.mxu0 %v3343
  %3383 = vmatprep.subr.bf16.mxu0 0
  %3384 = vmatpush1.bf16.msra.mxu0 %v3344
  %3385 = vmatprep.subr.bf16.mxu0 0
  %3386 = vmatpush1.bf16.msra.mxu0 %v3345
  %3387 = vmatprep.subr.bf16.mxu0 0
  %3388 = vmatpush1.bf16.msra.mxu0 %v3346
  %3389 = vmatprep.subr.bf16.mxu0 0
  %3390 = vmatpush1.bf16.msra.mxu0 %v3347
  %3391 = vmatprep.subr.bf16.mxu0 0
  %3392 = vmatpush1.bf16.msra.mxu0 %v3348
  %3393 = vmatprep.subr.bf16.mxu0 0
  %3394 = vmatpush1.bf16.msra.mxu0 %v3349
  %3395 = vmatprep.subr.bf16.mxu0 0
  %3396 = vmatpush1.bf16.msra.mxu0 %v3350
  %3397 = vmatprep.subr.bf16.mxu0 0
  %3398 = vmatpush1.bf16.msra.mxu0 %v3351
  %3399 = vmatprep.subr.bf16.mxu0 0
  %3400 = vmatpush1.bf16.msra.mxu0 %v3352
  %3401 = vmatprep.mubr.bf16.mxu0 %v3267
  %3402 = vmatmul.mubr.bf16.gmra.mrb[0].mxu0 %v3266
  %v3403 = vpop.f32.mrb[0].mxu0
  %v3404 = vadd.f32 %v3272, %v3403
  %v3405 = vpop.f32.mrb[0].mxu0
  %v3406 = vpop.f32.mrb[0].mxu0
  %v3407 = vadd.f32 %v3272, %v3406
  %v3408 = vpop.f32.mrb[0].mxu0
  %3409 = vdwg.mxu0
  %v3410 = vadd.f32 %v3075, %v3404
  %v3411 = vadd.f32 %v3076, %v3407
  %v3412 = vld [vmem:[%s7 + $0x3c] sm:$0x1]
  %v3413 = vld [vmem:[%s7 + $0x40] sm:$0x1]
  %3414 = vadd.xlane.f32.xlu0 %v3410
  %v3415 = vpop.xlane.xlu0 %3414
  %3416 = vadd.xlane.f32.xlu0 %v3411
  %v3417 = vpop.xlane.xlu0 %3416
  %v3418 = vmul.f32 %v3415, %v1554
  %v3419 = vmul.f32 %v3417, %v1554
  %v3420 = vsub.f32 %v3410, %v3418
  %v3421 = vsub.f32 %v3411, %v3419
  %v3422 = vmul.f32 %v3420, %v3420
  %v3423 = vmul.f32 %v3421, %v3421
  %3424 = vadd.xlane.f32.xlu0 %v3422
  %v3425 = vpop.xlane.xlu0 %3424
  %3426 = vadd.xlane.f32.xlu0 %v3423
  %v3427 = vpop.xlane.xlu0 %3426
  %v3428 = vmul.f32 %v3425, %v1554
  %v3429 = vmul.f32 %v3427, %v1554
  %v3430 = vadd.f32 %v3428, 1e-05
  %v3431 = vadd.f32 %v3429, 1e-05
  %v3432 = vrsqrt.pop %v3430
  %v3433 = vrsqrt.pop %v3431
  %v3434 = vmul.f32 %v3420, %v3432
  %v3435 = vmul.f32 %v3421, %v3433
  %v3436 = vlaneseq
  %v3437 = vshrl.u32 %v3436, 7
  %v3438 = vsub.s32 0, %v3437
  %v3439 = vrot.slane %v3412, %v3438
  %v3440 = vmul.f32 %v3434, %v3439
  %v3441 = vmul.f32 %v3435, %v3439
  %v3442 = vlaneseq
  %v3443 = vshrl.u32 %v3442, 7
  %v3444 = vsub.s32 0, %v3443
  %v3445 = vrot.slane %v3413, %v3444
  %v3446 = vadd.f32 %v3440, %v3445
  %v3447 = vadd.f32 %v3441, %v3445
  %s3448 = scalar_lea.vmem %s5, 640
  %v3449 = vld [vmem:[%s3448] sm:$0xff]
  %v3450 = vld [vmem:[%s3448 + $0x8] sm:$0xf]
  %v3451 = vld [vmem:[%s3448 + $0x28] sm:$0xff]
  %v3452 = vld [vmem:[%s3448 + $0x30] sm:$0xf]
  %v3453 = vld [vmem:[%s3448 + $0x50] sm:$0xff]
  %v3454 = vld [vmem:[%s3448 + $0x58] sm:$0xf]
  %v3455 = vld [vmem:[%s3448 + $0x78] sm:$0xff]
  %v3456 = vld [vmem:[%s3448 + $0x80] sm:$0xf]
  %v3457 = vld [vmem:[%s3448 + $0xa0] sm:$0xff]
  %v3458 = vld [vmem:[%s3448 + $0xa8] sm:$0xf]
  %v3459 = vld [vmem:[%s3448 + $0xc8] sm:$0xff]
  %v3460 = vld [vmem:[%s3448 + $0xd0] sm:$0xf]
  %v3461 = vld [vmem:[%s3448 + $0xf0] sm:$0xff]
  %v3462 = vld [vmem:[%s3448 + $0xf8] sm:$0xf]
  %v3463 = vld [vmem:[%s3448 + $0x118] sm:$0xff]
  %v3464 = vld [vmem:[%s3448 + $0x120] sm:$0xf]
  %v3465 = vld [vmem:[%s3448 + $0x140] sm:$0xff]
  %v3466 = vld [vmem:[%s3448 + $0x148] sm:$0xf]
  %v3467 = vld [vmem:[%s3448 + $0x168] sm:$0xff]
  %v3468 = vld [vmem:[%s3448 + $0x170] sm:$0xf]
  %v3469 = vld [vmem:[%s3448 + $0x190] sm:$0xff]
  %v3470 = vld [vmem:[%s3448 + $0x198] sm:$0xf]
  %v3471 = vld [vmem:[%s3448 + $0x1b8] sm:$0xff]
  %v3472 = vld [vmem:[%s3448 + $0x1c0] sm:$0xf]
  %v3473 = vld [vmem:[%s3448 + $0x1e0] sm:$0xff]
  %v3474 = vld [vmem:[%s3448 + $0x1e8] sm:$0xf]
  %v3475 = vld [vmem:[%s3448 + $0x208] sm:$0xff]
  %v3476 = vld [vmem:[%s3448 + $0x210] sm:$0xf]
  %v3477 = vld [vmem:[%s3448 + $0x230] sm:$0xff]
  %v3478 = vld [vmem:[%s3448 + $0x238] sm:$0xf]
  %v3479 = vld [vmem:[%s3448 + $0x258] sm:$0xff]
  %v3480 = vld [vmem:[%s3448 + $0x260] sm:$0xf]
  %v3481 = vpack.c.bf16 %v3447, %v3446
  %s3482 = scalar_lea.vmem %s7, 1
  %v3483 = vld [vmem:[%s3482] ss:$4 sm:$0x7]
  %v3485 = vlaneseq
  %v3486 = vshrl.u32 %v3485, 7
  %v3487 = vsub.s32 0, %v3486
  %v3488 = vrot.slane %v3483, %v3487
  %v3489 = vlaneseq
  %v3490 = vshrl.u32 %v3489, 7
  %v3491 = vsub.s32 1, %v3490
  %v3492 = vrot.slane %v3483, %v3491
  %v3493 = vlaneseq
  %v3494 = vshrl.u32 %v3493, 7
  %v3495 = vsub.s32 2, %v3494
  %v3496 = vrot.slane %v3483, %v3495
  %v3532 = vunpack.c.l.b16 %v3449
  %v3533 = vunpack.c.h.b16 %v3449
  %v3534 = vunpack.c.l.b16 %v3450
  %v3535 = vunpack.c.l.b16 %v3451
  %v3536 = vunpack.c.h.b16 %v3451
  %v3537 = vunpack.c.l.b16 %v3452
  %v3538 = vunpack.c.l.b16 %v3453
  %v3539 = vunpack.c.h.b16 %v3453
  %v3540 = vunpack.c.l.b16 %v3454
  %v3541 = vunpack.c.l.b16 %v3455
  %v3542 = vunpack.c.h.b16 %v3455
  %v3543 = vunpack.c.l.b16 %v3456
  %v3544 = vunpack.c.l.b16 %v3457
  %v3545 = vunpack.c.h.b16 %v3457
  %v3546 = vunpack.c.l.b16 %v3458
  %v3547 = vunpack.c.l.b16 %v3459
  %v3548 = vunpack.c.h.b16 %v3459
  %v3549 = vunpack.c.l.b16 %v3460
  %v3550 = vunpack.c.l.b16 %v3461
  %v3551 = vunpack.c.h.b16 %v3461
  %v3552 = vunpack.c.l.b16 %v3462
  %v3553 = vunpack.c.l.b16 %v3463
  %v3554 = vunpack.c.h.b16 %v3463
  %v3555 = vunpack.c.l.b16 %v3464
  %v3556 = vunpack.c.l.b16 %v3465
  %v3557 = vunpack.c.h.b16 %v3465
  %v3558 = vunpack.c.l.b16 %v3466
  %v3559 = vunpack.c.l.b16 %v3467
  %v3560 = vunpack.c.h.b16 %v3467
  %v3561 = vunpack.c.l.b16 %v3468
  %v3562 = vunpack.c.l.b16 %v3469
  %v3563 = vunpack.c.h.b16 %v3469
  %v3564 = vunpack.c.l.b16 %v3470
  %v3565 = vunpack.c.l.b16 %v3471
  %v3566 = vunpack.c.h.b16 %v3471
  %v3567 = vunpack.c.l.b16 %v3472
  %v3568 = vunpack.c.l.b16 %v3473
  %v3569 = vunpack.c.h.b16 %v3473
  %v3570 = vunpack.c.l.b16 %v3474
  %v3571 = vunpack.c.l.b16 %v3475
  %v3572 = vunpack.c.h.b16 %v3475
  %v3573 = vunpack.c.l.b16 %v3476
  %v3574 = vunpack.c.l.b16 %v3477
  %v3575 = vunpack.c.h.b16 %v3477
  %v3576 = vunpack.c.l.b16 %v3478
  %v3577 = vunpack.c.l.b16 %v3479
  %v3578 = vunpack.c.h.b16 %v3479
  %v3579 = vunpack.c.l.b16 %v3480
  %v3580 = vpack.c.b16 %v3535, %v3532
  %v3581 = vpack.c.b16 %v3536, %v3533
  %v3582 = vpack.c.b16 %v3537, %v3534
  %v3583 = vpack.c.b16 %v3541, %v3538
  %v3584 = vpack.c.b16 %v3542, %v3539
  %v3585 = vpack.c.b16 %v3543, %v3540
  %v3586 = vpack.c.b16 %v3547, %v3544
  %v3587 = vpack.c.b16 %v3548, %v3545
  %v3588 = vpack.c.b16 %v3549, %v3546
  %v3589 = vpack.c.b16 %v3553, %v3550
  %v3590 = vpack.c.b16 %v3554, %v3551
  %v3591 = vpack.c.b16 %v3555, %v3552
  %v3592 = vpack.c.b16 %v3559, %v3556
  %v3593 = vpack.c.b16 %v3560, %v3557
  %v3594 = vpack.c.b16 %v3561, %v3558
  %v3595 = vpack.c.b16 %v3565, %v3562
  %v3596 = vpack.c.b16 %v3566, %v3563
  %v3597 = vpack.c.b16 %v3567, %v3564
  %v3598 = vpack.c.b16 %v3571, %v3568
  %v3599 = vpack.c.b16 %v3572, %v3569
  %v3600 = vpack.c.b16 %v3573, %v3570
  %v3601 = vpack.c.b16 %v3577, %v3574
  %v3602 = vpack.c.b16 %v3578, %v3575
  %v3603 = vpack.c.b16 %v3579, %v3576
  %3628 = vmatprep.subr.bf16.mxu0 %v3581
  %3629 = vmatpush1.bf16.msra.mxu0 %v3580
  %3630 = vmatprep.subr.bf16.mxu0 %v3584
  %3631 = vmatpush1.bf16.msra.mxu0 %v3583
  %3632 = vmatprep.subr.bf16.mxu0 %v3587
  %3633 = vmatpush1.bf16.msra.mxu0 %v3586
  %3634 = vmatprep.subr.bf16.mxu0 %v3590
  %3635 = vmatpush1.bf16.msra.mxu0 %v3589
  %3636 = vmatprep.subr.bf16.mxu0 %v3593
  %3637 = vmatpush1.bf16.msra.mxu0 %v3592
  %3638 = vmatprep.subr.bf16.mxu0 %v3596
  %3639 = vmatpush1.bf16.msra.mxu0 %v3595
  %3640 = vmatprep.subr.bf16.mxu0 %v3599
  %3641 = vmatpush1.bf16.msra.mxu0 %v3598
  %3642 = vmatprep.subr.bf16.mxu0 %v3602
  %3643 = vmatpush1.bf16.msra.mxu0 %v3601
  %3644 = vmatprep.subr.bf16.mxu0 0
  %3645 = vmatpush1.bf16.msra.mxu0 0
  %3646 = vmatprep.subr.bf16.mxu0 0
  %3647 = vmatpush1.bf16.msra.mxu0 0
  %3648 = vmatprep.subr.bf16.mxu0 0
  %3649 = vmatpush1.bf16.msra.mxu0 0
  %3650 = vmatprep.subr.bf16.mxu0 0
  %3651 = vmatpush1.bf16.msra.mxu0 0
  %3652 = vmatprep.subr.bf16.mxu0 0
  %3653 = vmatpush1.bf16.msra.mxu0 0
  %3654 = vmatprep.subr.bf16.mxu0 0
  %3655 = vmatpush1.bf16.msra.mxu0 0
  %3656 = vmatprep.subr.bf16.mxu0 0
  %3657 = vmatpush1.bf16.msra.mxu0 0
  %3658 = vmatprep.subr.bf16.mxu0 0
  %3659 = vmatpush1.bf16.msra.mxu0 0
  %3660 = vmatprep.mubr.bf16.mxu0 0
  %3661 = vmatmul.mubr.bf16.gmra.mrb[0].mxu0 %v3481
  %v3662 = vpop.f32.mrb[0].mxu0
  %v3663 = vadd.f32 %v3488, %v3662
  %v3664 = vpop.f32.mrb[0].mxu0
  %v3665 = vadd.f32 %v3492, %v3664
  %v3666 = vpop.f32.mrb[0].mxu0
  %v3667 = vadd.f32 %v3488, %v3666
  %v3668 = vpop.f32.mrb[0].mxu0
  %v3669 = vadd.f32 %v3492, %v3668
  %3670 = vdwg.mxu0
  %3671 = vmatprep.subr.bf16.mxu0 0
  %3672 = vmatpush1.bf16.msra.mxu0 %v3582
  %3673 = vmatprep.subr.bf16.mxu0 0
  %3674 = vmatpush1.bf16.msra.mxu0 %v3585
  %3675 = vmatprep.subr.bf16.mxu0 0
  %3676 = vmatpush1.bf16.msra.mxu0 %v3588
  %3677 = vmatprep.subr.bf16.mxu0 0
  %3678 = vmatpush1.bf16.msra.mxu0 %v3591
  %3679 = vmatprep.subr.bf16.mxu0 0
  %3680 = vmatpush1.bf16.msra.mxu0 %v3594
  %3681 = vmatprep.subr.bf16.mxu0 0
  %3682 = vmatpush1.bf16.msra.mxu0 %v3597
  %3683 = vmatprep.subr.bf16.mxu0 0
  %3684 = vmatpush1.bf16.msra.mxu0 %v3600
  %3685 = vmatprep.subr.bf16.mxu0 0
  %3686 = vmatpush1.bf16.msra.mxu0 %v3603
  %3687 = vmatprep.subr.bf16.mxu0 0
  %3688 = vmatpush1.bf16.msra.mxu0 0
  %3689 = vmatprep.subr.bf16.mxu0 0
  %3690 = vmatpush1.bf16.msra.mxu0 0
  %3691 = vmatprep.subr.bf16.mxu0 0
  %3692 = vmatpush1.bf16.msra.mxu0 0
  %3693 = vmatprep.subr.bf16.mxu0 0
  %3694 = vmatpush1.bf16.msra.mxu0 0
  %3695 = vmatprep.subr.bf16.mxu0 0
  %3696 = vmatpush1.bf16.msra.mxu0 0
  %3697 = vmatprep.subr.bf16.mxu0 0
  %3698 = vmatpush1.bf16.msra.mxu0 0
  %3699 = vmatprep.subr.bf16.mxu0 0
  %3700 = vmatpush1.bf16.msra.mxu0 0
  %3701 = vmatprep.subr.bf16.mxu0 0
  %3702 = vmatpush1.bf16.msra.mxu0 0
  %3703 = vmatprep.mubr.bf16.mxu0 0
  %3704 = vmatmul.mubr.bf16.gmra.mrb[0].mxu0 %v3481
  %v3705 = vpop.f32.mrb[0].mxu0
  %v3706 = vadd.f32 %v3496, %v3705
  %v3707 = vpop.f32.mrb[0].mxu0
  %v3708 = vpop.f32.mrb[0].mxu0
  %v3709 = vadd.f32 %v3496, %v3708
  %v3710 = vpop.f32.mrb[0].mxu0
  %3711 = vdwg.mxu0
  %v3712 = vld [vmem:[%s3448 + $0xc] sm:$0xf]
  %v3713 = vld [vmem:[%s3448 + $0x34] sm:$0xf]
  %v3714 = vld [vmem:[%s3448 + $0x5c] sm:$0xf]
  %v3715 = vld [vmem:[%s3448 + $0x84] sm:$0xf]
  %v3716 = vld [vmem:[%s3448 + $0xac] sm:$0xf]
  %v3717 = vld [vmem:[%s3448 + $0xd4] sm:$0xf]
  %v3718 = vld [vmem:[%s3448 + $0xfc] sm:$0xf]
  %v3719 = vld [vmem:[%s3448 + $0x124] sm:$0xf]
  %v3720 = vld [vmem:[%s3448 + $0x14c] sm:$0xf]
  %v3721 = vld [vmem:[%s3448 + $0x174] sm:$0xf]
  %v3722 = vld [vmem:[%s3448 + $0x19c] sm:$0xf]
  %v3723 = vld [vmem:[%s3448 + $0x1c4] sm:$0xf]
  %v3724 = vld [vmem:[%s3448 + $0x1ec] sm:$0xf]
  %v3725 = vld [vmem:[%s3448 + $0x214] sm:$0xf]
  %v3726 = vld [vmem:[%s3448 + $0x23c] sm:$0xf]
  %v3727 = vld [vmem:[%s3448 + $0x264] sm:$0xf]
  %v3728 = vld [vmem:[%s7 + $0xd] sm:$0x1]
  %v3729 = vpack.c.bf16 %v3667, %v3663
  %v3730 = vpack.c.bf16 %v3709, %v3706
  %3731 = vxpose.xlu0.b32.start [1/16] %v3665, 128
  %3732 = vxpose.xlu0.b32.cont [2/16] %v3669, 128
  %3733 = vxpose.xlu0.b32.cont [3/16] 0.0, 128
  %3734 = vxpose.xlu0.b32.cont [4/16] 0.0, 128
  %3735 = vxpose.xlu0.b32.cont [5/16] 0.0, 128
  %3736 = vxpose.xlu0.b32.cont [6/16] 0.0, 128
  %3737 = vxpose.xlu0.b32.cont [7/16] 0.0, 128
  %3738 = vxpose.xlu0.b32.cont [8/16] 0.0, 128
  %3739 = vxpose.xlu0.b32.cont [9/16] 0.0, 128
  %3740 = vxpose.xlu0.b32.cont [10/16] 0.0, 128
  %3741 = vxpose.xlu0.b32.cont [11/16] 0.0, 128
  %3742 = vxpose.xlu0.b32.cont [12/16] 0.0, 128
  %3743 = vxpose.xlu0.b32.cont [13/16] 0.0, 128
  %3744 = vxpose.xlu0.b32.cont [14/16] 0.0, 128
  %3745 = vxpose.xlu0.b32.cont [15/16] 0.0, 128
  %3746 = vxpose.xlu0.b32.end [16/16] 0.0, 128
  %v3747 = vpop.trf.xlu0
  %v3748 = vpop.trf.xlu0
  %v3749 = vpop.trf.xlu0
  %v3750 = vpop.trf.xlu0
  %v3751 = vpop.trf.xlu0
  %v3752 = vpop.trf.xlu0
  %v3753 = vpop.trf.xlu0
  %v3754 = vpop.trf.xlu0
  %v3755 = vpop.trf.xlu0
  %v3756 = vpop.trf.xlu0
  %v3757 = vpop.trf.xlu0
  %v3758 = vpop.trf.xlu0
  %v3759 = vpop.trf.xlu0
  %v3760 = vpop.trf.xlu0
  %v3761 = vpop.trf.xlu0
  %v3762 = vpop.trf.xlu0
  %v3763 = vpack.c.bf16 %v3748, %v3747
  %v3764 = vpack.c.bf16 %v3750, %v3749
  %v3765 = vpack.c.bf16 %v3752, %v3751
  %v3766 = vpack.c.bf16 %v3754, %v3753
  %v3767 = vpack.c.bf16 %v3756, %v3755
  %v3768 = vpack.c.bf16 %v3758, %v3757
  %v3769 = vpack.c.bf16 %v3760, %v3759
  %v3770 = vpack.c.bf16 %v3762, %v3761
  %v3772 = vsel %vm450, %v3729, 0
  %3774 = vmatprep.subr.bf16.mxu0 0
  %3775 = vmatpush1.bf16.msra.mxu0 %v3763
  %3776 = vmatprep.subr.bf16.mxu0 0
  %3777 = vmatpush1.bf16.msra.mxu0 0
  %3778 = vmatprep.subr.bf16.mxu0 0
  %3779 = vmatpush1.bf16.msra.mxu0 0
  %3780 = vmatprep.subr.bf16.mxu0 0
  %3781 = vmatpush1.bf16.msra.mxu0 0
  %3782 = vmatprep.subr.bf16.mxu0 0
  %3783 = vmatpush1.bf16.msra.mxu0 0
  %3784 = vmatprep.subr.bf16.mxu0 0
  %3785 = vmatpush1.bf16.msra.mxu0 0
  %3786 = vmatprep.subr.bf16.mxu0 0
  %3787 = vmatpush1.bf16.msra.mxu0 0
  %3788 = vmatprep.subr.bf16.mxu0 0
  %3789 = vmatpush1.bf16.msra.mxu0 0
  %3790 = vmatprep.subr.bf16.mxu0 0
  %3791 = vmatpush1.bf16.msra.mxu0 0
  %3792 = vmatprep.subr.bf16.mxu0 0
  %3793 = vmatpush1.bf16.msra.mxu0 0
  %3794 = vmatprep.subr.bf16.mxu0 0
  %3795 = vmatpush1.bf16.msra.mxu0 0
  %3796 = vmatprep.subr.bf16.mxu0 0
  %3797 = vmatpush1.bf16.msra.mxu0 0
  %3798 = vmatprep.subr.bf16.mxu0 0
  %3799 = vmatpush1.bf16.msra.mxu0 0
  %3800 = vmatprep.subr.bf16.mxu0 0
  %3801 = vmatpush1.bf16.msra.mxu0 0
  %3802 = vmatprep.subr.bf16.mxu0 0
  %3803 = vmatpush1.bf16.msra.mxu0 0
  %3804 = vmatprep.subr.bf16.mxu0 0
  %3805 = vmatpush1.bf16.msra.mxu0 0
  %3806 = vmatprep.mubr.bf16.mxu0 0
  %3807 = vmatmul.mubr.bf16.gmra.mrb[0].mxu0 %v3772
  %v3808 = vpop.f32.mrb[0].mxu0
  %v3809 = vadd.f32 %v127, %v3808
  %v3810 = vpop.f32.mrb[0].mxu0
  %v3811 = vpop.f32.mrb[0].mxu0
  %v3812 = vadd.f32 %v128, %v3811
  %v3813 = vpop.f32.mrb[0].mxu0
  %3814 = vdwg.mxu0
  %v3815 = vsel %vm450, %v3809, -inf
  %3816 = vmax.xlane.f32.xlu0 %v3815
  %v3817 = vpop.xlane.xlu0 %3816
  %v3818 = vsel %vm450, %v3812, -inf
  %3819 = vmax.xlane.f32.xlu0 %v3818
  %v3820 = vpop.xlane.xlu0 %3819
  %v3821 = vsub.f32 %v3809, %v3817
  %v3822 = vsub.f32 %v3812, %v3820
  %v3823 = vmul.f32 %v3821, 1.442695
  %v3824 = vpow.pop %v3823
  %v3825 = vmul.f32 %v3822, 1.442695
  %v3826 = vpow.pop %v3825
  %v3827 = vsel %vm450, %v3824, 0.0
  %3828 = vadd.xlane.f32.xlu0 %v3827
  %v3829 = vpop.xlane.xlu0 %3828
  %v3830 = vsel %vm450, %v3826, 0.0
  %3831 = vadd.xlane.f32.xlu0 %v3830
  %v3832 = vpop.xlane.xlu0 %3831
  %v3833 = vrcp.pop %v3829
  %v3834 = vrcp.pop %v3832
  %v3835 = vmul.f32 %v3824, %v3833
  %v3836 = vmul.f32 %v3826, %v3834
  %v3837 = vpack.c.bf16 %v3836, %v3835
  %v3839 = vsel %vm450, %v3837, 0
  %3841 = vmatprep.subr.bf16.mxu0 0
  %3842 = vmatpush1.bf16.msra.mxu0 %v3730
  %3843 = vmatprep.subr.bf16.mxu0 0
  %3844 = vmatpush1.bf16.msra.mxu0 0
  %3845 = vmatprep.subr.bf16.mxu0 0
  %3846 = vmatpush1.bf16.msra.mxu0 0
  %3847 = vmatprep.subr.bf16.mxu0 0
  %3848 = vmatpush1.bf16.msra.mxu0 0
  %3849 = vmatprep.subr.bf16.mxu0 0
  %3850 = vmatpush1.bf16.msra.mxu0 0
  %3851 = vmatprep.subr.bf16.mxu0 0
  %3852 = vmatpush1.bf16.msra.mxu0 0
  %3853 = vmatprep.subr.bf16.mxu0 0
  %3854 = vmatpush1.bf16.msra.mxu0 0
  %3855 = vmatprep.subr.bf16.mxu0 0
  %3856 = vmatpush1.bf16.msra.mxu0 0
  %3857 = vmatprep.subr.bf16.mxu0 0
  %3858 = vmatpush1.bf16.msra.mxu0 0
  %3859 = vmatprep.subr.bf16.mxu0 0
  %3860 = vmatpush1.bf16.msra.mxu0 0
  %3861 = vmatprep.subr.bf16.mxu0 0
  %3862 = vmatpush1.bf16.msra.mxu0 0
  %3863 = vmatprep.subr.bf16.mxu0 0
  %3864 = vmatpush1.bf16.msra.mxu0 0
  %3865 = vmatprep.subr.bf16.mxu0 0
  %3866 = vmatpush1.bf16.msra.mxu0 0
  %3867 = vmatprep.subr.bf16.mxu0 0
  %3868 = vmatpush1.bf16.msra.mxu0 0
  %3869 = vmatprep.subr.bf16.mxu0 0
  %3870 = vmatpush1.bf16.msra.mxu0 0
  %3871 = vmatprep.subr.bf16.mxu0 0
  %3872 = vmatpush1.bf16.msra.mxu0 0
  %3873 = vmatprep.mubr.bf16.mxu0 0
  %3874 = vmatmul.mubr.bf16.gmra.mrb[0].mxu0 %v3839
  %v3875 = vpop.f32.mrb[0].mxu0
  %v3876 = vadd.f32 0.0, %v3875
  %v3877 = vpop.f32.mrb[0].mxu0
  %v3878 = vpop.f32.mrb[0].mxu0
  %v3879 = vadd.f32 0.0, %v3878
  %v3880 = vpop.f32.mrb[0].mxu0
  %3881 = vdwg.mxu0
  %3883 = vrot.lane.b32.xlu0 %v3729, 112
  %v3884 = vpop.permute.xlu0 %3883
  %v3886 = vsel %vm450, %v3884, 0
  %3888 = vmatprep.subr.bf16.mxu0 0
  %3889 = vmatpush1.bf16.msra.mxu0 %v3764
  %3890 = vmatprep.subr.bf16.mxu0 0
  %3891 = vmatpush1.bf16.msra.mxu0 0
  %3892 = vmatprep.subr.bf16.mxu0 0
  %3893 = vmatpush1.bf16.msra.mxu0 0
  %3894 = vmatprep.subr.bf16.mxu0 0
  %3895 = vmatpush1.bf16.msra.mxu0 0
  %3896 = vmatprep.subr.bf16.mxu0 0
  %3897 = vmatpush1.bf16.msra.mxu0 0
  %3898 = vmatprep.subr.bf16.mxu0 0
  %3899 = vmatpush1.bf16.msra.mxu0 0
  %3900 = vmatprep.subr.bf16.mxu0 0
  %3901 = vmatpush1.bf16.msra.mxu0 0
  %3902 = vmatprep.subr.bf16.mxu0 0
  %3903 = vmatpush1.bf16.msra.mxu0 0
  %3904 = vmatprep.subr.bf16.mxu0 0
  %3905 = vmatpush1.bf16.msra.mxu0 0
  %3906 = vmatprep.subr.bf16.mxu0 0
  %3907 = vmatpush1.bf16.msra.mxu0 0
  %3908 = vmatprep.subr.bf16.mxu0 0
  %3909 = vmatpush1.bf16.msra.mxu0 0
  %3910 = vmatprep.subr.bf16.mxu0 0
  %3911 = vmatpush1.bf16.msra.mxu0 0
  %3912 = vmatprep.subr.bf16.mxu0 0
  %3913 = vmatpush1.bf16.msra.mxu0 0
  %3914 = vmatprep.subr.bf16.mxu0 0
  %3915 = vmatpush1.bf16.msra.mxu0 0
  %3916 = vmatprep.subr.bf16.mxu0 0
  %3917 = vmatpush1.bf16.msra.mxu0 0
  %3918 = vmatprep.subr.bf16.mxu0 0
  %3919 = vmatpush1.bf16.msra.mxu0 0
  %3920 = vmatprep.mubr.bf16.mxu0 0
  %3921 = vmatmul.mubr.bf16.gmra.mrb[0].mxu0 %v3886
  %v3922 = vpop.f32.mrb[0].mxu0
  %v3923 = vadd.f32 %v127, %v3922
  %v3924 = vpop.f32.mrb[0].mxu0
  %v3925 = vpop.f32.mrb[0].mxu0
  %v3926 = vadd.f32 %v128, %v3925
  %v3927 = vpop.f32.mrb[0].mxu0
  %3928 = vdwg.mxu0
  %v3929 = vsel %vm450, %v3923, -inf
  %3930 = vmax.xlane.f32.xlu0 %v3929
  %v3931 = vpop.xlane.xlu0 %3930
  %v3932 = vsel %vm450, %v3926, -inf
  %3933 = vmax.xlane.f32.xlu0 %v3932
  %v3934 = vpop.xlane.xlu0 %3933
  %v3935 = vsub.f32 %v3923, %v3931
  %v3936 = vsub.f32 %v3926, %v3934
  %v3937 = vmul.f32 %v3935, 1.442695
  %v3938 = vpow.pop %v3937
  %v3939 = vmul.f32 %v3936, 1.442695
  %v3940 = vpow.pop %v3939
  %v3941 = vsel %vm450, %v3938, 0.0
  %3942 = vadd.xlane.f32.xlu0 %v3941
  %v3943 = vpop.xlane.xlu0 %3942
  %v3944 = vsel %vm450, %v3940, 0.0
  %3945 = vadd.xlane.f32.xlu0 %v3944
  %v3946 = vpop.xlane.xlu0 %3945
  %v3947 = vrcp.pop %v3943
  %v3948 = vrcp.pop %v3946
  %v3949 = vmul.f32 %v3938, %v3947
  %v3950 = vmul.f32 %v3940, %v3948
  %v3951 = vpack.c.bf16 %v3950, %v3949
  %3953 = vrot.lane.b32.xlu0 %v3730, 112
  %v3954 = vpop.permute.xlu0 %3953
  %v3957 = vsel %vm450, %v3951, 0
  %3959 = vmatprep.subr.bf16.mxu0 0
  %3960 = vmatpush1.bf16.msra.mxu0 %v3954
  %3961 = vmatprep.subr.bf16.mxu0 0
  %3962 = vmatpush1.bf16.msra.mxu0 0
  %3963 = vmatprep.subr.bf16.mxu0 0
  %3964 = vmatpush1.bf16.msra.mxu0 0
  %3965 = vmatprep.subr.bf16.mxu0 0
  %3966 = vmatpush1.bf16.msra.mxu0 0
  %3967 = vmatprep.subr.bf16.mxu0 0
  %3968 = vmatpush1.bf16.msra.mxu0 0
  %3969 = vmatprep.subr.bf16.mxu0 0
  %3970 = vmatpush1.bf16.msra.mxu0 0
  %3971 = vmatprep.subr.bf16.mxu0 0
  %3972 = vmatpush1.bf16.msra.mxu0 0
  %3973 = vmatprep.subr.bf16.mxu0 0
  %3974 = vmatpush1.bf16.msra.mxu0 0
  %3975 = vmatprep.subr.bf16.mxu0 0
  %3976 = vmatpush1.bf16.msra.mxu0 0
  %3977 = vmatprep.subr.bf16.mxu0 0
  %3978 = vmatpush1.bf16.msra.mxu0 0
  %3979 = vmatprep.subr.bf16.mxu0 0
  %3980 = vmatpush1.bf16.msra.mxu0 0
  %3981 = vmatprep.subr.bf16.mxu0 0
  %3982 = vmatpush1.bf16.msra.mxu0 0
  %3983 = vmatprep.subr.bf16.mxu0 0
  %3984 = vmatpush1.bf16.msra.mxu0 0
  %3985 = vmatprep.subr.bf16.mxu0 0
  %3986 = vmatpush1.bf16.msra.mxu0 0
  %3987 = vmatprep.subr.bf16.mxu0 0
  %3988 = vmatpush1.bf16.msra.mxu0 0
  %3989 = vmatprep.subr.bf16.mxu0 0
  %3990 = vmatpush1.bf16.msra.mxu0 0
  %3991 = vmatprep.mubr.bf16.mxu0 0
  %3992 = vmatmul.mubr.bf16.gmra.mrb[0].mxu0 %v3957
  %v3993 = vpop.f32.mrb[0].mxu0
  %v3994 = vadd.f32 0.0, %v3993
  %v3995 = vpop.f32.mrb[0].mxu0
  %v3996 = vpop.f32.mrb[0].mxu0
  %v3997 = vadd.f32 0.0, %v3996
  %v3998 = vpop.f32.mrb[0].mxu0
  %3999 = vdwg.mxu0
  %4000 = vrot.lane.b32.xlu0 %v3729, 96
  %v4001 = vpop.permute.xlu0 %4000
  %v4003 = vsel %vm450, %v4001, 0
  %4005 = vmatprep.subr.bf16.mxu0 0
  %4006 = vmatpush1.bf16.msra.mxu0 %v3765
  %4007 = vmatprep.subr.bf16.mxu0 0
  %4008 = vmatpush1.bf16.msra.mxu0 0
  %4009 = vmatprep.subr.bf16.mxu0 0
  %4010 = vmatpush1.bf16.msra.mxu0 0
  %4011 = vmatprep.subr.bf16.mxu0 0
  %4012 = vmatpush1.bf16.msra.mxu0 0
  %4013 = vmatprep.subr.bf16.mxu0 0
  %4014 = vmatpush1.bf16.msra.mxu0 0
  %4015 = vmatprep.subr.bf16.mxu0 0
  %4016 = vmatpush1.bf16.msra.mxu0 0
  %4017 = vmatprep.subr.bf16.mxu0 0
  %4018 = vmatpush1.bf16.msra.mxu0 0
  %4019 = vmatprep.subr.bf16.mxu0 0
  %4020 = vmatpush1.bf16.msra.mxu0 0
  %4021 = vmatprep.subr.bf16.mxu0 0
  %4022 = vmatpush1.bf16.msra.mxu0 0
  %4023 = vmatprep.subr.bf16.mxu0 0
  %4024 = vmatpush1.bf16.msra.mxu0 0
  %4025 = vmatprep.subr.bf16.mxu0 0
  %4026 = vmatpush1.bf16.msra.mxu0 0
  %4027 = vmatprep.subr.bf16.mxu0 0
  %4028 = vmatpush1.bf16.msra.mxu0 0
  %4029 = vmatprep.subr.bf16.mxu0 0
  %4030 = vmatpush1.bf16.msra.mxu0 0
  %4031 = vmatprep.subr.bf16.mxu0 0
  %4032 = vmatpush1.bf16.msra.mxu0 0
  %4033 = vmatprep.subr.bf16.mxu0 0
  %4034 = vmatpush1.bf16.msra.mxu0 0
  %4035 = vmatprep.subr.bf16.mxu0 0
  %4036 = vmatpush1.bf16.msra.mxu0 0
  %4037 = vmatprep.mubr.bf16.mxu0 0
  %4038 = vmatmul.mubr.bf16.gmra.mrb[0].mxu0 %v4003
  %v4039 = vpop.f32.mrb[0].mxu0
  %v4040 = vadd.f32 %v127, %v4039
  %v4041 = vpop.f32.mrb[0].mxu0
  %v4042 = vpop.f32.mrb[0].mxu0
  %v4043 = vadd.f32 %v128, %v4042
  %v4044 = vpop.f32.mrb[0].mxu0
  %4045 = vdwg.mxu0
  %v4046 = vsel %vm450, %v4040, -inf
  %4047 = vmax.xlane.f32.xlu0 %v4046
  %v4048 = vpop.xlane.xlu0 %4047
  %v4049 = vsel %vm450, %v4043, -inf
  %4050 = vmax.xlane.f32.xlu0 %v4049
  %v4051 = vpop.xlane.xlu0 %4050
  %v4052 = vsub.f32 %v4040, %v4048
  %v4053 = vsub.f32 %v4043, %v4051
  %v4054 = vmul.f32 %v4052, 1.442695
  %v4055 = vpow.pop %v4054
  %v4056 = vmul.f32 %v4053, 1.442695
  %v4057 = vpow.pop %v4056
  %v4058 = vsel %vm450, %v4055, 0.0
  %4059 = vadd.xlane.f32.xlu0 %v4058
  %v4060 = vpop.xlane.xlu0 %4059
  %v4061 = vsel %vm450, %v4057, 0.0
  %4062 = vadd.xlane.f32.xlu0 %v4061
  %v4063 = vpop.xlane.xlu0 %4062
  %v4064 = vrcp.pop %v4060
  %v4065 = vrcp.pop %v4063
  %v4066 = vmul.f32 %v4055, %v4064
  %v4067 = vmul.f32 %v4057, %v4065
  %v4068 = vpack.c.bf16 %v4067, %v4066
  %4069 = vrot.lane.b32.xlu0 %v3730, 96
  %v4070 = vpop.permute.xlu0 %4069
  %v4073 = vsel %vm450, %v4068, 0
  %4075 = vmatprep.subr.bf16.mxu0 0
  %4076 = vmatpush1.bf16.msra.mxu0 %v4070
  %4077 = vmatprep.subr.bf16.mxu0 0
  %4078 = vmatpush1.bf16.msra.mxu0 0
  %4079 = vmatprep.subr.bf16.mxu0 0
  %4080 = vmatpush1.bf16.msra.mxu0 0
  %4081 = vmatprep.subr.bf16.mxu0 0
  %4082 = vmatpush1.bf16.msra.mxu0 0
  %4083 = vmatprep.subr.bf16.mxu0 0
  %4084 = vmatpush1.bf16.msra.mxu0 0
  %4085 = vmatprep.subr.bf16.mxu0 0
  %4086 = vmatpush1.bf16.msra.mxu0 0
  %4087 = vmatprep.subr.bf16.mxu0 0
  %4088 = vmatpush1.bf16.msra.mxu0 0
  %4089 = vmatprep.subr.bf16.mxu0 0
  %4090 = vmatpush1.bf16.msra.mxu0 0
  %4091 = vmatprep.subr.bf16.mxu0 0
  %4092 = vmatpush1.bf16.msra.mxu0 0
  %4093 = vmatprep.subr.bf16.mxu0 0
  %4094 = vmatpush1.bf16.msra.mxu0 0
  %4095 = vmatprep.subr.bf16.mxu0 0
  %4096 = vmatpush1.bf16.msra.mxu0 0
  %4097 = vmatprep.subr.bf16.mxu0 0
  %4098 = vmatpush1.bf16.msra.mxu0 0
  %4099 = vmatprep.subr.bf16.mxu0 0
  %4100 = vmatpush1.bf16.msra.mxu0 0
  %4101 = vmatprep.subr.bf16.mxu0 0
  %4102 = vmatpush1.bf16.msra.mxu0 0
  %4103 = vmatprep.subr.bf16.mxu0 0
  %4104 = vmatpush1.bf16.msra.mxu0 0
  %4105 = vmatprep.subr.bf16.mxu0 0
  %4106 = vmatpush1.bf16.msra.mxu0 0
  %4107 = vmatprep.mubr.bf16.mxu0 0
  %4108 = vmatmul.mubr.bf16.gmra.mrb[0].mxu0 %v4073
  %v4109 = vpop.f32.mrb[0].mxu0
  %v4110 = vadd.f32 0.0, %v4109
  %v4111 = vpop.f32.mrb[0].mxu0
  %v4112 = vpop.f32.mrb[0].mxu0
  %v4113 = vadd.f32 0.0, %v4112
  %v4114 = vpop.f32.mrb[0].mxu0
  %4115 = vdwg.mxu0
  %4116 = vrot.lane.b32.xlu0 %v3729, 80
  %v4117 = vpop.permute.xlu0 %4116
  %v4119 = vsel %vm450, %v4117, 0
  %4121 = vmatprep.subr.bf16.mxu0 0
  %4122 = vmatpush1.bf16.msra.mxu0 %v3766
  %4123 = vmatprep.subr.bf16.mxu0 0
  %4124 = vmatpush1.bf16.msra.mxu0 0
  %4125 = vmatprep.subr.bf16.mxu0 0
  %4126 = vmatpush1.bf16.msra.mxu0 0
  %4127 = vmatprep.subr.bf16.mxu0 0
  %4128 = vmatpush1.bf16.msra.mxu0 0
  %4129 = vmatprep.subr.bf16.mxu0 0
  %4130 = vmatpush1.bf16.msra.mxu0 0
  %4131 = vmatprep.subr.bf16.mxu0 0
  %4132 = vmatpush1.bf16.msra.mxu0 0
  %4133 = vmatprep.subr.bf16.mxu0 0
  %4134 = vmatpush1.bf16.msra.mxu0 0
  %4135 = vmatprep.subr.bf16.mxu0 0
  %4136 = vmatpush1.bf16.msra.mxu0 0
  %4137 = vmatprep.subr.bf16.mxu0 0
  %4138 = vmatpush1.bf16.msra.mxu0 0
  %4139 = vmatprep.subr.bf16.mxu0 0
  %4140 = vmatpush1.bf16.msra.mxu0 0
  %4141 = vmatprep.subr.bf16.mxu0 0
  %4142 = vmatpush1.bf16.msra.mxu0 0
  %4143 = vmatprep.subr.bf16.mxu0 0
  %4144 = vmatpush1.bf16.msra.mxu0 0
  %4145 = vmatprep.subr.bf16.mxu0 0
  %4146 = vmatpush1.bf16.msra.mxu0 0
  %4147 = vmatprep.subr.bf16.mxu0 0
  %4148 = vmatpush1.bf16.msra.mxu0 0
  %4149 = vmatprep.subr.bf16.mxu0 0
  %4150 = vmatpush1.bf16.msra.mxu0 0
  %4151 = vmatprep.subr.bf16.mxu0 0
  %4152 = vmatpush1.bf16.msra.mxu0 0
  %4153 = vmatprep.mubr.bf16.mxu0 0
  %4154 = vmatmul.mubr.bf16.gmra.mrb[0].mxu0 %v4119
  %v4155 = vpop.f32.mrb[0].mxu0
  %v4156 = vadd.f32 %v127, %v4155
  %v4157 = vpop.f32.mrb[0].mxu0
  %v4158 = vpop.f32.mrb[0].mxu0
  %v4159 = vadd.f32 %v128, %v4158
  %v4160 = vpop.f32.mrb[0].mxu0
  %4161 = vdwg.mxu0
  %v4162 = vsel %vm450, %v4156, -inf
  %4163 = vmax.xlane.f32.xlu0 %v4162
  %v4164 = vpop.xlane.xlu0 %4163
  %v4165 = vsel %vm450, %v4159, -inf
  %4166 = vmax.xlane.f32.xlu0 %v4165
  %v4167 = vpop.xlane.xlu0 %4166
  %v4168 = vsub.f32 %v4156, %v4164
  %v4169 = vsub.f32 %v4159, %v4167
  %v4170 = vmul.f32 %v4168, 1.442695
  %v4171 = vpow.pop %v4170
  %v4172 = vmul.f32 %v4169, 1.442695
  %v4173 = vpow.pop %v4172
  %v4174 = vsel %vm450, %v4171, 0.0
  %4175 = vadd.xlane.f32.xlu0 %v4174
  %v4176 = vpop.xlane.xlu0 %4175
  %v4177 = vsel %vm450, %v4173, 0.0
  %4178 = vadd.xlane.f32.xlu0 %v4177
  %v4179 = vpop.xlane.xlu0 %4178
  %v4180 = vrcp.pop %v4176
  %v4181 = vrcp.pop %v4179
  %v4182 = vmul.f32 %v4171, %v4180
  %v4183 = vmul.f32 %v4173, %v4181
  %v4184 = vpack.c.bf16 %v4183, %v4182
  %4185 = vrot.lane.b32.xlu0 %v3730, 80
  %v4186 = vpop.permute.xlu0 %4185
  %v4189 = vsel %vm450, %v4184, 0
  %4191 = vmatprep.subr.bf16.mxu0 0
  %4192 = vmatpush1.bf16.msra.mxu0 %v4186
  %4193 = vmatprep.subr.bf16.mxu0 0
  %4194 = vmatpush1.bf16.msra.mxu0 0
  %4195 = vmatprep.subr.bf16.mxu0 0
  %4196 = vmatpush1.bf16.msra.mxu0 0
  %4197 = vmatprep.subr.bf16.mxu0 0
  %4198 = vmatpush1.bf16.msra.mxu0 0
  %4199 = vmatprep.subr.bf16.mxu0 0
  %4200 = vmatpush1.bf16.msra.mxu0 0
  %4201 = vmatprep.subr.bf16.mxu0 0
  %4202 = vmatpush1.bf16.msra.mxu0 0
  %4203 = vmatprep.subr.bf16.mxu0 0
  %4204 = vmatpush1.bf16.msra.mxu0 0
  %4205 = vmatprep.subr.bf16.mxu0 0
  %4206 = vmatpush1.bf16.msra.mxu0 0
  %4207 = vmatprep.subr.bf16.mxu0 0
  %4208 = vmatpush1.bf16.msra.mxu0 0
  %4209 = vmatprep.subr.bf16.mxu0 0
  %4210 = vmatpush1.bf16.msra.mxu0 0
  %4211 = vmatprep.subr.bf16.mxu0 0
  %4212 = vmatpush1.bf16.msra.mxu0 0
  %4213 = vmatprep.subr.bf16.mxu0 0
  %4214 = vmatpush1.bf16.msra.mxu0 0
  %4215 = vmatprep.subr.bf16.mxu0 0
  %4216 = vmatpush1.bf16.msra.mxu0 0
  %4217 = vmatprep.subr.bf16.mxu0 0
  %4218 = vmatpush1.bf16.msra.mxu0 0
  %4219 = vmatprep.subr.bf16.mxu0 0
  %4220 = vmatpush1.bf16.msra.mxu0 0
  %4221 = vmatprep.subr.bf16.mxu0 0
  %4222 = vmatpush1.bf16.msra.mxu0 0
  %4223 = vmatprep.mubr.bf16.mxu0 0
  %4224 = vmatmul.mubr.bf16.gmra.mrb[0].mxu0 %v4189
  %v4225 = vpop.f32.mrb[0].mxu0
  %v4226 = vadd.f32 0.0, %v4225
  %v4227 = vpop.f32.mrb[0].mxu0
  %v4228 = vpop.f32.mrb[0].mxu0
  %v4229 = vadd.f32 0.0, %v4228
  %v4230 = vpop.f32.mrb[0].mxu0
  %4231 = vdwg.mxu0
  %4232 = vrot.lane.b32.xlu0 %v3729, 64
  %v4233 = vpop.permute.xlu0 %4232
  %v4235 = vsel %vm450, %v4233, 0
  %4237 = vmatprep.subr.bf16.mxu0 0
  %4238 = vmatpush1.bf16.msra.mxu0 %v3767
  %4239 = vmatprep.subr.bf16.mxu0 0
  %4240 = vmatpush1.bf16.msra.mxu0 0
  %4241 = vmatprep.subr.bf16.mxu0 0
  %4242 = vmatpush1.bf16.msra.mxu0 0
  %4243 = vmatprep.subr.bf16.mxu0 0
  %4244 = vmatpush1.bf16.msra.mxu0 0
  %4245 = vmatprep.subr.bf16.mxu0 0
  %4246 = vmatpush1.bf16.msra.mxu0 0
  %4247 = vmatprep.subr.bf16.mxu0 0
  %4248 = vmatpush1.bf16.msra.mxu0 0
  %4249 = vmatprep.subr.bf16.mxu0 0
  %4250 = vmatpush1.bf16.msra.mxu0 0
  %4251 = vmatprep.subr.bf16.mxu0 0
  %4252 = vmatpush1.bf16.msra.mxu0 0
  %4253 = vmatprep.subr.bf16.mxu0 0
  %4254 = vmatpush1.bf16.msra.mxu0 0
  %4255 = vmatprep.subr.bf16.mxu0 0
  %4256 = vmatpush1.bf16.msra.mxu0 0
  %4257 = vmatprep.subr.bf16.mxu0 0
  %4258 = vmatpush1.bf16.msra.mxu0 0
  %4259 = vmatprep.subr.bf16.mxu0 0
  %4260 = vmatpush1.bf16.msra.mxu0 0
  %4261 = vmatprep.subr.bf16.mxu0 0
  %4262 = vmatpush1.bf16.msra.mxu0 0
  %4263 = vmatprep.subr.bf16.mxu0 0
  %4264 = vmatpush1.bf16.msra.mxu0 0
  %4265 = vmatprep.subr.bf16.mxu0 0
  %4266 = vmatpush1.bf16.msra.mxu0 0
  %4267 = vmatprep.subr.bf16.mxu0 0
  %4268 = vmatpush1.bf16.msra.mxu0 0
  %4269 = vmatprep.mubr.bf16.mxu0 0
  %4270 = vmatmul.mubr.bf16.gmra.mrb[0].mxu0 %v4235
  %v4271 = vpop.f32.mrb[0].mxu0
  %v4272 = vadd.f32 %v127, %v4271
  %v4273 = vpop.f32.mrb[0].mxu0
  %v4274 = vpop.f32.mrb[0].mxu0
  %v4275 = vadd.f32 %v128, %v4274
  %v4276 = vpop.f32.mrb[0].mxu0
  %4277 = vdwg.mxu0
  %v4278 = vsel %vm450, %v4272, -inf
  %4279 = vmax.xlane.f32.xlu0 %v4278
  %v4280 = vpop.xlane.xlu0 %4279
  %v4281 = vsel %vm450, %v4275, -inf
  %4282 = vmax.xlane.f32.xlu0 %v4281
  %v4283 = vpop.xlane.xlu0 %4282
  %v4284 = vsub.f32 %v4272, %v4280
  %v4285 = vsub.f32 %v4275, %v4283
  %v4286 = vmul.f32 %v4284, 1.442695
  %v4287 = vpow.pop %v4286
  %v4288 = vmul.f32 %v4285, 1.442695
  %v4289 = vpow.pop %v4288
  %v4290 = vsel %vm450, %v4287, 0.0
  %4291 = vadd.xlane.f32.xlu0 %v4290
  %v4292 = vpop.xlane.xlu0 %4291
  %v4293 = vsel %vm450, %v4289, 0.0
  %4294 = vadd.xlane.f32.xlu0 %v4293
  %v4295 = vpop.xlane.xlu0 %4294
  %v4296 = vrcp.pop %v4292
  %v4297 = vrcp.pop %v4295
  %v4298 = vmul.f32 %v4287, %v4296
  %v4299 = vmul.f32 %v4289, %v4297
  %v4300 = vpack.c.bf16 %v4299, %v4298
  %4301 = vrot.lane.b32.xlu0 %v3730, 64
  %v4302 = vpop.permute.xlu0 %4301
  %v4305 = vsel %vm450, %v4300, 0
  %4307 = vmatprep.subr.bf16.mxu0 0
  %4308 = vmatpush1.bf16.msra.mxu0 %v4302
  %4309 = vmatprep.subr.bf16.mxu0 0
  %4310 = vmatpush1.bf16.msra.mxu0 0
  %4311 = vmatprep.subr.bf16.mxu0 0
  %4312 = vmatpush1.bf16.msra.mxu0 0
  %4313 = vmatprep.subr.bf16.mxu0 0
  %4314 = vmatpush1.bf16.msra.mxu0 0
  %4315 = vmatprep.subr.bf16.mxu0 0
  %4316 = vmatpush1.bf16.msra.mxu0 0
  %4317 = vmatprep.subr.bf16.mxu0 0
  %4318 = vmatpush1.bf16.msra.mxu0 0
  %4319 = vmatprep.subr.bf16.mxu0 0
  %4320 = vmatpush1.bf16.msra.mxu0 0
  %4321 = vmatprep.subr.bf16.mxu0 0
  %4322 = vmatpush1.bf16.msra.mxu0 0
  %4323 = vmatprep.subr.bf16.mxu0 0
  %4324 = vmatpush1.bf16.msra.mxu0 0
  %4325 = vmatprep.subr.bf16.mxu0 0
  %4326 = vmatpush1.bf16.msra.mxu0 0
  %4327 = vmatprep.subr.bf16.mxu0 0
  %4328 = vmatpush1.bf16.msra.mxu0 0
  %4329 = vmatprep.subr.bf16.mxu0 0
  %4330 = vmatpush1.bf16.msra.mxu0 0
  %4331 = vmatprep.subr.bf16.mxu0 0
  %4332 = vmatpush1.bf16.msra.mxu0 0
  %4333 = vmatprep.subr.bf16.mxu0 0
  %4334 = vmatpush1.bf16.msra.mxu0 0
  %4335 = vmatprep.subr.bf16.mxu0 0
  %4336 = vmatpush1.bf16.msra.mxu0 0
  %4337 = vmatprep.subr.bf16.mxu0 0
  %4338 = vmatpush1.bf16.msra.mxu0 0
  %4339 = vmatprep.mubr.bf16.mxu0 0
  %4340 = vmatmul.mubr.bf16.gmra.mrb[0].mxu0 %v4305
  %v4341 = vpop.f32.mrb[0].mxu0
  %v4342 = vadd.f32 0.0, %v4341
  %v4343 = vpop.f32.mrb[0].mxu0
  %v4344 = vpop.f32.mrb[0].mxu0
  %v4345 = vadd.f32 0.0, %v4344
  %v4346 = vpop.f32.mrb[0].mxu0
  %4347 = vdwg.mxu0
  %4348 = vrot.lane.b32.xlu0 %v3729, 48
  %v4349 = vpop.permute.xlu0 %4348
  %v4351 = vsel %vm450, %v4349, 0
  %4353 = vmatprep.subr.bf16.mxu0 0
  %4354 = vmatpush1.bf16.msra.mxu0 %v3768
  %4355 = vmatprep.subr.bf16.mxu0 0
  %4356 = vmatpush1.bf16.msra.mxu0 0
  %4357 = vmatprep.subr.bf16.mxu0 0
  %4358 = vmatpush1.bf16.msra.mxu0 0
  %4359 = vmatprep.subr.bf16.mxu0 0
  %4360 = vmatpush1.bf16.msra.mxu0 0
  %4361 = vmatprep.subr.bf16.mxu0 0
  %4362 = vmatpush1.bf16.msra.mxu0 0
  %4363 = vmatprep.subr.bf16.mxu0 0
  %4364 = vmatpush1.bf16.msra.mxu0 0
  %4365 = vmatprep.subr.bf16.mxu0 0
  %4366 = vmatpush1.bf16.msra.mxu0 0
  %4367 = vmatprep.subr.bf16.mxu0 0
  %4368 = vmatpush1.bf16.msra.mxu0 0
  %4369 = vmatprep.subr.bf16.mxu0 0
  %4370 = vmatpush1.bf16.msra.mxu0 0
  %4371 = vmatprep.subr.bf16.mxu0 0
  %4372 = vmatpush1.bf16.msra.mxu0 0
  %4373 = vmatprep.subr.bf16.mxu0 0
  %4374 = vmatpush1.bf16.msra.mxu0 0
  %4375 = vmatprep.subr.bf16.mxu0 0
  %4376 = vmatpush1.bf16.msra.mxu0 0
  %4377 = vmatprep.subr.bf16.mxu0 0
  %4378 = vmatpush1.bf16.msra.mxu0 0
  %4379 = vmatprep.subr.bf16.mxu0 0
  %4380 = vmatpush1.bf16.msra.mxu0 0
  %4381 = vmatprep.subr.bf16.mxu0 0
  %4382 = vmatpush1.bf16.msra.mxu0 0
  %4383 = vmatprep.subr.bf16.mxu0 0
  %4384 = vmatpush1.bf16.msra.mxu0 0
  %4385 = vmatprep.mubr.bf16.mxu0 0
  %4386 = vmatmul.mubr.bf16.gmra.mrb[0].mxu0 %v4351
  %v4387 = vpop.f32.mrb[0].mxu0
  %v4388 = vadd.f32 %v127, %v4387
  %v4389 = vpop.f32.mrb[0].mxu0
  %v4390 = vpop.f32.mrb[0].mxu0
  %v4391 = vadd.f32 %v128, %v4390
  %v4392 = vpop.f32.mrb[0].mxu0
  %4393 = vdwg.mxu0
  %v4394 = vsel %vm450, %v4388, -inf
  %4395 = vmax.xlane.f32.xlu0 %v4394
  %v4396 = vpop.xlane.xlu0 %4395
  %v4397 = vsel %vm450, %v4391, -inf
  %4398 = vmax.xlane.f32.xlu0 %v4397
  %v4399 = vpop.xlane.xlu0 %4398
  %v4400 = vsub.f32 %v4388, %v4396
  %v4401 = vsub.f32 %v4391, %v4399
  %v4402 = vmul.f32 %v4400, 1.442695
  %v4403 = vpow.pop %v4402
  %v4404 = vmul.f32 %v4401, 1.442695
  %v4405 = vpow.pop %v4404
  %v4406 = vsel %vm450, %v4403, 0.0
  %4407 = vadd.xlane.f32.xlu0 %v4406
  %v4408 = vpop.xlane.xlu0 %4407
  %v4409 = vsel %vm450, %v4405, 0.0
  %4410 = vadd.xlane.f32.xlu0 %v4409
  %v4411 = vpop.xlane.xlu0 %4410
  %v4412 = vrcp.pop %v4408
  %v4413 = vrcp.pop %v4411
  %v4414 = vmul.f32 %v4403, %v4412
  %v4415 = vmul.f32 %v4405, %v4413
  %v4416 = vpack.c.bf16 %v4415, %v4414
  %4417 = vrot.lane.b32.xlu0 %v3730, 48
  %v4418 = vpop.permute.xlu0 %4417
  %v4421 = vsel %vm450, %v4416, 0
  %4423 = vmatprep.subr.bf16.mxu0 0
  %4424 = vmatpush1.bf16.msra.mxu0 %v4418
  %4425 = vmatprep.subr.bf16.mxu0 0
  %4426 = vmatpush1.bf16.msra.mxu0 0
  %4427 = vmatprep.subr.bf16.mxu0 0
  %4428 = vmatpush1.bf16.msra.mxu0 0
  %4429 = vmatprep.subr.bf16.mxu0 0
  %4430 = vmatpush1.bf16.msra.mxu0 0
  %4431 = vmatprep.subr.bf16.mxu0 0
  %4432 = vmatpush1.bf16.msra.mxu0 0
  %4433 = vmatprep.subr.bf16.mxu0 0
  %4434 = vmatpush1.bf16.msra.mxu0 0
  %4435 = vmatprep.subr.bf16.mxu0 0
  %4436 = vmatpush1.bf16.msra.mxu0 0
  %4437 = vmatprep.subr.bf16.mxu0 0
  %4438 = vmatpush1.bf16.msra.mxu0 0
  %4439 = vmatprep.subr.bf16.mxu0 0
  %4440 = vmatpush1.bf16.msra.mxu0 0
  %4441 = vmatprep.subr.bf16.mxu0 0
  %4442 = vmatpush1.bf16.msra.mxu0 0
  %4443 = vmatprep.subr.bf16.mxu0 0
  %4444 = vmatpush1.bf16.msra.mxu0 0
  %4445 = vmatprep.subr.bf16.mxu0 0
  %4446 = vmatpush1.bf16.msra.mxu0 0
  %4447 = vmatprep.subr.bf16.mxu0 0
  %4448 = vmatpush1.bf16.msra.mxu0 0
  %4449 = vmatprep.subr.bf16.mxu0 0
  %4450 = vmatpush1.bf16.msra.mxu0 0
  %4451 = vmatprep.subr.bf16.mxu0 0
  %4452 = vmatpush1.bf16.msra.mxu0 0
  %4453 = vmatprep.subr.bf16.mxu0 0
  %4454 = vmatpush1.bf16.msra.mxu0 0
  %4455 = vmatprep.mubr.bf16.mxu0 0
  %4456 = vmatmul.mubr.bf16.gmra.mrb[0].mxu0 %v4421
  %v4457 = vpop.f32.mrb[0].mxu0
  %v4458 = vadd.f32 0.0, %v4457
  %v4459 = vpop.f32.mrb[0].mxu0
  %v4460 = vpop.f32.mrb[0].mxu0
  %v4461 = vadd.f32 0.0, %v4460
  %v4462 = vpop.f32.mrb[0].mxu0
  %4463 = vdwg.mxu0
  %4464 = vrot.lane.b32.xlu0 %v3729, 32
  %v4465 = vpop.permute.xlu0 %4464
  %v4467 = vsel %vm450, %v4465, 0
  %4469 = vmatprep.subr.bf16.mxu0 0
  %4470 = vmatpush1.bf16.msra.mxu0 %v3769
  %4471 = vmatprep.subr.bf16.mxu0 0
  %4472 = vmatpush1.bf16.msra.mxu0 0
  %4473 = vmatprep.subr.bf16.mxu0 0
  %4474 = vmatpush1.bf16.msra.mxu0 0
  %4475 = vmatprep.subr.bf16.mxu0 0
  %4476 = vmatpush1.bf16.msra.mxu0 0
  %4477 = vmatprep.subr.bf16.mxu0 0
  %4478 = vmatpush1.bf16.msra.mxu0 0
  %4479 = vmatprep.subr.bf16.mxu0 0
  %4480 = vmatpush1.bf16.msra.mxu0 0
  %4481 = vmatprep.subr.bf16.mxu0 0
  %4482 = vmatpush1.bf16.msra.mxu0 0
  %4483 = vmatprep.subr.bf16.mxu0 0
  %4484 = vmatpush1.bf16.msra.mxu0 0
  %4485 = vmatprep.subr.bf16.mxu0 0
  %4486 = vmatpush1.bf16.msra.mxu0 0
  %4487 = vmatprep.subr.bf16.mxu0 0
  %4488 = vmatpush1.bf16.msra.mxu0 0
  %4489 = vmatprep.subr.bf16.mxu0 0
  %4490 = vmatpush1.bf16.msra.mxu0 0
  %4491 = vmatprep.subr.bf16.mxu0 0
  %4492 = vmatpush1.bf16.msra.mxu0 0
  %4493 = vmatprep.subr.bf16.mxu0 0
  %4494 = vmatpush1.bf16.msra.mxu0 0
  %4495 = vmatprep.subr.bf16.mxu0 0
  %4496 = vmatpush1.bf16.msra.mxu0 0
  %4497 = vmatprep.subr.bf16.mxu0 0
  %4498 = vmatpush1.bf16.msra.mxu0 0
  %4499 = vmatprep.subr.bf16.mxu0 0
  %4500 = vmatpush1.bf16.msra.mxu0 0
  %4501 = vmatprep.mubr.bf16.mxu0 0
  %4502 = vmatmul.mubr.bf16.gmra.mrb[0].mxu0 %v4467
  %v4503 = vpop.f32.mrb[0].mxu0
  %v4504 = vadd.f32 %v127, %v4503
  %v4505 = vpop.f32.mrb[0].mxu0
  %v4506 = vpop.f32.mrb[0].mxu0
  %v4507 = vadd.f32 %v128, %v4506
  %v4508 = vpop.f32.mrb[0].mxu0
  %4509 = vdwg.mxu0
  %v4510 = vsel %vm450, %v4504, -inf
  %4511 = vmax.xlane.f32.xlu0 %v4510
  %v4512 = vpop.xlane.xlu0 %4511
  %v4513 = vsel %vm450, %v4507, -inf
  %4514 = vmax.xlane.f32.xlu0 %v4513
  %v4515 = vpop.xlane.xlu0 %4514
  %v4516 = vsub.f32 %v4504, %v4512
  %v4517 = vsub.f32 %v4507, %v4515
  %v4518 = vmul.f32 %v4516, 1.442695
  %v4519 = vpow.pop %v4518
  %v4520 = vmul.f32 %v4517, 1.442695
  %v4521 = vpow.pop %v4520
  %v4522 = vsel %vm450, %v4519, 0.0
  %4523 = vadd.xlane.f32.xlu0 %v4522
  %v4524 = vpop.xlane.xlu0 %4523
  %v4525 = vsel %vm450, %v4521, 0.0
  %4526 = vadd.xlane.f32.xlu0 %v4525
  %v4527 = vpop.xlane.xlu0 %4526
  %v4528 = vrcp.pop %v4524
  %v4529 = vrcp.pop %v4527
  %v4530 = vmul.f32 %v4519, %v4528
  %v4531 = vmul.f32 %v4521, %v4529
  %v4532 = vpack.c.bf16 %v4531, %v4530
  %4533 = vrot.lane.b32.xlu0 %v3730, 32
  %v4534 = vpop.permute.xlu0 %4533
  %v4537 = vsel %vm450, %v4532, 0
  %4539 = vmatprep.subr.bf16.mxu0 0
  %4540 = vmatpush1.bf16.msra.mxu0 %v4534
  %4541 = vmatprep.subr.bf16.mxu0 0
  %4542 = vmatpush1.bf16.msra.mxu0 0
  %4543 = vmatprep.subr.bf16.mxu0 0
  %4544 = vmatpush1.bf16.msra.mxu0 0
  %4545 = vmatprep.subr.bf16.mxu0 0
  %4546 = vmatpush1.bf16.msra.mxu0 0
  %4547 = vmatprep.subr.bf16.mxu0 0
  %4548 = vmatpush1.bf16.msra.mxu0 0
  %4549 = vmatprep.subr.bf16.mxu0 0
  %4550 = vmatpush1.bf16.msra.mxu0 0
  %4551 = vmatprep.subr.bf16.mxu0 0
  %4552 = vmatpush1.bf16.msra.mxu0 0
  %4553 = vmatprep.subr.bf16.mxu0 0
  %4554 = vmatpush1.bf16.msra.mxu0 0
  %4555 = vmatprep.subr.bf16.mxu0 0
  %4556 = vmatpush1.bf16.msra.mxu0 0
  %4557 = vmatprep.subr.bf16.mxu0 0
  %4558 = vmatpush1.bf16.msra.mxu0 0
  %4559 = vmatprep.subr.bf16.mxu0 0
  %4560 = vmatpush1.bf16.msra.mxu0 0
  %4561 = vmatprep.subr.bf16.mxu0 0
  %4562 = vmatpush1.bf16.msra.mxu0 0
  %4563 = vmatprep.subr.bf16.mxu0 0
  %4564 = vmatpush1.bf16.msra.mxu0 0
  %4565 = vmatprep.subr.bf16.mxu0 0
  %4566 = vmatpush1.bf16.msra.mxu0 0
  %4567 = vmatprep.subr.bf16.mxu0 0
  %4568 = vmatpush1.bf16.msra.mxu0 0
  %4569 = vmatprep.subr.bf16.mxu0 0
  %4570 = vmatpush1.bf16.msra.mxu0 0
  %4571 = vmatprep.mubr.bf16.mxu0 0
  %4572 = vmatmul.mubr.bf16.gmra.mrb[0].mxu0 %v4537
  %v4573 = vpop.f32.mrb[0].mxu0
  %v4574 = vadd.f32 0.0, %v4573
  %v4575 = vpop.f32.mrb[0].mxu0
  %v4576 = vpop.f32.mrb[0].mxu0
  %v4577 = vadd.f32 0.0, %v4576
  %v4578 = vpop.f32.mrb[0].mxu0
  %4579 = vdwg.mxu0
  %4580 = vrot.lane.b32.xlu0 %v3729, 16
  %v4581 = vpop.permute.xlu0 %4580
  %v4583 = vsel %vm450, %v4581, 0
  %4585 = vmatprep.subr.bf16.mxu0 0
  %4586 = vmatpush1.bf16.msra.mxu0 %v3770
  %4587 = vmatprep.subr.bf16.mxu0 0
  %4588 = vmatpush1.bf16.msra.mxu0 0
  %4589 = vmatprep.subr.bf16.mxu0 0
  %4590 = vmatpush1.bf16.msra.mxu0 0
  %4591 = vmatprep.subr.bf16.mxu0 0
  %4592 = vmatpush1.bf16.msra.mxu0 0
  %4593 = vmatprep.subr.bf16.mxu0 0
  %4594 = vmatpush1.bf16.msra.mxu0 0
  %4595 = vmatprep.subr.bf16.mxu0 0
  %4596 = vmatpush1.bf16.msra.mxu0 0
  %4597 = vmatprep.subr.bf16.mxu0 0
  %4598 = vmatpush1.bf16.msra.mxu0 0
  %4599 = vmatprep.subr.bf16.mxu0 0
  %4600 = vmatpush1.bf16.msra.mxu0 0
  %4601 = vmatprep.subr.bf16.mxu0 0
  %4602 = vmatpush1.bf16.msra.mxu0 0
  %4603 = vmatprep.subr.bf16.mxu0 0
  %4604 = vmatpush1.bf16.msra.mxu0 0
  %4605 = vmatprep.subr.bf16.mxu0 0
  %4606 = vmatpush1.bf16.msra.mxu0 0
  %4607 = vmatprep.subr.bf16.mxu0 0
  %4608 = vmatpush1.bf16.msra.mxu0 0
  %4609 = vmatprep.subr.bf16.mxu0 0
  %4610 = vmatpush1.bf16.msra.mxu0 0
  %4611 = vmatprep.subr.bf16.mxu0 0
  %4612 = vmatpush1.bf16.msra.mxu0 0
  %4613 = vmatprep.subr.bf16.mxu0 0
  %4614 = vmatpush1.bf16.msra.mxu0 0
  %4615 = vmatprep.subr.bf16.mxu0 0
  %4616 = vmatpush1.bf16.msra.mxu0 0
  %4617 = vmatprep.mubr.bf16.mxu0 0
  %4618 = vmatmul.mubr.bf16.gmra.mrb[0].mxu0 %v4583
  %v4619 = vpop.f32.mrb[0].mxu0
  %v4620 = vadd.f32 %v127, %v4619
  %v4621 = vpop.f32.mrb[0].mxu0
  %v4622 = vpop.f32.mrb[0].mxu0
  %v4623 = vadd.f32 %v128, %v4622
  %v4624 = vpop.f32.mrb[0].mxu0
  %4625 = vdwg.mxu0
  %v4626 = vsel %vm450, %v4620, -inf
  %4627 = vmax.xlane.f32.xlu0 %v4626
  %v4628 = vpop.xlane.xlu0 %4627
  %v4629 = vsel %vm450, %v4623, -inf
  %4630 = vmax.xlane.f32.xlu0 %v4629
  %v4631 = vpop.xlane.xlu0 %4630
  %v4632 = vsub.f32 %v4620, %v4628
  %v4633 = vsub.f32 %v4623, %v4631
  %v4634 = vmul.f32 %v4632, 1.442695
  %v4635 = vpow.pop %v4634
  %v4636 = vmul.f32 %v4633, 1.442695
  %v4637 = vpow.pop %v4636
  %v4638 = vsel %vm450, %v4635, 0.0
  %4639 = vadd.xlane.f32.xlu0 %v4638
  %v4640 = vpop.xlane.xlu0 %4639
  %v4641 = vsel %vm450, %v4637, 0.0
  %4642 = vadd.xlane.f32.xlu0 %v4641
  %v4643 = vpop.xlane.xlu0 %4642
  %v4644 = vrcp.pop %v4640
  %v4645 = vrcp.pop %v4643
  %v4646 = vmul.f32 %v4635, %v4644
  %v4647 = vmul.f32 %v4637, %v4645
  %v4648 = vpack.c.bf16 %v4647, %v4646
  %4649 = vrot.lane.b32.xlu0 %v3730, 16
  %v4650 = vpop.permute.xlu0 %4649
  %v4653 = vsel %vm450, %v4648, 0
  %4655 = vmatprep.subr.bf16.mxu0 0
  %4656 = vmatpush1.bf16.msra.mxu0 %v4650
  %4657 = vmatprep.subr.bf16.mxu0 0
  %4658 = vmatpush1.bf16.msra.mxu0 0
  %4659 = vmatprep.subr.bf16.mxu0 0
  %4660 = vmatpush1.bf16.msra.mxu0 0
  %4661 = vmatprep.subr.bf16.mxu0 0
  %4662 = vmatpush1.bf16.msra.mxu0 0
  %4663 = vmatprep.subr.bf16.mxu0 0
  %4664 = vmatpush1.bf16.msra.mxu0 0
  %4665 = vmatprep.subr.bf16.mxu0 0
  %4666 = vmatpush1.bf16.msra.mxu0 0
  %4667 = vmatprep.subr.bf16.mxu0 0
  %4668 = vmatpush1.bf16.msra.mxu0 0
  %4669 = vmatprep.subr.bf16.mxu0 0
  %4670 = vmatpush1.bf16.msra.mxu0 0
  %4671 = vmatprep.subr.bf16.mxu0 0
  %4672 = vmatpush1.bf16.msra.mxu0 0
  %4673 = vmatprep.subr.bf16.mxu0 0
  %4674 = vmatpush1.bf16.msra.mxu0 0
  %4675 = vmatprep.subr.bf16.mxu0 0
  %4676 = vmatpush1.bf16.msra.mxu0 0
  %4677 = vmatprep.subr.bf16.mxu0 0
  %4678 = vmatpush1.bf16.msra.mxu0 0
  %4679 = vmatprep.subr.bf16.mxu0 0
  %4680 = vmatpush1.bf16.msra.mxu0 0
  %4681 = vmatprep.subr.bf16.mxu0 0
  %4682 = vmatpush1.bf16.msra.mxu0 0
  %4683 = vmatprep.subr.bf16.mxu0 0
  %4684 = vmatpush1.bf16.msra.mxu0 0
  %4685 = vmatprep.subr.bf16.mxu0 0
  %4686 = vmatpush1.bf16.msra.mxu0 0
  %4687 = vmatprep.mubr.bf16.mxu0 0
  %4688 = vmatmul.mubr.bf16.gmra.mrb[0].mxu0 %v4653
  %v4689 = vpop.f32.mrb[0].mxu0
  %v4690 = vadd.f32 0.0, %v4689
  %v4691 = vpop.f32.mrb[0].mxu0
  %v4692 = vpop.f32.mrb[0].mxu0
  %v4693 = vadd.f32 0.0, %v4692
  %v4694 = vpop.f32.mrb[0].mxu0
  %4695 = vdwg.mxu0
  %4698 = vrot.lane.b32.xlu0 %v3994, 16
  %v4699 = vpop.permute.xlu0 %4698
  %4700 = vrot.lane.b32.xlu0 %v3997, 16
  %v4701 = vpop.permute.xlu0 %4700
  %4706 = vrot.lane.b32.xlu0 %v4110, 32
  %v4707 = vpop.permute.xlu0 %4706
  %4708 = vrot.lane.b32.xlu0 %v4113, 32
  %v4709 = vpop.permute.xlu0 %4708
  %4714 = vrot.lane.b32.xlu0 %v4226, 48
  %v4715 = vpop.permute.xlu0 %4714
  %4716 = vrot.lane.b32.xlu0 %v4229, 48
  %v4717 = vpop.permute.xlu0 %4716
  %4722 = vrot.lane.b32.xlu0 %v4342, 64
  %v4723 = vpop.permute.xlu0 %4722
  %4724 = vrot.lane.b32.xlu0 %v4345, 64
  %v4725 = vpop.permute.xlu0 %4724
  %4730 = vrot.lane.b32.xlu0 %v4458, 80
  %v4731 = vpop.permute.xlu0 %4730
  %4732 = vrot.lane.b32.xlu0 %v4461, 80
  %v4733 = vpop.permute.xlu0 %4732
  %4738 = vrot.lane.b32.xlu0 %v4574, 96
  %v4739 = vpop.permute.xlu0 %4738
  %4740 = vrot.lane.b32.xlu0 %v4577, 96
  %v4741 = vpop.permute.xlu0 %4740
  %4746 = vrot.lane.b32.xlu0 %v4690, 112
  %v4747 = vpop.permute.xlu0 %4746
  %4748 = vrot.lane.b32.xlu0 %v4693, 112
  %v4749 = vpop.permute.xlu0 %4748
  %v4752 = vsel %vm450, %v3876, %v4699
  %v4753 = vsel %vm450, %v3879, %v4701
  %v4754 = vsel %vm1434, %v4752, %v4707
  %v4755 = vsel %vm1434, %v4753, %v4709
  %v4756 = vsel %vm1437, %v4754, %v4715
  %v4757 = vsel %vm1437, %v4755, %v4717
  %v4758 = vsel %vm1440, %v4756, %v4723
  %v4759 = vsel %vm1440, %v4757, %v4725
  %v4760 = vsel %vm1443, %v4758, %v4731
  %v4761 = vsel %vm1443, %v4759, %v4733
  %v4762 = vsel %vm1446, %v4760, %v4739
  %v4763 = vsel %vm1446, %v4761, %v4741
  %v4764 = vsel %vm1449, %v4762, %v4747
  %v4765 = vsel %vm1449, %v4763, %v4749
  %v4766 = vpack.c.bf16 %v4765, %v4764
  %v4767 = vlaneseq
  %v4768 = vshrl.u32 %v4767, 7
  %v4769 = vsub.s32 0, %v4768
  %v4770 = vrot.slane %v3728, %v4769
  %v4787 = vunpack.c.l.b16 %v3712
  %v4788 = vunpack.c.l.b16 %v3713
  %v4789 = vunpack.c.l.b16 %v3714
  %v4790 = vunpack.c.l.b16 %v3715
  %v4791 = vunpack.c.l.b16 %v3716
  %v4792 = vunpack.c.l.b16 %v3717
  %v4793 = vunpack.c.l.b16 %v3718
  %v4794 = vunpack.c.l.b16 %v3719
  %v4795 = vunpack.c.l.b16 %v3720
  %v4796 = vunpack.c.l.b16 %v3721
  %v4797 = vunpack.c.l.b16 %v3722
  %v4798 = vunpack.c.l.b16 %v3723
  %v4799 = vunpack.c.l.b16 %v3724
  %v4800 = vunpack.c.l.b16 %v3725
  %v4801 = vunpack.c.l.b16 %v3726
  %v4802 = vunpack.c.l.b16 %v3727
  %v4803 = vpack.c.b16 %v4788, %v4787
  %v4804 = vpack.c.b16 %v4790, %v4789
  %v4805 = vpack.c.b16 %v4792, %v4791
  %v4806 = vpack.c.b16 %v4794, %v4793
  %v4807 = vpack.c.b16 %v4796, %v4795
  %v4808 = vpack.c.b16 %v4798, %v4797
  %v4809 = vpack.c.b16 %v4800, %v4799
  %v4810 = vpack.c.b16 %v4802, %v4801
  %4819 = vmatprep.subr.bf16.mxu0 0
  %4820 = vmatpush1.bf16.msra.mxu0 %v4803
  %4821 = vmatprep.subr.bf16.mxu0 0
  %4822 = vmatpush1.bf16.msra.mxu0 %v4804
  %4823 = vmatprep.subr.bf16.mxu0 0
  %4824 = vmatpush1.bf16.msra.mxu0 %v4805
  %4825 = vmatprep.subr.bf16.mxu0 0
  %4826 = vmatpush1.bf16.msra.mxu0 %v4806
  %4827 = vmatprep.subr.bf16.mxu0 0
  %4828 = vmatpush1.bf16.msra.mxu0 %v4807
  %4829 = vmatprep.subr.bf16.mxu0 0
  %4830 = vmatpush1.bf16.msra.mxu0 %v4808
  %4831 = vmatprep.subr.bf16.mxu0 0
  %4832 = vmatpush1.bf16.msra.mxu0 %v4809
  %4833 = vmatprep.subr.bf16.mxu0 0
  %4834 = vmatpush1.bf16.msra.mxu0 %v4810
  %4835 = vmatprep.subr.bf16.mxu0 0
  %4836 = vmatpush1.bf16.msra.mxu0 0
  %4837 = vmatprep.subr.bf16.mxu0 0
  %4838 = vmatpush1.bf16.msra.mxu0 0
  %4839 = vmatprep.subr.bf16.mxu0 0
  %4840 = vmatpush1.bf16.msra.mxu0 0
  %4841 = vmatprep.subr.bf16.mxu0 0
  %4842 = vmatpush1.bf16.msra.mxu0 0
  %4843 = vmatprep.subr.bf16.mxu0 0
  %4844 = vmatpush1.bf16.msra.mxu0 0
  %4845 = vmatprep.subr.bf16.mxu0 0
  %4846 = vmatpush1.bf16.msra.mxu0 0
  %4847 = vmatprep.subr.bf16.mxu0 0
  %4848 = vmatpush1.bf16.msra.mxu0 0
  %4849 = vmatprep.subr.bf16.mxu0 0
  %4850 = vmatpush1.bf16.msra.mxu0 0
  %4851 = vmatprep.mubr.bf16.mxu0 0
  %4852 = vmatmul.mubr.bf16.gmra.mrb[0].mxu0 %v4766
  %v4853 = vpop.f32.mrb[0].mxu0
  %v4854 = vadd.f32 %v4770, %v4853
  %v4855 = vpop.f32.mrb[0].mxu0
  %v4856 = vpop.f32.mrb[0].mxu0
  %v4857 = vadd.f32 %v4770, %v4856
  %v4858 = vpop.f32.mrb[0].mxu0
  %4859 = vdwg.mxu0
  %v4860 = vadd.f32 %v3446, %v4854
  %v4861 = vadd.f32 %v3447, %v4857
  %v4862 = vld [vmem:[%s7 + $0x2d] sm:$0x1]
  %v4863 = vld [vmem:[%s7 + $0x31] sm:$0x1]
  %4864 = vadd.xlane.f32.xlu0 %v4860
  %v4865 = vpop.xlane.xlu0 %4864
  %4866 = vadd.xlane.f32.xlu0 %v4861
  %v4867 = vpop.xlane.xlu0 %4866
  %v4868 = vmul.f32 %v4865, %v1554
  %v4869 = vmul.f32 %v4867, %v1554
  %v4870 = vsub.f32 %v4860, %v4868
  %v4871 = vsub.f32 %v4861, %v4869
  %v4872 = vmul.f32 %v4870, %v4870
  %v4873 = vmul.f32 %v4871, %v4871
  %4874 = vadd.xlane.f32.xlu0 %v4872
  %v4875 = vpop.xlane.xlu0 %4874
  %4876 = vadd.xlane.f32.xlu0 %v4873
  %v4877 = vpop.xlane.xlu0 %4876
  %v4878 = vmul.f32 %v4875, %v1554
  %v4879 = vmul.f32 %v4877, %v1554
  %v4880 = vadd.f32 %v4878, 1e-05
  %v4881 = vadd.f32 %v4879, 1e-05
  %v4882 = vrsqrt.pop %v4880
  %v4883 = vrsqrt.pop %v4881
  %v4884 = vmul.f32 %v4870, %v4882
  %v4885 = vmul.f32 %v4871, %v4883
  %v4886 = vlaneseq
  %v4887 = vshrl.u32 %v4886, 7
  %v4888 = vsub.s32 0, %v4887
  %v4889 = vrot.slane %v4862, %v4888
  %v4890 = vmul.f32 %v4884, %v4889
  %v4891 = vmul.f32 %v4885, %v4889
  %v4892 = vlaneseq
  %v4893 = vshrl.u32 %v4892, 7
  %v4894 = vsub.s32 0, %v4893
  %v4895 = vrot.slane %v4863, %v4894
  %v4896 = vadd.f32 %v4890, %v4895
  %v4897 = vadd.f32 %v4891, %v4895
  %v4898 = vld [vmem:[%s3448 + $0x10] sm:$0xf]
  %v4899 = vld [vmem:[%s3448 + $0x38] sm:$0xf]
  %v4900 = vld [vmem:[%s3448 + $0x60] sm:$0xf]
  %v4901 = vld [vmem:[%s3448 + $0x88] sm:$0xf]
  %v4902 = vld [vmem:[%s3448 + $0xb0] sm:$0xf]
  %v4903 = vld [vmem:[%s3448 + $0xd8] sm:$0xf]
  %v4904 = vld [vmem:[%s3448 + $0x100] sm:$0xf]
  %v4905 = vld [vmem:[%s3448 + $0x128] sm:$0xf]
  %v4906 = vld [vmem:[%s3448 + $0x150] sm:$0xf]
  %v4907 = vld [vmem:[%s3448 + $0x178] sm:$0xf]
  %v4908 = vld [vmem:[%s3448 + $0x1a0] sm:$0xf]
  %v4909 = vld [vmem:[%s3448 + $0x1c8] sm:$0xf]
  %v4910 = vld [vmem:[%s3448 + $0x1f0] sm:$0xf]
  %v4911 = vld [vmem:[%s3448 + $0x218] sm:$0xf]
  %v4912 = vld [vmem:[%s3448 + $0x240] sm:$0xf]
  %v4913 = vld [vmem:[%s3448 + $0x268] sm:$0xf]
  %v4914 = vpack.c.bf16 %v4897, %v4896
  %v4915 = vld [vmem:[%s7 + $0x11] sm:$0x1]
  %v4916 = vlaneseq
  %v4917 = vshrl.u32 %v4916, 7
  %v4918 = vsub.s32 0, %v4917
  %v4919 = vrot.slane %v4915, %v4918
  %v4936 = vunpack.c.l.b16 %v4898
  %v4937 = vunpack.c.l.b16 %v4899
  %v4938 = vunpack.c.l.b16 %v4900
  %v4939 = vunpack.c.l.b16 %v4901
  %v4940 = vunpack.c.l.b16 %v4902
  %v4941 = vunpack.c.l.b16 %v4903
  %v4942 = vunpack.c.l.b16 %v4904
  %v4943 = vunpack.c.l.b16 %v4905
  %v4944 = vunpack.c.l.b16 %v4906
  %v4945 = vunpack.c.l.b16 %v4907
  %v4946 = vunpack.c.l.b16 %v4908
  %v4947 = vunpack.c.l.b16 %v4909
  %v4948 = vunpack.c.l.b16 %v4910
  %v4949 = vunpack.c.l.b16 %v4911
  %v4950 = vunpack.c.l.b16 %v4912
  %v4951 = vunpack.c.l.b16 %v4913
  %v4952 = vpack.c.b16 %v4937, %v4936
  %v4953 = vpack.c.b16 %v4939, %v4938
  %v4954 = vpack.c.b16 %v4941, %v4940
  %v4955 = vpack.c.b16 %v4943, %v4942
  %v4956 = vpack.c.b16 %v4945, %v4944
  %v4957 = vpack.c.b16 %v4947, %v4946
  %v4958 = vpack.c.b16 %v4949, %v4948
  %v4959 = vpack.c.b16 %v4951, %v4950
  %4968 = vmatprep.subr.bf16.mxu0 0
  %4969 = vmatpush1.bf16.msra.mxu0 %v4952
  %4970 = vmatprep.subr.bf16.mxu0 0
  %4971 = vmatpush1.bf16.msra.mxu0 %v4953
  %4972 = vmatprep.subr.bf16.mxu0 0
  %4973 = vmatpush1.bf16.msra.mxu0 %v4954
  %4974 = vmatprep.subr.bf16.mxu0 0
  %4975 = vmatpush1.bf16.msra.mxu0 %v4955
  %4976 = vmatprep.subr.bf16.mxu0 0
  %4977 = vmatpush1.bf16.msra.mxu0 %v4956
  %4978 = vmatprep.subr.bf16.mxu0 0
  %4979 = vmatpush1.bf16.msra.mxu0 %v4957
  %4980 = vmatprep.subr.bf16.mxu0 0
  %4981 = vmatpush1.bf16.msra.mxu0 %v4958
  %4982 = vmatprep.subr.bf16.mxu0 0
  %4983 = vmatpush1.bf16.msra.mxu0 %v4959
  %4984 = vmatprep.subr.bf16.mxu0 0
  %4985 = vmatpush1.bf16.msra.mxu0 0
  %4986 = vmatprep.subr.bf16.mxu0 0
  %4987 = vmatpush1.bf16.msra.mxu0 0
  %4988 = vmatprep.subr.bf16.mxu0 0
  %4989 = vmatpush1.bf16.msra.mxu0 0
  %4990 = vmatprep.subr.bf16.mxu0 0
  %4991 = vmatpush1.bf16.msra.mxu0 0
  %4992 = vmatprep.subr.bf16.mxu0 0
  %4993 = vmatpush1.bf16.msra.mxu0 0
  %4994 = vmatprep.subr.bf16.mxu0 0
  %4995 = vmatpush1.bf16.msra.mxu0 0
  %4996 = vmatprep.subr.bf16.mxu0 0
  %4997 = vmatpush1.bf16.msra.mxu0 0
  %4998 = vmatprep.subr.bf16.mxu0 0
  %4999 = vmatpush1.bf16.msra.mxu0 0
  %5000 = vmatprep.mubr.bf16.mxu0 0
  %5001 = vmatmul.mubr.bf16.gmra.mrb[0].mxu0 %v4914
  %v5002 = vpop.f32.mrb[0].mxu0
  %v5003 = vadd.f32 %v4919, %v5002
  %v5004 = vpop.f32.mrb[0].mxu0
  %v5005 = vpop.f32.mrb[0].mxu0
  %v5006 = vadd.f32 %v4919, %v5005
  %v5007 = vpop.f32.mrb[0].mxu0
  %5008 = vdwg.mxu0
  %v5009 = vld [vmem:[%s3448 + $0x14] sm:$0xff]
  %v5010 = vld [vmem:[%s3448 + $0x3c] sm:$0xff]
  %v5011 = vld [vmem:[%s3448 + $0x64] sm:$0xff]
  %v5012 = vld [vmem:[%s3448 + $0x8c] sm:$0xff]
  %v5013 = vld [vmem:[%s3448 + $0xb4] sm:$0xff]
  %v5014 = vld [vmem:[%s3448 + $0xdc] sm:$0xff]
  %v5015 = vld [vmem:[%s3448 + $0x104] sm:$0xff]
  %v5016 = vld [vmem:[%s3448 + $0x12c] sm:$0xff]
  %v5017 = vld [vmem:[%s3448 + $0x154] sm:$0xff]
  %v5018 = vld [vmem:[%s3448 + $0x17c] sm:$0xff]
  %v5019 = vld [vmem:[%s3448 + $0x1a4] sm:$0xff]
  %v5020 = vld [vmem:[%s3448 + $0x1cc] sm:$0xff]
  %v5021 = vld [vmem:[%s3448 + $0x1f4] sm:$0xff]
  %v5022 = vld [vmem:[%s3448 + $0x21c] sm:$0xff]
  %v5023 = vld [vmem:[%s3448 + $0x244] sm:$0xff]
  %v5024 = vld [vmem:[%s3448 + $0x26c] sm:$0xff]
  %s5025 = scalar_lea.vmem %s7, 21
  %v5026 = vld [vmem:[%s5025] ss:$4 sm:$0x3]
  %v5028 = vlaneseq
  %v5029 = vshrl.u32 %v5028, 7
  %v5030 = vsub.s32 0, %v5029
  %v5031 = vrot.slane %v5026, %v5030
  %v5032 = vlaneseq
  %v5033 = vshrl.u32 %v5032, 7
  %v5034 = vsub.s32 1, %v5033
  %v5035 = vrot.slane %v5026, %v5034
  %v5054 = vunpack.c.l.b16 %v5009
  %v5055 = vunpack.c.h.b16 %v5009
  %v5056 = vunpack.c.l.b16 %v5010
  %v5057 = vunpack.c.h.b16 %v5010
  %v5058 = vunpack.c.l.b16 %v5011
  %v5059 = vunpack.c.h.b16 %v5011
  %v5060 = vunpack.c.l.b16 %v5012
  %v5061 = vunpack.c.h.b16 %v5012
  %v5062 = vunpack.c.l.b16 %v5013
  %v5063 = vunpack.c.h.b16 %v5013
  %v5064 = vunpack.c.l.b16 %v5014
  %v5065 = vunpack.c.h.b16 %v5014
  %v5066 = vunpack.c.l.b16 %v5015
  %v5067 = vunpack.c.h.b16 %v5015
  %v5068 = vunpack.c.l.b16 %v5016
  %v5069 = vunpack.c.h.b16 %v5016
  %v5070 = vunpack.c.l.b16 %v5017
  %v5071 = vunpack.c.h.b16 %v5017
  %v5072 = vunpack.c.l.b16 %v5018
  %v5073 = vunpack.c.h.b16 %v5018
  %v5074 = vunpack.c.l.b16 %v5019
  %v5075 = vunpack.c.h.b16 %v5019
  %v5076 = vunpack.c.l.b16 %v5020
  %v5077 = vunpack.c.h.b16 %v5020
  %v5078 = vunpack.c.l.b16 %v5021
  %v5079 = vunpack.c.h.b16 %v5021
  %v5080 = vunpack.c.l.b16 %v5022
  %v5081 = vunpack.c.h.b16 %v5022
  %v5082 = vunpack.c.l.b16 %v5023
  %v5083 = vunpack.c.h.b16 %v5023
  %v5084 = vunpack.c.l.b16 %v5024
  %v5085 = vunpack.c.h.b16 %v5024
  %v5086 = vpack.c.b16 %v5056, %v5054
  %v5087 = vpack.c.b16 %v5057, %v5055
  %v5088 = vpack.c.b16 %v5060, %v5058
  %v5089 = vpack.c.b16 %v5061, %v5059
  %v5090 = vpack.c.b16 %v5064, %v5062
  %v5091 = vpack.c.b16 %v5065, %v5063
  %v5092 = vpack.c.b16 %v5068, %v5066
  %v5093 = vpack.c.b16 %v5069, %v5067
  %v5094 = vpack.c.b16 %v5072, %v5070
  %v5095 = vpack.c.b16 %v5073, %v5071
  %v5096 = vpack.c.b16 %v5076, %v5074
  %v5097 = vpack.c.b16 %v5077, %v5075
  %v5098 = vpack.c.b16 %v5080, %v5078
  %v5099 = vpack.c.b16 %v5081, %v5079
  %v5100 = vpack.c.b16 %v5084, %v5082
  %v5101 = vpack.c.b16 %v5085, %v5083
  %5118 = vmatprep.subr.bf16.mxu0 %v5087
  %5119 = vmatpush1.bf16.msra.mxu0 %v5086
  %5120 = vmatprep.subr.bf16.mxu0 %v5089
  %5121 = vmatpush1.bf16.msra.mxu0 %v5088
  %5122 = vmatprep.subr.bf16.mxu0 %v5091
  %5123 = vmatpush1.bf16.msra.mxu0 %v5090
  %5124 = vmatprep.subr.bf16.mxu0 %v5093
  %5125 = vmatpush1.bf16.msra.mxu0 %v5092
  %5126 = vmatprep.subr.bf16.mxu0 %v5095
  %5127 = vmatpush1.bf16.msra.mxu0 %v5094
  %5128 = vmatprep.subr.bf16.mxu0 %v5097
  %5129 = vmatpush1.bf16.msra.mxu0 %v5096
  %5130 = vmatprep.subr.bf16.mxu0 %v5099
  %5131 = vmatpush1.bf16.msra.mxu0 %v5098
  %5132 = vmatprep.subr.bf16.mxu0 %v5101
  %5133 = vmatpush1.bf16.msra.mxu0 %v5100
  %5134 = vmatprep.subr.bf16.mxu0 0
  %5135 = vmatpush1.bf16.msra.mxu0 0
  %5136 = vmatprep.subr.bf16.mxu0 0
  %5137 = vmatpush1.bf16.msra.mxu0 0
  %5138 = vmatprep.subr.bf16.mxu0 0
  %5139 = vmatpush1.bf16.msra.mxu0 0
  %5140 = vmatprep.subr.bf16.mxu0 0
  %5141 = vmatpush1.bf16.msra.mxu0 0
  %5142 = vmatprep.subr.bf16.mxu0 0
  %5143 = vmatpush1.bf16.msra.mxu0 0
  %5144 = vmatprep.subr.bf16.mxu0 0
  %5145 = vmatpush1.bf16.msra.mxu0 0
  %5146 = vmatprep.subr.bf16.mxu0 0
  %5147 = vmatpush1.bf16.msra.mxu0 0
  %5148 = vmatprep.subr.bf16.mxu0 0
  %5149 = vmatpush1.bf16.msra.mxu0 0
  %5150 = vmatprep.mubr.bf16.mxu0 0
  %5151 = vmatmul.mubr.bf16.gmra.mrb[0].mxu0 %v1712
  %v5152 = vpop.f32.mrb[0].mxu0
  %v5153 = vadd.f32 %v5031, %v5152
  %v5154 = vpop.f32.mrb[0].mxu0
  %v5155 = vadd.f32 %v5035, %v5154
  %v5156 = vpop.f32.mrb[0].mxu0
  %v5157 = vadd.f32 %v5031, %v5156
  %v5158 = vpop.f32.mrb[0].mxu0
  %v5159 = vadd.f32 %v5035, %v5158
  %5160 = vmatprep.mubr.bf16.mxu0 0
  %5161 = vmatmul.mubr.bf16.gmra.mrb[0].mxu0 %v1713
  %v5162 = vpop.f32.mrb[0].mxu0
  %v5163 = vadd.f32 %v5031, %v5162
  %v5164 = vpop.f32.mrb[0].mxu0
  %v5165 = vadd.f32 %v5035, %v5164
  %v5166 = vpop.f32.mrb[0].mxu0
  %v5167 = vadd.f32 %v5031, %v5166
  %v5168 = vpop.f32.mrb[0].mxu0
  %v5169 = vadd.f32 %v5035, %v5168
  %5170 = vdwg.mxu0
  %v5171 = vld [vmem:[%s3448 + $0x1c] sm:$0xf]
  %v5172 = vld [vmem:[%s3448 + $0x44] sm:$0xf]
  %v5173 = vld [vmem:[%s3448 + $0x6c] sm:$0xf]
  %v5174 = vld [vmem:[%s3448 + $0x94] sm:$0xf]
  %v5175 = vld [vmem:[%s3448 + $0xbc] sm:$0xf]
  %v5176 = vld [vmem:[%s3448 + $0xe4] sm:$0xf]
  %v5177 = vld [vmem:[%s3448 + $0x10c] sm:$0xf]
  %v5178 = vld [vmem:[%s3448 + $0x134] sm:$0xf]
  %v5179 = vld [vmem:[%s3448 + $0x15c] sm:$0xf]
  %v5180 = vld [vmem:[%s3448 + $0x184] sm:$0xf]
  %v5181 = vld [vmem:[%s3448 + $0x1ac] sm:$0xf]
  %v5182 = vld [vmem:[%s3448 + $0x1d4] sm:$0xf]
  %v5183 = vld [vmem:[%s3448 + $0x1fc] sm:$0xf]
  %v5184 = vld [vmem:[%s3448 + $0x224] sm:$0xf]
  %v5185 = vld [vmem:[%s3448 + $0x24c] sm:$0xf]
  %v5186 = vld [vmem:[%s3448 + $0x274] sm:$0xf]
  %v5187 = vld [vmem:[%s7 + $0x1d] sm:$0x1]
  %v5188 = vpack.c.bf16 %v5006, %v5003
  %v5189 = vpack.c.bf16 %v5159, %v5155
  %v5190 = vpack.c.bf16 %v5169, %v5165
  %5191 = vxpose.xlu0.b32.start [1/16] %v5153, 128
  %5192 = vxpose.xlu0.b32.cont [2/16] %v5157, 128
  %5193 = vxpose.xlu0.b32.cont [3/16] %v5163, 128
  %5194 = vxpose.xlu0.b32.cont [4/16] %v5167, 128
  %5195 = vxpose.xlu0.b32.cont [5/16] 0.0, 128
  %5196 = vxpose.xlu0.b32.cont [6/16] 0.0, 128
  %5197 = vxpose.xlu0.b32.cont [7/16] 0.0, 128
  %5198 = vxpose.xlu0.b32.cont [8/16] 0.0, 128
  %5199 = vxpose.xlu0.b32.cont [9/16] 0.0, 128
  %5200 = vxpose.xlu0.b32.cont [10/16] 0.0, 128
  %5201 = vxpose.xlu0.b32.cont [11/16] 0.0, 128
  %5202 = vxpose.xlu0.b32.cont [12/16] 0.0, 128
  %5203 = vxpose.xlu0.b32.cont [13/16] 0.0, 128
  %5204 = vxpose.xlu0.b32.cont [14/16] 0.0, 128
  %5205 = vxpose.xlu0.b32.cont [15/16] 0.0, 128
  %5206 = vxpose.xlu0.b32.end [16/16] 0.0, 128
  %v5207 = vpop.trf.xlu0
  %v5208 = vpop.trf.xlu0
  %v5209 = vpop.trf.xlu0
  %v5210 = vpop.trf.xlu0
  %v5211 = vpop.trf.xlu0
  %v5212 = vpop.trf.xlu0
  %v5213 = vpop.trf.xlu0
  %v5214 = vpop.trf.xlu0
  %v5215 = vpop.trf.xlu0
  %v5216 = vpop.trf.xlu0
  %v5217 = vpop.trf.xlu0
  %v5218 = vpop.trf.xlu0
  %v5219 = vpop.trf.xlu0
  %v5220 = vpop.trf.xlu0
  %v5221 = vpop.trf.xlu0
  %v5222 = vpop.trf.xlu0
  %v5223 = vpack.c.bf16 %v5208, %v5207
  %v5224 = vpack.c.bf16 %v5210, %v5209
  %v5225 = vpack.c.bf16 %v5212, %v5211
  %v5226 = vpack.c.bf16 %v5214, %v5213
  %v5227 = vpack.c.bf16 %v5216, %v5215
  %v5228 = vpack.c.bf16 %v5218, %v5217
  %v5229 = vpack.c.bf16 %v5220, %v5219
  %v5230 = vpack.c.bf16 %v5222, %v5221
  %v5232 = vsel %vm450, %v5188, 0
  %5234 = vmatprep.subr.bf16.mxu0 0
  %5235 = vmatpush1.bf16.msra.mxu0 %v5223
  %5236 = vmatprep.subr.bf16.mxu0 0
  %5237 = vmatpush1.bf16.msra.mxu0 0
  %5238 = vmatprep.subr.bf16.mxu0 0
  %5239 = vmatpush1.bf16.msra.mxu0 0
  %5240 = vmatprep.subr.bf16.mxu0 0
  %5241 = vmatpush1.bf16.msra.mxu0 0
  %5242 = vmatprep.subr.bf16.mxu0 0
  %5243 = vmatpush1.bf16.msra.mxu0 0
  %5244 = vmatprep.subr.bf16.mxu0 0
  %5245 = vmatpush1.bf16.msra.mxu0 0
  %5246 = vmatprep.subr.bf16.mxu0 0
  %5247 = vmatpush1.bf16.msra.mxu0 0
  %5248 = vmatprep.subr.bf16.mxu0 0
  %5249 = vmatpush1.bf16.msra.mxu0 0
  %5250 = vmatprep.subr.bf16.mxu0 0
  %5251 = vmatpush1.bf16.msra.mxu0 0
  %5252 = vmatprep.subr.bf16.mxu0 0
  %5253 = vmatpush1.bf16.msra.mxu0 0
  %5254 = vmatprep.subr.bf16.mxu0 0
  %5255 = vmatpush1.bf16.msra.mxu0 0
  %5256 = vmatprep.subr.bf16.mxu0 0
  %5257 = vmatpush1.bf16.msra.mxu0 0
  %5258 = vmatprep.subr.bf16.mxu0 0
  %5259 = vmatpush1.bf16.msra.mxu0 0
  %5260 = vmatprep.subr.bf16.mxu0 0
  %5261 = vmatpush1.bf16.msra.mxu0 0
  %5262 = vmatprep.subr.bf16.mxu0 0
  %5263 = vmatpush1.bf16.msra.mxu0 0
  %5264 = vmatprep.subr.bf16.mxu0 0
  %5265 = vmatpush1.bf16.msra.mxu0 0
  %5266 = vmatprep.mubr.bf16.mxu0 0
  %5267 = vmatmul.mubr.bf16.gmra.mrb[0].mxu0 %v5232
  %v5268 = vpop.f32.mrb[0].mxu0
  %v5269 = vadd.f32 %v1923, %v5268
  %v5270 = vpop.f32.mrb[0].mxu0
  %v5271 = vpop.f32.mrb[0].mxu0
  %v5272 = vadd.f32 %v1925, %v5271
  %v5273 = vpop.f32.mrb[0].mxu0
  %5274 = vdwg.mxu0
  %v5275 = vsel %vm1434, %v5269, -inf
  %5276 = vmax.xlane.f32.xlu0 %v5275
  %v5277 = vpop.xlane.xlu0 %5276
  %v5278 = vsel %vm1434, %v5272, -inf
  %5279 = vmax.xlane.f32.xlu0 %v5278
  %v5280 = vpop.xlane.xlu0 %5279
  %v5281 = vsub.f32 %v5269, %v5277
  %v5282 = vsub.f32 %v5272, %v5280
  %v5283 = vmul.f32 %v5281, 1.442695
  %v5284 = vpow.pop %v5283
  %v5285 = vmul.f32 %v5282, 1.442695
  %v5286 = vpow.pop %v5285
  %v5287 = vsel %vm1434, %v5284, 0.0
  %5288 = vadd.xlane.f32.xlu0 %v5287
  %v5289 = vpop.xlane.xlu0 %5288
  %v5290 = vsel %vm1434, %v5286, 0.0
  %5291 = vadd.xlane.f32.xlu0 %v5290
  %v5292 = vpop.xlane.xlu0 %5291
  %v5293 = vrcp.pop %v5289
  %v5294 = vrcp.pop %v5292
  %v5295 = vmul.f32 %v5284, %v5293
  %v5296 = vmul.f32 %v5286, %v5294
  %v5297 = vpack.c.bf16 %v5296, %v5295
  %v5299 = vsel %vm1434, %v5297, 0
  %5301 = vmatprep.subr.bf16.mxu0 0
  %5302 = vmatpush1.bf16.msra.mxu0 %v5189
  %5303 = vmatprep.subr.bf16.mxu0 0
  %5304 = vmatpush1.bf16.msra.mxu0 %v5190
  %5305 = vmatprep.subr.bf16.mxu0 0
  %5306 = vmatpush1.bf16.msra.mxu0 0
  %5307 = vmatprep.subr.bf16.mxu0 0
  %5308 = vmatpush1.bf16.msra.mxu0 0
  %5309 = vmatprep.subr.bf16.mxu0 0
  %5310 = vmatpush1.bf16.msra.mxu0 0
  %5311 = vmatprep.subr.bf16.mxu0 0
  %5312 = vmatpush1.bf16.msra.mxu0 0
  %5313 = vmatprep.subr.bf16.mxu0 0
  %5314 = vmatpush1.bf16.msra.mxu0 0
  %5315 = vmatprep.subr.bf16.mxu0 0
  %5316 = vmatpush1.bf16.msra.mxu0 0
  %5317 = vmatprep.subr.bf16.mxu0 0
  %5318 = vmatpush1.bf16.msra.mxu0 0
  %5319 = vmatprep.subr.bf16.mxu0 0
  %5320 = vmatpush1.bf16.msra.mxu0 0
  %5321 = vmatprep.subr.bf16.mxu0 0
  %5322 = vmatpush1.bf16.msra.mxu0 0
  %5323 = vmatprep.subr.bf16.mxu0 0
  %5324 = vmatpush1.bf16.msra.mxu0 0
  %5325 = vmatprep.subr.bf16.mxu0 0
  %5326 = vmatpush1.bf16.msra.mxu0 0
  %5327 = vmatprep.subr.bf16.mxu0 0
  %5328 = vmatpush1.bf16.msra.mxu0 0
  %5329 = vmatprep.subr.bf16.mxu0 0
  %5330 = vmatpush1.bf16.msra.mxu0 0
  %5331 = vmatprep.subr.bf16.mxu0 0
  %5332 = vmatpush1.bf16.msra.mxu0 0
  %5333 = vmatprep.mubr.bf16.mxu0 0
  %5334 = vmatmul.mubr.bf16.gmra.mrb[0].mxu0 %v5299
  %v5335 = vpop.f32.mrb[0].mxu0
  %v5336 = vadd.f32 0.0, %v5335
  %v5337 = vpop.f32.mrb[0].mxu0
  %v5338 = vpop.f32.mrb[0].mxu0
  %v5339 = vadd.f32 0.0, %v5338
  %v5340 = vpop.f32.mrb[0].mxu0
  %5341 = vdwg.mxu0
  %5343 = vrot.lane.b32.xlu0 %v5188, 112
  %v5344 = vpop.permute.xlu0 %5343
  %v5346 = vsel %vm450, %v5344, 0
  %5348 = vmatprep.subr.bf16.mxu0 0
  %5349 = vmatpush1.bf16.msra.mxu0 %v5224
  %5350 = vmatprep.subr.bf16.mxu0 0
  %5351 = vmatpush1.bf16.msra.mxu0 0
  %5352 = vmatprep.subr.bf16.mxu0 0
  %5353 = vmatpush1.bf16.msra.mxu0 0
  %5354 = vmatprep.subr.bf16.mxu0 0
  %5355 = vmatpush1.bf16.msra.mxu0 0
  %5356 = vmatprep.subr.bf16.mxu0 0
  %5357 = vmatpush1.bf16.msra.mxu0 0
  %5358 = vmatprep.subr.bf16.mxu0 0
  %5359 = vmatpush1.bf16.msra.mxu0 0
  %5360 = vmatprep.subr.bf16.mxu0 0
  %5361 = vmatpush1.bf16.msra.mxu0 0
  %5362 = vmatprep.subr.bf16.mxu0 0
  %5363 = vmatpush1.bf16.msra.mxu0 0
  %5364 = vmatprep.subr.bf16.mxu0 0
  %5365 = vmatpush1.bf16.msra.mxu0 0
  %5366 = vmatprep.subr.bf16.mxu0 0
  %5367 = vmatpush1.bf16.msra.mxu0 0
  %5368 = vmatprep.subr.bf16.mxu0 0
  %5369 = vmatpush1.bf16.msra.mxu0 0
  %5370 = vmatprep.subr.bf16.mxu0 0
  %5371 = vmatpush1.bf16.msra.mxu0 0
  %5372 = vmatprep.subr.bf16.mxu0 0
  %5373 = vmatpush1.bf16.msra.mxu0 0
  %5374 = vmatprep.subr.bf16.mxu0 0
  %5375 = vmatpush1.bf16.msra.mxu0 0
  %5376 = vmatprep.subr.bf16.mxu0 0
  %5377 = vmatpush1.bf16.msra.mxu0 0
  %5378 = vmatprep.subr.bf16.mxu0 0
  %5379 = vmatpush1.bf16.msra.mxu0 0
  %5380 = vmatprep.mubr.bf16.mxu0 0
  %5381 = vmatmul.mubr.bf16.gmra.mrb[0].mxu0 %v5346
  %v5382 = vpop.f32.mrb[0].mxu0
  %v5383 = vadd.f32 %v1923, %v5382
  %v5384 = vpop.f32.mrb[0].mxu0
  %v5385 = vpop.f32.mrb[0].mxu0
  %v5386 = vadd.f32 %v1925, %v5385
  %v5387 = vpop.f32.mrb[0].mxu0
  %5388 = vdwg.mxu0
  %v5389 = vsel %vm1434, %v5383, -inf
  %5390 = vmax.xlane.f32.xlu0 %v5389
  %v5391 = vpop.xlane.xlu0 %5390
  %v5392 = vsel %vm1434, %v5386, -inf
  %5393 = vmax.xlane.f32.xlu0 %v5392
  %v5394 = vpop.xlane.xlu0 %5393
  %v5395 = vsub.f32 %v5383, %v5391
  %v5396 = vsub.f32 %v5386, %v5394
  %v5397 = vmul.f32 %v5395, 1.442695
  %v5398 = vpow.pop %v5397
  %v5399 = vmul.f32 %v5396, 1.442695
  %v5400 = vpow.pop %v5399
  %v5401 = vsel %vm1434, %v5398, 0.0
  %5402 = vadd.xlane.f32.xlu0 %v5401
  %v5403 = vpop.xlane.xlu0 %5402
  %v5404 = vsel %vm1434, %v5400, 0.0
  %5405 = vadd.xlane.f32.xlu0 %v5404
  %v5406 = vpop.xlane.xlu0 %5405
  %v5407 = vrcp.pop %v5403
  %v5408 = vrcp.pop %v5406
  %v5409 = vmul.f32 %v5398, %v5407
  %v5410 = vmul.f32 %v5400, %v5408
  %v5411 = vpack.c.bf16 %v5410, %v5409
  %5414 = vrot.lane.b32.xlu0 %v5189, 112
  %v5415 = vpop.permute.xlu0 %5414
  %5416 = vrot.lane.b32.xlu0 %v5190, 112
  %v5417 = vpop.permute.xlu0 %5416
  %v5421 = vsel %vm1434, %v5411, 0
  %5423 = vmatprep.subr.bf16.mxu0 0
  %5424 = vmatpush1.bf16.msra.mxu0 %v5415
  %5425 = vmatprep.subr.bf16.mxu0 0
  %5426 = vmatpush1.bf16.msra.mxu0 %v5417
  %5427 = vmatprep.subr.bf16.mxu0 0
  %5428 = vmatpush1.bf16.msra.mxu0 0
  %5429 = vmatprep.subr.bf16.mxu0 0
  %5430 = vmatpush1.bf16.msra.mxu0 0
  %5431 = vmatprep.subr.bf16.mxu0 0
  %5432 = vmatpush1.bf16.msra.mxu0 0
  %5433 = vmatprep.subr.bf16.mxu0 0
  %5434 = vmatpush1.bf16.msra.mxu0 0
  %5435 = vmatprep.subr.bf16.mxu0 0
  %5436 = vmatpush1.bf16.msra.mxu0 0
  %5437 = vmatprep.subr.bf16.mxu0 0
  %5438 = vmatpush1.bf16.msra.mxu0 0
  %5439 = vmatprep.subr.bf16.mxu0 0
  %5440 = vmatpush1.bf16.msra.mxu0 0
  %5441 = vmatprep.subr.bf16.mxu0 0
  %5442 = vmatpush1.bf16.msra.mxu0 0
  %5443 = vmatprep.subr.bf16.mxu0 0
  %5444 = vmatpush1.bf16.msra.mxu0 0
  %5445 = vmatprep.subr.bf16.mxu0 0
  %5446 = vmatpush1.bf16.msra.mxu0 0
  %5447 = vmatprep.subr.bf16.mxu0 0
  %5448 = vmatpush1.bf16.msra.mxu0 0
  %5449 = vmatprep.subr.bf16.mxu0 0
  %5450 = vmatpush1.bf16.msra.mxu0 0
  %5451 = vmatprep.subr.bf16.mxu0 0
  %5452 = vmatpush1.bf16.msra.mxu0 0
  %5453 = vmatprep.subr.bf16.mxu0 0
  %5454 = vmatpush1.bf16.msra.mxu0 0
  %5455 = vmatprep.mubr.bf16.mxu0 0
  %5456 = vmatmul.mubr.bf16.gmra.mrb[0].mxu0 %v5421
  %v5457 = vpop.f32.mrb[0].mxu0
  %v5458 = vadd.f32 0.0, %v5457
  %v5459 = vpop.f32.mrb[0].mxu0
  %v5460 = vpop.f32.mrb[0].mxu0
  %v5461 = vadd.f32 0.0, %v5460
  %v5462 = vpop.f32.mrb[0].mxu0
  %5463 = vdwg.mxu0
  %5464 = vrot.lane.b32.xlu0 %v5188, 96
  %v5465 = vpop.permute.xlu0 %5464
  %v5467 = vsel %vm450, %v5465, 0
  %5469 = vmatprep.subr.bf16.mxu0 0
  %5470 = vmatpush1.bf16.msra.mxu0 %v5225
  %5471 = vmatprep.subr.bf16.mxu0 0
  %5472 = vmatpush1.bf16.msra.mxu0 0
  %5473 = vmatprep.subr.bf16.mxu0 0
  %5474 = vmatpush1.bf16.msra.mxu0 0
  %5475 = vmatprep.subr.bf16.mxu0 0
  %5476 = vmatpush1.bf16.msra.mxu0 0
  %5477 = vmatprep.subr.bf16.mxu0 0
  %5478 = vmatpush1.bf16.msra.mxu0 0
  %5479 = vmatprep.subr.bf16.mxu0 0
  %5480 = vmatpush1.bf16.msra.mxu0 0
  %5481 = vmatprep.subr.bf16.mxu0 0
  %5482 = vmatpush1.bf16.msra.mxu0 0
  %5483 = vmatprep.subr.bf16.mxu0 0
  %5484 = vmatpush1.bf16.msra.mxu0 0
  %5485 = vmatprep.subr.bf16.mxu0 0
  %5486 = vmatpush1.bf16.msra.mxu0 0
  %5487 = vmatprep.subr.bf16.mxu0 0
  %5488 = vmatpush1.bf16.msra.mxu0 0
  %5489 = vmatprep.subr.bf16.mxu0 0
  %5490 = vmatpush1.bf16.msra.mxu0 0
  %5491 = vmatprep.subr.bf16.mxu0 0
  %5492 = vmatpush1.bf16.msra.mxu0 0
  %5493 = vmatprep.subr.bf16.mxu0 0
  %5494 = vmatpush1.bf16.msra.mxu0 0
  %5495 = vmatprep.subr.bf16.mxu0 0
  %5496 = vmatpush1.bf16.msra.mxu0 0
  %5497 = vmatprep.subr.bf16.mxu0 0
  %5498 = vmatpush1.bf16.msra.mxu0 0
  %5499 = vmatprep.subr.bf16.mxu0 0
  %5500 = vmatpush1.bf16.msra.mxu0 0
  %5501 = vmatprep.mubr.bf16.mxu0 0
  %5502 = vmatmul.mubr.bf16.gmra.mrb[0].mxu0 %v5467
  %v5503 = vpop.f32.mrb[0].mxu0
  %v5504 = vadd.f32 %v1923, %v5503
  %v5505 = vpop.f32.mrb[0].mxu0
  %v5506 = vpop.f32.mrb[0].mxu0
  %v5507 = vadd.f32 %v1925, %v5506
  %v5508 = vpop.f32.mrb[0].mxu0
  %5509 = vdwg.mxu0
  %v5510 = vsel %vm1434, %v5504, -inf
  %5511 = vmax.xlane.f32.xlu0 %v5510
  %v5512 = vpop.xlane.xlu0 %5511
  %v5513 = vsel %vm1434, %v5507, -inf
  %5514 = vmax.xlane.f32.xlu0 %v5513
  %v5515 = vpop.xlane.xlu0 %5514
  %v5516 = vsub.f32 %v5504, %v5512
  %v5517 = vsub.f32 %v5507, %v5515
  %v5518 = vmul.f32 %v5516, 1.442695
  %v5519 = vpow.pop %v5518
  %v5520 = vmul.f32 %v5517, 1.442695
  %v5521 = vpow.pop %v5520
  %v5522 = vsel %vm1434, %v5519, 0.0
  %5523 = vadd.xlane.f32.xlu0 %v5522
  %v5524 = vpop.xlane.xlu0 %5523
  %v5525 = vsel %vm1434, %v5521, 0.0
  %5526 = vadd.xlane.f32.xlu0 %v5525
  %v5527 = vpop.xlane.xlu0 %5526
  %v5528 = vrcp.pop %v5524
  %v5529 = vrcp.pop %v5527
  %v5530 = vmul.f32 %v5519, %v5528
  %v5531 = vmul.f32 %v5521, %v5529
  %v5532 = vpack.c.bf16 %v5531, %v5530
  %5533 = vrot.lane.b32.xlu0 %v5189, 96
  %v5534 = vpop.permute.xlu0 %5533
  %5535 = vrot.lane.b32.xlu0 %v5190, 96
  %v5536 = vpop.permute.xlu0 %5535
  %v5540 = vsel %vm1434, %v5532, 0
  %5542 = vmatprep.subr.bf16.mxu0 0
  %5543 = vmatpush1.bf16.msra.mxu0 %v5534
  %5544 = vmatprep.subr.bf16.mxu0 0
  %5545 = vmatpush1.bf16.msra.mxu0 %v5536
  %5546 = vmatprep.subr.bf16.mxu0 0
  %5547 = vmatpush1.bf16.msra.mxu0 0
  %5548 = vmatprep.subr.bf16.mxu0 0
  %5549 = vmatpush1.bf16.msra.mxu0 0
  %5550 = vmatprep.subr.bf16.mxu0 0
  %5551 = vmatpush1.bf16.msra.mxu0 0
  %5552 = vmatprep.subr.bf16.mxu0 0
  %5553 = vmatpush1.bf16.msra.mxu0 0
  %5554 = vmatprep.subr.bf16.mxu0 0
  %5555 = vmatpush1.bf16.msra.mxu0 0
  %5556 = vmatprep.subr.bf16.mxu0 0
  %5557 = vmatpush1.bf16.msra.mxu0 0
  %5558 = vmatprep.subr.bf16.mxu0 0
  %5559 = vmatpush1.bf16.msra.mxu0 0
  %5560 = vmatprep.subr.bf16.mxu0 0
  %5561 = vmatpush1.bf16.msra.mxu0 0
  %5562 = vmatprep.subr.bf16.mxu0 0
  %5563 = vmatpush1.bf16.msra.mxu0 0
  %5564 = vmatprep.subr.bf16.mxu0 0
  %5565 = vmatpush1.bf16.msra.mxu0 0
  %5566 = vmatprep.subr.bf16.mxu0 0
  %5567 = vmatpush1.bf16.msra.mxu0 0
  %5568 = vmatprep.subr.bf16.mxu0 0
  %5569 = vmatpush1.bf16.msra.mxu0 0
  %5570 = vmatprep.subr.bf16.mxu0 0
  %5571 = vmatpush1.bf16.msra.mxu0 0
  %5572 = vmatprep.subr.bf16.mxu0 0
  %5573 = vmatpush1.bf16.msra.mxu0 0
  %5574 = vmatprep.mubr.bf16.mxu0 0
  %5575 = vmatmul.mubr.bf16.gmra.mrb[0].mxu0 %v5540
  %v5576 = vpop.f32.mrb[0].mxu0
  %v5577 = vadd.f32 0.0, %v5576
  %v5578 = vpop.f32.mrb[0].mxu0
  %v5579 = vpop.f32.mrb[0].mxu0
  %v5580 = vadd.f32 0.0, %v5579
  %v5581 = vpop.f32.mrb[0].mxu0
  %5582 = vdwg.mxu0
  %5583 = vrot.lane.b32.xlu0 %v5188, 80
  %v5584 = vpop.permute.xlu0 %5583
  %v5586 = vsel %vm450, %v5584, 0
  %5588 = vmatprep.subr.bf16.mxu0 0
  %5589 = vmatpush1.bf16.msra.mxu0 %v5226
  %5590 = vmatprep.subr.bf16.mxu0 0
  %5591 = vmatpush1.bf16.msra.mxu0 0
  %5592 = vmatprep.subr.bf16.mxu0 0
  %5593 = vmatpush1.bf16.msra.mxu0 0
  %5594 = vmatprep.subr.bf16.mxu0 0
  %5595 = vmatpush1.bf16.msra.mxu0 0
  %5596 = vmatprep.subr.bf16.mxu0 0
  %5597 = vmatpush1.bf16.msra.mxu0 0
  %5598 = vmatprep.subr.bf16.mxu0 0
  %5599 = vmatpush1.bf16.msra.mxu0 0
  %5600 = vmatprep.subr.bf16.mxu0 0
  %5601 = vmatpush1.bf16.msra.mxu0 0
  %5602 = vmatprep.subr.bf16.mxu0 0
  %5603 = vmatpush1.bf16.msra.mxu0 0
  %5604 = vmatprep.subr.bf16.mxu0 0
  %5605 = vmatpush1.bf16.msra.mxu0 0
  %5606 = vmatprep.subr.bf16.mxu0 0
  %5607 = vmatpush1.bf16.msra.mxu0 0
  %5608 = vmatprep.subr.bf16.mxu0 0
  %5609 = vmatpush1.bf16.msra.mxu0 0
  %5610 = vmatprep.subr.bf16.mxu0 0
  %5611 = vmatpush1.bf16.msra.mxu0 0
  %5612 = vmatprep.subr.bf16.mxu0 0
  %5613 = vmatpush1.bf16.msra.mxu0 0
  %5614 = vmatprep.subr.bf16.mxu0 0
  %5615 = vmatpush1.bf16.msra.mxu0 0
  %5616 = vmatprep.subr.bf16.mxu0 0
  %5617 = vmatpush1.bf16.msra.mxu0 0
  %5618 = vmatprep.subr.bf16.mxu0 0
  %5619 = vmatpush1.bf16.msra.mxu0 0
  %5620 = vmatprep.mubr.bf16.mxu0 0
  %5621 = vmatmul.mubr.bf16.gmra.mrb[0].mxu0 %v5586
  %v5622 = vpop.f32.mrb[0].mxu0
  %v5623 = vadd.f32 %v1923, %v5622
  %v5624 = vpop.f32.mrb[0].mxu0
  %v5625 = vpop.f32.mrb[0].mxu0
  %v5626 = vadd.f32 %v1925, %v5625
  %v5627 = vpop.f32.mrb[0].mxu0
  %5628 = vdwg.mxu0
  %v5629 = vsel %vm1434, %v5623, -inf
  %5630 = vmax.xlane.f32.xlu0 %v5629
  %v5631 = vpop.xlane.xlu0 %5630
  %v5632 = vsel %vm1434, %v5626, -inf
  %5633 = vmax.xlane.f32.xlu0 %v5632
  %v5634 = vpop.xlane.xlu0 %5633
  %v5635 = vsub.f32 %v5623, %v5631
  %v5636 = vsub.f32 %v5626, %v5634
  %v5637 = vmul.f32 %v5635, 1.442695
  %v5638 = vpow.pop %v5637
  %v5639 = vmul.f32 %v5636, 1.442695
  %v5640 = vpow.pop %v5639
  %v5641 = vsel %vm1434, %v5638, 0.0
  %5642 = vadd.xlane.f32.xlu0 %v5641
  %v5643 = vpop.xlane.xlu0 %5642
  %v5644 = vsel %vm1434, %v5640, 0.0
  %5645 = vadd.xlane.f32.xlu0 %v5644
  %v5646 = vpop.xlane.xlu0 %5645
  %v5647 = vrcp.pop %v5643
  %v5648 = vrcp.pop %v5646
  %v5649 = vmul.f32 %v5638, %v5647
  %v5650 = vmul.f32 %v5640, %v5648
  %v5651 = vpack.c.bf16 %v5650, %v5649
  %5652 = vrot.lane.b32.xlu0 %v5189, 80
  %v5653 = vpop.permute.xlu0 %5652
  %5654 = vrot.lane.b32.xlu0 %v5190, 80
  %v5655 = vpop.permute.xlu0 %5654
  %v5659 = vsel %vm1434, %v5651, 0
  %5661 = vmatprep.subr.bf16.mxu0 0
  %5662 = vmatpush1.bf16.msra.mxu0 %v5653
  %5663 = vmatprep.subr.bf16.mxu0 0
  %5664 = vmatpush1.bf16.msra.mxu0 %v5655
  %5665 = vmatprep.subr.bf16.mxu0 0
  %5666 = vmatpush1.bf16.msra.mxu0 0
  %5667 = vmatprep.subr.bf16.mxu0 0
  %5668 = vmatpush1.bf16.msra.mxu0 0
  %5669 = vmatprep.subr.bf16.mxu0 0
  %5670 = vmatpush1.bf16.msra.mxu0 0
  %5671 = vmatprep.subr.bf16.mxu0 0
  %5672 = vmatpush1.bf16.msra.mxu0 0
  %5673 = vmatprep.subr.bf16.mxu0 0
  %5674 = vmatpush1.bf16.msra.mxu0 0
  %5675 = vmatprep.subr.bf16.mxu0 0
  %5676 = vmatpush1.bf16.msra.mxu0 0
  %5677 = vmatprep.subr.bf16.mxu0 0
  %5678 = vmatpush1.bf16.msra.mxu0 0
  %5679 = vmatprep.subr.bf16.mxu0 0
  %5680 = vmatpush1.bf16.msra.mxu0 0
  %5681 = vmatprep.subr.bf16.mxu0 0
  %5682 = vmatpush1.bf16.msra.mxu0 0
  %5683 = vmatprep.subr.bf16.mxu0 0
  %5684 = vmatpush1.bf16.msra.mxu0 0
  %5685 = vmatprep.subr.bf16.mxu0 0
  %5686 = vmatpush1.bf16.msra.mxu0 0
  %5687 = vmatprep.subr.bf16.mxu0 0
  %5688 = vmatpush1.bf16.msra.mxu0 0
  %5689 = vmatprep.subr.bf16.mxu0 0
  %5690 = vmatpush1.bf16.msra.mxu0 0
  %5691 = vmatprep.subr.bf16.mxu0 0
  %5692 = vmatpush1.bf16.msra.mxu0 0
  %5693 = vmatprep.mubr.bf16.mxu0 0
  %5694 = vmatmul.mubr.bf16.gmra.mrb[0].mxu0 %v5659
  %v5695 = vpop.f32.mrb[0].mxu0
  %v5696 = vadd.f32 0.0, %v5695
  %v5697 = vpop.f32.mrb[0].mxu0
  %v5698 = vpop.f32.mrb[0].mxu0
  %v5699 = vadd.f32 0.0, %v5698
  %v5700 = vpop.f32.mrb[0].mxu0
  %5701 = vdwg.mxu0
  %5702 = vrot.lane.b32.xlu0 %v5188, 64
  %v5703 = vpop.permute.xlu0 %5702
  %v5705 = vsel %vm450, %v5703, 0
  %5707 = vmatprep.subr.bf16.mxu0 0
  %5708 = vmatpush1.bf16.msra.mxu0 %v5227
  %5709 = vmatprep.subr.bf16.mxu0 0
  %5710 = vmatpush1.bf16.msra.mxu0 0
  %5711 = vmatprep.subr.bf16.mxu0 0
  %5712 = vmatpush1.bf16.msra.mxu0 0
  %5713 = vmatprep.subr.bf16.mxu0 0
  %5714 = vmatpush1.bf16.msra.mxu0 0
  %5715 = vmatprep.subr.bf16.mxu0 0
  %5716 = vmatpush1.bf16.msra.mxu0 0
  %5717 = vmatprep.subr.bf16.mxu0 0
  %5718 = vmatpush1.bf16.msra.mxu0 0
  %5719 = vmatprep.subr.bf16.mxu0 0
  %5720 = vmatpush1.bf16.msra.mxu0 0
  %5721 = vmatprep.subr.bf16.mxu0 0
  %5722 = vmatpush1.bf16.msra.mxu0 0
  %5723 = vmatprep.subr.bf16.mxu0 0
  %5724 = vmatpush1.bf16.msra.mxu0 0
  %5725 = vmatprep.subr.bf16.mxu0 0
  %5726 = vmatpush1.bf16.msra.mxu0 0
  %5727 = vmatprep.subr.bf16.mxu0 0
  %5728 = vmatpush1.bf16.msra.mxu0 0
  %5729 = vmatprep.subr.bf16.mxu0 0
  %5730 = vmatpush1.bf16.msra.mxu0 0
  %5731 = vmatprep.subr.bf16.mxu0 0
  %5732 = vmatpush1.bf16.msra.mxu0 0
  %5733 = vmatprep.subr.bf16.mxu0 0
  %5734 = vmatpush1.bf16.msra.mxu0 0
  %5735 = vmatprep.subr.bf16.mxu0 0
  %5736 = vmatpush1.bf16.msra.mxu0 0
  %5737 = vmatprep.subr.bf16.mxu0 0
  %5738 = vmatpush1.bf16.msra.mxu0 0
  %5739 = vmatprep.mubr.bf16.mxu0 0
  %5740 = vmatmul.mubr.bf16.gmra.mrb[0].mxu0 %v5705
  %v5741 = vpop.f32.mrb[0].mxu0
  %v5742 = vadd.f32 %v1923, %v5741
  %v5743 = vpop.f32.mrb[0].mxu0
  %v5744 = vpop.f32.mrb[0].mxu0
  %v5745 = vadd.f32 %v1925, %v5744
  %v5746 = vpop.f32.mrb[0].mxu0
  %5747 = vdwg.mxu0
  %v5748 = vsel %vm1434, %v5742, -inf
  %5749 = vmax.xlane.f32.xlu0 %v5748
  %v5750 = vpop.xlane.xlu0 %5749
  %v5751 = vsel %vm1434, %v5745, -inf
  %5752 = vmax.xlane.f32.xlu0 %v5751
  %v5753 = vpop.xlane.xlu0 %5752
  %v5754 = vsub.f32 %v5742, %v5750
  %v5755 = vsub.f32 %v5745, %v5753
  %v5756 = vmul.f32 %v5754, 1.442695
  %v5757 = vpow.pop %v5756
  %v5758 = vmul.f32 %v5755, 1.442695
  %v5759 = vpow.pop %v5758
  %v5760 = vsel %vm1434, %v5757, 0.0
  %5761 = vadd.xlane.f32.xlu0 %v5760
  %v5762 = vpop.xlane.xlu0 %5761
  %v5763 = vsel %vm1434, %v5759, 0.0
  %5764 = vadd.xlane.f32.xlu0 %v5763
  %v5765 = vpop.xlane.xlu0 %5764
  %v5766 = vrcp.pop %v5762
  %v5767 = vrcp.pop %v5765
  %v5768 = vmul.f32 %v5757, %v5766
  %v5769 = vmul.f32 %v5759, %v5767
  %v5770 = vpack.c.bf16 %v5769, %v5768
  %5771 = vrot.lane.b32.xlu0 %v5189, 64
  %v5772 = vpop.permute.xlu0 %5771
  %5773 = vrot.lane.b32.xlu0 %v5190, 64
  %v5774 = vpop.permute.xlu0 %5773
  %v5778 = vsel %vm1434, %v5770, 0
  %5780 = vmatprep.subr.bf16.mxu0 0
  %5781 = vmatpush1.bf16.msra.mxu0 %v5772
  %5782 = vmatprep.subr.bf16.mxu0 0
  %5783 = vmatpush1.bf16.msra.mxu0 %v5774
  %5784 = vmatprep.subr.bf16.mxu0 0
  %5785 = vmatpush1.bf16.msra.mxu0 0
  %5786 = vmatprep.subr.bf16.mxu0 0
  %5787 = vmatpush1.bf16.msra.mxu0 0
  %5788 = vmatprep.subr.bf16.mxu0 0
  %5789 = vmatpush1.bf16.msra.mxu0 0
  %5790 = vmatprep.subr.bf16.mxu0 0
  %5791 = vmatpush1.bf16.msra.mxu0 0
  %5792 = vmatprep.subr.bf16.mxu0 0
  %5793 = vmatpush1.bf16.msra.mxu0 0
  %5794 = vmatprep.subr.bf16.mxu0 0
  %5795 = vmatpush1.bf16.msra.mxu0 0
  %5796 = vmatprep.subr.bf16.mxu0 0
  %5797 = vmatpush1.bf16.msra.mxu0 0
  %5798 = vmatprep.subr.bf16.mxu0 0
  %5799 = vmatpush1.bf16.msra.mxu0 0
  %5800 = vmatprep.subr.bf16.mxu0 0
  %5801 = vmatpush1.bf16.msra.mxu0 0
  %5802 = vmatprep.subr.bf16.mxu0 0
  %5803 = vmatpush1.bf16.msra.mxu0 0
  %5804 = vmatprep.subr.bf16.mxu0 0
  %5805 = vmatpush1.bf16.msra.mxu0 0
  %5806 = vmatprep.subr.bf16.mxu0 0
  %5807 = vmatpush1.bf16.msra.mxu0 0
  %5808 = vmatprep.subr.bf16.mxu0 0
  %5809 = vmatpush1.bf16.msra.mxu0 0
  %5810 = vmatprep.subr.bf16.mxu0 0
  %5811 = vmatpush1.bf16.msra.mxu0 0
  %5812 = vmatprep.mubr.bf16.mxu0 0
  %5813 = vmatmul.mubr.bf16.gmra.mrb[0].mxu0 %v5778
  %v5814 = vpop.f32.mrb[0].mxu0
  %v5815 = vadd.f32 0.0, %v5814
  %v5816 = vpop.f32.mrb[0].mxu0
  %v5817 = vpop.f32.mrb[0].mxu0
  %v5818 = vadd.f32 0.0, %v5817
  %v5819 = vpop.f32.mrb[0].mxu0
  %5820 = vdwg.mxu0
  %5821 = vrot.lane.b32.xlu0 %v5188, 48
  %v5822 = vpop.permute.xlu0 %5821
  %v5824 = vsel %vm450, %v5822, 0
  %5826 = vmatprep.subr.bf16.mxu0 0
  %5827 = vmatpush1.bf16.msra.mxu0 %v5228
  %5828 = vmatprep.subr.bf16.mxu0 0
  %5829 = vmatpush1.bf16.msra.mxu0 0
  %5830 = vmatprep.subr.bf16.mxu0 0
  %5831 = vmatpush1.bf16.msra.mxu0 0
  %5832 = vmatprep.subr.bf16.mxu0 0
  %5833 = vmatpush1.bf16.msra.mxu0 0
  %5834 = vmatprep.subr.bf16.mxu0 0
  %5835 = vmatpush1.bf16.msra.mxu0 0
  %5836 = vmatprep.subr.bf16.mxu0 0
  %5837 = vmatpush1.bf16.msra.mxu0 0
  %5838 = vmatprep.subr.bf16.mxu0 0
  %5839 = vmatpush1.bf16.msra.mxu0 0
  %5840 = vmatprep.subr.bf16.mxu0 0
  %5841 = vmatpush1.bf16.msra.mxu0 0
  %5842 = vmatprep.subr.bf16.mxu0 0
  %5843 = vmatpush1.bf16.msra.mxu0 0
  %5844 = vmatprep.subr.bf16.mxu0 0
  %5845 = vmatpush1.bf16.msra.mxu0 0
  %5846 = vmatprep.subr.bf16.mxu0 0
  %5847 = vmatpush1.bf16.msra.mxu0 0
  %5848 = vmatprep.subr.bf16.mxu0 0
  %5849 = vmatpush1.bf16.msra.mxu0 0
  %5850 = vmatprep.subr.bf16.mxu0 0
  %5851 = vmatpush1.bf16.msra.mxu0 0
  %5852 = vmatprep.subr.bf16.mxu0 0
  %5853 = vmatpush1.bf16.msra.mxu0 0
  %5854 = vmatprep.subr.bf16.mxu0 0
  %5855 = vmatpush1.bf16.msra.mxu0 0
  %5856 = vmatprep.subr.bf16.mxu0 0
  %5857 = vmatpush1.bf16.msra.mxu0 0
  %5858 = vmatprep.mubr.bf16.mxu0 0
  %5859 = vmatmul.mubr.bf16.gmra.mrb[0].mxu0 %v5824
  %v5860 = vpop.f32.mrb[0].mxu0
  %v5861 = vadd.f32 %v1923, %v5860
  %v5862 = vpop.f32.mrb[0].mxu0
  %v5863 = vpop.f32.mrb[0].mxu0
  %v5864 = vadd.f32 %v1925, %v5863
  %v5865 = vpop.f32.mrb[0].mxu0
  %5866 = vdwg.mxu0
  %v5867 = vsel %vm1434, %v5861, -inf
  %5868 = vmax.xlane.f32.xlu0 %v5867
  %v5869 = vpop.xlane.xlu0 %5868
  %v5870 = vsel %vm1434, %v5864, -inf
  %5871 = vmax.xlane.f32.xlu0 %v5870
  %v5872 = vpop.xlane.xlu0 %5871
  %v5873 = vsub.f32 %v5861, %v5869
  %v5874 = vsub.f32 %v5864, %v5872
  %v5875 = vmul.f32 %v5873, 1.442695
  %v5876 = vpow.pop %v5875
  %v5877 = vmul.f32 %v5874, 1.442695
  %v5878 = vpow.pop %v5877
  %v5879 = vsel %vm1434, %v5876, 0.0
  %5880 = vadd.xlane.f32.xlu0 %v5879
  %v5881 = vpop.xlane.xlu0 %5880
  %v5882 = vsel %vm1434, %v5878, 0.0
  %5883 = vadd.xlane.f32.xlu0 %v5882
  %v5884 = vpop.xlane.xlu0 %5883
  %v5885 = vrcp.pop %v5881
  %v5886 = vrcp.pop %v5884
  %v5887 = vmul.f32 %v5876, %v5885
  %v5888 = vmul.f32 %v5878, %v5886
  %v5889 = vpack.c.bf16 %v5888, %v5887
  %5890 = vrot.lane.b32.xlu0 %v5189, 48
  %v5891 = vpop.permute.xlu0 %5890
  %5892 = vrot.lane.b32.xlu0 %v5190, 48
  %v5893 = vpop.permute.xlu0 %5892
  %v5897 = vsel %vm1434, %v5889, 0
  %5899 = vmatprep.subr.bf16.mxu0 0
  %5900 = vmatpush1.bf16.msra.mxu0 %v5891
  %5901 = vmatprep.subr.bf16.mxu0 0
  %5902 = vmatpush1.bf16.msra.mxu0 %v5893
  %5903 = vmatprep.subr.bf16.mxu0 0
  %5904 = vmatpush1.bf16.msra.mxu0 0
  %5905 = vmatprep.subr.bf16.mxu0 0
  %5906 = vmatpush1.bf16.msra.mxu0 0
  %5907 = vmatprep.subr.bf16.mxu0 0
  %5908 = vmatpush1.bf16.msra.mxu0 0
  %5909 = vmatprep.subr.bf16.mxu0 0
  %5910 = vmatpush1.bf16.msra.mxu0 0
  %5911 = vmatprep.subr.bf16.mxu0 0
  %5912 = vmatpush1.bf16.msra.mxu0 0
  %5913 = vmatprep.subr.bf16.mxu0 0
  %5914 = vmatpush1.bf16.msra.mxu0 0
  %5915 = vmatprep.subr.bf16.mxu0 0
  %5916 = vmatpush1.bf16.msra.mxu0 0
  %5917 = vmatprep.subr.bf16.mxu0 0
  %5918 = vmatpush1.bf16.msra.mxu0 0
  %5919 = vmatprep.subr.bf16.mxu0 0
  %5920 = vmatpush1.bf16.msra.mxu0 0
  %5921 = vmatprep.subr.bf16.mxu0 0
  %5922 = vmatpush1.bf16.msra.mxu0 0
  %5923 = vmatprep.subr.bf16.mxu0 0
  %5924 = vmatpush1.bf16.msra.mxu0 0
  %5925 = vmatprep.subr.bf16.mxu0 0
  %5926 = vmatpush1.bf16.msra.mxu0 0
  %5927 = vmatprep.subr.bf16.mxu0 0
  %5928 = vmatpush1.bf16.msra.mxu0 0
  %5929 = vmatprep.subr.bf16.mxu0 0
  %5930 = vmatpush1.bf16.msra.mxu0 0
  %5931 = vmatprep.mubr.bf16.mxu0 0
  %5932 = vmatmul.mubr.bf16.gmra.mrb[0].mxu0 %v5897
  %v5933 = vpop.f32.mrb[0].mxu0
  %v5934 = vadd.f32 0.0, %v5933
  %v5935 = vpop.f32.mrb[0].mxu0
  %v5936 = vpop.f32.mrb[0].mxu0
  %v5937 = vadd.f32 0.0, %v5936
  %v5938 = vpop.f32.mrb[0].mxu0
  %5939 = vdwg.mxu0
  %5940 = vrot.lane.b32.xlu0 %v5188, 32
  %v5941 = vpop.permute.xlu0 %5940
  %v5943 = vsel %vm450, %v5941, 0
  %5945 = vmatprep.subr.bf16.mxu0 0
  %5946 = vmatpush1.bf16.msra.mxu0 %v5229
  %5947 = vmatprep.subr.bf16.mxu0 0
  %5948 = vmatpush1.bf16.msra.mxu0 0
  %5949 = vmatprep.subr.bf16.mxu0 0
  %5950 = vmatpush1.bf16.msra.mxu0 0
  %5951 = vmatprep.subr.bf16.mxu0 0
  %5952 = vmatpush1.bf16.msra.mxu0 0
  %5953 = vmatprep.subr.bf16.mxu0 0
  %5954 = vmatpush1.bf16.msra.mxu0 0
  %5955 = vmatprep.subr.bf16.mxu0 0
  %5956 = vmatpush1.bf16.msra.mxu0 0
  %5957 = vmatprep.subr.bf16.mxu0 0
  %5958 = vmatpush1.bf16.msra.mxu0 0
  %5959 = vmatprep.subr.bf16.mxu0 0
  %5960 = vmatpush1.bf16.msra.mxu0 0
  %5961 = vmatprep.subr.bf16.mxu0 0
  %5962 = vmatpush1.bf16.msra.mxu0 0
  %5963 = vmatprep.subr.bf16.mxu0 0
  %5964 = vmatpush1.bf16.msra.mxu0 0
  %5965 = vmatprep.subr.bf16.mxu0 0
  %5966 = vmatpush1.bf16.msra.mxu0 0
  %5967 = vmatprep.subr.bf16.mxu0 0
  %5968 = vmatpush1.bf16.msra.mxu0 0
  %5969 = vmatprep.subr.bf16.mxu0 0
  %5970 = vmatpush1.bf16.msra.mxu0 0
  %5971 = vmatprep.subr.bf16.mxu0 0
  %5972 = vmatpush1.bf16.msra.mxu0 0
  %5973 = vmatprep.subr.bf16.mxu0 0
  %5974 = vmatpush1.bf16.msra.mxu0 0
  %5975 = vmatprep.subr.bf16.mxu0 0
  %5976 = vmatpush1.bf16.msra.mxu0 0
  %5977 = vmatprep.mubr.bf16.mxu0 0
  %5978 = vmatmul.mubr.bf16.gmra.mrb[0].mxu0 %v5943
  %v5979 = vpop.f32.mrb[0].mxu0
  %v5980 = vadd.f32 %v1923, %v5979
  %v5981 = vpop.f32.mrb[0].mxu0
  %v5982 = vpop.f32.mrb[0].mxu0
  %v5983 = vadd.f32 %v1925, %v5982
  %v5984 = vpop.f32.mrb[0].mxu0
  %5985 = vdwg.mxu0
  %v5986 = vsel %vm1434, %v5980, -inf
  %5987 = vmax.xlane.f32.xlu0 %v5986
  %v5988 = vpop.xlane.xlu0 %5987
  %v5989 = vsel %vm1434, %v5983, -inf
  %5990 = vmax.xlane.f32.xlu0 %v5989
  %v5991 = vpop.xlane.xlu0 %5990
  %v5992 = vsub.f32 %v5980, %v5988
  %v5993 = vsub.f32 %v5983, %v5991
  %v5994 = vmul.f32 %v5992, 1.442695
  %v5995 = vpow.pop %v5994
  %v5996 = vmul.f32 %v5993, 1.442695
  %v5997 = vpow.pop %v5996
  %v5998 = vsel %vm1434, %v5995, 0.0
  %5999 = vadd.xlane.f32.xlu0 %v5998
  %v6000 = vpop.xlane.xlu0 %5999
  %v6001 = vsel %vm1434, %v5997, 0.0
  %6002 = vadd.xlane.f32.xlu0 %v6001
  %v6003 = vpop.xlane.xlu0 %6002
  %v6004 = vrcp.pop %v6000
  %v6005 = vrcp.pop %v6003
  %v6006 = vmul.f32 %v5995, %v6004
  %v6007 = vmul.f32 %v5997, %v6005
  %v6008 = vpack.c.bf16 %v6007, %v6006
  %6009 = vrot.lane.b32.xlu0 %v5189, 32
  %v6010 = vpop.permute.xlu0 %6009
  %6011 = vrot.lane.b32.xlu0 %v5190, 32
  %v6012 = vpop.permute.xlu0 %6011
  %v6016 = vsel %vm1434, %v6008, 0
  %6018 = vmatprep.subr.bf16.mxu0 0
  %6019 = vmatpush1.bf16.msra.mxu0 %v6010
  %6020 = vmatprep.subr.bf16.mxu0 0
  %6021 = vmatpush1.bf16.msra.mxu0 %v6012
  %6022 = vmatprep.subr.bf16.mxu0 0
  %6023 = vmatpush1.bf16.msra.mxu0 0
  %6024 = vmatprep.subr.bf16.mxu0 0
  %6025 = vmatpush1.bf16.msra.mxu0 0
  %6026 = vmatprep.subr.bf16.mxu0 0
  %6027 = vmatpush1.bf16.msra.mxu0 0
  %6028 = vmatprep.subr.bf16.mxu0 0
  %6029 = vmatpush1.bf16.msra.mxu0 0
  %6030 = vmatprep.subr.bf16.mxu0 0
  %6031 = vmatpush1.bf16.msra.mxu0 0
  %6032 = vmatprep.subr.bf16.mxu0 0
  %6033 = vmatpush1.bf16.msra.mxu0 0
  %6034 = vmatprep.subr.bf16.mxu0 0
  %6035 = vmatpush1.bf16.msra.mxu0 0
  %6036 = vmatprep.subr.bf16.mxu0 0
  %6037 = vmatpush1.bf16.msra.mxu0 0
  %6038 = vmatprep.subr.bf16.mxu0 0
  %6039 = vmatpush1.bf16.msra.mxu0 0
  %6040 = vmatprep.subr.bf16.mxu0 0
  %6041 = vmatpush1.bf16.msra.mxu0 0
  %6042 = vmatprep.subr.bf16.mxu0 0
  %6043 = vmatpush1.bf16.msra.mxu0 0
  %6044 = vmatprep.subr.bf16.mxu0 0
  %6045 = vmatpush1.bf16.msra.mxu0 0
  %6046 = vmatprep.subr.bf16.mxu0 0
  %6047 = vmatpush1.bf16.msra.mxu0 0
  %6048 = vmatprep.subr.bf16.mxu0 0
  %6049 = vmatpush1.bf16.msra.mxu0 0
  %6050 = vmatprep.mubr.bf16.mxu0 0
  %6051 = vmatmul.mubr.bf16.gmra.mrb[0].mxu0 %v6016
  %v6052 = vpop.f32.mrb[0].mxu0
  %v6053 = vadd.f32 0.0, %v6052
  %v6054 = vpop.f32.mrb[0].mxu0
  %v6055 = vpop.f32.mrb[0].mxu0
  %v6056 = vadd.f32 0.0, %v6055
  %v6057 = vpop.f32.mrb[0].mxu0
  %6058 = vdwg.mxu0
  %6059 = vrot.lane.b32.xlu0 %v5188, 16
  %v6060 = vpop.permute.xlu0 %6059
  %v6062 = vsel %vm450, %v6060, 0
  %6064 = vmatprep.subr.bf16.mxu0 0
  %6065 = vmatpush1.bf16.msra.mxu0 %v5230
  %6066 = vmatprep.subr.bf16.mxu0 0
  %6067 = vmatpush1.bf16.msra.mxu0 0
  %6068 = vmatprep.subr.bf16.mxu0 0
  %6069 = vmatpush1.bf16.msra.mxu0 0
  %6070 = vmatprep.subr.bf16.mxu0 0
  %6071 = vmatpush1.bf16.msra.mxu0 0
  %6072 = vmatprep.subr.bf16.mxu0 0
  %6073 = vmatpush1.bf16.msra.mxu0 0
  %6074 = vmatprep.subr.bf16.mxu0 0
  %6075 = vmatpush1.bf16.msra.mxu0 0
  %6076 = vmatprep.subr.bf16.mxu0 0
  %6077 = vmatpush1.bf16.msra.mxu0 0
  %6078 = vmatprep.subr.bf16.mxu0 0
  %6079 = vmatpush1.bf16.msra.mxu0 0
  %6080 = vmatprep.subr.bf16.mxu0 0
  %6081 = vmatpush1.bf16.msra.mxu0 0
  %6082 = vmatprep.subr.bf16.mxu0 0
  %6083 = vmatpush1.bf16.msra.mxu0 0
  %6084 = vmatprep.subr.bf16.mxu0 0
  %6085 = vmatpush1.bf16.msra.mxu0 0
  %6086 = vmatprep.subr.bf16.mxu0 0
  %6087 = vmatpush1.bf16.msra.mxu0 0
  %6088 = vmatprep.subr.bf16.mxu0 0
  %6089 = vmatpush1.bf16.msra.mxu0 0
  %6090 = vmatprep.subr.bf16.mxu0 0
  %6091 = vmatpush1.bf16.msra.mxu0 0
  %6092 = vmatprep.subr.bf16.mxu0 0
  %6093 = vmatpush1.bf16.msra.mxu0 0
  %6094 = vmatprep.subr.bf16.mxu0 0
  %6095 = vmatpush1.bf16.msra.mxu0 0
  %6096 = vmatprep.mubr.bf16.mxu0 0
  %6097 = vmatmul.mubr.bf16.gmra.mrb[0].mxu0 %v6062
  %v6098 = vpop.f32.mrb[0].mxu0
  %v6099 = vadd.f32 %v1923, %v6098
  %v6100 = vpop.f32.mrb[0].mxu0
  %v6101 = vpop.f32.mrb[0].mxu0
  %v6102 = vadd.f32 %v1925, %v6101
  %v6103 = vpop.f32.mrb[0].mxu0
  %6104 = vdwg.mxu0
  %v6105 = vsel %vm1434, %v6099, -inf
  %6106 = vmax.xlane.f32.xlu0 %v6105
  %v6107 = vpop.xlane.xlu0 %6106
  %v6108 = vsel %vm1434, %v6102, -inf
  %6109 = vmax.xlane.f32.xlu0 %v6108
  %v6110 = vpop.xlane.xlu0 %6109
  %v6111 = vsub.f32 %v6099, %v6107
  %v6112 = vsub.f32 %v6102, %v6110
  %v6113 = vmul.f32 %v6111, 1.442695
  %v6114 = vpow.pop %v6113
  %v6115 = vmul.f32 %v6112, 1.442695
  %v6116 = vpow.pop %v6115
  %v6117 = vsel %vm1434, %v6114, 0.0
  %6118 = vadd.xlane.f32.xlu0 %v6117
  %v6119 = vpop.xlane.xlu0 %6118
  %v6120 = vsel %vm1434, %v6116, 0.0
  %6121 = vadd.xlane.f32.xlu0 %v6120
  %v6122 = vpop.xlane.xlu0 %6121
  %v6123 = vrcp.pop %v6119
  %v6124 = vrcp.pop %v6122
  %v6125 = vmul.f32 %v6114, %v6123
  %v6126 = vmul.f32 %v6116, %v6124
  %v6127 = vpack.c.bf16 %v6126, %v6125
  %6128 = vrot.lane.b32.xlu0 %v5189, 16
  %v6129 = vpop.permute.xlu0 %6128
  %6130 = vrot.lane.b32.xlu0 %v5190, 16
  %v6131 = vpop.permute.xlu0 %6130
  %v6135 = vsel %vm1434, %v6127, 0
  %6137 = vmatprep.subr.bf16.mxu0 0
  %6138 = vmatpush1.bf16.msra.mxu0 %v6129
  %6139 = vmatprep.subr.bf16.mxu0 0
  %6140 = vmatpush1.bf16.msra.mxu0 %v6131
  %6141 = vmatprep.subr.bf16.mxu0 0
  %6142 = vmatpush1.bf16.msra.mxu0 0
  %6143 = vmatprep.subr.bf16.mxu0 0
  %6144 = vmatpush1.bf16.msra.mxu0 0
  %6145 = vmatprep.subr.bf16.mxu0 0
  %6146 = vmatpush1.bf16.msra.mxu0 0
  %6147 = vmatprep.subr.bf16.mxu0 0
  %6148 = vmatpush1.bf16.msra.mxu0 0
  %6149 = vmatprep.subr.bf16.mxu0 0
  %6150 = vmatpush1.bf16.msra.mxu0 0
  %6151 = vmatprep.subr.bf16.mxu0 0
  %6152 = vmatpush1.bf16.msra.mxu0 0
  %6153 = vmatprep.subr.bf16.mxu0 0
  %6154 = vmatpush1.bf16.msra.mxu0 0
  %6155 = vmatprep.subr.bf16.mxu0 0
  %6156 = vmatpush1.bf16.msra.mxu0 0
  %6157 = vmatprep.subr.bf16.mxu0 0
  %6158 = vmatpush1.bf16.msra.mxu0 0
  %6159 = vmatprep.subr.bf16.mxu0 0
  %6160 = vmatpush1.bf16.msra.mxu0 0
  %6161 = vmatprep.subr.bf16.mxu0 0
  %6162 = vmatpush1.bf16.msra.mxu0 0
  %6163 = vmatprep.subr.bf16.mxu0 0
  %6164 = vmatpush1.bf16.msra.mxu0 0
  %6165 = vmatprep.subr.bf16.mxu0 0
  %6166 = vmatpush1.bf16.msra.mxu0 0
  %6167 = vmatprep.subr.bf16.mxu0 0
  %6168 = vmatpush1.bf16.msra.mxu0 0
  %6169 = vmatprep.mubr.bf16.mxu0 0
  %6170 = vmatmul.mubr.bf16.gmra.mrb[0].mxu0 %v6135
  %v6171 = vpop.f32.mrb[0].mxu0
  %v6172 = vadd.f32 0.0, %v6171
  %v6173 = vpop.f32.mrb[0].mxu0
  %v6174 = vpop.f32.mrb[0].mxu0
  %v6175 = vadd.f32 0.0, %v6174
  %v6176 = vpop.f32.mrb[0].mxu0
  %6177 = vdwg.mxu0
  %6180 = vrot.lane.b32.xlu0 %v5458, 16
  %v6181 = vpop.permute.xlu0 %6180
  %6182 = vrot.lane.b32.xlu0 %v5461, 16
  %v6183 = vpop.permute.xlu0 %6182
  %6188 = vrot.lane.b32.xlu0 %v5577, 32
  %v6189 = vpop.permute.xlu0 %6188
  %6190 = vrot.lane.b32.xlu0 %v5580, 32
  %v6191 = vpop.permute.xlu0 %6190
  %6196 = vrot.lane.b32.xlu0 %v5696, 48
  %v6197 = vpop.permute.xlu0 %6196
  %6198 = vrot.lane.b32.xlu0 %v5699, 48
  %v6199 = vpop.permute.xlu0 %6198
  %6204 = vrot.lane.b32.xlu0 %v5815, 64
  %v6205 = vpop.permute.xlu0 %6204
  %6206 = vrot.lane.b32.xlu0 %v5818, 64
  %v6207 = vpop.permute.xlu0 %6206
  %6212 = vrot.lane.b32.xlu0 %v5934, 80
  %v6213 = vpop.permute.xlu0 %6212
  %6214 = vrot.lane.b32.xlu0 %v5937, 80
  %v6215 = vpop.permute.xlu0 %6214
  %6220 = vrot.lane.b32.xlu0 %v6053, 96
  %v6221 = vpop.permute.xlu0 %6220
  %6222 = vrot.lane.b32.xlu0 %v6056, 96
  %v6223 = vpop.permute.xlu0 %6222
  %6228 = vrot.lane.b32.xlu0 %v6172, 112
  %v6229 = vpop.permute.xlu0 %6228
  %6230 = vrot.lane.b32.xlu0 %v6175, 112
  %v6231 = vpop.permute.xlu0 %6230
  %v6234 = vsel %vm450, %v5336, %v6181
  %v6235 = vsel %vm450, %v5339, %v6183
  %v6236 = vsel %vm1434, %v6234, %v6189
  %v6237 = vsel %vm1434, %v6235, %v6191
  %v6238 = vsel %vm1437, %v6236, %v6197
  %v6239 = vsel %vm1437, %v6237, %v6199
  %v6240 = vsel %vm1440, %v6238, %v6205
  %v6241 = vsel %vm1440, %v6239, %v6207
  %v6242 = vsel %vm1443, %v6240, %v6213
  %v6243 = vsel %vm1443, %v6241, %v6215
  %v6244 = vsel %vm1446, %v6242, %v6221
  %v6245 = vsel %vm1446, %v6243, %v6223
  %v6246 = vsel %vm1449, %v6244, %v6229
  %v6247 = vsel %vm1449, %v6245, %v6231
  %v6248 = vpack.c.bf16 %v6247, %v6246
  %v6249 = vlaneseq
  %v6250 = vshrl.u32 %v6249, 7
  %v6251 = vsub.s32 0, %v6250
  %v6252 = vrot.slane %v5187, %v6251
  %v6269 = vunpack.c.l.b16 %v5171
  %v6270 = vunpack.c.l.b16 %v5172
  %v6271 = vunpack.c.l.b16 %v5173
  %v6272 = vunpack.c.l.b16 %v5174
  %v6273 = vunpack.c.l.b16 %v5175
  %v6274 = vunpack.c.l.b16 %v5176
  %v6275 = vunpack.c.l.b16 %v5177
  %v6276 = vunpack.c.l.b16 %v5178
  %v6277 = vunpack.c.l.b16 %v5179
  %v6278 = vunpack.c.l.b16 %v5180
  %v6279 = vunpack.c.l.b16 %v5181
  %v6280 = vunpack.c.l.b16 %v5182
  %v6281 = vunpack.c.l.b16 %v5183
  %v6282 = vunpack.c.l.b16 %v5184
  %v6283 = vunpack.c.l.b16 %v5185
  %v6284 = vunpack.c.l.b16 %v5186
  %v6285 = vpack.c.b16 %v6270, %v6269
  %v6286 = vpack.c.b16 %v6272, %v6271
  %v6287 = vpack.c.b16 %v6274, %v6273
  %v6288 = vpack.c.b16 %v6276, %v6275
  %v6289 = vpack.c.b16 %v6278, %v6277
  %v6290 = vpack.c.b16 %v6280, %v6279
  %v6291 = vpack.c.b16 %v6282, %v6281
  %v6292 = vpack.c.b16 %v6284, %v6283
  %6301 = vmatprep.subr.bf16.mxu0 0
  %6302 = vmatpush1.bf16.msra.mxu0 %v6285
  %6303 = vmatprep.subr.bf16.mxu0 0
  %6304 = vmatpush1.bf16.msra.mxu0 %v6286
  %6305 = vmatprep.subr.bf16.mxu0 0
  %6306 = vmatpush1.bf16.msra.mxu0 %v6287
  %6307 = vmatprep.subr.bf16.mxu0 0
  %6308 = vmatpush1.bf16.msra.mxu0 %v6288
  %6309 = vmatprep.subr.bf16.mxu0 0
  %6310 = vmatpush1.bf16.msra.mxu0 %v6289
  %6311 = vmatprep.subr.bf16.mxu0 0
  %6312 = vmatpush1.bf16.msra.mxu0 %v6290
  %6313 = vmatprep.subr.bf16.mxu0 0
  %6314 = vmatpush1.bf16.msra.mxu0 %v6291
  %6315 = vmatprep.subr.bf16.mxu0 0
  %6316 = vmatpush1.bf16.msra.mxu0 %v6292
  %6317 = vmatprep.subr.bf16.mxu0 0
  %6318 = vmatpush1.bf16.msra.mxu0 0
  %6319 = vmatprep.subr.bf16.mxu0 0
  %6320 = vmatpush1.bf16.msra.mxu0 0
  %6321 = vmatprep.subr.bf16.mxu0 0
  %6322 = vmatpush1.bf16.msra.mxu0 0
  %6323 = vmatprep.subr.bf16.mxu0 0
  %6324 = vmatpush1.bf16.msra.mxu0 0
  %6325 = vmatprep.subr.bf16.mxu0 0
  %6326 = vmatpush1.bf16.msra.mxu0 0
  %6327 = vmatprep.subr.bf16.mxu0 0
  %6328 = vmatpush1.bf16.msra.mxu0 0
  %6329 = vmatprep.subr.bf16.mxu0 0
  %6330 = vmatpush1.bf16.msra.mxu0 0
  %6331 = vmatprep.subr.bf16.mxu0 0
  %6332 = vmatpush1.bf16.msra.mxu0 0
  %6333 = vmatprep.mubr.bf16.mxu0 0
  %6334 = vmatmul.mubr.bf16.gmra.mrb[0].mxu0 %v6248
  %v6335 = vpop.f32.mrb[0].mxu0
  %v6336 = vadd.f32 %v6252, %v6335
  %v6337 = vpop.f32.mrb[0].mxu0
  %v6338 = vpop.f32.mrb[0].mxu0
  %v6339 = vadd.f32 %v6252, %v6338
  %v6340 = vpop.f32.mrb[0].mxu0
  %6341 = vdwg.mxu0
  %v6342 = vadd.f32 %v4896, %v6336
  %v6343 = vadd.f32 %v4897, %v6339
  %v6344 = vld [vmem:[%s7 + $0x35] sm:$0x1]
  %v6345 = vld [vmem:[%s7 + $0x39] sm:$0x1]
  %6346 = vadd.xlane.f32.xlu0 %v6342
  %v6347 = vpop.xlane.xlu0 %6346
  %6348 = vadd.xlane.f32.xlu0 %v6343
  %v6349 = vpop.xlane.xlu0 %6348
  %v6350 = vmul.f32 %v6347, %v1554
  %v6351 = vmul.f32 %v6349, %v1554
  %v6352 = vsub.f32 %v6342, %v6350
  %v6353 = vsub.f32 %v6343, %v6351
  %v6354 = vmul.f32 %v6352, %v6352
  %v6355 = vmul.f32 %v6353, %v6353
  %6356 = vadd.xlane.f32.xlu0 %v6354
  %v6357 = vpop.xlane.xlu0 %6356
  %6358 = vadd.xlane.f32.xlu0 %v6355
  %v6359 = vpop.xlane.xlu0 %6358
  %v6360 = vmul.f32 %v6357, %v1554
  %v6361 = vmul.f32 %v6359, %v1554
  %v6362 = vadd.f32 %v6360, 1e-05
  %v6363 = vadd.f32 %v6361, 1e-05
  %v6364 = vrsqrt.pop %v6362
  %v6365 = vrsqrt.pop %v6363
  %v6366 = vmul.f32 %v6352, %v6364
  %v6367 = vmul.f32 %v6353, %v6365
  %v6368 = vlaneseq
  %v6369 = vshrl.u32 %v6368, 7
  %v6370 = vsub.s32 0, %v6369
  %v6371 = vrot.slane %v6344, %v6370
  %v6372 = vmul.f32 %v6366, %v6371
  %v6373 = vmul.f32 %v6367, %v6371
  %v6374 = vlaneseq
  %v6375 = vshrl.u32 %v6374, 7
  %v6376 = vsub.s32 0, %v6375
  %v6377 = vrot.slane %v6345, %v6376
  %v6378 = vadd.f32 %v6372, %v6377
  %v6379 = vadd.f32 %v6373, %v6377
  %v6380 = vld [vmem:[%s3448 + $0x20] sm:$0xff]
  %v6381 = vld [vmem:[%s3448 + $0x48] sm:$0xff]
  %v6382 = vld [vmem:[%s3448 + $0x70] sm:$0xff]
  %v6383 = vld [vmem:[%s3448 + $0x98] sm:$0xff]
  %v6384 = vld [vmem:[%s3448 + $0xc0] sm:$0xff]
  %v6385 = vld [vmem:[%s3448 + $0xe8] sm:$0xff]
  %v6386 = vld [vmem:[%s3448 + $0x110] sm:$0xff]
  %v6387 = vld [vmem:[%s3448 + $0x138] sm:$0xff]
  %v6388 = vld [vmem:[%s3448 + $0x160] sm:$0xff]
  %v6389 = vld [vmem:[%s3448 + $0x188] sm:$0xff]
  %v6390 = vld [vmem:[%s3448 + $0x1b0] sm:$0xff]
  %v6391 = vld [vmem:[%s3448 + $0x1d8] sm:$0xff]
  %v6392 = vld [vmem:[%s3448 + $0x200] sm:$0xff]
  %v6393 = vld [vmem:[%s3448 + $0x228] sm:$0xff]
  %v6394 = vld [vmem:[%s3448 + $0x250] sm:$0xff]
  %v6395 = vld [vmem:[%s3448 + $0x278] sm:$0xff]
  %v6396 = vpack.c.bf16 %v6379, %v6378
  %s6397 = scalar_lea.vmem %s7, 33
  %v6398 = vld [vmem:[%s6397] ss:$4 sm:$0x3]
  %v6400 = vlaneseq
  %v6401 = vshrl.u32 %v6400, 7
  %v6402 = vsub.s32 0, %v6401
  %v6403 = vrot.slane %v6398, %v6402
  %v6404 = vlaneseq
  %v6405 = vshrl.u32 %v6404, 7
  %v6406 = vsub.s32 1, %v6405
  %v6407 = vrot.slane %v6398, %v6406
  %v6426 = vunpack.c.l.b16 %v6380
  %v6427 = vunpack.c.h.b16 %v6380
  %v6428 = vunpack.c.l.b16 %v6381
  %v6429 = vunpack.c.h.b16 %v6381
  %v6430 = vunpack.c.l.b16 %v6382
  %v6431 = vunpack.c.h.b16 %v6382
  %v6432 = vunpack.c.l.b16 %v6383
  %v6433 = vunpack.c.h.b16 %v6383
  %v6434 = vunpack.c.l.b16 %v6384
  %v6435 = vunpack.c.h.b16 %v6384
  %v6436 = vunpack.c.l.b16 %v6385
  %v6437 = vunpack.c.h.b16 %v6385
  %v6438 = vunpack.c.l.b16 %v6386
  %v6439 = vunpack.c.h.b16 %v6386
  %v6440 = vunpack.c.l.b16 %v6387
  %v6441 = vunpack.c.h.b16 %v6387
  %v6442 = vunpack.c.l.b16 %v6388
  %v6443 = vunpack.c.h.b16 %v6388
  %v6444 = vunpack.c.l.b16 %v6389
  %v6445 = vunpack.c.h.b16 %v6389
  %v6446 = vunpack.c.l.b16 %v6390
  %v6447 = vunpack.c.h.b16 %v6390
  %v6448 = vunpack.c.l.b16 %v6391
  %v6449 = vunpack.c.h.b16 %v6391
  %v6450 = vunpack.c.l.b16 %v6392
  %v6451 = vunpack.c.h.b16 %v6392
  %v6452 = vunpack.c.l.b16 %v6393
  %v6453 = vunpack.c.h.b16 %v6393
  %v6454 = vunpack.c.l.b16 %v6394
  %v6455 = vunpack.c.h.b16 %v6394
  %v6456 = vunpack.c.l.b16 %v6395
  %v6457 = vunpack.c.h.b16 %v6395
  %v6458 = vpack.c.b16 %v6428, %v6426
  %v6459 = vpack.c.b16 %v6429, %v6427
  %v6460 = vpack.c.b16 %v6432, %v6430
  %v6461 = vpack.c.b16 %v6433, %v6431
  %v6462 = vpack.c.b16 %v6436, %v6434
  %v6463 = vpack.c.b16 %v6437, %v6435
  %v6464 = vpack.c.b16 %v6440, %v6438
  %v6465 = vpack.c.b16 %v6441, %v6439
  %v6466 = vpack.c.b16 %v6444, %v6442
  %v6467 = vpack.c.b16 %v6445, %v6443
  %v6468 = vpack.c.b16 %v6448, %v6446
  %v6469 = vpack.c.b16 %v6449, %v6447
  %v6470 = vpack.c.b16 %v6452, %v6450
  %v6471 = vpack.c.b16 %v6453, %v6451
  %v6472 = vpack.c.b16 %v6456, %v6454
  %v6473 = vpack.c.b16 %v6457, %v6455
  %6490 = vmatprep.subr.bf16.mxu0 %v6459
  %6491 = vmatpush1.bf16.msra.mxu0 %v6458
  %6492 = vmatprep.subr.bf16.mxu0 %v6461
  %6493 = vmatpush1.bf16.msra.mxu0 %v6460
  %6494 = vmatprep.subr.bf16.mxu0 %v6463
  %6495 = vmatpush1.bf16.msra.mxu0 %v6462
  %6496 = vmatprep.subr.bf16.mxu0 %v6465
  %6497 = vmatpush1.bf16.msra.mxu0 %v6464
  %6498 = vmatprep.subr.bf16.mxu0 %v6467
  %6499 = vmatpush1.bf16.msra.mxu0 %v6466
  %6500 = vmatprep.subr.bf16.mxu0 %v6469
  %6501 = vmatpush1.bf16.msra.mxu0 %v6468
  %6502 = vmatprep.subr.bf16.mxu0 %v6471
  %6503 = vmatpush1.bf16.msra.mxu0 %v6470
  %6504 = vmatprep.subr.bf16.mxu0 %v6473
  %6505 = vmatpush1.bf16.msra.mxu0 %v6472
  %6506 = vmatprep.subr.bf16.mxu0 0
  %6507 = vmatpush1.bf16.msra.mxu0 0
  %6508 = vmatprep.subr.bf16.mxu0 0
  %6509 = vmatpush1.bf16.msra.mxu0 0
  %6510 = vmatprep.subr.bf16.mxu0 0
  %6511 = vmatpush1.bf16.msra.mxu0 0
  %6512 = vmatprep.subr.bf16.mxu0 0
  %6513 = vmatpush1.bf16.msra.mxu0 0
  %6514 = vmatprep.subr.bf16.mxu0 0
  %6515 = vmatpush1.bf16.msra.mxu0 0
  %6516 = vmatprep.subr.bf16.mxu0 0
  %6517 = vmatpush1.bf16.msra.mxu0 0
  %6518 = vmatprep.subr.bf16.mxu0 0
  %6519 = vmatpush1.bf16.msra.mxu0 0
  %6520 = vmatprep.subr.bf16.mxu0 0
  %6521 = vmatpush1.bf16.msra.mxu0 0
  %6522 = vmatprep.mubr.bf16.mxu0 0
  %6523 = vmatmul.mubr.bf16.gmra.mrb[0].mxu0 %v6396
  %v6524 = vpop.f32.mrb[0].mxu0
  %v6525 = vadd.f32 %v6403, %v6524
  %v6526 = vpop.f32.mrb[0].mxu0
  %v6527 = vadd.f32 %v6407, %v6526
  %v6528 = vpop.f32.mrb[0].mxu0
  %v6529 = vadd.f32 %v6403, %v6528
  %v6530 = vpop.f32.mrb[0].mxu0
  %v6531 = vadd.f32 %v6407, %v6530
  %6532 = vdwg.mxu0
  %v6533 = vmax.f32 %v6525, 0.0
  %v6534 = vmax.f32 %v6527, 0.0
  %v6535 = vmax.f32 %v6529, 0.0
  %v6536 = vmax.f32 %v6531, 0.0
  %s6537 = scalar_lea.vmem %s6, 128
  %v6538 = vld [vmem:[%s6537] sm:$0xf]
  %v6539 = vld [vmem:[%s6537 + $0x4] sm:$0xf]
  %v6540 = vld [vmem:[%s6537 + $0x8] sm:$0xf]
  %v6541 = vld [vmem:[%s6537 + $0xc] sm:$0xf]
  %v6542 = vld [vmem:[%s6537 + $0x10] sm:$0xf]
  %v6543 = vld [vmem:[%s6537 + $0x14] sm:$0xf]
  %v6544 = vld [vmem:[%s6537 + $0x18] sm:$0xf]
  %v6545 = vld [vmem:[%s6537 + $0x1c] sm:$0xf]
  %v6546 = vld [vmem:[%s6537 + $0x20] sm:$0xf]
  %v6547 = vld [vmem:[%s6537 + $0x24] sm:$0xf]
  %v6548 = vld [vmem:[%s6537 + $0x28] sm:$0xf]
  %v6549 = vld [vmem:[%s6537 + $0x2c] sm:$0xf]
  %v6550 = vld [vmem:[%s6537 + $0x30] sm:$0xf]
  %v6551 = vld [vmem:[%s6537 + $0x34] sm:$0xf]
  %v6552 = vld [vmem:[%s6537 + $0x38] sm:$0xf]
  %v6553 = vld [vmem:[%s6537 + $0x3c] sm:$0xf]
  %v6554 = vld [vmem:[%s6537 + $0x40] sm:$0xf]
  %v6555 = vld [vmem:[%s6537 + $0x44] sm:$0xf]
  %v6556 = vld [vmem:[%s6537 + $0x48] sm:$0xf]
  %v6557 = vld [vmem:[%s6537 + $0x4c] sm:$0xf]
  %v6558 = vld [vmem:[%s6537 + $0x50] sm:$0xf]
  %v6559 = vld [vmem:[%s6537 + $0x54] sm:$0xf]
  %v6560 = vld [vmem:[%s6537 + $0x58] sm:$0xf]
  %v6561 = vld [vmem:[%s6537 + $0x5c] sm:$0xf]
  %v6562 = vld [vmem:[%s6537 + $0x60] sm:$0xf]
  %v6563 = vld [vmem:[%s6537 + $0x64] sm:$0xf]
  %v6564 = vld [vmem:[%s6537 + $0x68] sm:$0xf]
  %v6565 = vld [vmem:[%s6537 + $0x6c] sm:$0xf]
  %v6566 = vld [vmem:[%s6537 + $0x70] sm:$0xf]
  %v6567 = vld [vmem:[%s6537 + $0x74] sm:$0xf]
  %v6568 = vld [vmem:[%s6537 + $0x78] sm:$0xf]
  %v6569 = vld [vmem:[%s6537 + $0x7c] sm:$0xf]
  %v6570 = vpack.c.bf16 %v6535, %v6533
  %v6571 = vpack.c.bf16 %v6536, %v6534
  %v6572 = vld [vmem:[%s7 + $0x29] sm:$0x1]
  %v6573 = vlaneseq
  %v6574 = vshrl.u32 %v6573, 7
  %v6575 = vsub.s32 0, %v6574
  %v6576 = vrot.slane %v6572, %v6575
  %v6609 = vunpack.c.l.b16 %v6538
  %v6610 = vunpack.c.l.b16 %v6539
  %v6611 = vunpack.c.l.b16 %v6540
  %v6612 = vunpack.c.l.b16 %v6541
  %v6613 = vunpack.c.l.b16 %v6542
  %v6614 = vunpack.c.l.b16 %v6543
  %v6615 = vunpack.c.l.b16 %v6544
  %v6616 = vunpack.c.l.b16 %v6545
  %v6617 = vunpack.c.l.b16 %v6546
  %v6618 = vunpack.c.l.b16 %v6547
  %v6619 = vunpack.c.l.b16 %v6548
  %v6620 = vunpack.c.l.b16 %v6549
  %v6621 = vunpack.c.l.b16 %v6550
  %v6622 = vunpack.c.l.b16 %v6551
  %v6623 = vunpack.c.l.b16 %v6552
  %v6624 = vunpack.c.l.b16 %v6553
  %v6625 = vunpack.c.l.b16 %v6554
  %v6626 = vunpack.c.l.b16 %v6555
  %v6627 = vunpack.c.l.b16 %v6556
  %v6628 = vunpack.c.l.b16 %v6557
  %v6629 = vunpack.c.l.b16 %v6558
  %v6630 = vunpack.c.l.b16 %v6559
  %v6631 = vunpack.c.l.b16 %v6560
  %v6632 = vunpack.c.l.b16 %v6561
  %v6633 = vunpack.c.l.b16 %v6562
  %v6634 = vunpack.c.l.b16 %v6563
  %v6635 = vunpack.c.l.b16 %v6564
  %v6636 = vunpack.c.l.b16 %v6565
  %v6637 = vunpack.c.l.b16 %v6566
  %v6638 = vunpack.c.l.b16 %v6567
  %v6639 = vunpack.c.l.b16 %v6568
  %v6640 = vunpack.c.l.b16 %v6569
  %v6641 = vpack.c.b16 %v6610, %v6609
  %v6642 = vpack.c.b16 %v6612, %v6611
  %v6643 = vpack.c.b16 %v6614, %v6613
  %v6644 = vpack.c.b16 %v6616, %v6615
  %v6645 = vpack.c.b16 %v6618, %v6617
  %v6646 = vpack.c.b16 %v6620, %v6619
  %v6647 = vpack.c.b16 %v6622, %v6621
  %v6648 = vpack.c.b16 %v6624, %v6623
  %v6649 = vpack.c.b16 %v6626, %v6625
  %v6650 = vpack.c.b16 %v6628, %v6627
  %v6651 = vpack.c.b16 %v6630, %v6629
  %v6652 = vpack.c.b16 %v6632, %v6631
  %v6653 = vpack.c.b16 %v6634, %v6633
  %v6654 = vpack.c.b16 %v6636, %v6635
  %v6655 = vpack.c.b16 %v6638, %v6637
  %v6656 = vpack.c.b16 %v6640, %v6639
  %6673 = vmatprep.subr.bf16.mxu0 0
  %6674 = vmatpush1.bf16.msra.mxu0 %v6641
  %6675 = vmatprep.subr.bf16.mxu0 0
  %6676 = vmatpush1.bf16.msra.mxu0 %v6642
  %6677 = vmatprep.subr.bf16.mxu0 0
  %6678 = vmatpush1.bf16.msra.mxu0 %v6643
  %6679 = vmatprep.subr.bf16.mxu0 0
  %6680 = vmatpush1.bf16.msra.mxu0 %v6644
  %6681 = vmatprep.subr.bf16.mxu0 0
  %6682 = vmatpush1.bf16.msra.mxu0 %v6645
  %6683 = vmatprep.subr.bf16.mxu0 0
  %6684 = vmatpush1.bf16.msra.mxu0 %v6646
  %6685 = vmatprep.subr.bf16.mxu0 0
  %6686 = vmatpush1.bf16.msra.mxu0 %v6647
  %6687 = vmatprep.subr.bf16.mxu0 0
  %6688 = vmatpush1.bf16.msra.mxu0 %v6648
  %6689 = vmatprep.subr.bf16.mxu0 0
  %6690 = vmatpush1.bf16.msra.mxu0 %v6649
  %6691 = vmatprep.subr.bf16.mxu0 0
  %6692 = vmatpush1.bf16.msra.mxu0 %v6650
  %6693 = vmatprep.subr.bf16.mxu0 0
  %6694 = vmatpush1.bf16.msra.mxu0 %v6651
  %6695 = vmatprep.subr.bf16.mxu0 0
  %6696 = vmatpush1.bf16.msra.mxu0 %v6652
  %6697 = vmatprep.subr.bf16.mxu0 0
  %6698 = vmatpush1.bf16.msra.mxu0 %v6653
  %6699 = vmatprep.subr.bf16.mxu0 0
  %6700 = vmatpush1.bf16.msra.mxu0 %v6654
  %6701 = vmatprep.subr.bf16.mxu0 0
  %6702 = vmatpush1.bf16.msra.mxu0 %v6655
  %6703 = vmatprep.subr.bf16.mxu0 0
  %6704 = vmatpush1.bf16.msra.mxu0 %v6656
  %6705 = vmatprep.mubr.bf16.mxu0 %v6571
  %6706 = vmatmul.mubr.bf16.gmra.mrb[0].mxu0 %v6570
  %v6707 = vpop.f32.mrb[0].mxu0
  %v6708 = vadd.f32 %v6576, %v6707
  %v6709 = vpop.f32.mrb[0].mxu0
  %v6710 = vpop.f32.mrb[0].mxu0
  %v6711 = vadd.f32 %v6576, %v6710
  %v6712 = vpop.f32.mrb[0].mxu0
  %6713 = vdwg.mxu0
  %v6714 = vadd.f32 %v6378, %v6708
  %v6715 = vadd.f32 %v6379, %v6711
  %v6716 = vld [vmem:[%s7 + $0x3d] sm:$0x1]
  %v6717 = vld [vmem:[%s7 + $0x41] sm:$0x1]
  %6718 = vadd.xlane.f32.xlu0 %v6714
  %v6719 = vpop.xlane.xlu0 %6718
  %6720 = vadd.xlane.f32.xlu0 %v6715
  %v6721 = vpop.xlane.xlu0 %6720
  %v6722 = vmul.f32 %v6719, %v1554
  %v6723 = vmul.f32 %v6721, %v1554
  %v6724 = vsub.f32 %v6714, %v6722
  %v6725 = vsub.f32 %v6715, %v6723
  %v6726 = vmul.f32 %v6724, %v6724
  %v6727 = vmul.f32 %v6725, %v6725
  %6728 = vadd.xlane.f32.xlu0 %v6726
  %v6729 = vpop.xlane.xlu0 %6728
  %6730 = vadd.xlane.f32.xlu0 %v6727
  %v6731 = vpop.xlane.xlu0 %6730
  %v6732 = vmul.f32 %v6729, %v1554
  %v6733 = vmul.f32 %v6731, %v1554
  %v6734 = vadd.f32 %v6732, 1e-05
  %v6735 = vadd.f32 %v6733, 1e-05
  %v6736 = vrsqrt.pop %v6734
  %v6737 = vrsqrt.pop %v6735
  %v6738 = vmul.f32 %v6724, %v6736
  %v6739 = vmul.f32 %v6725, %v6737
  %v6740 = vlaneseq
  %v6741 = vshrl.u32 %v6740, 7
  %v6742 = vsub.s32 0, %v6741
  %v6743 = vrot.slane %v6716, %v6742
  %v6744 = vmul.f32 %v6738, %v6743
  %v6745 = vmul.f32 %v6739, %v6743
  %v6746 = vlaneseq
  %v6747 = vshrl.u32 %v6746, 7
  %v6748 = vsub.s32 0, %v6747
  %v6749 = vrot.slane %v6717, %v6748
  %v6750 = vadd.f32 %v6744, %v6749
  %v6751 = vadd.f32 %v6745, %v6749
  %s6752 = scalar_lea.vmem %s5, 1280
  %v6753 = vld [vmem:[%s6752] sm:$0xff]
  %v6754 = vld [vmem:[%s6752 + $0x8] sm:$0xf]
  %v6755 = vld [vmem:[%s6752 + $0x28] sm:$0xff]
  %v6756 = vld [vmem:[%s6752 + $0x30] sm:$0xf]
  %v6757 = vld [vmem:[%s6752 + $0x50] sm:$0xff]
  %v6758 = vld [vmem:[%s6752 + $0x58] sm:$0xf]
  %v6759 = vld [vmem:[%s6752 + $0x78] sm:$0xff]
  %v6760 = vld [vmem:[%s6752 + $0x80] sm:$0xf]
  %v6761 = vld [vmem:[%s6752 + $0xa0] sm:$0xff]
  %v6762 = vld [vmem:[%s6752 + $0xa8] sm:$0xf]
  %v6763 = vld [vmem:[%s6752 + $0xc8] sm:$0xff]
  %v6764 = vld [vmem:[%s6752 + $0xd0] sm:$0xf]
  %v6765 = vld [vmem:[%s6752 + $0xf0] sm:$0xff]
  %v6766 = vld [vmem:[%s6752 + $0xf8] sm:$0xf]
  %v6767 = vld [vmem:[%s6752 + $0x118] sm:$0xff]
  %v6768 = vld [vmem:[%s6752 + $0x120] sm:$0xf]
  %v6769 = vld [vmem:[%s6752 + $0x140] sm:$0xff]
  %v6770 = vld [vmem:[%s6752 + $0x148] sm:$0xf]
  %v6771 = vld [vmem:[%s6752 + $0x168] sm:$0xff]
  %v6772 = vld [vmem:[%s6752 + $0x170] sm:$0xf]
  %v6773 = vld [vmem:[%s6752 + $0x190] sm:$0xff]
  %v6774 = vld [vmem:[%s6752 + $0x198] sm:$0xf]
  %v6775 = vld [vmem:[%s6752 + $0x1b8] sm:$0xff]
  %v6776 = vld [vmem:[%s6752 + $0x1c0] sm:$0xf]
  %v6777 = vld [vmem:[%s6752 + $0x1e0] sm:$0xff]
  %v6778 = vld [vmem:[%s6752 + $0x1e8] sm:$0xf]
  %v6779 = vld [vmem:[%s6752 + $0x208] sm:$0xff]
  %v6780 = vld [vmem:[%s6752 + $0x210] sm:$0xf]
  %v6781 = vld [vmem:[%s6752 + $0x230] sm:$0xff]
  %v6782 = vld [vmem:[%s6752 + $0x238] sm:$0xf]
  %v6783 = vld [vmem:[%s6752 + $0x258] sm:$0xff]
  %v6784 = vld [vmem:[%s6752 + $0x260] sm:$0xf]
  %v6785 = vpack.c.bf16 %v6751, %v6750
  %s6786 = scalar_lea.vmem %s7, 2
  %v6787 = vld [vmem:[%s6786] ss:$4 sm:$0x7]
  %v6789 = vlaneseq
  %v6790 = vshrl.u32 %v6789, 7
  %v6791 = vsub.s32 0, %v6790
  %v6792 = vrot.slane %v6787, %v6791
  %v6793 = vlaneseq
  %v6794 = vshrl.u32 %v6793, 7
  %v6795 = vsub.s32 1, %v6794
  %v6796 = vrot.slane %v6787, %v6795
  %v6797 = vlaneseq
  %v6798 = vshrl.u32 %v6797, 7
  %v6799 = vsub.s32 2, %v6798
  %v6800 = vrot.slane %v6787, %v6799
  %v6836 = vunpack.c.l.b16 %v6753
  %v6837 = vunpack.c.h.b16 %v6753
  %v6838 = vunpack.c.l.b16 %v6754
  %v6839 = vunpack.c.l.b16 %v6755
  %v6840 = vunpack.c.h.b16 %v6755
  %v6841 = vunpack.c.l.b16 %v6756
  %v6842 = vunpack.c.l.b16 %v6757
  %v6843 = vunpack.c.h.b16 %v6757
  %v6844 = vunpack.c.l.b16 %v6758
  %v6845 = vunpack.c.l.b16 %v6759
  %v6846 = vunpack.c.h.b16 %v6759
  %v6847 = vunpack.c.l.b16 %v6760
  %v6848 = vunpack.c.l.b16 %v6761
  %v6849 = vunpack.c.h.b16 %v6761
  %v6850 = vunpack.c.l.b16 %v6762
  %v6851 = vunpack.c.l.b16 %v6763
  %v6852 = vunpack.c.h.b16 %v6763
  %v6853 = vunpack.c.l.b16 %v6764
  %v6854 = vunpack.c.l.b16 %v6765
  %v6855 = vunpack.c.h.b16 %v6765
  %v6856 = vunpack.c.l.b16 %v6766
  %v6857 = vunpack.c.l.b16 %v6767
  %v6858 = vunpack.c.h.b16 %v6767
  %v6859 = vunpack.c.l.b16 %v6768
  %v6860 = vunpack.c.l.b16 %v6769
  %v6861 = vunpack.c.h.b16 %v6769
  %v6862 = vunpack.c.l.b16 %v6770
  %v6863 = vunpack.c.l.b16 %v6771
  %v6864 = vunpack.c.h.b16 %v6771
  %v6865 = vunpack.c.l.b16 %v6772
  %v6866 = vunpack.c.l.b16 %v6773
  %v6867 = vunpack.c.h.b16 %v6773
  %v6868 = vunpack.c.l.b16 %v6774
  %v6869 = vunpack.c.l.b16 %v6775
  %v6870 = vunpack.c.h.b16 %v6775
  %v6871 = vunpack.c.l.b16 %v6776
  %v6872 = vunpack.c.l.b16 %v6777
  %v6873 = vunpack.c.h.b16 %v6777
  %v6874 = vunpack.c.l.b16 %v6778
  %v6875 = vunpack.c.l.b16 %v6779
  %v6876 = vunpack.c.h.b16 %v6779
  %v6877 = vunpack.c.l.b16 %v6780
  %v6878 = vunpack.c.l.b16 %v6781
  %v6879 = vunpack.c.h.b16 %v6781
  %v6880 = vunpack.c.l.b16 %v6782
  %v6881 = vunpack.c.l.b16 %v6783
  %v6882 = vunpack.c.h.b16 %v6783
  %v6883 = vunpack.c.l.b16 %v6784
  %v6884 = vpack.c.b16 %v6839, %v6836
  %v6885 = vpack.c.b16 %v6840, %v6837
  %v6886 = vpack.c.b16 %v6841, %v6838
  %v6887 = vpack.c.b16 %v6845, %v6842
  %v6888 = vpack.c.b16 %v6846, %v6843
  %v6889 = vpack.c.b16 %v6847, %v6844
  %v6890 = vpack.c.b16 %v6851, %v6848
  %v6891 = vpack.c.b16 %v6852, %v6849
  %v6892 = vpack.c.b16 %v6853, %v6850
  %v6893 = vpack.c.b16 %v6857, %v6854
  %v6894 = vpack.c.b16 %v6858, %v6855
  %v6895 = vpack.c.b16 %v6859, %v6856
  %v6896 = vpack.c.b16 %v6863, %v6860
  %v6897 = vpack.c.b16 %v6864, %v6861
  %v6898 = vpack.c.b16 %v6865, %v6862
  %v6899 = vpack.c.b16 %v6869, %v6866
  %v6900 = vpack.c.b16 %v6870, %v6867
  %v6901 = vpack.c.b16 %v6871, %v6868
  %v6902 = vpack.c.b16 %v6875, %v6872
  %v6903 = vpack.c.b16 %v6876, %v6873
  %v6904 = vpack.c.b16 %v6877, %v6874
  %v6905 = vpack.c.b16 %v6881, %v6878
  %v6906 = vpack.c.b16 %v6882, %v6879
  %v6907 = vpack.c.b16 %v6883, %v6880
  %6932 = vmatprep.subr.bf16.mxu0 %v6885
  %6933 = vmatpush1.bf16.msra.mxu0 %v6884
  %6934 = vmatprep.subr.bf16.mxu0 %v6888
  %6935 = vmatpush1.bf16.msra.mxu0 %v6887
  %6936 = vmatprep.subr.bf16.mxu0 %v6891
  %6937 = vmatpush1.bf16.msra.mxu0 %v6890
  %6938 = vmatprep.subr.bf16.mxu0 %v6894
  %6939 = vmatpush1.bf16.msra.mxu0 %v6893
  %6940 = vmatprep.subr.bf16.mxu0 %v6897
  %6941 = vmatpush1.bf16.msra.mxu0 %v6896
  %6942 = vmatprep.subr.bf16.mxu0 %v6900
  %6943 = vmatpush1.bf16.msra.mxu0 %v6899
  %6944 = vmatprep.subr.bf16.mxu0 %v6903
  %6945 = vmatpush1.bf16.msra.mxu0 %v6902
  %6946 = vmatprep.subr.bf16.mxu0 %v6906
  %6947 = vmatpush1.bf16.msra.mxu0 %v6905
  %6948 = vmatprep.subr.bf16.mxu0 0
  %6949 = vmatpush1.bf16.msra.mxu0 0
  %6950 = vmatprep.subr.bf16.mxu0 0
  %6951 = vmatpush1.bf16.msra.mxu0 0
  %6952 = vmatprep.subr.bf16.mxu0 0
  %6953 = vmatpush1.bf16.msra.mxu0 0
  %6954 = vmatprep.subr.bf16.mxu0 0
  %6955 = vmatpush1.bf16.msra.mxu0 0
  %6956 = vmatprep.subr.bf16.mxu0 0
  %6957 = vmatpush1.bf16.msra.mxu0 0
  %6958 = vmatprep.subr.bf16.mxu0 0
  %6959 = vmatpush1.bf16.msra.mxu0 0
  %6960 = vmatprep.subr.bf16.mxu0 0
  %6961 = vmatpush1.bf16.msra.mxu0 0
  %6962 = vmatprep.subr.bf16.mxu0 0
  %6963 = vmatpush1.bf16.msra.mxu0 0
  %6964 = vmatprep.mubr.bf16.mxu0 0
  %6965 = vmatmul.mubr.bf16.gmra.mrb[0].mxu0 %v6785
  %v6966 = vpop.f32.mrb[0].mxu0
  %v6967 = vadd.f32 %v6792, %v6966
  %v6968 = vpop.f32.mrb[0].mxu0
  %v6969 = vadd.f32 %v6796, %v6968
  %v6970 = vpop.f32.mrb[0].mxu0
  %v6971 = vadd.f32 %v6792, %v6970
  %v6972 = vpop.f32.mrb[0].mxu0
  %v6973 = vadd.f32 %v6796, %v6972
  %6974 = vdwg.mxu0
  %6975 = vmatprep.subr.bf16.mxu0 0
  %6976 = vmatpush1.bf16.msra.mxu0 %v6886
  %6977 = vmatprep.subr.bf16.mxu0 0
  %6978 = vmatpush1.bf16.msra.mxu0 %v6889
  %6979 = vmatprep.subr.bf16.mxu0 0
  %6980 = vmatpush1.bf16.msra.mxu0 %v6892
  %6981 = vmatprep.subr.bf16.mxu0 0
  %6982 = vmatpush1.bf16.msra.mxu0 %v6895
  %6983 = vmatprep.subr.bf16.mxu0 0
  %6984 = vmatpush1.bf16.msra.mxu0 %v6898
  %6985 = vmatprep.subr.bf16.mxu0 0
  %6986 = vmatpush1.bf16.msra.mxu0 %v6901
  %6987 = vmatprep.subr.bf16.mxu0 0
  %6988 = vmatpush1.bf16.msra.mxu0 %v6904
  %6989 = vmatprep.subr.bf16.mxu0 0
  %6990 = vmatpush1.bf16.msra.mxu0 %v6907
  %6991 = vmatprep.subr.bf16.mxu0 0
  %6992 = vmatpush1.bf16.msra.mxu0 0
  %6993 = vmatprep.subr.bf16.mxu0 0
  %6994 = vmatpush1.bf16.msra.mxu0 0
  %6995 = vmatprep.subr.bf16.mxu0 0
  %6996 = vmatpush1.bf16.msra.mxu0 0
  %6997 = vmatprep.subr.bf16.mxu0 0
  %6998 = vmatpush1.bf16.msra.mxu0 0
  %6999 = vmatprep.subr.bf16.mxu0 0
  %7000 = vmatpush1.bf16.msra.mxu0 0
  %7001 = vmatprep.subr.bf16.mxu0 0
  %7002 = vmatpush1.bf16.msra.mxu0 0
  %7003 = vmatprep.subr.bf16.mxu0 0
  %7004 = vmatpush1.bf16.msra.mxu0 0
  %7005 = vmatprep.subr.bf16.mxu0 0
  %7006 = vmatpush1.bf16.msra.mxu0 0
  %7007 = vmatprep.mubr.bf16.mxu0 0
  %7008 = vmatmul.mubr.bf16.gmra.mrb[0].mxu0 %v6785
  %v7009 = vpop.f32.mrb[0].mxu0
  %v7010 = vadd.f32 %v6800, %v7009
  %v7011 = vpop.f32.mrb[0].mxu0
  %v7012 = vpop.f32.mrb[0].mxu0
  %v7013 = vadd.f32 %v6800, %v7012
  %v7014 = vpop.f32.mrb[0].mxu0
  %7015 = vdwg.mxu0
  %v7016 = vld [vmem:[%s6752 + $0xc] sm:$0xf]
  %v7017 = vld [vmem:[%s6752 + $0x34] sm:$0xf]
  %v7018 = vld [vmem:[%s6752 + $0x5c] sm:$0xf]
  %v7019 = vld [vmem:[%s6752 + $0x84] sm:$0xf]
  %v7020 = vld [vmem:[%s6752 + $0xac] sm:$0xf]
  %v7021 = vld [vmem:[%s6752 + $0xd4] sm:$0xf]
  %v7022 = vld [vmem:[%s6752 + $0xfc] sm:$0xf]
  %v7023 = vld [vmem:[%s6752 + $0x124] sm:$0xf]
  %v7024 = vld [vmem:[%s6752 + $0x14c] sm:$0xf]
  %v7025 = vld [vmem:[%s6752 + $0x174] sm:$0xf]
  %v7026 = vld [vmem:[%s6752 + $0x19c] sm:$0xf]
  %v7027 = vld [vmem:[%s6752 + $0x1c4] sm:$0xf]
  %v7028 = vld [vmem:[%s6752 + $0x1ec] sm:$0xf]
  %v7029 = vld [vmem:[%s6752 + $0x214] sm:$0xf]
  %v7030 = vld [vmem:[%s6752 + $0x23c] sm:$0xf]
  %v7031 = vld [vmem:[%s6752 + $0x264] sm:$0xf]
  %v7032 = vld [vmem:[%s7 + $0xe] sm:$0x1]
  %v7033 = vpack.c.bf16 %v6971, %v6967
  %v7034 = vpack.c.bf16 %v7013, %v7010
  %7035 = vxpose.xlu0.b32.start [1/16] %v6969, 128
  %7036 = vxpose.xlu0.b32.cont [2/16] %v6973, 128
  %7037 = vxpose.xlu0.b32.cont [3/16] 0.0, 128
  %7038 = vxpose.xlu0.b32.cont [4/16] 0.0, 128
  %7039 = vxpose.xlu0.b32.cont [5/16] 0.0, 128
  %7040 = vxpose.xlu0.b32.cont [6/16] 0.0, 128
  %7041 = vxpose.xlu0.b32.cont [7/16] 0.0, 128
  %7042 = vxpose.xlu0.b32.cont [8/16] 0.0, 128
  %7043 = vxpose.xlu0.b32.cont [9/16] 0.0, 128
  %7044 = vxpose.xlu0.b32.cont [10/16] 0.0, 128
  %7045 = vxpose.xlu0.b32.cont [11/16] 0.0, 128
  %7046 = vxpose.xlu0.b32.cont [12/16] 0.0, 128
  %7047 = vxpose.xlu0.b32.cont [13/16] 0.0, 128
  %7048 = vxpose.xlu0.b32.cont [14/16] 0.0, 128
  %7049 = vxpose.xlu0.b32.cont [15/16] 0.0, 128
  %7050 = vxpose.xlu0.b32.end [16/16] 0.0, 128
  %v7051 = vpop.trf.xlu0
  %v7052 = vpop.trf.xlu0
  %v7053 = vpop.trf.xlu0
  %v7054 = vpop.trf.xlu0
  %v7055 = vpop.trf.xlu0
  %v7056 = vpop.trf.xlu0
  %v7057 = vpop.trf.xlu0
  %v7058 = vpop.trf.xlu0
  %v7059 = vpop.trf.xlu0
  %v7060 = vpop.trf.xlu0
  %v7061 = vpop.trf.xlu0
  %v7062 = vpop.trf.xlu0
  %v7063 = vpop.trf.xlu0
  %v7064 = vpop.trf.xlu0
  %v7065 = vpop.trf.xlu0
  %v7066 = vpop.trf.xlu0
  %v7067 = vpack.c.bf16 %v7052, %v7051
  %v7068 = vpack.c.bf16 %v7054, %v7053
  %v7069 = vpack.c.bf16 %v7056, %v7055
  %v7070 = vpack.c.bf16 %v7058, %v7057
  %v7071 = vpack.c.bf16 %v7060, %v7059
  %v7072 = vpack.c.bf16 %v7062, %v7061
  %v7073 = vpack.c.bf16 %v7064, %v7063
  %v7074 = vpack.c.bf16 %v7066, %v7065
  %v7076 = vsel %vm450, %v7033, 0
  %7078 = vmatprep.subr.bf16.mxu0 0
  %7079 = vmatpush1.bf16.msra.mxu0 %v7067
  %7080 = vmatprep.subr.bf16.mxu0 0
  %7081 = vmatpush1.bf16.msra.mxu0 0
  %7082 = vmatprep.subr.bf16.mxu0 0
  %7083 = vmatpush1.bf16.msra.mxu0 0
  %7084 = vmatprep.subr.bf16.mxu0 0
  %7085 = vmatpush1.bf16.msra.mxu0 0
  %7086 = vmatprep.subr.bf16.mxu0 0
  %7087 = vmatpush1.bf16.msra.mxu0 0
  %7088 = vmatprep.subr.bf16.mxu0 0
  %7089 = vmatpush1.bf16.msra.mxu0 0
  %7090 = vmatprep.subr.bf16.mxu0 0
  %7091 = vmatpush1.bf16.msra.mxu0 0
  %7092 = vmatprep.subr.bf16.mxu0 0
  %7093 = vmatpush1.bf16.msra.mxu0 0
  %7094 = vmatprep.subr.bf16.mxu0 0
  %7095 = vmatpush1.bf16.msra.mxu0 0
  %7096 = vmatprep.subr.bf16.mxu0 0
  %7097 = vmatpush1.bf16.msra.mxu0 0
  %7098 = vmatprep.subr.bf16.mxu0 0
  %7099 = vmatpush1.bf16.msra.mxu0 0
  %7100 = vmatprep.subr.bf16.mxu0 0
  %7101 = vmatpush1.bf16.msra.mxu0 0
  %7102 = vmatprep.subr.bf16.mxu0 0
  %7103 = vmatpush1.bf16.msra.mxu0 0
  %7104 = vmatprep.subr.bf16.mxu0 0
  %7105 = vmatpush1.bf16.msra.mxu0 0
  %7106 = vmatprep.subr.bf16.mxu0 0
  %7107 = vmatpush1.bf16.msra.mxu0 0
  %7108 = vmatprep.subr.bf16.mxu0 0
  %7109 = vmatpush1.bf16.msra.mxu0 0
  %7110 = vmatprep.mubr.bf16.mxu0 0
  %7111 = vmatmul.mubr.bf16.gmra.mrb[0].mxu0 %v7076
  %v7112 = vpop.f32.mrb[0].mxu0
  %v7113 = vadd.f32 %v127, %v7112
  %v7114 = vpop.f32.mrb[0].mxu0
  %v7115 = vpop.f32.mrb[0].mxu0
  %v7116 = vadd.f32 %v128, %v7115
  %v7117 = vpop.f32.mrb[0].mxu0
  %7118 = vdwg.mxu0
  %v7119 = vsel %vm450, %v7113, -inf
  %7120 = vmax.xlane.f32.xlu0 %v7119
  %v7121 = vpop.xlane.xlu0 %7120
  %v7122 = vsel %vm450, %v7116, -inf
  %7123 = vmax.xlane.f32.xlu0 %v7122
  %v7124 = vpop.xlane.xlu0 %7123
  %v7125 = vsub.f32 %v7113, %v7121
  %v7126 = vsub.f32 %v7116, %v7124
  %v7127 = vmul.f32 %v7125, 1.442695
  %v7128 = vpow.pop %v7127
  %v7129 = vmul.f32 %v7126, 1.442695
  %v7130 = vpow.pop %v7129
  %v7131 = vsel %vm450, %v7128, 0.0
  %7132 = vadd.xlane.f32.xlu0 %v7131
  %v7133 = vpop.xlane.xlu0 %7132
  %v7134 = vsel %vm450, %v7130, 0.0
  %7135 = vadd.xlane.f32.xlu0 %v7134
  %v7136 = vpop.xlane.xlu0 %7135
  %v7137 = vrcp.pop %v7133
  %v7138 = vrcp.pop %v7136
  %v7139 = vmul.f32 %v7128, %v7137
  %v7140 = vmul.f32 %v7130, %v7138
  %v7141 = vpack.c.bf16 %v7140, %v7139
  %v7143 = vsel %vm450, %v7141, 0
  %7145 = vmatprep.subr.bf16.mxu0 0
  %7146 = vmatpush1.bf16.msra.mxu0 %v7034
  %7147 = vmatprep.subr.bf16.mxu0 0
  %7148 = vmatpush1.bf16.msra.mxu0 0
  %7149 = vmatprep.subr.bf16.mxu0 0
  %7150 = vmatpush1.bf16.msra.mxu0 0
  %7151 = vmatprep.subr.bf16.mxu0 0
  %7152 = vmatpush1.bf16.msra.mxu0 0
  %7153 = vmatprep.subr.bf16.mxu0 0
  %7154 = vmatpush1.bf16.msra.mxu0 0
  %7155 = vmatprep.subr.bf16.mxu0 0
  %7156 = vmatpush1.bf16.msra.mxu0 0
  %7157 = vmatprep.subr.bf16.mxu0 0
  %7158 = vmatpush1.bf16.msra.mxu0 0
  %7159 = vmatprep.subr.bf16.mxu0 0
  %7160 = vmatpush1.bf16.msra.mxu0 0
  %7161 = vmatprep.subr.bf16.mxu0 0
  %7162 = vmatpush1.bf16.msra.mxu0 0
  %7163 = vmatprep.subr.bf16.mxu0 0
  %7164 = vmatpush1.bf16.msra.mxu0 0
  %7165 = vmatprep.subr.bf16.mxu0 0
  %7166 = vmatpush1.bf16.msra.mxu0 0
  %7167 = vmatprep.subr.bf16.mxu0 0
  %7168 = vmatpush1.bf16.msra.mxu0 0
  %7169 = vmatprep.subr.bf16.mxu0 0
  %7170 = vmatpush1.bf16.msra.mxu0 0
  %7171 = vmatprep.subr.bf16.mxu0 0
  %7172 = vmatpush1.bf16.msra.mxu0 0
  %7173 = vmatprep.subr.bf16.mxu0 0
  %7174 = vmatpush1.bf16.msra.mxu0 0
  %7175 = vmatprep.subr.bf16.mxu0 0
  %7176 = vmatpush1.bf16.msra.mxu0 0
  %7177 = vmatprep.mubr.bf16.mxu0 0
  %7178 = vmatmul.mubr.bf16.gmra.mrb[0].mxu0 %v7143
  %v7179 = vpop.f32.mrb[0].mxu0
  %v7180 = vadd.f32 0.0, %v7179
  %v7181 = vpop.f32.mrb[0].mxu0
  %v7182 = vpop.f32.mrb[0].mxu0
  %v7183 = vadd.f32 0.0, %v7182
  %v7184 = vpop.f32.mrb[0].mxu0
  %7185 = vdwg.mxu0
  %7187 = vrot.lane.b32.xlu0 %v7033, 112
  %v7188 = vpop.permute.xlu0 %7187
  %v7190 = vsel %vm450, %v7188, 0
  %7192 = vmatprep.subr.bf16.mxu0 0
  %7193 = vmatpush1.bf16.msra.mxu0 %v7068
  %7194 = vmatprep.subr.bf16.mxu0 0
  %7195 = vmatpush1.bf16.msra.mxu0 0
  %7196 = vmatprep.subr.bf16.mxu0 0
  %7197 = vmatpush1.bf16.msra.mxu0 0
  %7198 = vmatprep.subr.bf16.mxu0 0
  %7199 = vmatpush1.bf16.msra.mxu0 0
  %7200 = vmatprep.subr.bf16.mxu0 0
  %7201 = vmatpush1.bf16.msra.mxu0 0
  %7202 = vmatprep.subr.bf16.mxu0 0
  %7203 = vmatpush1.bf16.msra.mxu0 0
  %7204 = vmatprep.subr.bf16.mxu0 0
  %7205 = vmatpush1.bf16.msra.mxu0 0
  %7206 = vmatprep.subr.bf16.mxu0 0
  %7207 = vmatpush1.bf16.msra.mxu0 0
  %7208 = vmatprep.subr.bf16.mxu0 0
  %7209 = vmatpush1.bf16.msra.mxu0 0
  %7210 = vmatprep.subr.bf16.mxu0 0
  %7211 = vmatpush1.bf16.msra.mxu0 0
  %7212 = vmatprep.subr.bf16.mxu0 0
  %7213 = vmatpush1.bf16.msra.mxu0 0
  %7214 = vmatprep.subr.bf16.mxu0 0
  %7215 = vmatpush1.bf16.msra.mxu0 0
  %7216 = vmatprep.subr.bf16.mxu0 0
  %7217 = vmatpush1.bf16.msra.mxu0 0
  %7218 = vmatprep.subr.bf16.mxu0 0
  %7219 = vmatpush1.bf16.msra.mxu0 0
  %7220 = vmatprep.subr.bf16.mxu0 0
  %7221 = vmatpush1.bf16.msra.mxu0 0
  %7222 = vmatprep.subr.bf16.mxu0 0
  %7223 = vmatpush1.bf16.msra.mxu0 0
  %7224 = vmatprep.mubr.bf16.mxu0 0
  %7225 = vmatmul.mubr.bf16.gmra.mrb[0].mxu0 %v7190
  %v7226 = vpop.f32.mrb[0].mxu0
  %v7227 = vadd.f32 %v127, %v7226
  %v7228 = vpop.f32.mrb[0].mxu0
  %v7229 = vpop.f32.mrb[0].mxu0
  %v7230 = vadd.f32 %v128, %v7229
  %v7231 = vpop.f32.mrb[0].mxu0
  %7232 = vdwg.mxu0
  %v7233 = vsel %vm450, %v7227, -inf
  %7234 = vmax.xlane.f32.xlu0 %v7233
  %v7235 = vpop.xlane.xlu0 %7234
  %v7236 = vsel %vm450, %v7230, -inf
  %7237 = vmax.xlane.f32.xlu0 %v7236
  %v7238 = vpop.xlane.xlu0 %7237
  %v7239 = vsub.f32 %v7227, %v7235
  %v7240 = vsub.f32 %v7230, %v7238
  %v7241 = vmul.f32 %v7239, 1.442695
  %v7242 = vpow.pop %v7241
  %v7243 = vmul.f32 %v7240, 1.442695
  %v7244 = vpow.pop %v7243
  %v7245 = vsel %vm450, %v7242, 0.0
  %7246 = vadd.xlane.f32.xlu0 %v7245
  %v7247 = vpop.xlane.xlu0 %7246
  %v7248 = vsel %vm450, %v7244, 0.0
  %7249 = vadd.xlane.f32.xlu0 %v7248
  %v7250 = vpop.xlane.xlu0 %7249
  %v7251 = vrcp.pop %v7247
  %v7252 = vrcp.pop %v7250
  %v7253 = vmul.f32 %v7242, %v7251
  %v7254 = vmul.f32 %v7244, %v7252
  %v7255 = vpack.c.bf16 %v7254, %v7253
  %7257 = vrot.lane.b32.xlu0 %v7034, 112
  %v7258 = vpop.permute.xlu0 %7257
  %v7261 = vsel %vm450, %v7255, 0
  %7263 = vmatprep.subr.bf16.mxu0 0
  %7264 = vmatpush1.bf16.msra.mxu0 %v7258
  %7265 = vmatprep.subr.bf16.mxu0 0
  %7266 = vmatpush1.bf16.msra.mxu0 0
  %7267 = vmatprep.subr.bf16.mxu0 0
  %7268 = vmatpush1.bf16.msra.mxu0 0
  %7269 = vmatprep.subr.bf16.mxu0 0
  %7270 = vmatpush1.bf16.msra.mxu0 0
  %7271 = vmatprep.subr.bf16.mxu0 0
  %7272 = vmatpush1.bf16.msra.mxu0 0
  %7273 = vmatprep.subr.bf16.mxu0 0
  %7274 = vmatpush1.bf16.msra.mxu0 0
  %7275 = vmatprep.subr.bf16.mxu0 0
  %7276 = vmatpush1.bf16.msra.mxu0 0
  %7277 = vmatprep.subr.bf16.mxu0 0
  %7278 = vmatpush1.bf16.msra.mxu0 0
  %7279 = vmatprep.subr.bf16.mxu0 0
  %7280 = vmatpush1.bf16.msra.mxu0 0
  %7281 = vmatprep.subr.bf16.mxu0 0
  %7282 = vmatpush1.bf16.msra.mxu0 0
  %7283 = vmatprep.subr.bf16.mxu0 0
  %7284 = vmatpush1.bf16.msra.mxu0 0
  %7285 = vmatprep.subr.bf16.mxu0 0
  %7286 = vmatpush1.bf16.msra.mxu0 0
  %7287 = vmatprep.subr.bf16.mxu0 0
  %7288 = vmatpush1.bf16.msra.mxu0 0
  %7289 = vmatprep.subr.bf16.mxu0 0
  %7290 = vmatpush1.bf16.msra.mxu0 0
  %7291 = vmatprep.subr.bf16.mxu0 0
  %7292 = vmatpush1.bf16.msra.mxu0 0
  %7293 = vmatprep.subr.bf16.mxu0 0
  %7294 = vmatpush1.bf16.msra.mxu0 0
  %7295 = vmatprep.mubr.bf16.mxu0 0
  %7296 = vmatmul.mubr.bf16.gmra.mrb[0].mxu0 %v7261
  %v7297 = vpop.f32.mrb[0].mxu0
  %v7298 = vadd.f32 0.0, %v7297
  %v7299 = vpop.f32.mrb[0].mxu0
  %v7300 = vpop.f32.mrb[0].mxu0
  %v7301 = vadd.f32 0.0, %v7300
  %v7302 = vpop.f32.mrb[0].mxu0
  %7303 = vdwg.mxu0
  %7304 = vrot.lane.b32.xlu0 %v7033, 96
  %v7305 = vpop.permute.xlu0 %7304
  %v7307 = vsel %vm450, %v7305, 0
  %7309 = vmatprep.subr.bf16.mxu0 0
  %7310 = vmatpush1.bf16.msra.mxu0 %v7069
  %7311 = vmatprep.subr.bf16.mxu0 0
  %7312 = vmatpush1.bf16.msra.mxu0 0
  %7313 = vmatprep.subr.bf16.mxu0 0
  %7314 = vmatpush1.bf16.msra.mxu0 0
  %7315 = vmatprep.subr.bf16.mxu0 0
  %7316 = vmatpush1.bf16.msra.mxu0 0
  %7317 = vmatprep.subr.bf16.mxu0 0
  %7318 = vmatpush1.bf16.msra.mxu0 0
  %7319 = vmatprep.subr.bf16.mxu0 0
  %7320 = vmatpush1.bf16.msra.mxu0 0
  %7321 = vmatprep.subr.bf16.mxu0 0
  %7322 = vmatpush1.bf16.msra.mxu0 0
  %7323 = vmatprep.subr.bf16.mxu0 0
  %7324 = vmatpush1.bf16.msra.mxu0 0
  %7325 = vmatprep.subr.bf16.mxu0 0
  %7326 = vmatpush1.bf16.msra.mxu0 0
  %7327 = vmatprep.subr.bf16.mxu0 0
  %7328 = vmatpush1.bf16.msra.mxu0 0
  %7329 = vmatprep.subr.bf16.mxu0 0
  %7330 = vmatpush1.bf16.msra.mxu0 0
  %7331 = vmatprep.subr.bf16.mxu0 0
  %7332 = vmatpush1.bf16.msra.mxu0 0
  %7333 = vmatprep.subr.bf16.mxu0 0
  %7334 = vmatpush1.bf16.msra.mxu0 0
  %7335 = vmatprep.subr.bf16.mxu0 0
  %7336 = vmatpush1.bf16.msra.mxu0 0
  %7337 = vmatprep.subr.bf16.mxu0 0
  %7338 = vmatpush1.bf16.msra.mxu0 0
  %7339 = vmatprep.subr.bf16.mxu0 0
  %7340 = vmatpush1.bf16.msra.mxu0 0
  %7341 = vmatprep.mubr.bf16.mxu0 0
  %7342 = vmatmul.mubr.bf16.gmra.mrb[0].mxu0 %v7307
  %v7343 = vpop.f32.mrb[0].mxu0
  %v7344 = vadd.f32 %v127, %v7343
  %v7345 = vpop.f32.mrb[0].mxu0
  %v7346 = vpop.f32.mrb[0].mxu0
  %v7347 = vadd.f32 %v128, %v7346
  %v7348 = vpop.f32.mrb[0].mxu0
  %7349 = vdwg.mxu0
  %v7350 = vsel %vm450, %v7344, -inf
  %7351 = vmax.xlane.f32.xlu0 %v7350
  %v7352 = vpop.xlane.xlu0 %7351
  %v7353 = vsel %vm450, %v7347, -inf
  %7354 = vmax.xlane.f32.xlu0 %v7353
  %v7355 = vpop.xlane.xlu0 %7354
  %v7356 = vsub.f32 %v7344, %v7352
  %v7357 = vsub.f32 %v7347, %v7355
  %v7358 = vmul.f32 %v7356, 1.442695
  %v7359 = vpow.pop %v7358
  %v7360 = vmul.f32 %v7357, 1.442695
  %v7361 = vpow.pop %v7360
  %v7362 = vsel %vm450, %v7359, 0.0
  %7363 = vadd.xlane.f32.xlu0 %v7362
  %v7364 = vpop.xlane.xlu0 %7363
  %v7365 = vsel %vm450, %v7361, 0.0
  %7366 = vadd.xlane.f32.xlu0 %v7365
  %v7367 = vpop.xlane.xlu0 %7366
  %v7368 = vrcp.pop %v7364
  %v7369 = vrcp.pop %v7367
  %v7370 = vmul.f32 %v7359, %v7368
  %v7371 = vmul.f32 %v7361, %v7369
  %v7372 = vpack.c.bf16 %v7371, %v7370
  %7373 = vrot.lane.b32.xlu0 %v7034, 96
  %v7374 = vpop.permute.xlu0 %7373
  %v7377 = vsel %vm450, %v7372, 0
  %7379 = vmatprep.subr.bf16.mxu0 0
  %7380 = vmatpush1.bf16.msra.mxu0 %v7374
  %7381 = vmatprep.subr.bf16.mxu0 0
  %7382 = vmatpush1.bf16.msra.mxu0 0
  %7383 = vmatprep.subr.bf16.mxu0 0
  %7384 = vmatpush1.bf16.msra.mxu0 0
  %7385 = vmatprep.subr.bf16.mxu0 0
  %7386 = vmatpush1.bf16.msra.mxu0 0
  %7387 = vmatprep.subr.bf16.mxu0 0
  %7388 = vmatpush1.bf16.msra.mxu0 0
  %7389 = vmatprep.subr.bf16.mxu0 0
  %7390 = vmatpush1.bf16.msra.mxu0 0
  %7391 = vmatprep.subr.bf16.mxu0 0
  %7392 = vmatpush1.bf16.msra.mxu0 0
  %7393 = vmatprep.subr.bf16.mxu0 0
  %7394 = vmatpush1.bf16.msra.mxu0 0
  %7395 = vmatprep.subr.bf16.mxu0 0
  %7396 = vmatpush1.bf16.msra.mxu0 0
  %7397 = vmatprep.subr.bf16.mxu0 0
  %7398 = vmatpush1.bf16.msra.mxu0 0
  %7399 = vmatprep.subr.bf16.mxu0 0
  %7400 = vmatpush1.bf16.msra.mxu0 0
  %7401 = vmatprep.subr.bf16.mxu0 0
  %7402 = vmatpush1.bf16.msra.mxu0 0
  %7403 = vmatprep.subr.bf16.mxu0 0
  %7404 = vmatpush1.bf16.msra.mxu0 0
  %7405 = vmatprep.subr.bf16.mxu0 0
  %7406 = vmatpush1.bf16.msra.mxu0 0
  %7407 = vmatprep.subr.bf16.mxu0 0
  %7408 = vmatpush1.bf16.msra.mxu0 0
  %7409 = vmatprep.subr.bf16.mxu0 0
  %7410 = vmatpush1.bf16.msra.mxu0 0
  %7411 = vmatprep.mubr.bf16.mxu0 0
  %7412 = vmatmul.mubr.bf16.gmra.mrb[0].mxu0 %v7377
  %v7413 = vpop.f32.mrb[0].mxu0
  %v7414 = vadd.f32 0.0, %v7413
  %v7415 = vpop.f32.mrb[0].mxu0
  %v7416 = vpop.f32.mrb[0].mxu0
  %v7417 = vadd.f32 0.0, %v7416
  %v7418 = vpop.f32.mrb[0].mxu0
  %7419 = vdwg.mxu0
  %7420 = vrot.lane.b32.xlu0 %v7033, 80
  %v7421 = vpop.permute.xlu0 %7420
  %v7423 = vsel %vm450, %v7421, 0
  %7425 = vmatprep.subr.bf16.mxu0 0
  %7426 = vmatpush1.bf16.msra.mxu0 %v7070
  %7427 = vmatprep.subr.bf16.mxu0 0
  %7428 = vmatpush1.bf16.msra.mxu0 0
  %7429 = vmatprep.subr.bf16.mxu0 0
  %7430 = vmatpush1.bf16.msra.mxu0 0
  %7431 = vmatprep.subr.bf16.mxu0 0
  %7432 = vmatpush1.bf16.msra.mxu0 0
  %7433 = vmatprep.subr.bf16.mxu0 0
  %7434 = vmatpush1.bf16.msra.mxu0 0
  %7435 = vmatprep.subr.bf16.mxu0 0
  %7436 = vmatpush1.bf16.msra.mxu0 0
  %7437 = vmatprep.subr.bf16.mxu0 0
  %7438 = vmatpush1.bf16.msra.mxu0 0
  %7439 = vmatprep.subr.bf16.mxu0 0
  %7440 = vmatpush1.bf16.msra.mxu0 0
  %7441 = vmatprep.subr.bf16.mxu0 0
  %7442 = vmatpush1.bf16.msra.mxu0 0
  %7443 = vmatprep.subr.bf16.mxu0 0
  %7444 = vmatpush1.bf16.msra.mxu0 0
  %7445 = vmatprep.subr.bf16.mxu0 0
  %7446 = vmatpush1.bf16.msra.mxu0 0
  %7447 = vmatprep.subr.bf16.mxu0 0
  %7448 = vmatpush1.bf16.msra.mxu0 0
  %7449 = vmatprep.subr.bf16.mxu0 0
  %7450 = vmatpush1.bf16.msra.mxu0 0
  %7451 = vmatprep.subr.bf16.mxu0 0
  %7452 = vmatpush1.bf16.msra.mxu0 0
  %7453 = vmatprep.subr.bf16.mxu0 0
  %7454 = vmatpush1.bf16.msra.mxu0 0
  %7455 = vmatprep.subr.bf16.mxu0 0
  %7456 = vmatpush1.bf16.msra.mxu0 0
  %7457 = vmatprep.mubr.bf16.mxu0 0
  %7458 = vmatmul.mubr.bf16.gmra.mrb[0].mxu0 %v7423
  %v7459 = vpop.f32.mrb[0].mxu0
  %v7460 = vadd.f32 %v127, %v7459
  %v7461 = vpop.f32.mrb[0].mxu0
  %v7462 = vpop.f32.mrb[0].mxu0
  %v7463 = vadd.f32 %v128, %v7462
  %v7464 = vpop.f32.mrb[0].mxu0
  %7465 = vdwg.mxu0
  %v7466 = vsel %vm450, %v7460, -inf
  %7467 = vmax.xlane.f32.xlu0 %v7466
  %v7468 = vpop.xlane.xlu0 %7467
  %v7469 = vsel %vm450, %v7463, -inf
  %7470 = vmax.xlane.f32.xlu0 %v7469
  %v7471 = vpop.xlane.xlu0 %7470
  %v7472 = vsub.f32 %v7460, %v7468
  %v7473 = vsub.f32 %v7463, %v7471
  %v7474 = vmul.f32 %v7472, 1.442695
  %v7475 = vpow.pop %v7474
  %v7476 = vmul.f32 %v7473, 1.442695
  %v7477 = vpow.pop %v7476
  %v7478 = vsel %vm450, %v7475, 0.0
  %7479 = vadd.xlane.f32.xlu0 %v7478
  %v7480 = vpop.xlane.xlu0 %7479
  %v7481 = vsel %vm450, %v7477, 0.0
  %7482 = vadd.xlane.f32.xlu0 %v7481
  %v7483 = vpop.xlane.xlu0 %7482
  %v7484 = vrcp.pop %v7480
  %v7485 = vrcp.pop %v7483
  %v7486 = vmul.f32 %v7475, %v7484
  %v7487 = vmul.f32 %v7477, %v7485
  %v7488 = vpack.c.bf16 %v7487, %v7486
  %7489 = vrot.lane.b32.xlu0 %v7034, 80
  %v7490 = vpop.permute.xlu0 %7489
  %v7493 = vsel %vm450, %v7488, 0
  %7495 = vmatprep.subr.bf16.mxu0 0
  %7496 = vmatpush1.bf16.msra.mxu0 %v7490
  %7497 = vmatprep.subr.bf16.mxu0 0
  %7498 = vmatpush1.bf16.msra.mxu0 0
  %7499 = vmatprep.subr.bf16.mxu0 0
  %7500 = vmatpush1.bf16.msra.mxu0 0
  %7501 = vmatprep.subr.bf16.mxu0 0
  %7502 = vmatpush1.bf16.msra.mxu0 0
  %7503 = vmatprep.subr.bf16.mxu0 0
  %7504 = vmatpush1.bf16.msra.mxu0 0
  %7505 = vmatprep.subr.bf16.mxu0 0
  %7506 = vmatpush1.bf16.msra.mxu0 0
  %7507 = vmatprep.subr.bf16.mxu0 0
  %7508 = vmatpush1.bf16.msra.mxu0 0
  %7509 = vmatprep.subr.bf16.mxu0 0
  %7510 = vmatpush1.bf16.msra.mxu0 0
  %7511 = vmatprep.subr.bf16.mxu0 0
  %7512 = vmatpush1.bf16.msra.mxu0 0
  %7513 = vmatprep.subr.bf16.mxu0 0
  %7514 = vmatpush1.bf16.msra.mxu0 0
  %7515 = vmatprep.subr.bf16.mxu0 0
  %7516 = vmatpush1.bf16.msra.mxu0 0
  %7517 = vmatprep.subr.bf16.mxu0 0
  %7518 = vmatpush1.bf16.msra.mxu0 0
  %7519 = vmatprep.subr.bf16.mxu0 0
  %7520 = vmatpush1.bf16.msra.mxu0 0
  %7521 = vmatprep.subr.bf16.mxu0 0
  %7522 = vmatpush1.bf16.msra.mxu0 0
  %7523 = vmatprep.subr.bf16.mxu0 0
  %7524 = vmatpush1.bf16.msra.mxu0 0
  %7525 = vmatprep.subr.bf16.mxu0 0
  %7526 = vmatpush1.bf16.msra.mxu0 0
  %7527 = vmatprep.mubr.bf16.mxu0 0
  %7528 = vmatmul.mubr.bf16.gmra.mrb[0].mxu0 %v7493
  %v7529 = vpop.f32.mrb[0].mxu0
  %v7530 = vadd.f32 0.0, %v7529
  %v7531 = vpop.f32.mrb[0].mxu0
  %v7532 = vpop.f32.mrb[0].mxu0
  %v7533 = vadd.f32 0.0, %v7532
  %v7534 = vpop.f32.mrb[0].mxu0
  %7535 = vdwg.mxu0
  %7536 = vrot.lane.b32.xlu0 %v7033, 64
  %v7537 = vpop.permute.xlu0 %7536
  %v7539 = vsel %vm450, %v7537, 0
  %7541 = vmatprep.subr.bf16.mxu0 0
  %7542 = vmatpush1.bf16.msra.mxu0 %v7071
  %7543 = vmatprep.subr.bf16.mxu0 0
  %7544 = vmatpush1.bf16.msra.mxu0 0
  %7545 = vmatprep.subr.bf16.mxu0 0
  %7546 = vmatpush1.bf16.msra.mxu0 0
  %7547 = vmatprep.subr.bf16.mxu0 0
  %7548 = vmatpush1.bf16.msra.mxu0 0
  %7549 = vmatprep.subr.bf16.mxu0 0
  %7550 = vmatpush1.bf16.msra.mxu0 0
  %7551 = vmatprep.subr.bf16.mxu0 0
  %7552 = vmatpush1.bf16.msra.mxu0 0
  %7553 = vmatprep.subr.bf16.mxu0 0
  %7554 = vmatpush1.bf16.msra.mxu0 0
  %7555 = vmatprep.subr.bf16.mxu0 0
  %7556 = vmatpush1.bf16.msra.mxu0 0
  %7557 = vmatprep.subr.bf16.mxu0 0
  %7558 = vmatpush1.bf16.msra.mxu0 0
  %7559 = vmatprep.subr.bf16.mxu0 0
  %7560 = vmatpush1.bf16.msra.mxu0 0
  %7561 = vmatprep.subr.bf16.mxu0 0
  %7562 = vmatpush1.bf16.msra.mxu0 0
  %7563 = vmatprep.subr.bf16.mxu0 0
  %7564 = vmatpush1.bf16.msra.mxu0 0
  %7565 = vmatprep.subr.bf16.mxu0 0
  %7566 = vmatpush1.bf16.msra.mxu0 0
  %7567 = vmatprep.subr.bf16.mxu0 0
  %7568 = vmatpush1.bf16.msra.mxu0 0
  %7569 = vmatprep.subr.bf16.mxu0 0
  %7570 = vmatpush1.bf16.msra.mxu0 0
  %7571 = vmatprep.subr.bf16.mxu0 0
  %7572 = vmatpush1.bf16.msra.mxu0 0
  %7573 = vmatprep.mubr.bf16.mxu0 0
  %7574 = vmatmul.mubr.bf16.gmra.mrb[0].mxu0 %v7539
  %v7575 = vpop.f32.mrb[0].mxu0
  %v7576 = vadd.f32 %v127, %v7575
  %v7577 = vpop.f32.mrb[0].mxu0
  %v7578 = vpop.f32.mrb[0].mxu0
  %v7579 = vadd.f32 %v128, %v7578
  %v7580 = vpop.f32.mrb[0].mxu0
  %7581 = vdwg.mxu0
  %v7582 = vsel %vm450, %v7576, -inf
  %7583 = vmax.xlane.f32.xlu0 %v7582
  %v7584 = vpop.xlane.xlu0 %7583
  %v7585 = vsel %vm450, %v7579, -inf
  %7586 = vmax.xlane.f32.xlu0 %v7585
  %v7587 = vpop.xlane.xlu0 %7586
  %v7588 = vsub.f32 %v7576, %v7584
  %v7589 = vsub.f32 %v7579, %v7587
  %v7590 = vmul.f32 %v7588, 1.442695
  %v7591 = vpow.pop %v7590
  %v7592 = vmul.f32 %v7589, 1.442695
  %v7593 = vpow.pop %v7592
  %v7594 = vsel %vm450, %v7591, 0.0
  %7595 = vadd.xlane.f32.xlu0 %v7594
  %v7596 = vpop.xlane.xlu0 %7595
  %v7597 = vsel %vm450, %v7593, 0.0
  %7598 = vadd.xlane.f32.xlu0 %v7597
  %v7599 = vpop.xlane.xlu0 %7598
  %v7600 = vrcp.pop %v7596
  %v7601 = vrcp.pop %v7599
  %v7602 = vmul.f32 %v7591, %v7600
  %v7603 = vmul.f32 %v7593, %v7601
  %v7604 = vpack.c.bf16 %v7603, %v7602
  %7605 = vrot.lane.b32.xlu0 %v7034, 64
  %v7606 = vpop.permute.xlu0 %7605
  %v7609 = vsel %vm450, %v7604, 0
  %7611 = vmatprep.subr.bf16.mxu0 0
  %7612 = vmatpush1.bf16.msra.mxu0 %v7606
  %7613 = vmatprep.subr.bf16.mxu0 0
  %7614 = vmatpush1.bf16.msra.mxu0 0
  %7615 = vmatprep.subr.bf16.mxu0 0
  %7616 = vmatpush1.bf16.msra.mxu0 0
  %7617 = vmatprep.subr.bf16.mxu0 0
  %7618 = vmatpush1.bf16.msra.mxu0 0
  %7619 = vmatprep.subr.bf16.mxu0 0
  %7620 = vmatpush1.bf16.msra.mxu0 0
  %7621 = vmatprep.subr.bf16.mxu0 0
  %7622 = vmatpush1.bf16.msra.mxu0 0
  %7623 = vmatprep.subr.bf16.mxu0 0
  %7624 = vmatpush1.bf16.msra.mxu0 0
  %7625 = vmatprep.subr.bf16.mxu0 0
  %7626 = vmatpush1.bf16.msra.mxu0 0
  %7627 = vmatprep.subr.bf16.mxu0 0
  %7628 = vmatpush1.bf16.msra.mxu0 0
  %7629 = vmatprep.subr.bf16.mxu0 0
  %7630 = vmatpush1.bf16.msra.mxu0 0
  %7631 = vmatprep.subr.bf16.mxu0 0
  %7632 = vmatpush1.bf16.msra.mxu0 0
  %7633 = vmatprep.subr.bf16.mxu0 0
  %7634 = vmatpush1.bf16.msra.mxu0 0
  %7635 = vmatprep.subr.bf16.mxu0 0
  %7636 = vmatpush1.bf16.msra.mxu0 0
  %7637 = vmatprep.subr.bf16.mxu0 0
  %7638 = vmatpush1.bf16.msra.mxu0 0
  %7639 = vmatprep.subr.bf16.mxu0 0
  %7640 = vmatpush1.bf16.msra.mxu0 0
  %7641 = vmatprep.subr.bf16.mxu0 0
  %7642 = vmatpush1.bf16.msra.mxu0 0
  %7643 = vmatprep.mubr.bf16.mxu0 0
  %7644 = vmatmul.mubr.bf16.gmra.mrb[0].mxu0 %v7609
  %v7645 = vpop.f32.mrb[0].mxu0
  %v7646 = vadd.f32 0.0, %v7645
  %v7647 = vpop.f32.mrb[0].mxu0
  %v7648 = vpop.f32.mrb[0].mxu0
  %v7649 = vadd.f32 0.0, %v7648
  %v7650 = vpop.f32.mrb[0].mxu0
  %7651 = vdwg.mxu0
  %7652 = vrot.lane.b32.xlu0 %v7033, 48
  %v7653 = vpop.permute.xlu0 %7652
  %v7655 = vsel %vm450, %v7653, 0
  %7657 = vmatprep.subr.bf16.mxu0 0
  %7658 = vmatpush1.bf16.msra.mxu0 %v7072
  %7659 = vmatprep.subr.bf16.mxu0 0
  %7660 = vmatpush1.bf16.msra.mxu0 0
  %7661 = vmatprep.subr.bf16.mxu0 0
  %7662 = vmatpush1.bf16.msra.mxu0 0
  %7663 = vmatprep.subr.bf16.mxu0 0
  %7664 = vmatpush1.bf16.msra.mxu0 0
  %7665 = vmatprep.subr.bf16.mxu0 0
  %7666 = vmatpush1.bf16.msra.mxu0 0
  %7667 = vmatprep.subr.bf16.mxu0 0
  %7668 = vmatpush1.bf16.msra.mxu0 0
  %7669 = vmatprep.subr.bf16.mxu0 0
  %7670 = vmatpush1.bf16.msra.mxu0 0
  %7671 = vmatprep.subr.bf16.mxu0 0
  %7672 = vmatpush1.bf16.msra.mxu0 0
  %7673 = vmatprep.subr.bf16.mxu0 0
  %7674 = vmatpush1.bf16.msra.mxu0 0
  %7675 = vmatprep.subr.bf16.mxu0 0
  %7676 = vmatpush1.bf16.msra.mxu0 0
  %7677 = vmatprep.subr.bf16.mxu0 0
  %7678 = vmatpush1.bf16.msra.mxu0 0
  %7679 = vmatprep.subr.bf16.mxu0 0
  %7680 = vmatpush1.bf16.msra.mxu0 0
  %7681 = vmatprep.subr.bf16.mxu0 0
  %7682 = vmatpush1.bf16.msra.mxu0 0
  %7683 = vmatprep.subr.bf16.mxu0 0
  %7684 = vmatpush1.bf16.msra.mxu0 0
  %7685 = vmatprep.subr.bf16.mxu0 0
  %7686 = vmatpush1.bf16.msra.mxu0 0
  %7687 = vmatprep.subr.bf16.mxu0 0
  %7688 = vmatpush1.bf16.msra.mxu0 0
  %7689 = vmatprep.mubr.bf16.mxu0 0
  %7690 = vmatmul.mubr.bf16.gmra.mrb[0].mxu0 %v7655
  %v7691 = vpop.f32.mrb[0].mxu0
  %v7692 = vadd.f32 %v127, %v7691
  %v7693 = vpop.f32.mrb[0].mxu0
  %v7694 = vpop.f32.mrb[0].mxu0
  %v7695 = vadd.f32 %v128, %v7694
  %v7696 = vpop.f32.mrb[0].mxu0
  %7697 = vdwg.mxu0
  %v7698 = vsel %vm450, %v7692, -inf
  %7699 = vmax.xlane.f32.xlu0 %v7698
  %v7700 = vpop.xlane.xlu0 %7699
  %v7701 = vsel %vm450, %v7695, -inf
  %7702 = vmax.xlane.f32.xlu0 %v7701
  %v7703 = vpop.xlane.xlu0 %7702
  %v7704 = vsub.f32 %v7692, %v7700
  %v7705 = vsub.f32 %v7695, %v7703
  %v7706 = vmul.f32 %v7704, 1.442695
  %v7707 = vpow.pop %v7706
  %v7708 = vmul.f32 %v7705, 1.442695
  %v7709 = vpow.pop %v7708
  %v7710 = vsel %vm450, %v7707, 0.0
  %7711 = vadd.xlane.f32.xlu0 %v7710
  %v7712 = vpop.xlane.xlu0 %7711
  %v7713 = vsel %vm450, %v7709, 0.0
  %7714 = vadd.xlane.f32.xlu0 %v7713
  %v7715 = vpop.xlane.xlu0 %7714
  %v7716 = vrcp.pop %v7712
  %v7717 = vrcp.pop %v7715
  %v7718 = vmul.f32 %v7707, %v7716
  %v7719 = vmul.f32 %v7709, %v7717
  %v7720 = vpack.c.bf16 %v7719, %v7718
  %7721 = vrot.lane.b32.xlu0 %v7034, 48
  %v7722 = vpop.permute.xlu0 %7721
  %v7725 = vsel %vm450, %v7720, 0
  %7727 = vmatprep.subr.bf16.mxu0 0
  %7728 = vmatpush1.bf16.msra.mxu0 %v7722
  %7729 = vmatprep.subr.bf16.mxu0 0
  %7730 = vmatpush1.bf16.msra.mxu0 0
  %7731 = vmatprep.subr.bf16.mxu0 0
  %7732 = vmatpush1.bf16.msra.mxu0 0
  %7733 = vmatprep.subr.bf16.mxu0 0
  %7734 = vmatpush1.bf16.msra.mxu0 0
  %7735 = vmatprep.subr.bf16.mxu0 0
  %7736 = vmatpush1.bf16.msra.mxu0 0
  %7737 = vmatprep.subr.bf16.mxu0 0
  %7738 = vmatpush1.bf16.msra.mxu0 0
  %7739 = vmatprep.subr.bf16.mxu0 0
  %7740 = vmatpush1.bf16.msra.mxu0 0
  %7741 = vmatprep.subr.bf16.mxu0 0
  %7742 = vmatpush1.bf16.msra.mxu0 0
  %7743 = vmatprep.subr.bf16.mxu0 0
  %7744 = vmatpush1.bf16.msra.mxu0 0
  %7745 = vmatprep.subr.bf16.mxu0 0
  %7746 = vmatpush1.bf16.msra.mxu0 0
  %7747 = vmatprep.subr.bf16.mxu0 0
  %7748 = vmatpush1.bf16.msra.mxu0 0
  %7749 = vmatprep.subr.bf16.mxu0 0
  %7750 = vmatpush1.bf16.msra.mxu0 0
  %7751 = vmatprep.subr.bf16.mxu0 0
  %7752 = vmatpush1.bf16.msra.mxu0 0
  %7753 = vmatprep.subr.bf16.mxu0 0
  %7754 = vmatpush1.bf16.msra.mxu0 0
  %7755 = vmatprep.subr.bf16.mxu0 0
  %7756 = vmatpush1.bf16.msra.mxu0 0
  %7757 = vmatprep.subr.bf16.mxu0 0
  %7758 = vmatpush1.bf16.msra.mxu0 0
  %7759 = vmatprep.mubr.bf16.mxu0 0
  %7760 = vmatmul.mubr.bf16.gmra.mrb[0].mxu0 %v7725
  %v7761 = vpop.f32.mrb[0].mxu0
  %v7762 = vadd.f32 0.0, %v7761
  %v7763 = vpop.f32.mrb[0].mxu0
  %v7764 = vpop.f32.mrb[0].mxu0
  %v7765 = vadd.f32 0.0, %v7764
  %v7766 = vpop.f32.mrb[0].mxu0
  %7767 = vdwg.mxu0
  %7768 = vrot.lane.b32.xlu0 %v7033, 32
  %v7769 = vpop.permute.xlu0 %7768
  %v7771 = vsel %vm450, %v7769, 0
  %7773 = vmatprep.subr.bf16.mxu0 0
  %7774 = vmatpush1.bf16.msra.mxu0 %v7073
  %7775 = vmatprep.subr.bf16.mxu0 0
  %7776 = vmatpush1.bf16.msra.mxu0 0
  %7777 = vmatprep.subr.bf16.mxu0 0
  %7778 = vmatpush1.bf16.msra.mxu0 0
  %7779 = vmatprep.subr.bf16.mxu0 0
  %7780 = vmatpush1.bf16.msra.mxu0 0
  %7781 = vmatprep.subr.bf16.mxu0 0
  %7782 = vmatpush1.bf16.msra.mxu0 0
  %7783 = vmatprep.subr.bf16.mxu0 0
  %7784 = vmatpush1.bf16.msra.mxu0 0
  %7785 = vmatprep.subr.bf16.mxu0 0
  %7786 = vmatpush1.bf16.msra.mxu0 0
  %7787 = vmatprep.subr.bf16.mxu0 0
  %7788 = vmatpush1.bf16.msra.mxu0 0
  %7789 = vmatprep.subr.bf16.mxu0 0
  %7790 = vmatpush1.bf16.msra.mxu0 0
  %7791 = vmatprep.subr.bf16.mxu0 0
  %7792 = vmatpush1.bf16.msra.mxu0 0
  %7793 = vmatprep.subr.bf16.mxu0 0
  %7794 = vmatpush1.bf16.msra.mxu0 0
  %7795 = vmatprep.subr.bf16.mxu0 0
  %7796 = vmatpush1.bf16.msra.mxu0 0
  %7797 = vmatprep.subr.bf16.mxu0 0
  %7798 = vmatpush1.bf16.msra.mxu0 0
  %7799 = vmatprep.subr.bf16.mxu0 0
  %7800 = vmatpush1.bf16.msra.mxu0 0
  %7801 = vmatprep.subr.bf16.mxu0 0
  %7802 = vmatpush1.bf16.msra.mxu0 0
  %7803 = vmatprep.subr.bf16.mxu0 0
  %7804 = vmatpush1.bf16.msra.mxu0 0
  %7805 = vmatprep.mubr.bf16.mxu0 0
  %7806 = vmatmul.mubr.bf16.gmra.mrb[0].mxu0 %v7771
  %v7807 = vpop.f32.mrb[0].mxu0
  %v7808 = vadd.f32 %v127, %v7807
  %v7809 = vpop.f32.mrb[0].mxu0
  %v7810 = vpop.f32.mrb[0].mxu0
  %v7811 = vadd.f32 %v128, %v7810
  %v7812 = vpop.f32.mrb[0].mxu0
  %7813 = vdwg.mxu0
  %v7814 = vsel %vm450, %v7808, -inf
  %7815 = vmax.xlane.f32.xlu0 %v7814
  %v7816 = vpop.xlane.xlu0 %7815
  %v7817 = vsel %vm450, %v7811, -inf
  %7818 = vmax.xlane.f32.xlu0 %v7817
  %v7819 = vpop.xlane.xlu0 %7818
  %v7820 = vsub.f32 %v7808, %v7816
  %v7821 = vsub.f32 %v7811, %v7819
  %v7822 = vmul.f32 %v7820, 1.442695
  %v7823 = vpow.pop %v7822
  %v7824 = vmul.f32 %v7821, 1.442695
  %v7825 = vpow.pop %v7824
  %v7826 = vsel %vm450, %v7823, 0.0
  %7827 = vadd.xlane.f32.xlu0 %v7826
  %v7828 = vpop.xlane.xlu0 %7827
  %v7829 = vsel %vm450, %v7825, 0.0
  %7830 = vadd.xlane.f32.xlu0 %v7829
  %v7831 = vpop.xlane.xlu0 %7830
  %v7832 = vrcp.pop %v7828
  %v7833 = vrcp.pop %v7831
  %v7834 = vmul.f32 %v7823, %v7832
  %v7835 = vmul.f32 %v7825, %v7833
  %v7836 = vpack.c.bf16 %v7835, %v7834
  %7837 = vrot.lane.b32.xlu0 %v7034, 32
  %v7838 = vpop.permute.xlu0 %7837
  %v7841 = vsel %vm450, %v7836, 0
  %7843 = vmatprep.subr.bf16.mxu0 0
  %7844 = vmatpush1.bf16.msra.mxu0 %v7838
  %7845 = vmatprep.subr.bf16.mxu0 0
  %7846 = vmatpush1.bf16.msra.mxu0 0
  %7847 = vmatprep.subr.bf16.mxu0 0
  %7848 = vmatpush1.bf16.msra.mxu0 0
  %7849 = vmatprep.subr.bf16.mxu0 0
  %7850 = vmatpush1.bf16.msra.mxu0 0
  %7851 = vmatprep.subr.bf16.mxu0 0
  %7852 = vmatpush1.bf16.msra.mxu0 0
  %7853 = vmatprep.subr.bf16.mxu0 0
  %7854 = vmatpush1.bf16.msra.mxu0 0
  %7855 = vmatprep.subr.bf16.mxu0 0
  %7856 = vmatpush1.bf16.msra.mxu0 0
  %7857 = vmatprep.subr.bf16.mxu0 0
  %7858 = vmatpush1.bf16.msra.mxu0 0
  %7859 = vmatprep.subr.bf16.mxu0 0
  %7860 = vmatpush1.bf16.msra.mxu0 0
  %7861 = vmatprep.subr.bf16.mxu0 0
  %7862 = vmatpush1.bf16.msra.mxu0 0
  %7863 = vmatprep.subr.bf16.mxu0 0
  %7864 = vmatpush1.bf16.msra.mxu0 0
  %7865 = vmatprep.subr.bf16.mxu0 0
  %7866 = vmatpush1.bf16.msra.mxu0 0
  %7867 = vmatprep.subr.bf16.mxu0 0
  %7868 = vmatpush1.bf16.msra.mxu0 0
  %7869 = vmatprep.subr.bf16.mxu0 0
  %7870 = vmatpush1.bf16.msra.mxu0 0
  %7871 = vmatprep.subr.bf16.mxu0 0
  %7872 = vmatpush1.bf16.msra.mxu0 0
  %7873 = vmatprep.subr.bf16.mxu0 0
  %7874 = vmatpush1.bf16.msra.mxu0 0
  %7875 = vmatprep.mubr.bf16.mxu0 0
  %7876 = vmatmul.mubr.bf16.gmra.mrb[0].mxu0 %v7841
  %v7877 = vpop.f32.mrb[0].mxu0
  %v7878 = vadd.f32 0.0, %v7877
  %v7879 = vpop.f32.mrb[0].mxu0
  %v7880 = vpop.f32.mrb[0].mxu0
  %v7881 = vadd.f32 0.0, %v7880
  %v7882 = vpop.f32.mrb[0].mxu0
  %7883 = vdwg.mxu0
  %7884 = vrot.lane.b32.xlu0 %v7033, 16
  %v7885 = vpop.permute.xlu0 %7884
  %v7887 = vsel %vm450, %v7885, 0
  %7889 = vmatprep.subr.bf16.mxu0 0
  %7890 = vmatpush1.bf16.msra.mxu0 %v7074
  %7891 = vmatprep.subr.bf16.mxu0 0
  %7892 = vmatpush1.bf16.msra.mxu0 0
  %7893 = vmatprep.subr.bf16.mxu0 0
  %7894 = vmatpush1.bf16.msra.mxu0 0
  %7895 = vmatprep.subr.bf16.mxu0 0
  %7896 = vmatpush1.bf16.msra.mxu0 0
  %7897 = vmatprep.subr.bf16.mxu0 0
  %7898 = vmatpush1.bf16.msra.mxu0 0
  %7899 = vmatprep.subr.bf16.mxu0 0
  %7900 = vmatpush1.bf16.msra.mxu0 0
  %7901 = vmatprep.subr.bf16.mxu0 0
  %7902 = vmatpush1.bf16.msra.mxu0 0
  %7903 = vmatprep.subr.bf16.mxu0 0
  %7904 = vmatpush1.bf16.msra.mxu0 0
  %7905 = vmatprep.subr.bf16.mxu0 0
  %7906 = vmatpush1.bf16.msra.mxu0 0
  %7907 = vmatprep.subr.bf16.mxu0 0
  %7908 = vmatpush1.bf16.msra.mxu0 0
  %7909 = vmatprep.subr.bf16.mxu0 0
  %7910 = vmatpush1.bf16.msra.mxu0 0
  %7911 = vmatprep.subr.bf16.mxu0 0
  %7912 = vmatpush1.bf16.msra.mxu0 0
  %7913 = vmatprep.subr.bf16.mxu0 0
  %7914 = vmatpush1.bf16.msra.mxu0 0
  %7915 = vmatprep.subr.bf16.mxu0 0
  %7916 = vmatpush1.bf16.msra.mxu0 0
  %7917 = vmatprep.subr.bf16.mxu0 0
  %7918 = vmatpush1.bf16.msra.mxu0 0
  %7919 = vmatprep.subr.bf16.mxu0 0
  %7920 = vmatpush1.bf16.msra.mxu0 0
  %7921 = vmatprep.mubr.bf16.mxu0 0
  %7922 = vmatmul.mubr.bf16.gmra.mrb[0].mxu0 %v7887
  %v7923 = vpop.f32.mrb[0].mxu0
  %v7924 = vadd.f32 %v127, %v7923
  %v7925 = vpop.f32.mrb[0].mxu0
  %v7926 = vpop.f32.mrb[0].mxu0
  %v7927 = vadd.f32 %v128, %v7926
  %v7928 = vpop.f32.mrb[0].mxu0
  %7929 = vdwg.mxu0
  %v7930 = vsel %vm450, %v7924, -inf
  %7931 = vmax.xlane.f32.xlu0 %v7930
  %v7932 = vpop.xlane.xlu0 %7931
  %v7933 = vsel %vm450, %v7927, -inf
  %7934 = vmax.xlane.f32.xlu0 %v7933
  %v7935 = vpop.xlane.xlu0 %7934
  %v7936 = vsub.f32 %v7924, %v7932
  %v7937 = vsub.f32 %v7927, %v7935
  %v7938 = vmul.f32 %v7936, 1.442695
  %v7939 = vpow.pop %v7938
  %v7940 = vmul.f32 %v7937, 1.442695
  %v7941 = vpow.pop %v7940
  %v7942 = vsel %vm450, %v7939, 0.0
  %7943 = vadd.xlane.f32.xlu0 %v7942
  %v7944 = vpop.xlane.xlu0 %7943
  %v7945 = vsel %vm450, %v7941, 0.0
  %7946 = vadd.xlane.f32.xlu0 %v7945
  %v7947 = vpop.xlane.xlu0 %7946
  %v7948 = vrcp.pop %v7944
  %v7949 = vrcp.pop %v7947
  %v7950 = vmul.f32 %v7939, %v7948
  %v7951 = vmul.f32 %v7941, %v7949
  %v7952 = vpack.c.bf16 %v7951, %v7950
  %7953 = vrot.lane.b32.xlu0 %v7034, 16
  %v7954 = vpop.permute.xlu0 %7953
  %v7957 = vsel %vm450, %v7952, 0
  %7959 = vmatprep.subr.bf16.mxu0 0
  %7960 = vmatpush1.bf16.msra.mxu0 %v7954
  %7961 = vmatprep.subr.bf16.mxu0 0
  %7962 = vmatpush1.bf16.msra.mxu0 0
  %7963 = vmatprep.subr.bf16.mxu0 0
  %7964 = vmatpush1.bf16.msra.mxu0 0
  %7965 = vmatprep.subr.bf16.mxu0 0
  %7966 = vmatpush1.bf16.msra.mxu0 0
  %7967 = vmatprep.subr.bf16.mxu0 0
  %7968 = vmatpush1.bf16.msra.mxu0 0
  %7969 = vmatprep.subr.bf16.mxu0 0
  %7970 = vmatpush1.bf16.msra.mxu0 0
  %7971 = vmatprep.subr.bf16.mxu0 0
  %7972 = vmatpush1.bf16.msra.mxu0 0
  %7973 = vmatprep.subr.bf16.mxu0 0
  %7974 = vmatpush1.bf16.msra.mxu0 0
  %7975 = vmatprep.subr.bf16.mxu0 0
  %7976 = vmatpush1.bf16.msra.mxu0 0
  %7977 = vmatprep.subr.bf16.mxu0 0
  %7978 = vmatpush1.bf16.msra.mxu0 0
  %7979 = vmatprep.subr.bf16.mxu0 0
  %7980 = vmatpush1.bf16.msra.mxu0 0
  %7981 = vmatprep.subr.bf16.mxu0 0
  %7982 = vmatpush1.bf16.msra.mxu0 0
  %7983 = vmatprep.subr.bf16.mxu0 0
  %7984 = vmatpush1.bf16.msra.mxu0 0
  %7985 = vmatprep.subr.bf16.mxu0 0
  %7986 = vmatpush1.bf16.msra.mxu0 0
  %7987 = vmatprep.subr.bf16.mxu0 0
  %7988 = vmatpush1.bf16.msra.mxu0 0
  %7989 = vmatprep.subr.bf16.mxu0 0
  %7990 = vmatpush1.bf16.msra.mxu0 0
  %7991 = vmatprep.mubr.bf16.mxu0 0
  %7992 = vmatmul.mubr.bf16.gmra.mrb[0].mxu0 %v7957
  %v7993 = vpop.f32.mrb[0].mxu0
  %v7994 = vadd.f32 0.0, %v7993
  %v7995 = vpop.f32.mrb[0].mxu0
  %v7996 = vpop.f32.mrb[0].mxu0
  %v7997 = vadd.f32 0.0, %v7996
  %v7998 = vpop.f32.mrb[0].mxu0
  %7999 = vdwg.mxu0
  %8002 = vrot.lane.b32.xlu0 %v7298, 16
  %v8003 = vpop.permute.xlu0 %8002
  %8004 = vrot.lane.b32.xlu0 %v7301, 16
  %v8005 = vpop.permute.xlu0 %8004
  %8010 = vrot.lane.b32.xlu0 %v7414, 32
  %v8011 = vpop.permute.xlu0 %8010
  %8012 = vrot.lane.b32.xlu0 %v7417, 32
  %v8013 = vpop.permute.xlu0 %8012
  %8018 = vrot.lane.b32.xlu0 %v7530, 48
  %v8019 = vpop.permute.xlu0 %8018
  %8020 = vrot.lane.b32.xlu0 %v7533, 48
  %v8021 = vpop.permute.xlu0 %8020
  %8026 = vrot.lane.b32.xlu0 %v7646, 64
  %v8027 = vpop.permute.xlu0 %8026
  %8028 = vrot.lane.b32.xlu0 %v7649, 64
  %v8029 = vpop.permute.xlu0 %8028
  %8034 = vrot.lane.b32.xlu0 %v7762, 80
  %v8035 = vpop.permute.xlu0 %8034
  %8036 = vrot.lane.b32.xlu0 %v7765, 80
  %v8037 = vpop.permute.xlu0 %8036
  %8042 = vrot.lane.b32.xlu0 %v7878, 96
  %v8043 = vpop.permute.xlu0 %8042
  %8044 = vrot.lane.b32.xlu0 %v7881, 96
  %v8045 = vpop.permute.xlu0 %8044
  %8050 = vrot.lane.b32.xlu0 %v7994, 112
  %v8051 = vpop.permute.xlu0 %8050
  %8052 = vrot.lane.b32.xlu0 %v7997, 112
  %v8053 = vpop.permute.xlu0 %8052
  %v8056 = vsel %vm450, %v7180, %v8003
  %v8057 = vsel %vm450, %v7183, %v8005
  %v8058 = vsel %vm1434, %v8056, %v8011
  %v8059 = vsel %vm1434, %v8057, %v8013
  %v8060 = vsel %vm1437, %v8058, %v8019
  %v8061 = vsel %vm1437, %v8059, %v8021
  %v8062 = vsel %vm1440, %v8060, %v8027
  %v8063 = vsel %vm1440, %v8061, %v8029
  %v8064 = vsel %vm1443, %v8062, %v8035
  %v8065 = vsel %vm1443, %v8063, %v8037
  %v8066 = vsel %vm1446, %v8064, %v8043
  %v8067 = vsel %vm1446, %v8065, %v8045
  %v8068 = vsel %vm1449, %v8066, %v8051
  %v8069 = vsel %vm1449, %v8067, %v8053
  %v8070 = vpack.c.bf16 %v8069, %v8068
  %v8071 = vlaneseq
  %v8072 = vshrl.u32 %v8071, 7
  %v8073 = vsub.s32 0, %v8072
  %v8074 = vrot.slane %v7032, %v8073
  %v8091 = vunpack.c.l.b16 %v7016
  %v8092 = vunpack.c.l.b16 %v7017
  %v8093 = vunpack.c.l.b16 %v7018
  %v8094 = vunpack.c.l.b16 %v7019
  %v8095 = vunpack.c.l.b16 %v7020
  %v8096 = vunpack.c.l.b16 %v7021
  %v8097 = vunpack.c.l.b16 %v7022
  %v8098 = vunpack.c.l.b16 %v7023
  %v8099 = vunpack.c.l.b16 %v7024
  %v8100 = vunpack.c.l.b16 %v7025
  %v8101 = vunpack.c.l.b16 %v7026
  %v8102 = vunpack.c.l.b16 %v7027
  %v8103 = vunpack.c.l.b16 %v7028
  %v8104 = vunpack.c.l.b16 %v7029
  %v8105 = vunpack.c.l.b16 %v7030
  %v8106 = vunpack.c.l.b16 %v7031
  %v8107 = vpack.c.b16 %v8092, %v8091
  %v8108 = vpack.c.b16 %v8094, %v8093
  %v8109 = vpack.c.b16 %v8096, %v8095
  %v8110 = vpack.c.b16 %v8098, %v8097
  %v8111 = vpack.c.b16 %v8100, %v8099
  %v8112 = vpack.c.b16 %v8102, %v8101
  %v8113 = vpack.c.b16 %v8104, %v8103
  %v8114 = vpack.c.b16 %v8106, %v8105
  %8123 = vmatprep.subr.bf16.mxu0 0
  %8124 = vmatpush1.bf16.msra.mxu0 %v8107
  %8125 = vmatprep.subr.bf16.mxu0 0
  %8126 = vmatpush1.bf16.msra.mxu0 %v8108
  %8127 = vmatprep.subr.bf16.mxu0 0
  %8128 = vmatpush1.bf16.msra.mxu0 %v8109
  %8129 = vmatprep.subr.bf16.mxu0 0
  %8130 = vmatpush1.bf16.msra.mxu0 %v8110
  %8131 = vmatprep.subr.bf16.mxu0 0
  %8132 = vmatpush1.bf16.msra.mxu0 %v8111
  %8133 = vmatprep.subr.bf16.mxu0 0
  %8134 = vmatpush1.bf16.msra.mxu0 %v8112
  %8135 = vmatprep.subr.bf16.mxu0 0
  %8136 = vmatpush1.bf16.msra.mxu0 %v8113
  %8137 = vmatprep.subr.bf16.mxu0 0
  %8138 = vmatpush1.bf16.msra.mxu0 %v8114
  %8139 = vmatprep.subr.bf16.mxu0 0
  %8140 = vmatpush1.bf16.msra.mxu0 0
  %8141 = vmatprep.subr.bf16.mxu0 0
  %8142 = vmatpush1.bf16.msra.mxu0 0
  %8143 = vmatprep.subr.bf16.mxu0 0
  %8144 = vmatpush1.bf16.msra.mxu0 0
  %8145 = vmatprep.subr.bf16.mxu0 0
  %8146 = vmatpush1.bf16.msra.mxu0 0
  %8147 = vmatprep.subr.bf16.mxu0 0
  %8148 = vmatpush1.bf16.msra.mxu0 0
  %8149 = vmatprep.subr.bf16.mxu0 0
  %8150 = vmatpush1.bf16.msra.mxu0 0
  %8151 = vmatprep.subr.bf16.mxu0 0
  %8152 = vmatpush1.bf16.msra.mxu0 0
  %8153 = vmatprep.subr.bf16.mxu0 0
  %8154 = vmatpush1.bf16.msra.mxu0 0
  %8155 = vmatprep.mubr.bf16.mxu0 0
  %8156 = vmatmul.mubr.bf16.gmra.mrb[0].mxu0 %v8070
  %v8157 = vpop.f32.mrb[0].mxu0
  %v8158 = vadd.f32 %v8074, %v8157
  %v8159 = vpop.f32.mrb[0].mxu0
  %v8160 = vpop.f32.mrb[0].mxu0
  %v8161 = vadd.f32 %v8074, %v8160
  %v8162 = vpop.f32.mrb[0].mxu0
  %8163 = vdwg.mxu0
  %v8164 = vadd.f32 %v6750, %v8158
  %v8165 = vadd.f32 %v6751, %v8161
  %v8166 = vld [vmem:[%s7 + $0x2e] sm:$0x1]
  %v8167 = vld [vmem:[%s7 + $0x32] sm:$0x1]
  %8168 = vadd.xlane.f32.xlu0 %v8164
  %v8169 = vpop.xlane.xlu0 %8168
  %8170 = vadd.xlane.f32.xlu0 %v8165
  %v8171 = vpop.xlane.xlu0 %8170
  %v8172 = vmul.f32 %v8169, %v1554
  %v8173 = vmul.f32 %v8171, %v1554
  %v8174 = vsub.f32 %v8164, %v8172
  %v8175 = vsub.f32 %v8165, %v8173
  %v8176 = vmul.f32 %v8174, %v8174
  %v8177 = vmul.f32 %v8175, %v8175
  %8178 = vadd.xlane.f32.xlu0 %v8176
  %v8179 = vpop.xlane.xlu0 %8178
  %8180 = vadd.xlane.f32.xlu0 %v8177
  %v8181 = vpop.xlane.xlu0 %8180
  %v8182 = vmul.f32 %v8179, %v1554
  %v8183 = vmul.f32 %v8181, %v1554
  %v8184 = vadd.f32 %v8182, 1e-05
  %v8185 = vadd.f32 %v8183, 1e-05
  %v8186 = vrsqrt.pop %v8184
  %v8187 = vrsqrt.pop %v8185
  %v8188 = vmul.f32 %v8174, %v8186
  %v8189 = vmul.f32 %v8175, %v8187
  %v8190 = vlaneseq
  %v8191 = vshrl.u32 %v8190, 7
  %v8192 = vsub.s32 0, %v8191
  %v8193 = vrot.slane %v8166, %v8192
  %v8194 = vmul.f32 %v8188, %v8193
  %v8195 = vmul.f32 %v8189, %v8193
  %v8196 = vlaneseq
  %v8197 = vshrl.u32 %v8196, 7
  %v8198 = vsub.s32 0, %v8197
  %v8199 = vrot.slane %v8167, %v8198
  %v8200 = vadd.f32 %v8194, %v8199
  %v8201 = vadd.f32 %v8195, %v8199
  %v8202 = vld [vmem:[%s6752 + $0x10] sm:$0xf]
  %v8203 = vld [vmem:[%s6752 + $0x38] sm:$0xf]
  %v8204 = vld [vmem:[%s6752 + $0x60] sm:$0xf]
  %v8205 = vld [vmem:[%s6752 + $0x88] sm:$0xf]
  %v8206 = vld [vmem:[%s6752 + $0xb0] sm:$0xf]
  %v8207 = vld [vmem:[%s6752 + $0xd8] sm:$0xf]
  %v8208 = vld [vmem:[%s6752 + $0x100] sm:$0xf]
  %v8209 = vld [vmem:[%s6752 + $0x128] sm:$0xf]
  %v8210 = vld [vmem:[%s6752 + $0x150] sm:$0xf]
  %v8211 = vld [vmem:[%s6752 + $0x178] sm:$0xf]
  %v8212 = vld [vmem:[%s6752 + $0x1a0] sm:$0xf]
  %v8213 = vld [vmem:[%s6752 + $0x1c8] sm:$0xf]
  %v8214 = vld [vmem:[%s6752 + $0x1f0] sm:$0xf]
  %v8215 = vld [vmem:[%s6752 + $0x218] sm:$0xf]
  %v8216 = vld [vmem:[%s6752 + $0x240] sm:$0xf]
  %v8217 = vld [vmem:[%s6752 + $0x268] sm:$0xf]
  %v8218 = vpack.c.bf16 %v8201, %v8200
  %v8219 = vld [vmem:[%s7 + $0x12] sm:$0x1]
  %v8220 = vlaneseq
  %v8221 = vshrl.u32 %v8220, 7
  %v8222 = vsub.s32 0, %v8221
  %v8223 = vrot.slane %v8219, %v8222
  %v8240 = vunpack.c.l.b16 %v8202
  %v8241 = vunpack.c.l.b16 %v8203
  %v8242 = vunpack.c.l.b16 %v8204
  %v8243 = vunpack.c.l.b16 %v8205
  %v8244 = vunpack.c.l.b16 %v8206
  %v8245 = vunpack.c.l.b16 %v8207
  %v8246 = vunpack.c.l.b16 %v8208
  %v8247 = vunpack.c.l.b16 %v8209
  %v8248 = vunpack.c.l.b16 %v8210
  %v8249 = vunpack.c.l.b16 %v8211
  %v8250 = vunpack.c.l.b16 %v8212
  %v8251 = vunpack.c.l.b16 %v8213
  %v8252 = vunpack.c.l.b16 %v8214
  %v8253 = vunpack.c.l.b16 %v8215
  %v8254 = vunpack.c.l.b16 %v8216
  %v8255 = vunpack.c.l.b16 %v8217
  %v8256 = vpack.c.b16 %v8241, %v8240
  %v8257 = vpack.c.b16 %v8243, %v8242
  %v8258 = vpack.c.b16 %v8245, %v8244
  %v8259 = vpack.c.b16 %v8247, %v8246
  %v8260 = vpack.c.b16 %v8249, %v8248
  %v8261 = vpack.c.b16 %v8251, %v8250
  %v8262 = vpack.c.b16 %v8253, %v8252
  %v8263 = vpack.c.b16 %v8255, %v8254
  %8272 = vmatprep.subr.bf16.mxu0 0
  %8273 = vmatpush1.bf16.msra.mxu0 %v8256
  %8274 = vmatprep.subr.bf16.mxu0 0
  %8275 = vmatpush1.bf16.msra.mxu0 %v8257
  %8276 = vmatprep.subr.bf16.mxu0 0
  %8277 = vmatpush1.bf16.msra.mxu0 %v8258
  %8278 = vmatprep.subr.bf16.mxu0 0
  %8279 = vmatpush1.bf16.msra.mxu0 %v8259
  %8280 = vmatprep.subr.bf16.mxu0 0
  %8281 = vmatpush1.bf16.msra.mxu0 %v8260
  %8282 = vmatprep.subr.bf16.mxu0 0
  %8283 = vmatpush1.bf16.msra.mxu0 %v8261
  %8284 = vmatprep.subr.bf16.mxu0 0
  %8285 = vmatpush1.bf16.msra.mxu0 %v8262
  %8286 = vmatprep.subr.bf16.mxu0 0
  %8287 = vmatpush1.bf16.msra.mxu0 %v8263
  %8288 = vmatprep.subr.bf16.mxu0 0
  %8289 = vmatpush1.bf16.msra.mxu0 0
  %8290 = vmatprep.subr.bf16.mxu0 0
  %8291 = vmatpush1.bf16.msra.mxu0 0
  %8292 = vmatprep.subr.bf16.mxu0 0
  %8293 = vmatpush1.bf16.msra.mxu0 0
  %8294 = vmatprep.subr.bf16.mxu0 0
  %8295 = vmatpush1.bf16.msra.mxu0 0
  %8296 = vmatprep.subr.bf16.mxu0 0
  %8297 = vmatpush1.bf16.msra.mxu0 0
  %8298 = vmatprep.subr.bf16.mxu0 0
  %8299 = vmatpush1.bf16.msra.mxu0 0
  %8300 = vmatprep.subr.bf16.mxu0 0
  %8301 = vmatpush1.bf16.msra.mxu0 0
  %8302 = vmatprep.subr.bf16.mxu0 0
  %8303 = vmatpush1.bf16.msra.mxu0 0
  %8304 = vmatprep.mubr.bf16.mxu0 0
  %8305 = vmatmul.mubr.bf16.gmra.mrb[0].mxu0 %v8218
  %v8306 = vpop.f32.mrb[0].mxu0
  %v8307 = vadd.f32 %v8223, %v8306
  %v8308 = vpop.f32.mrb[0].mxu0
  %v8309 = vpop.f32.mrb[0].mxu0
  %v8310 = vadd.f32 %v8223, %v8309
  %v8311 = vpop.f32.mrb[0].mxu0
  %8312 = vdwg.mxu0
  %v8313 = vld [vmem:[%s6752 + $0x14] sm:$0xff]
  %v8314 = vld [vmem:[%s6752 + $0x3c] sm:$0xff]
  %v8315 = vld [vmem:[%s6752 + $0x64] sm:$0xff]
  %v8316 = vld [vmem:[%s6752 + $0x8c] sm:$0xff]
  %v8317 = vld [vmem:[%s6752 + $0xb4] sm:$0xff]
  %v8318 = vld [vmem:[%s6752 + $0xdc] sm:$0xff]
  %v8319 = vld [vmem:[%s6752 + $0x104] sm:$0xff]
  %v8320 = vld [vmem:[%s6752 + $0x12c] sm:$0xff]
  %v8321 = vld [vmem:[%s6752 + $0x154] sm:$0xff]
  %v8322 = vld [vmem:[%s6752 + $0x17c] sm:$0xff]
  %v8323 = vld [vmem:[%s6752 + $0x1a4] sm:$0xff]
  %v8324 = vld [vmem:[%s6752 + $0x1cc] sm:$0xff]
  %v8325 = vld [vmem:[%s6752 + $0x1f4] sm:$0xff]
  %v8326 = vld [vmem:[%s6752 + $0x21c] sm:$0xff]
  %v8327 = vld [vmem:[%s6752 + $0x244] sm:$0xff]
  %v8328 = vld [vmem:[%s6752 + $0x26c] sm:$0xff]
  %s8329 = scalar_lea.vmem %s7, 22
  %v8330 = vld [vmem:[%s8329] ss:$4 sm:$0x3]
  %v8332 = vlaneseq
  %v8333 = vshrl.u32 %v8332, 7
  %v8334 = vsub.s32 0, %v8333
  %v8335 = vrot.slane %v8330, %v8334
  %v8336 = vlaneseq
  %v8337 = vshrl.u32 %v8336, 7
  %v8338 = vsub.s32 1, %v8337
  %v8339 = vrot.slane %v8330, %v8338
  %v8358 = vunpack.c.l.b16 %v8313
  %v8359 = vunpack.c.h.b16 %v8313
  %v8360 = vunpack.c.l.b16 %v8314
  %v8361 = vunpack.c.h.b16 %v8314
  %v8362 = vunpack.c.l.b16 %v8315
  %v8363 = vunpack.c.h.b16 %v8315
  %v8364 = vunpack.c.l.b16 %v8316
  %v8365 = vunpack.c.h.b16 %v8316
  %v8366 = vunpack.c.l.b16 %v8317
  %v8367 = vunpack.c.h.b16 %v8317
  %v8368 = vunpack.c.l.b16 %v8318
  %v8369 = vunpack.c.h.b16 %v8318
  %v8370 = vunpack.c.l.b16 %v8319
  %v8371 = vunpack.c.h.b16 %v8319
  %v8372 = vunpack.c.l.b16 %v8320
  %v8373 = vunpack.c.h.b16 %v8320
  %v8374 = vunpack.c.l.b16 %v8321
  %v8375 = vunpack.c.h.b16 %v8321
  %v8376 = vunpack.c.l.b16 %v8322
  %v8377 = vunpack.c.h.b16 %v8322
  %v8378 = vunpack.c.l.b16 %v8323
  %v8379 = vunpack.c.h.b16 %v8323
  %v8380 = vunpack.c.l.b16 %v8324
  %v8381 = vunpack.c.h.b16 %v8324
  %v8382 = vunpack.c.l.b16 %v8325
  %v8383 = vunpack.c.h.b16 %v8325
  %v8384 = vunpack.c.l.b16 %v8326
  %v8385 = vunpack.c.h.b16 %v8326
  %v8386 = vunpack.c.l.b16 %v8327
  %v8387 = vunpack.c.h.b16 %v8327
  %v8388 = vunpack.c.l.b16 %v8328
  %v8389 = vunpack.c.h.b16 %v8328
  %v8390 = vpack.c.b16 %v8360, %v8358
  %v8391 = vpack.c.b16 %v8361, %v8359
  %v8392 = vpack.c.b16 %v8364, %v8362
  %v8393 = vpack.c.b16 %v8365, %v8363
  %v8394 = vpack.c.b16 %v8368, %v8366
  %v8395 = vpack.c.b16 %v8369, %v8367
  %v8396 = vpack.c.b16 %v8372, %v8370
  %v8397 = vpack.c.b16 %v8373, %v8371
  %v8398 = vpack.c.b16 %v8376, %v8374
  %v8399 = vpack.c.b16 %v8377, %v8375
  %v8400 = vpack.c.b16 %v8380, %v8378
  %v8401 = vpack.c.b16 %v8381, %v8379
  %v8402 = vpack.c.b16 %v8384, %v8382
  %v8403 = vpack.c.b16 %v8385, %v8383
  %v8404 = vpack.c.b16 %v8388, %v8386
  %v8405 = vpack.c.b16 %v8389, %v8387
  %8422 = vmatprep.subr.bf16.mxu0 %v8391
  %8423 = vmatpush1.bf16.msra.mxu0 %v8390
  %8424 = vmatprep.subr.bf16.mxu0 %v8393
  %8425 = vmatpush1.bf16.msra.mxu0 %v8392
  %8426 = vmatprep.subr.bf16.mxu0 %v8395
  %8427 = vmatpush1.bf16.msra.mxu0 %v8394
  %8428 = vmatprep.subr.bf16.mxu0 %v8397
  %8429 = vmatpush1.bf16.msra.mxu0 %v8396
  %8430 = vmatprep.subr.bf16.mxu0 %v8399
  %8431 = vmatpush1.bf16.msra.mxu0 %v8398
  %8432 = vmatprep.subr.bf16.mxu0 %v8401
  %8433 = vmatpush1.bf16.msra.mxu0 %v8400
  %8434 = vmatprep.subr.bf16.mxu0 %v8403
  %8435 = vmatpush1.bf16.msra.mxu0 %v8402
  %8436 = vmatprep.subr.bf16.mxu0 %v8405
  %8437 = vmatpush1.bf16.msra.mxu0 %v8404
  %8438 = vmatprep.subr.bf16.mxu0 0
  %8439 = vmatpush1.bf16.msra.mxu0 0
  %8440 = vmatprep.subr.bf16.mxu0 0
  %8441 = vmatpush1.bf16.msra.mxu0 0
  %8442 = vmatprep.subr.bf16.mxu0 0
  %8443 = vmatpush1.bf16.msra.mxu0 0
  %8444 = vmatprep.subr.bf16.mxu0 0
  %8445 = vmatpush1.bf16.msra.mxu0 0
  %8446 = vmatprep.subr.bf16.mxu0 0
  %8447 = vmatpush1.bf16.msra.mxu0 0
  %8448 = vmatprep.subr.bf16.mxu0 0
  %8449 = vmatpush1.bf16.msra.mxu0 0
  %8450 = vmatprep.subr.bf16.mxu0 0
  %8451 = vmatpush1.bf16.msra.mxu0 0
  %8452 = vmatprep.subr.bf16.mxu0 0
  %8453 = vmatpush1.bf16.msra.mxu0 0
  %8454 = vmatprep.mubr.bf16.mxu0 0
  %8455 = vmatmul.mubr.bf16.gmra.mrb[0].mxu0 %v1712
  %v8456 = vpop.f32.mrb[0].mxu0
  %v8457 = vadd.f32 %v8335, %v8456
  %v8458 = vpop.f32.mrb[0].mxu0
  %v8459 = vadd.f32 %v8339, %v8458
  %v8460 = vpop.f32.mrb[0].mxu0
  %v8461 = vadd.f32 %v8335, %v8460
  %v8462 = vpop.f32.mrb[0].mxu0
  %v8463 = vadd.f32 %v8339, %v8462
  %8464 = vmatprep.mubr.bf16.mxu0 0
  %8465 = vmatmul.mubr.bf16.gmra.mrb[0].mxu0 %v1713
  %v8466 = vpop.f32.mrb[0].mxu0
  %v8467 = vadd.f32 %v8335, %v8466
  %v8468 = vpop.f32.mrb[0].mxu0
  %v8469 = vadd.f32 %v8339, %v8468
  %v8470 = vpop.f32.mrb[0].mxu0
  %v8471 = vadd.f32 %v8335, %v8470
  %v8472 = vpop.f32.mrb[0].mxu0
  %v8473 = vadd.f32 %v8339, %v8472
  %8474 = vdwg.mxu0
  %v8475 = vld [vmem:[%s6752 + $0x1c] sm:$0xf]
  %v8476 = vld [vmem:[%s6752 + $0x44] sm:$0xf]
  %v8477 = vld [vmem:[%s6752 + $0x6c] sm:$0xf]
  %v8478 = vld [vmem:[%s6752 + $0x94] sm:$0xf]
  %v8479 = vld [vmem:[%s6752 + $0xbc] sm:$0xf]
  %v8480 = vld [vmem:[%s6752 + $0xe4] sm:$0xf]
  %v8481 = vld [vmem:[%s6752 + $0x10c] sm:$0xf]
  %v8482 = vld [vmem:[%s6752 + $0x134] sm:$0xf]
  %v8483 = vld [vmem:[%s6752 + $0x15c] sm:$0xf]
  %v8484 = vld [vmem:[%s6752 + $0x184] sm:$0xf]
  %v8485 = vld [vmem:[%s6752 + $0x1ac] sm:$0xf]
  %v8486 = vld [vmem:[%s6752 + $0x1d4] sm:$0xf]
  %v8487 = vld [vmem:[%s6752 + $0x1fc] sm:$0xf]
  %v8488 = vld [vmem:[%s6752 + $0x224] sm:$0xf]
  %v8489 = vld [vmem:[%s6752 + $0x24c] sm:$0xf]
  %v8490 = vld [vmem:[%s6752 + $0x274] sm:$0xf]
  %v8491 = vld [vmem:[%s7 + $0x1e] sm:$0x1]
  %v8492 = vpack.c.bf16 %v8310, %v8307
  %v8493 = vpack.c.bf16 %v8463, %v8459
  %v8494 = vpack.c.bf16 %v8473, %v8469
  %8495 = vxpose.xlu0.b32.start [1/16] %v8457, 128
  %8496 = vxpose.xlu0.b32.cont [2/16] %v8461, 128
  %8497 = vxpose.xlu0.b32.cont [3/16] %v8467, 128
  %8498 = vxpose.xlu0.b32.cont [4/16] %v8471, 128
  %8499 = vxpose.xlu0.b32.cont [5/16] 0.0, 128
  %8500 = vxpose.xlu0.b32.cont [6/16] 0.0, 128
  %8501 = vxpose.xlu0.b32.cont [7/16] 0.0, 128
  %8502 = vxpose.xlu0.b32.cont [8/16] 0.0, 128
  %8503 = vxpose.xlu0.b32.cont [9/16] 0.0, 128
  %8504 = vxpose.xlu0.b32.cont [10/16] 0.0, 128
  %8505 = vxpose.xlu0.b32.cont [11/16] 0.0, 128
  %8506 = vxpose.xlu0.b32.cont [12/16] 0.0, 128
  %8507 = vxpose.xlu0.b32.cont [13/16] 0.0, 128
  %8508 = vxpose.xlu0.b32.cont [14/16] 0.0, 128
  %8509 = vxpose.xlu0.b32.cont [15/16] 0.0, 128
  %8510 = vxpose.xlu0.b32.end [16/16] 0.0, 128
  %v8511 = vpop.trf.xlu0
  %v8512 = vpop.trf.xlu0
  %v8513 = vpop.trf.xlu0
  %v8514 = vpop.trf.xlu0
  %v8515 = vpop.trf.xlu0
  %v8516 = vpop.trf.xlu0
  %v8517 = vpop.trf.xlu0
  %v8518 = vpop.trf.xlu0
  %v8519 = vpop.trf.xlu0
  %v8520 = vpop.trf.xlu0
  %v8521 = vpop.trf.xlu0
  %v8522 = vpop.trf.xlu0
  %v8523 = vpop.trf.xlu0
  %v8524 = vpop.trf.xlu0
  %v8525 = vpop.trf.xlu0
  %v8526 = vpop.trf.xlu0
  %v8527 = vpack.c.bf16 %v8512, %v8511
  %v8528 = vpack.c.bf16 %v8514, %v8513
  %v8529 = vpack.c.bf16 %v8516, %v8515
  %v8530 = vpack.c.bf16 %v8518, %v8517
  %v8531 = vpack.c.bf16 %v8520, %v8519
  %v8532 = vpack.c.bf16 %v8522, %v8521
  %v8533 = vpack.c.bf16 %v8524, %v8523
  %v8534 = vpack.c.bf16 %v8526, %v8525
  %v8536 = vsel %vm450, %v8492, 0
  %8538 = vmatprep.subr.bf16.mxu0 0
  %8539 = vmatpush1.bf16.msra.mxu0 %v8527
  %8540 = vmatprep.subr.bf16.mxu0 0
  %8541 = vmatpush1.bf16.msra.mxu0 0
  %8542 = vmatprep.subr.bf16.mxu0 0
  %8543 = vmatpush1.bf16.msra.mxu0 0
  %8544 = vmatprep.subr.bf16.mxu0 0
  %8545 = vmatpush1.bf16.msra.mxu0 0
  %8546 = vmatprep.subr.bf16.mxu0 0
  %8547 = vmatpush1.bf16.msra.mxu0 0
  %8548 = vmatprep.subr.bf16.mxu0 0
  %8549 = vmatpush1.bf16.msra.mxu0 0
  %8550 = vmatprep.subr.bf16.mxu0 0
  %8551 = vmatpush1.bf16.msra.mxu0 0
  %8552 = vmatprep.subr.bf16.mxu0 0
  %8553 = vmatpush1.bf16.msra.mxu0 0
  %8554 = vmatprep.subr.bf16.mxu0 0
  %8555 = vmatpush1.bf16.msra.mxu0 0
  %8556 = vmatprep.subr.bf16.mxu0 0
  %8557 = vmatpush1.bf16.msra.mxu0 0
  %8558 = vmatprep.subr.bf16.mxu0 0
  %8559 = vmatpush1.bf16.msra.mxu0 0
  %8560 = vmatprep.subr.bf16.mxu0 0
  %8561 = vmatpush1.bf16.msra.mxu0 0
  %8562 = vmatprep.subr.bf16.mxu0 0
  %8563 = vmatpush1.bf16.msra.mxu0 0
  %8564 = vmatprep.subr.bf16.mxu0 0
  %8565 = vmatpush1.bf16.msra.mxu0 0
  %8566 = vmatprep.subr.bf16.mxu0 0
  %8567 = vmatpush1.bf16.msra.mxu0 0
  %8568 = vmatprep.subr.bf16.mxu0 0
  %8569 = vmatpush1.bf16.msra.mxu0 0
  %8570 = vmatprep.mubr.bf16.mxu0 0
  %8571 = vmatmul.mubr.bf16.gmra.mrb[0].mxu0 %v8536
  %v8572 = vpop.f32.mrb[0].mxu0
  %v8573 = vadd.f32 %v1923, %v8572
  %v8574 = vpop.f32.mrb[0].mxu0
  %v8575 = vpop.f32.mrb[0].mxu0
  %v8576 = vadd.f32 %v1925, %v8575
  %v8577 = vpop.f32.mrb[0].mxu0
  %8578 = vdwg.mxu0
  %v8579 = vsel %vm1434, %v8573, -inf
  %8580 = vmax.xlane.f32.xlu0 %v8579
  %v8581 = vpop.xlane.xlu0 %8580
  %v8582 = vsel %vm1434, %v8576, -inf
  %8583 = vmax.xlane.f32.xlu0 %v8582
  %v8584 = vpop.xlane.xlu0 %8583
  %v8585 = vsub.f32 %v8573, %v8581
  %v8586 = vsub.f32 %v8576, %v8584
  %v8587 = vmul.f32 %v8585, 1.442695
  %v8588 = vpow.pop %v8587
  %v8589 = vmul.f32 %v8586, 1.442695
  %v8590 = vpow.pop %v8589
  %v8591 = vsel %vm1434, %v8588, 0.0
  %8592 = vadd.xlane.f32.xlu0 %v8591
  %v8593 = vpop.xlane.xlu0 %8592
  %v8594 = vsel %vm1434, %v8590, 0.0
  %8595 = vadd.xlane.f32.xlu0 %v8594
  %v8596 = vpop.xlane.xlu0 %8595
  %v8597 = vrcp.pop %v8593
  %v8598 = vrcp.pop %v8596
  %v8599 = vmul.f32 %v8588, %v8597
  %v8600 = vmul.f32 %v8590, %v8598
  %v8601 = vpack.c.bf16 %v8600, %v8599
  %v8603 = vsel %vm1434, %v8601, 0
  %8605 = vmatprep.subr.bf16.mxu0 0
  %8606 = vmatpush1.bf16.msra.mxu0 %v8493
  %8607 = vmatprep.subr.bf16.mxu0 0
  %8608 = vmatpush1.bf16.msra.mxu0 %v8494
  %8609 = vmatprep.subr.bf16.mxu0 0
  %8610 = vmatpush1.bf16.msra.mxu0 0
  %8611 = vmatprep.subr.bf16.mxu0 0
  %8612 = vmatpush1.bf16.msra.mxu0 0
  %8613 = vmatprep.subr.bf16.mxu0 0
  %8614 = vmatpush1.bf16.msra.mxu0 0
  %8615 = vmatprep.subr.bf16.mxu0 0
  %8616 = vmatpush1.bf16.msra.mxu0 0
  %8617 = vmatprep.subr.bf16.mxu0 0
  %8618 = vmatpush1.bf16.msra.mxu0 0
  %8619 = vmatprep.subr.bf16.mxu0 0
  %8620 = vmatpush1.bf16.msra.mxu0 0
  %8621 = vmatprep.subr.bf16.mxu0 0
  %8622 = vmatpush1.bf16.msra.mxu0 0
  %8623 = vmatprep.subr.bf16.mxu0 0
  %8624 = vmatpush1.bf16.msra.mxu0 0
  %8625 = vmatprep.subr.bf16.mxu0 0
  %8626 = vmatpush1.bf16.msra.mxu0 0
  %8627 = vmatprep.subr.bf16.mxu0 0
  %8628 = vmatpush1.bf16.msra.mxu0 0
  %8629 = vmatprep.subr.bf16.mxu0 0
  %8630 = vmatpush1.bf16.msra.mxu0 0
  %8631 = vmatprep.subr.bf16.mxu0 0
  %8632 = vmatpush1.bf16.msra.mxu0 0
  %8633 = vmatprep.subr.bf16.mxu0 0
  %8634 = vmatpush1.bf16.msra.mxu0 0
  %8635 = vmatprep.subr.bf16.mxu0 0
  %8636 = vmatpush1.bf16.msra.mxu0 0
  %8637 = vmatprep.mubr.bf16.mxu0 0
  %8638 = vmatmul.mubr.bf16.gmra.mrb[0].mxu0 %v8603
  %v8639 = vpop.f32.mrb[0].mxu0
  %v8640 = vadd.f32 0.0, %v8639
  %v8641 = vpop.f32.mrb[0].mxu0
  %v8642 = vpop.f32.mrb[0].mxu0
  %v8643 = vadd.f32 0.0, %v8642
  %v8644 = vpop.f32.mrb[0].mxu0
  %8645 = vdwg.mxu0
  %8647 = vrot.lane.b32.xlu0 %v8492, 112
  %v8648 = vpop.permute.xlu0 %8647
  %v8650 = vsel %vm450, %v8648, 0
  %8652 = vmatprep.subr.bf16.mxu0 0
  %8653 = vmatpush1.bf16.msra.mxu0 %v8528
  %8654 = vmatprep.subr.bf16.mxu0 0
  %8655 = vmatpush1.bf16.msra.mxu0 0
  %8656 = vmatprep.subr.bf16.mxu0 0
  %8657 = vmatpush1.bf16.msra.mxu0 0
  %8658 = vmatprep.subr.bf16.mxu0 0
  %8659 = vmatpush1.bf16.msra.mxu0 0
  %8660 = vmatprep.subr.bf16.mxu0 0
  %8661 = vmatpush1.bf16.msra.mxu0 0
  %8662 = vmatprep.subr.bf16.mxu0 0
  %8663 = vmatpush1.bf16.msra.mxu0 0
  %8664 = vmatprep.subr.bf16.mxu0 0
  %8665 = vmatpush1.bf16.msra.mxu0 0
  %8666 = vmatprep.subr.bf16.mxu0 0
  %8667 = vmatpush1.bf16.msra.mxu0 0
  %8668 = vmatprep.subr.bf16.mxu0 0
  %8669 = vmatpush1.bf16.msra.mxu0 0
  %8670 = vmatprep.subr.bf16.mxu0 0
  %8671 = vmatpush1.bf16.msra.mxu0 0
  %8672 = vmatprep.subr.bf16.mxu0 0
  %8673 = vmatpush1.bf16.msra.mxu0 0
  %8674 = vmatprep.subr.bf16.mxu0 0
  %8675 = vmatpush1.bf16.msra.mxu0 0
  %8676 = vmatprep.subr.bf16.mxu0 0
  %8677 = vmatpush1.bf16.msra.mxu0 0
  %8678 = vmatprep.subr.bf16.mxu0 0
  %8679 = vmatpush1.bf16.msra.mxu0 0
  %8680 = vmatprep.subr.bf16.mxu0 0
  %8681 = vmatpush1.bf16.msra.mxu0 0
  %8682 = vmatprep.subr.bf16.mxu0 0
  %8683 = vmatpush1.bf16.msra.mxu0 0
  %8684 = vmatprep.mubr.bf16.mxu0 0
  %8685 = vmatmul.mubr.bf16.gmra.mrb[0].mxu0 %v8650
  %v8686 = vpop.f32.mrb[0].mxu0
  %v8687 = vadd.f32 %v1923, %v8686
  %v8688 = vpop.f32.mrb[0].mxu0
  %v8689 = vpop.f32.mrb[0].mxu0
  %v8690 = vadd.f32 %v1925, %v8689
  %v8691 = vpop.f32.mrb[0].mxu0
  %8692 = vdwg.mxu0
  %v8693 = vsel %vm1434, %v8687, -inf
  %8694 = vmax.xlane.f32.xlu0 %v8693
  %v8695 = vpop.xlane.xlu0 %8694
  %v8696 = vsel %vm1434, %v8690, -inf
  %8697 = vmax.xlane.f32.xlu0 %v8696
  %v8698 = vpop.xlane.xlu0 %8697
  %v8699 = vsub.f32 %v8687, %v8695
  %v8700 = vsub.f32 %v8690, %v8698
  %v8701 = vmul.f32 %v8699, 1.442695
  %v8702 = vpow.pop %v8701
  %v8703 = vmul.f32 %v8700, 1.442695
  %v8704 = vpow.pop %v8703
  %v8705 = vsel %vm1434, %v8702, 0.0
  %8706 = vadd.xlane.f32.xlu0 %v8705
  %v8707 = vpop.xlane.xlu0 %8706
  %v8708 = vsel %vm1434, %v8704, 0.0
  %8709 = vadd.xlane.f32.xlu0 %v8708
  %v8710 = vpop.xlane.xlu0 %8709
  %v8711 = vrcp.pop %v8707
  %v8712 = vrcp.pop %v8710
  %v8713 = vmul.f32 %v8702, %v8711
  %v8714 = vmul.f32 %v8704, %v8712
  %v8715 = vpack.c.bf16 %v8714, %v8713
  %8718 = vrot.lane.b32.xlu0 %v8493, 112
  %v8719 = vpop.permute.xlu0 %8718
  %8720 = vrot.lane.b32.xlu0 %v8494, 112
  %v8721 = vpop.permute.xlu0 %8720
  %v8725 = vsel %vm1434, %v8715, 0
  %8727 = vmatprep.subr.bf16.mxu0 0
  %8728 = vmatpush1.bf16.msra.mxu0 %v8719
  %8729 = vmatprep.subr.bf16.mxu0 0
  %8730 = vmatpush1.bf16.msra.mxu0 %v8721
  %8731 = vmatprep.subr.bf16.mxu0 0
  %8732 = vmatpush1.bf16.msra.mxu0 0
  %8733 = vmatprep.subr.bf16.mxu0 0
  %8734 = vmatpush1.bf16.msra.mxu0 0
  %8735 = vmatprep.subr.bf16.mxu0 0
  %8736 = vmatpush1.bf16.msra.mxu0 0
  %8737 = vmatprep.subr.bf16.mxu0 0
  %8738 = vmatpush1.bf16.msra.mxu0 0
  %8739 = vmatprep.subr.bf16.mxu0 0
  %8740 = vmatpush1.bf16.msra.mxu0 0
  %8741 = vmatprep.subr.bf16.mxu0 0
  %8742 = vmatpush1.bf16.msra.mxu0 0
  %8743 = vmatprep.subr.bf16.mxu0 0
  %8744 = vmatpush1.bf16.msra.mxu0 0
  %8745 = vmatprep.subr.bf16.mxu0 0
  %8746 = vmatpush1.bf16.msra.mxu0 0
  %8747 = vmatprep.subr.bf16.mxu0 0
  %8748 = vmatpush1.bf16.msra.mxu0 0
  %8749 = vmatprep.subr.bf16.mxu0 0
  %8750 = vmatpush1.bf16.msra.mxu0 0
  %8751 = vmatprep.subr.bf16.mxu0 0
  %8752 = vmatpush1.bf16.msra.mxu0 0
  %8753 = vmatprep.subr.bf16.mxu0 0
  %8754 = vmatpush1.bf16.msra.mxu0 0
  %8755 = vmatprep.subr.bf16.mxu0 0
  %8756 = vmatpush1.bf16.msra.mxu0 0
  %8757 = vmatprep.subr.bf16.mxu0 0
  %8758 = vmatpush1.bf16.msra.mxu0 0
  %8759 = vmatprep.mubr.bf16.mxu0 0
  %8760 = vmatmul.mubr.bf16.gmra.mrb[0].mxu0 %v8725
  %v8761 = vpop.f32.mrb[0].mxu0
  %v8762 = vadd.f32 0.0, %v8761
  %v8763 = vpop.f32.mrb[0].mxu0
  %v8764 = vpop.f32.mrb[0].mxu0
  %v8765 = vadd.f32 0.0, %v8764
  %v8766 = vpop.f32.mrb[0].mxu0
  %8767 = vdwg.mxu0
  %8768 = vrot.lane.b32.xlu0 %v8492, 96
  %v8769 = vpop.permute.xlu0 %8768
  %v8771 = vsel %vm450, %v8769, 0
  %8773 = vmatprep.subr.bf16.mxu0 0
  %8774 = vmatpush1.bf16.msra.mxu0 %v8529
  %8775 = vmatprep.subr.bf16.mxu0 0
  %8776 = vmatpush1.bf16.msra.mxu0 0
  %8777 = vmatprep.subr.bf16.mxu0 0
  %8778 = vmatpush1.bf16.msra.mxu0 0
  %8779 = vmatprep.subr.bf16.mxu0 0
  %8780 = vmatpush1.bf16.msra.mxu0 0
  %8781 = vmatprep.subr.bf16.mxu0 0
  %8782 = vmatpush1.bf16.msra.mxu0 0
  %8783 = vmatprep.subr.bf16.mxu0 0
  %8784 = vmatpush1.bf16.msra.mxu0 0
  %8785 = vmatprep.subr.bf16.mxu0 0
  %8786 = vmatpush1.bf16.msra.mxu0 0
  %8787 = vmatprep.subr.bf16.mxu0 0
  %8788 = vmatpush1.bf16.msra.mxu0 0
  %8789 = vmatprep.subr.bf16.mxu0 0
  %8790 = vmatpush1.bf16.msra.mxu0 0
  %8791 = vmatprep.subr.bf16.mxu0 0
  %8792 = vmatpush1.bf16.msra.mxu0 0
  %8793 = vmatprep.subr.bf16.mxu0 0
  %8794 = vmatpush1.bf16.msra.mxu0 0
  %8795 = vmatprep.subr.bf16.mxu0 0
  %8796 = vmatpush1.bf16.msra.mxu0 0
  %8797 = vmatprep.subr.bf16.mxu0 0
  %8798 = vmatpush1.bf16.msra.mxu0 0
  %8799 = vmatprep.subr.bf16.mxu0 0
  %8800 = vmatpush1.bf16.msra.mxu0 0
  %8801 = vmatprep.subr.bf16.mxu0 0
  %8802 = vmatpush1.bf16.msra.mxu0 0
  %8803 = vmatprep.subr.bf16.mxu0 0
  %8804 = vmatpush1.bf16.msra.mxu0 0
  %8805 = vmatprep.mubr.bf16.mxu0 0
  %8806 = vmatmul.mubr.bf16.gmra.mrb[0].mxu0 %v8771
  %v8807 = vpop.f32.mrb[0].mxu0
  %v8808 = vadd.f32 %v1923, %v8807
  %v8809 = vpop.f32.mrb[0].mxu0
  %v8810 = vpop.f32.mrb[0].mxu0
  %v8811 = vadd.f32 %v1925, %v8810
  %v8812 = vpop.f32.mrb[0].mxu0
  %8813 = vdwg.mxu0
  %v8814 = vsel %vm1434, %v8808, -inf
  %8815 = vmax.xlane.f32.xlu0 %v8814
  %v8816 = vpop.xlane.xlu0 %8815
  %v8817 = vsel %vm1434, %v8811, -inf
  %8818 = vmax.xlane.f32.xlu0 %v8817
  %v8819 = vpop.xlane.xlu0 %8818
  %v8820 = vsub.f32 %v8808, %v8816
  %v8821 = vsub.f32 %v8811, %v8819
  %v8822 = vmul.f32 %v8820, 1.442695
  %v8823 = vpow.pop %v8822
  %v8824 = vmul.f32 %v8821, 1.442695
  %v8825 = vpow.pop %v8824
  %v8826 = vsel %vm1434, %v8823, 0.0
  %8827 = vadd.xlane.f32.xlu0 %v8826
  %v8828 = vpop.xlane.xlu0 %8827
  %v8829 = vsel %vm1434, %v8825, 0.0
  %8830 = vadd.xlane.f32.xlu0 %v8829
  %v8831 = vpop.xlane.xlu0 %8830
  %v8832 = vrcp.pop %v8828
  %v8833 = vrcp.pop %v8831
  %v8834 = vmul.f32 %v8823, %v8832
  %v8835 = vmul.f32 %v8825, %v8833
  %v8836 = vpack.c.bf16 %v8835, %v8834
  %8837 = vrot.lane.b32.xlu0 %v8493, 96
  %v8838 = vpop.permute.xlu0 %8837
  %8839 = vrot.lane.b32.xlu0 %v8494, 96
  %v8840 = vpop.permute.xlu0 %8839
  %v8844 = vsel %vm1434, %v8836, 0
  %8846 = vmatprep.subr.bf16.mxu0 0
  %8847 = vmatpush1.bf16.msra.mxu0 %v8838
  %8848 = vmatprep.subr.bf16.mxu0 0
  %8849 = vmatpush1.bf16.msra.mxu0 %v8840
  %8850 = vmatprep.subr.bf16.mxu0 0
  %8851 = vmatpush1.bf16.msra.mxu0 0
  %8852 = vmatprep.subr.bf16.mxu0 0
  %8853 = vmatpush1.bf16.msra.mxu0 0
  %8854 = vmatprep.subr.bf16.mxu0 0
  %8855 = vmatpush1.bf16.msra.mxu0 0
  %8856 = vmatprep.subr.bf16.mxu0 0
  %8857 = vmatpush1.bf16.msra.mxu0 0
  %8858 = vmatprep.subr.bf16.mxu0 0
  %8859 = vmatpush1.bf16.msra.mxu0 0
  %8860 = vmatprep.subr.bf16.mxu0 0
  %8861 = vmatpush1.bf16.msra.mxu0 0
  %8862 = vmatprep.subr.bf16.mxu0 0
  %8863 = vmatpush1.bf16.msra.mxu0 0
  %8864 = vmatprep.subr.bf16.mxu0 0
  %8865 = vmatpush1.bf16.msra.mxu0 0
  %8866 = vmatprep.subr.bf16.mxu0 0
  %8867 = vmatpush1.bf16.msra.mxu0 0
  %8868 = vmatprep.subr.bf16.mxu0 0
  %8869 = vmatpush1.bf16.msra.mxu0 0
  %8870 = vmatprep.subr.bf16.mxu0 0
  %8871 = vmatpush1.bf16.msra.mxu0 0
  %8872 = vmatprep.subr.bf16.mxu0 0
  %8873 = vmatpush1.bf16.msra.mxu0 0
  %8874 = vmatprep.subr.bf16.mxu0 0
  %8875 = vmatpush1.bf16.msra.mxu0 0
  %8876 = vmatprep.subr.bf16.mxu0 0
  %8877 = vmatpush1.bf16.msra.mxu0 0
  %8878 = vmatprep.mubr.bf16.mxu0 0
  %8879 = vmatmul.mubr.bf16.gmra.mrb[0].mxu0 %v8844
  %v8880 = vpop.f32.mrb[0].mxu0
  %v8881 = vadd.f32 0.0, %v8880
  %v8882 = vpop.f32.mrb[0].mxu0
  %v8883 = vpop.f32.mrb[0].mxu0
  %v8884 = vadd.f32 0.0, %v8883
  %v8885 = vpop.f32.mrb[0].mxu0
  %8886 = vdwg.mxu0
  %8887 = vrot.lane.b32.xlu0 %v8492, 80
  %v8888 = vpop.permute.xlu0 %8887
  %v8890 = vsel %vm450, %v8888, 0
  %8892 = vmatprep.subr.bf16.mxu0 0
  %8893 = vmatpush1.bf16.msra.mxu0 %v8530
  %8894 = vmatprep.subr.bf16.mxu0 0
  %8895 = vmatpush1.bf16.msra.mxu0 0
  %8896 = vmatprep.subr.bf16.mxu0 0
  %8897 = vmatpush1.bf16.msra.mxu0 0
  %8898 = vmatprep.subr.bf16.mxu0 0
  %8899 = vmatpush1.bf16.msra.mxu0 0
  %8900 = vmatprep.subr.bf16.mxu0 0
  %8901 = vmatpush1.bf16.msra.mxu0 0
  %8902 = vmatprep.subr.bf16.mxu0 0
  %8903 = vmatpush1.bf16.msra.mxu0 0
  %8904 = vmatprep.subr.bf16.mxu0 0
  %8905 = vmatpush1.bf16.msra.mxu0 0
  %8906 = vmatprep.subr.bf16.mxu0 0
  %8907 = vmatpush1.bf16.msra.mxu0 0
  %8908 = vmatprep.subr.bf16.mxu0 0
  %8909 = vmatpush1.bf16.msra.mxu0 0
  %8910 = vmatprep.subr.bf16.mxu0 0
  %8911 = vmatpush1.bf16.msra.mxu0 0
  %8912 = vmatprep.subr.bf16.mxu0 0
  %8913 = vmatpush1.bf16.msra.mxu0 0
  %8914 = vmatprep.subr.bf16.mxu0 0
  %8915 = vmatpush1.bf16.msra.mxu0 0
  %8916 = vmatprep.subr.bf16.mxu0 0
  %8917 = vmatpush1.bf16.msra.mxu0 0
  %8918 = vmatprep.subr.bf16.mxu0 0
  %8919 = vmatpush1.bf16.msra.mxu0 0
  %8920 = vmatprep.subr.bf16.mxu0 0
  %8921 = vmatpush1.bf16.msra.mxu0 0
  %8922 = vmatprep.subr.bf16.mxu0 0
  %8923 = vmatpush1.bf16.msra.mxu0 0
  %8924 = vmatprep.mubr.bf16.mxu0 0
  %8925 = vmatmul.mubr.bf16.gmra.mrb[0].mxu0 %v8890
  %v8926 = vpop.f32.mrb[0].mxu0
  %v8927 = vadd.f32 %v1923, %v8926
  %v8928 = vpop.f32.mrb[0].mxu0
  %v8929 = vpop.f32.mrb[0].mxu0
  %v8930 = vadd.f32 %v1925, %v8929
  %v8931 = vpop.f32.mrb[0].mxu0
  %8932 = vdwg.mxu0
  %v8933 = vsel %vm1434, %v8927, -inf
  %8934 = vmax.xlane.f32.xlu0 %v8933
  %v8935 = vpop.xlane.xlu0 %8934
  %v8936 = vsel %vm1434, %v8930, -inf
  %8937 = vmax.xlane.f32.xlu0 %v8936
  %v8938 = vpop.xlane.xlu0 %8937
  %v8939 = vsub.f32 %v8927, %v8935
  %v8940 = vsub.f32 %v8930, %v8938
  %v8941 = vmul.f32 %v8939, 1.442695
  %v8942 = vpow.pop %v8941
  %v8943 = vmul.f32 %v8940, 1.442695
  %v8944 = vpow.pop %v8943
  %v8945 = vsel %vm1434, %v8942, 0.0
  %8946 = vadd.xlane.f32.xlu0 %v8945
  %v8947 = vpop.xlane.xlu0 %8946
  %v8948 = vsel %vm1434, %v8944, 0.0
  %8949 = vadd.xlane.f32.xlu0 %v8948
  %v8950 = vpop.xlane.xlu0 %8949
  %v8951 = vrcp.pop %v8947
  %v8952 = vrcp.pop %v8950
  %v8953 = vmul.f32 %v8942, %v8951
  %v8954 = vmul.f32 %v8944, %v8952
  %v8955 = vpack.c.bf16 %v8954, %v8953
  %8956 = vrot.lane.b32.xlu0 %v8493, 80
  %v8957 = vpop.permute.xlu0 %8956
  %8958 = vrot.lane.b32.xlu0 %v8494, 80
  %v8959 = vpop.permute.xlu0 %8958
  %v8963 = vsel %vm1434, %v8955, 0
  %8965 = vmatprep.subr.bf16.mxu0 0
  %8966 = vmatpush1.bf16.msra.mxu0 %v8957
  %8967 = vmatprep.subr.bf16.mxu0 0
  %8968 = vmatpush1.bf16.msra.mxu0 %v8959
  %8969 = vmatprep.subr.bf16.mxu0 0
  %8970 = vmatpush1.bf16.msra.mxu0 0
  %8971 = vmatprep.subr.bf16.mxu0 0
  %8972 = vmatpush1.bf16.msra.mxu0 0
  %8973 = vmatprep.subr.bf16.mxu0 0
  %8974 = vmatpush1.bf16.msra.mxu0 0
  %8975 = vmatprep.subr.bf16.mxu0 0
  %8976 = vmatpush1.bf16.msra.mxu0 0
  %8977 = vmatprep.subr.bf16.mxu0 0
  %8978 = vmatpush1.bf16.msra.mxu0 0
  %8979 = vmatprep.subr.bf16.mxu0 0
  %8980 = vmatpush1.bf16.msra.mxu0 0
  %8981 = vmatprep.subr.bf16.mxu0 0
  %8982 = vmatpush1.bf16.msra.mxu0 0
  %8983 = vmatprep.subr.bf16.mxu0 0
  %8984 = vmatpush1.bf16.msra.mxu0 0
  %8985 = vmatprep.subr.bf16.mxu0 0
  %8986 = vmatpush1.bf16.msra.mxu0 0
  %8987 = vmatprep.subr.bf16.mxu0 0
  %8988 = vmatpush1.bf16.msra.mxu0 0
  %8989 = vmatprep.subr.bf16.mxu0 0
  %8990 = vmatpush1.bf16.msra.mxu0 0
  %8991 = vmatprep.subr.bf16.mxu0 0
  %8992 = vmatpush1.bf16.msra.mxu0 0
  %8993 = vmatprep.subr.bf16.mxu0 0
  %8994 = vmatpush1.bf16.msra.mxu0 0
  %8995 = vmatprep.subr.bf16.mxu0 0
  %8996 = vmatpush1.bf16.msra.mxu0 0
  %8997 = vmatprep.mubr.bf16.mxu0 0
  %8998 = vmatmul.mubr.bf16.gmra.mrb[0].mxu0 %v8963
  %v8999 = vpop.f32.mrb[0].mxu0
  %v9000 = vadd.f32 0.0, %v8999
  %v9001 = vpop.f32.mrb[0].mxu0
  %v9002 = vpop.f32.mrb[0].mxu0
  %v9003 = vadd.f32 0.0, %v9002
  %v9004 = vpop.f32.mrb[0].mxu0
  %9005 = vdwg.mxu0
  %9006 = vrot.lane.b32.xlu0 %v8492, 64
  %v9007 = vpop.permute.xlu0 %9006
  %v9009 = vsel %vm450, %v9007, 0
  %9011 = vmatprep.subr.bf16.mxu0 0
  %9012 = vmatpush1.bf16.msra.mxu0 %v8531
  %9013 = vmatprep.subr.bf16.mxu0 0
  %9014 = vmatpush1.bf16.msra.mxu0 0
  %9015 = vmatprep.subr.bf16.mxu0 0
  %9016 = vmatpush1.bf16.msra.mxu0 0
  %9017 = vmatprep.subr.bf16.mxu0 0
  %9018 = vmatpush1.bf16.msra.mxu0 0
  %9019 = vmatprep.subr.bf16.mxu0 0
  %9020 = vmatpush1.bf16.msra.mxu0 0
  %9021 = vmatprep.subr.bf16.mxu0 0
  %9022 = vmatpush1.bf16.msra.mxu0 0
  %9023 = vmatprep.subr.bf16.mxu0 0
  %9024 = vmatpush1.bf16.msra.mxu0 0
  %9025 = vmatprep.subr.bf16.mxu0 0
  %9026 = vmatpush1.bf16.msra.mxu0 0
  %9027 = vmatprep.subr.bf16.mxu0 0
  %9028 = vmatpush1.bf16.msra.mxu0 0
  %9029 = vmatprep.subr.bf16.mxu0 0
  %9030 = vmatpush1.bf16.msra.mxu0 0
  %9031 = vmatprep.subr.bf16.mxu0 0
  %9032 = vmatpush1.bf16.msra.mxu0 0
  %9033 = vmatprep.subr.bf16.mxu0 0
  %9034 = vmatpush1.bf16.msra.mxu0 0
  %9035 = vmatprep.subr.bf16.mxu0 0
  %9036 = vmatpush1.bf16.msra.mxu0 0
  %9037 = vmatprep.subr.bf16.mxu0 0
  %9038 = vmatpush1.bf16.msra.mxu0 0
  %9039 = vmatprep.subr.bf16.mxu0 0
  %9040 = vmatpush1.bf16.msra.mxu0 0
  %9041 = vmatprep.subr.bf16.mxu0 0
  %9042 = vmatpush1.bf16.msra.mxu0 0
  %9043 = vmatprep.mubr.bf16.mxu0 0
  %9044 = vmatmul.mubr.bf16.gmra.mrb[0].mxu0 %v9009
  %v9045 = vpop.f32.mrb[0].mxu0
  %v9046 = vadd.f32 %v1923, %v9045
  %v9047 = vpop.f32.mrb[0].mxu0
  %v9048 = vpop.f32.mrb[0].mxu0
  %v9049 = vadd.f32 %v1925, %v9048
  %v9050 = vpop.f32.mrb[0].mxu0
  %9051 = vdwg.mxu0
  %v9052 = vsel %vm1434, %v9046, -inf
  %9053 = vmax.xlane.f32.xlu0 %v9052
  %v9054 = vpop.xlane.xlu0 %9053
  %v9055 = vsel %vm1434, %v9049, -inf
  %9056 = vmax.xlane.f32.xlu0 %v9055
  %v9057 = vpop.xlane.xlu0 %9056
  %v9058 = vsub.f32 %v9046, %v9054
  %v9059 = vsub.f32 %v9049, %v9057
  %v9060 = vmul.f32 %v9058, 1.442695
  %v9061 = vpow.pop %v9060
  %v9062 = vmul.f32 %v9059, 1.442695
  %v9063 = vpow.pop %v9062
  %v9064 = vsel %vm1434, %v9061, 0.0
  %9065 = vadd.xlane.f32.xlu0 %v9064
  %v9066 = vpop.xlane.xlu0 %9065
  %v9067 = vsel %vm1434, %v9063, 0.0
  %9068 = vadd.xlane.f32.xlu0 %v9067
  %v9069 = vpop.xlane.xlu0 %9068
  %v9070 = vrcp.pop %v9066
  %v9071 = vrcp.pop %v9069
  %v9072 = vmul.f32 %v9061, %v9070
  %v9073 = vmul.f32 %v9063, %v9071
  %v9074 = vpack.c.bf16 %v9073, %v9072
  %9075 = vrot.lane.b32.xlu0 %v8493, 64
  %v9076 = vpop.permute.xlu0 %9075
  %9077 = vrot.lane.b32.xlu0 %v8494, 64
  %v9078 = vpop.permute.xlu0 %9077
  %v9082 = vsel %vm1434, %v9074, 0
  %9084 = vmatprep.subr.bf16.mxu0 0
  %9085 = vmatpush1.bf16.msra.mxu0 %v9076
  %9086 = vmatprep.subr.bf16.mxu0 0
  %9087 = vmatpush1.bf16.msra.mxu0 %v9078
  %9088 = vmatprep.subr.bf16.mxu0 0
  %9089 = vmatpush1.bf16.msra.mxu0 0
  %9090 = vmatprep.subr.bf16.mxu0 0
  %9091 = vmatpush1.bf16.msra.mxu0 0
  %9092 = vmatprep.subr.bf16.mxu0 0
  %9093 = vmatpush1.bf16.msra.mxu0 0
  %9094 = vmatprep.subr.bf16.mxu0 0
  %9095 = vmatpush1.bf16.msra.mxu0 0
  %9096 = vmatprep.subr.bf16.mxu0 0
  %9097 = vmatpush1.bf16.msra.mxu0 0
  %9098 = vmatprep.subr.bf16.mxu0 0
  %9099 = vmatpush1.bf16.msra.mxu0 0
  %9100 = vmatprep.subr.bf16.mxu0 0
  %9101 = vmatpush1.bf16.msra.mxu0 0
  %9102 = vmatprep.subr.bf16.mxu0 0
  %9103 = vmatpush1.bf16.msra.mxu0 0
  %9104 = vmatprep.subr.bf16.mxu0 0
  %9105 = vmatpush1.bf16.msra.mxu0 0
  %9106 = vmatprep.subr.bf16.mxu0 0
  %9107 = vmatpush1.bf16.msra.mxu0 0
  %9108 = vmatprep.subr.bf16.mxu0 0
  %9109 = vmatpush1.bf16.msra.mxu0 0
  %9110 = vmatprep.subr.bf16.mxu0 0
  %9111 = vmatpush1.bf16.msra.mxu0 0
  %9112 = vmatprep.subr.bf16.mxu0 0
  %9113 = vmatpush1.bf16.msra.mxu0 0
  %9114 = vmatprep.subr.bf16.mxu0 0
  %9115 = vmatpush1.bf16.msra.mxu0 0
  %9116 = vmatprep.mubr.bf16.mxu0 0
  %9117 = vmatmul.mubr.bf16.gmra.mrb[0].mxu0 %v9082
  %v9118 = vpop.f32.mrb[0].mxu0
  %v9119 = vadd.f32 0.0, %v9118
  %v9120 = vpop.f32.mrb[0].mxu0
  %v9121 = vpop.f32.mrb[0].mxu0
  %v9122 = vadd.f32 0.0, %v9121
  %v9123 = vpop.f32.mrb[0].mxu0
  %9124 = vdwg.mxu0
  %9125 = vrot.lane.b32.xlu0 %v8492, 48
  %v9126 = vpop.permute.xlu0 %9125
  %v9128 = vsel %vm450, %v9126, 0
  %9130 = vmatprep.subr.bf16.mxu0 0
  %9131 = vmatpush1.bf16.msra.mxu0 %v8532
  %9132 = vmatprep.subr.bf16.mxu0 0
  %9133 = vmatpush1.bf16.msra.mxu0 0
  %9134 = vmatprep.subr.bf16.mxu0 0
  %9135 = vmatpush1.bf16.msra.mxu0 0
  %9136 = vmatprep.subr.bf16.mxu0 0
  %9137 = vmatpush1.bf16.msra.mxu0 0
  %9138 = vmatprep.subr.bf16.mxu0 0
  %9139 = vmatpush1.bf16.msra.mxu0 0
  %9140 = vmatprep.subr.bf16.mxu0 0
  %9141 = vmatpush1.bf16.msra.mxu0 0
  %9142 = vmatprep.subr.bf16.mxu0 0
  %9143 = vmatpush1.bf16.msra.mxu0 0
  %9144 = vmatprep.subr.bf16.mxu0 0
  %9145 = vmatpush1.bf16.msra.mxu0 0
  %9146 = vmatprep.subr.bf16.mxu0 0
  %9147 = vmatpush1.bf16.msra.mxu0 0
  %9148 = vmatprep.subr.bf16.mxu0 0
  %9149 = vmatpush1.bf16.msra.mxu0 0
  %9150 = vmatprep.subr.bf16.mxu0 0
  %9151 = vmatpush1.bf16.msra.mxu0 0
  %9152 = vmatprep.subr.bf16.mxu0 0
  %9153 = vmatpush1.bf16.msra.mxu0 0
  %9154 = vmatprep.subr.bf16.mxu0 0
  %9155 = vmatpush1.bf16.msra.mxu0 0
  %9156 = vmatprep.subr.bf16.mxu0 0
  %9157 = vmatpush1.bf16.msra.mxu0 0
  %9158 = vmatprep.subr.bf16.mxu0 0
  %9159 = vmatpush1.bf16.msra.mxu0 0
  %9160 = vmatprep.subr.bf16.mxu0 0
  %9161 = vmatpush1.bf16.msra.mxu0 0
  %9162 = vmatprep.mubr.bf16.mxu0 0
  %9163 = vmatmul.mubr.bf16.gmra.mrb[0].mxu0 %v9128
  %v9164 = vpop.f32.mrb[0].mxu0
  %v9165 = vadd.f32 %v1923, %v9164
  %v9166 = vpop.f32.mrb[0].mxu0
  %v9167 = vpop.f32.mrb[0].mxu0
  %v9168 = vadd.f32 %v1925, %v9167
  %v9169 = vpop.f32.mrb[0].mxu0
  %9170 = vdwg.mxu0
  %v9171 = vsel %vm1434, %v9165, -inf
  %9172 = vmax.xlane.f32.xlu0 %v9171
  %v9173 = vpop.xlane.xlu0 %9172
  %v9174 = vsel %vm1434, %v9168, -inf
  %9175 = vmax.xlane.f32.xlu0 %v9174
  %v9176 = vpop.xlane.xlu0 %9175
  %v9177 = vsub.f32 %v9165, %v9173
  %v9178 = vsub.f32 %v9168, %v9176
  %v9179 = vmul.f32 %v9177, 1.442695
  %v9180 = vpow.pop %v9179
  %v9181 = vmul.f32 %v9178, 1.442695
  %v9182 = vpow.pop %v9181
  %v9183 = vsel %vm1434, %v9180, 0.0
  %9184 = vadd.xlane.f32.xlu0 %v9183
  %v9185 = vpop.xlane.xlu0 %9184
  %v9186 = vsel %vm1434, %v9182, 0.0
  %9187 = vadd.xlane.f32.xlu0 %v9186
  %v9188 = vpop.xlane.xlu0 %9187
  %v9189 = vrcp.pop %v9185
  %v9190 = vrcp.pop %v9188
  %v9191 = vmul.f32 %v9180, %v9189
  %v9192 = vmul.f32 %v9182, %v9190
  %v9193 = vpack.c.bf16 %v9192, %v9191
  %9194 = vrot.lane.b32.xlu0 %v8493, 48
  %v9195 = vpop.permute.xlu0 %9194
  %9196 = vrot.lane.b32.xlu0 %v8494, 48
  %v9197 = vpop.permute.xlu0 %9196
  %v9201 = vsel %vm1434, %v9193, 0
  %9203 = vmatprep.subr.bf16.mxu0 0
  %9204 = vmatpush1.bf16.msra.mxu0 %v9195
  %9205 = vmatprep.subr.bf16.mxu0 0
  %9206 = vmatpush1.bf16.msra.mxu0 %v9197
  %9207 = vmatprep.subr.bf16.mxu0 0
  %9208 = vmatpush1.bf16.msra.mxu0 0
  %9209 = vmatprep.subr.bf16.mxu0 0
  %9210 = vmatpush1.bf16.msra.mxu0 0
  %9211 = vmatprep.subr.bf16.mxu0 0
  %9212 = vmatpush1.bf16.msra.mxu0 0
  %9213 = vmatprep.subr.bf16.mxu0 0
  %9214 = vmatpush1.bf16.msra.mxu0 0
  %9215 = vmatprep.subr.bf16.mxu0 0
  %9216 = vmatpush1.bf16.msra.mxu0 0
  %9217 = vmatprep.subr.bf16.mxu0 0
  %9218 = vmatpush1.bf16.msra.mxu0 0
  %9219 = vmatprep.subr.bf16.mxu0 0
  %9220 = vmatpush1.bf16.msra.mxu0 0
  %9221 = vmatprep.subr.bf16.mxu0 0
  %9222 = vmatpush1.bf16.msra.mxu0 0
  %9223 = vmatprep.subr.bf16.mxu0 0
  %9224 = vmatpush1.bf16.msra.mxu0 0
  %9225 = vmatprep.subr.bf16.mxu0 0
  %9226 = vmatpush1.bf16.msra.mxu0 0
  %9227 = vmatprep.subr.bf16.mxu0 0
  %9228 = vmatpush1.bf16.msra.mxu0 0
  %9229 = vmatprep.subr.bf16.mxu0 0
  %9230 = vmatpush1.bf16.msra.mxu0 0
  %9231 = vmatprep.subr.bf16.mxu0 0
  %9232 = vmatpush1.bf16.msra.mxu0 0
  %9233 = vmatprep.subr.bf16.mxu0 0
  %9234 = vmatpush1.bf16.msra.mxu0 0
  %9235 = vmatprep.mubr.bf16.mxu0 0
  %9236 = vmatmul.mubr.bf16.gmra.mrb[0].mxu0 %v9201
  %v9237 = vpop.f32.mrb[0].mxu0
  %v9238 = vadd.f32 0.0, %v9237
  %v9239 = vpop.f32.mrb[0].mxu0
  %v9240 = vpop.f32.mrb[0].mxu0
  %v9241 = vadd.f32 0.0, %v9240
  %v9242 = vpop.f32.mrb[0].mxu0
  %9243 = vdwg.mxu0
  %9244 = vrot.lane.b32.xlu0 %v8492, 32
  %v9245 = vpop.permute.xlu0 %9244
  %v9247 = vsel %vm450, %v9245, 0
  %9249 = vmatprep.subr.bf16.mxu0 0
  %9250 = vmatpush1.bf16.msra.mxu0 %v8533
  %9251 = vmatprep.subr.bf16.mxu0 0
  %9252 = vmatpush1.bf16.msra.mxu0 0
  %9253 = vmatprep.subr.bf16.mxu0 0
  %9254 = vmatpush1.bf16.msra.mxu0 0
  %9255 = vmatprep.subr.bf16.mxu0 0
  %9256 = vmatpush1.bf16.msra.mxu0 0
  %9257 = vmatprep.subr.bf16.mxu0 0
  %9258 = vmatpush1.bf16.msra.mxu0 0
  %9259 = vmatprep.subr.bf16.mxu0 0
  %9260 = vmatpush1.bf16.msra.mxu0 0
  %9261 = vmatprep.subr.bf16.mxu0 0
  %9262 = vmatpush1.bf16.msra.mxu0 0
  %9263 = vmatprep.subr.bf16.mxu0 0
  %9264 = vmatpush1.bf16.msra.mxu0 0
  %9265 = vmatprep.subr.bf16.mxu0 0
  %9266 = vmatpush1.bf16.msra.mxu0 0
  %9267 = vmatprep.subr.bf16.mxu0 0
  %9268 = vmatpush1.bf16.msra.mxu0 0
  %9269 = vmatprep.subr.bf16.mxu0 0
  %9270 = vmatpush1.bf16.msra.mxu0 0
  %9271 = vmatprep.subr.bf16.mxu0 0
  %9272 = vmatpush1.bf16.msra.mxu0 0
  %9273 = vmatprep.subr.bf16.mxu0 0
  %9274 = vmatpush1.bf16.msra.mxu0 0
  %9275 = vmatprep.subr.bf16.mxu0 0
  %9276 = vmatpush1.bf16.msra.mxu0 0
  %9277 = vmatprep.subr.bf16.mxu0 0
  %9278 = vmatpush1.bf16.msra.mxu0 0
  %9279 = vmatprep.subr.bf16.mxu0 0
  %9280 = vmatpush1.bf16.msra.mxu0 0
  %9281 = vmatprep.mubr.bf16.mxu0 0
  %9282 = vmatmul.mubr.bf16.gmra.mrb[0].mxu0 %v9247
  %v9283 = vpop.f32.mrb[0].mxu0
  %v9284 = vadd.f32 %v1923, %v9283
  %v9285 = vpop.f32.mrb[0].mxu0
  %v9286 = vpop.f32.mrb[0].mxu0
  %v9287 = vadd.f32 %v1925, %v9286
  %v9288 = vpop.f32.mrb[0].mxu0
  %9289 = vdwg.mxu0
  %v9290 = vsel %vm1434, %v9284, -inf
  %9291 = vmax.xlane.f32.xlu0 %v9290
  %v9292 = vpop.xlane.xlu0 %9291
  %v9293 = vsel %vm1434, %v9287, -inf
  %9294 = vmax.xlane.f32.xlu0 %v9293
  %v9295 = vpop.xlane.xlu0 %9294
  %v9296 = vsub.f32 %v9284, %v9292
  %v9297 = vsub.f32 %v9287, %v9295
  %v9298 = vmul.f32 %v9296, 1.442695
  %v9299 = vpow.pop %v9298
  %v9300 = vmul.f32 %v9297, 1.442695
  %v9301 = vpow.pop %v9300
  %v9302 = vsel %vm1434, %v9299, 0.0
  %9303 = vadd.xlane.f32.xlu0 %v9302
  %v9304 = vpop.xlane.xlu0 %9303
  %v9305 = vsel %vm1434, %v9301, 0.0
  %9306 = vadd.xlane.f32.xlu0 %v9305
  %v9307 = vpop.xlane.xlu0 %9306
  %v9308 = vrcp.pop %v9304
  %v9309 = vrcp.pop %v9307
  %v9310 = vmul.f32 %v9299, %v9308
  %v9311 = vmul.f32 %v9301, %v9309
  %v9312 = vpack.c.bf16 %v9311, %v9310
  %9313 = vrot.lane.b32.xlu0 %v8493, 32
  %v9314 = vpop.permute.xlu0 %9313
  %9315 = vrot.lane.b32.xlu0 %v8494, 32
  %v9316 = vpop.permute.xlu0 %9315
  %v9320 = vsel %vm1434, %v9312, 0
  %9322 = vmatprep.subr.bf16.mxu0 0
  %9323 = vmatpush1.bf16.msra.mxu0 %v9314
  %9324 = vmatprep.subr.bf16.mxu0 0
  %9325 = vmatpush1.bf16.msra.mxu0 %v9316
  %9326 = vmatprep.subr.bf16.mxu0 0
  %9327 = vmatpush1.bf16.msra.mxu0 0
  %9328 = vmatprep.subr.bf16.mxu0 0
  %9329 = vmatpush1.bf16.msra.mxu0 0
  %9330 = vmatprep.subr.bf16.mxu0 0
  %9331 = vmatpush1.bf16.msra.mxu0 0
  %9332 = vmatprep.subr.bf16.mxu0 0
  %9333 = vmatpush1.bf16.msra.mxu0 0
  %9334 = vmatprep.subr.bf16.mxu0 0
  %9335 = vmatpush1.bf16.msra.mxu0 0
  %9336 = vmatprep.subr.bf16.mxu0 0
  %9337 = vmatpush1.bf16.msra.mxu0 0
  %9338 = vmatprep.subr.bf16.mxu0 0
  %9339 = vmatpush1.bf16.msra.mxu0 0
  %9340 = vmatprep.subr.bf16.mxu0 0
  %9341 = vmatpush1.bf16.msra.mxu0 0
  %9342 = vmatprep.subr.bf16.mxu0 0
  %9343 = vmatpush1.bf16.msra.mxu0 0
  %9344 = vmatprep.subr.bf16.mxu0 0
  %9345 = vmatpush1.bf16.msra.mxu0 0
  %9346 = vmatprep.subr.bf16.mxu0 0
  %9347 = vmatpush1.bf16.msra.mxu0 0
  %9348 = vmatprep.subr.bf16.mxu0 0
  %9349 = vmatpush1.bf16.msra.mxu0 0
  %9350 = vmatprep.subr.bf16.mxu0 0
  %9351 = vmatpush1.bf16.msra.mxu0 0
  %9352 = vmatprep.subr.bf16.mxu0 0
  %9353 = vmatpush1.bf16.msra.mxu0 0
  %9354 = vmatprep.mubr.bf16.mxu0 0
  %9355 = vmatmul.mubr.bf16.gmra.mrb[0].mxu0 %v9320
  %v9356 = vpop.f32.mrb[0].mxu0
  %v9357 = vadd.f32 0.0, %v9356
  %v9358 = vpop.f32.mrb[0].mxu0
  %v9359 = vpop.f32.mrb[0].mxu0
  %v9360 = vadd.f32 0.0, %v9359
  %v9361 = vpop.f32.mrb[0].mxu0
  %9362 = vdwg.mxu0
  %9363 = vrot.lane.b32.xlu0 %v8492, 16
  %v9364 = vpop.permute.xlu0 %9363
  %v9366 = vsel %vm450, %v9364, 0
  %9368 = vmatprep.subr.bf16.mxu0 0
  %9369 = vmatpush1.bf16.msra.mxu0 %v8534
  %9370 = vmatprep.subr.bf16.mxu0 0
  %9371 = vmatpush1.bf16.msra.mxu0 0
  %9372 = vmatprep.subr.bf16.mxu0 0
  %9373 = vmatpush1.bf16.msra.mxu0 0
  %9374 = vmatprep.subr.bf16.mxu0 0
  %9375 = vmatpush1.bf16.msra.mxu0 0
  %9376 = vmatprep.subr.bf16.mxu0 0
  %9377 = vmatpush1.bf16.msra.mxu0 0
  %9378 = vmatprep.subr.bf16.mxu0 0
  %9379 = vmatpush1.bf16.msra.mxu0 0
  %9380 = vmatprep.subr.bf16.mxu0 0
  %9381 = vmatpush1.bf16.msra.mxu0 0
  %9382 = vmatprep.subr.bf16.mxu0 0
  %9383 = vmatpush1.bf16.msra.mxu0 0
  %9384 = vmatprep.subr.bf16.mxu0 0
  %9385 = vmatpush1.bf16.msra.mxu0 0
  %9386 = vmatprep.subr.bf16.mxu0 0
  %9387 = vmatpush1.bf16.msra.mxu0 0
  %9388 = vmatprep.subr.bf16.mxu0 0
  %9389 = vmatpush1.bf16.msra.mxu0 0
  %9390 = vmatprep.subr.bf16.mxu0 0
  %9391 = vmatpush1.bf16.msra.mxu0 0
  %9392 = vmatprep.subr.bf16.mxu0 0
  %9393 = vmatpush1.bf16.msra.mxu0 0
  %9394 = vmatprep.subr.bf16.mxu0 0
  %9395 = vmatpush1.bf16.msra.mxu0 0
  %9396 = vmatprep.subr.bf16.mxu0 0
  %9397 = vmatpush1.bf16.msra.mxu0 0
  %9398 = vmatprep.subr.bf16.mxu0 0
  %9399 = vmatpush1.bf16.msra.mxu0 0
  %9400 = vmatprep.mubr.bf16.mxu0 0
  %9401 = vmatmul.mubr.bf16.gmra.mrb[0].mxu0 %v9366
  %v9402 = vpop.f32.mrb[0].mxu0
  %v9403 = vadd.f32 %v1923, %v9402
  %v9404 = vpop.f32.mrb[0].mxu0
  %v9405 = vpop.f32.mrb[0].mxu0
  %v9406 = vadd.f32 %v1925, %v9405
  %v9407 = vpop.f32.mrb[0].mxu0
  %9408 = vdwg.mxu0
  %v9409 = vsel %vm1434, %v9403, -inf
  %9410 = vmax.xlane.f32.xlu0 %v9409
  %v9411 = vpop.xlane.xlu0 %9410
  %v9412 = vsel %vm1434, %v9406, -inf
  %9413 = vmax.xlane.f32.xlu0 %v9412
  %v9414 = vpop.xlane.xlu0 %9413
  %v9415 = vsub.f32 %v9403, %v9411
  %v9416 = vsub.f32 %v9406, %v9414
  %v9417 = vmul.f32 %v9415, 1.442695
  %v9418 = vpow.pop %v9417
  %v9419 = vmul.f32 %v9416, 1.442695
  %v9420 = vpow.pop %v9419
  %v9421 = vsel %vm1434, %v9418, 0.0
  %9422 = vadd.xlane.f32.xlu0 %v9421
  %v9423 = vpop.xlane.xlu0 %9422
  %v9424 = vsel %vm1434, %v9420, 0.0
  %9425 = vadd.xlane.f32.xlu0 %v9424
  %v9426 = vpop.xlane.xlu0 %9425
  %v9427 = vrcp.pop %v9423
  %v9428 = vrcp.pop %v9426
  %v9429 = vmul.f32 %v9418, %v9427
  %v9430 = vmul.f32 %v9420, %v9428
  %v9431 = vpack.c.bf16 %v9430, %v9429
  %9432 = vrot.lane.b32.xlu0 %v8493, 16
  %v9433 = vpop.permute.xlu0 %9432
  %9434 = vrot.lane.b32.xlu0 %v8494, 16
  %v9435 = vpop.permute.xlu0 %9434
  %v9439 = vsel %vm1434, %v9431, 0
  %9441 = vmatprep.subr.bf16.mxu0 0
  %9442 = vmatpush1.bf16.msra.mxu0 %v9433
  %9443 = vmatprep.subr.bf16.mxu0 0
  %9444 = vmatpush1.bf16.msra.mxu0 %v9435
  %9445 = vmatprep.subr.bf16.mxu0 0
  %9446 = vmatpush1.bf16.msra.mxu0 0
  %9447 = vmatprep.subr.bf16.mxu0 0
  %9448 = vmatpush1.bf16.msra.mxu0 0
  %9449 = vmatprep.subr.bf16.mxu0 0
  %9450 = vmatpush1.bf16.msra.mxu0 0
  %9451 = vmatprep.subr.bf16.mxu0 0
  %9452 = vmatpush1.bf16.msra.mxu0 0
  %9453 = vmatprep.subr.bf16.mxu0 0
  %9454 = vmatpush1.bf16.msra.mxu0 0
  %9455 = vmatprep.subr.bf16.mxu0 0
  %9456 = vmatpush1.bf16.msra.mxu0 0
  %9457 = vmatprep.subr.bf16.mxu0 0
  %9458 = vmatpush1.bf16.msra.mxu0 0
  %9459 = vmatprep.subr.bf16.mxu0 0
  %9460 = vmatpush1.bf16.msra.mxu0 0
  %9461 = vmatprep.subr.bf16.mxu0 0
  %9462 = vmatpush1.bf16.msra.mxu0 0
  %9463 = vmatprep.subr.bf16.mxu0 0
  %9464 = vmatpush1.bf16.msra.mxu0 0
  %9465 = vmatprep.subr.bf16.mxu0 0
  %9466 = vmatpush1.bf16.msra.mxu0 0
  %9467 = vmatprep.subr.bf16.mxu0 0
  %9468 = vmatpush1.bf16.msra.mxu0 0
  %9469 = vmatprep.subr.bf16.mxu0 0
  %9470 = vmatpush1.bf16.msra.mxu0 0
  %9471 = vmatprep.subr.bf16.mxu0 0
  %9472 = vmatpush1.bf16.msra.mxu0 0
  %9473 = vmatprep.mubr.bf16.mxu0 0
  %9474 = vmatmul.mubr.bf16.gmra.mrb[0].mxu0 %v9439
  %v9475 = vpop.f32.mrb[0].mxu0
  %v9476 = vadd.f32 0.0, %v9475
  %v9477 = vpop.f32.mrb[0].mxu0
  %v9478 = vpop.f32.mrb[0].mxu0
  %v9479 = vadd.f32 0.0, %v9478
  %v9480 = vpop.f32.mrb[0].mxu0
  %9481 = vdwg.mxu0
  %9484 = vrot.lane.b32.xlu0 %v8762, 16
  %v9485 = vpop.permute.xlu0 %9484
  %9486 = vrot.lane.b32.xlu0 %v8765, 16
  %v9487 = vpop.permute.xlu0 %9486
  %9492 = vrot.lane.b32.xlu0 %v8881, 32
  %v9493 = vpop.permute.xlu0 %9492
  %9494 = vrot.lane.b32.xlu0 %v8884, 32
  %v9495 = vpop.permute.xlu0 %9494
  %9500 = vrot.lane.b32.xlu0 %v9000, 48
  %v9501 = vpop.permute.xlu0 %9500
  %9502 = vrot.lane.b32.xlu0 %v9003, 48
  %v9503 = vpop.permute.xlu0 %9502
  %9508 = vrot.lane.b32.xlu0 %v9119, 64
  %v9509 = vpop.permute.xlu0 %9508
  %9510 = vrot.lane.b32.xlu0 %v9122, 64
  %v9511 = vpop.permute.xlu0 %9510
  %9516 = vrot.lane.b32.xlu0 %v9238, 80
  %v9517 = vpop.permute.xlu0 %9516
  %9518 = vrot.lane.b32.xlu0 %v9241, 80
  %v9519 = vpop.permute.xlu0 %9518
  %9524 = vrot.lane.b32.xlu0 %v9357, 96
  %v9525 = vpop.permute.xlu0 %9524
  %9526 = vrot.lane.b32.xlu0 %v9360, 96
  %v9527 = vpop.permute.xlu0 %9526
  %9532 = vrot.lane.b32.xlu0 %v9476, 112
  %v9533 = vpop.permute.xlu0 %9532
  %9534 = vrot.lane.b32.xlu0 %v9479, 112
  %v9535 = vpop.permute.xlu0 %9534
  %v9538 = vsel %vm450, %v8640, %v9485
  %v9539 = vsel %vm450, %v8643, %v9487
  %v9540 = vsel %vm1434, %v9538, %v9493
  %v9541 = vsel %vm1434, %v9539, %v9495
  %v9542 = vsel %vm1437, %v9540, %v9501
  %v9543 = vsel %vm1437, %v9541, %v9503
  %v9544 = vsel %vm1440, %v9542, %v9509
  %v9545 = vsel %vm1440, %v9543, %v9511
  %v9546 = vsel %vm1443, %v9544, %v9517
  %v9547 = vsel %vm1443, %v9545, %v9519
  %v9548 = vsel %vm1446, %v9546, %v9525
  %v9549 = vsel %vm1446, %v9547, %v9527
  %v9550 = vsel %vm1449, %v9548, %v9533
  %v9551 = vsel %vm1449, %v9549, %v9535
  %v9552 = vpack.c.bf16 %v9551, %v9550
  %v9553 = vlaneseq
  %v9554 = vshrl.u32 %v9553, 7
  %v9555 = vsub.s32 0, %v9554
  %v9556 = vrot.slane %v8491, %v9555
  %v9573 = vunpack.c.l.b16 %v8475
  %v9574 = vunpack.c.l.b16 %v8476
  %v9575 = vunpack.c.l.b16 %v8477
  %v9576 = vunpack.c.l.b16 %v8478
  %v9577 = vunpack.c.l.b16 %v8479
  %v9578 = vunpack.c.l.b16 %v8480
  %v9579 = vunpack.c.l.b16 %v8481
  %v9580 = vunpack.c.l.b16 %v8482
  %v9581 = vunpack.c.l.b16 %v8483
  %v9582 = vunpack.c.l.b16 %v8484
  %v9583 = vunpack.c.l.b16 %v8485
  %v9584 = vunpack.c.l.b16 %v8486
  %v9585 = vunpack.c.l.b16 %v8487
  %v9586 = vunpack.c.l.b16 %v8488
  %v9587 = vunpack.c.l.b16 %v8489
  %v9588 = vunpack.c.l.b16 %v8490
  %v9589 = vpack.c.b16 %v9574, %v9573
  %v9590 = vpack.c.b16 %v9576, %v9575
  %v9591 = vpack.c.b16 %v9578, %v9577
  %v9592 = vpack.c.b16 %v9580, %v9579
  %v9593 = vpack.c.b16 %v9582, %v9581
  %v9594 = vpack.c.b16 %v9584, %v9583
  %v9595 = vpack.c.b16 %v9586, %v9585
  %v9596 = vpack.c.b16 %v9588, %v9587
  %9605 = vmatprep.subr.bf16.mxu0 0
  %9606 = vmatpush1.bf16.msra.mxu0 %v9589
  %9607 = vmatprep.subr.bf16.mxu0 0
  %9608 = vmatpush1.bf16.msra.mxu0 %v9590
  %9609 = vmatprep.subr.bf16.mxu0 0
  %9610 = vmatpush1.bf16.msra.mxu0 %v9591
  %9611 = vmatprep.subr.bf16.mxu0 0
  %9612 = vmatpush1.bf16.msra.mxu0 %v9592
  %9613 = vmatprep.subr.bf16.mxu0 0
  %9614 = vmatpush1.bf16.msra.mxu0 %v9593
  %9615 = vmatprep.subr.bf16.mxu0 0
  %9616 = vmatpush1.bf16.msra.mxu0 %v9594
  %9617 = vmatprep.subr.bf16.mxu0 0
  %9618 = vmatpush1.bf16.msra.mxu0 %v9595
  %9619 = vmatprep.subr.bf16.mxu0 0
  %9620 = vmatpush1.bf16.msra.mxu0 %v9596
  %9621 = vmatprep.subr.bf16.mxu0 0
  %9622 = vmatpush1.bf16.msra.mxu0 0
  %9623 = vmatprep.subr.bf16.mxu0 0
  %9624 = vmatpush1.bf16.msra.mxu0 0
  %9625 = vmatprep.subr.bf16.mxu0 0
  %9626 = vmatpush1.bf16.msra.mxu0 0
  %9627 = vmatprep.subr.bf16.mxu0 0
  %9628 = vmatpush1.bf16.msra.mxu0 0
  %9629 = vmatprep.subr.bf16.mxu0 0
  %9630 = vmatpush1.bf16.msra.mxu0 0
  %9631 = vmatprep.subr.bf16.mxu0 0
  %9632 = vmatpush1.bf16.msra.mxu0 0
  %9633 = vmatprep.subr.bf16.mxu0 0
  %9634 = vmatpush1.bf16.msra.mxu0 0
  %9635 = vmatprep.subr.bf16.mxu0 0
  %9636 = vmatpush1.bf16.msra.mxu0 0
  %9637 = vmatprep.mubr.bf16.mxu0 0
  %9638 = vmatmul.mubr.bf16.gmra.mrb[0].mxu0 %v9552
  %v9639 = vpop.f32.mrb[0].mxu0
  %v9640 = vadd.f32 %v9556, %v9639
  %v9641 = vpop.f32.mrb[0].mxu0
  %v9642 = vpop.f32.mrb[0].mxu0
  %v9643 = vadd.f32 %v9556, %v9642
  %v9644 = vpop.f32.mrb[0].mxu0
  %9645 = vdwg.mxu0
  %v9646 = vadd.f32 %v8200, %v9640
  %v9647 = vadd.f32 %v8201, %v9643
  %v9648 = vld [vmem:[%s7 + $0x36] sm:$0x1]
  %v9649 = vld [vmem:[%s7 + $0x3a] sm:$0x1]
  %9650 = vadd.xlane.f32.xlu0 %v9646
  %v9651 = vpop.xlane.xlu0 %9650
  %9652 = vadd.xlane.f32.xlu0 %v9647
  %v9653 = vpop.xlane.xlu0 %9652
  %v9654 = vmul.f32 %v9651, %v1554
  %v9655 = vmul.f32 %v9653, %v1554
  %v9656 = vsub.f32 %v9646, %v9654
  %v9657 = vsub.f32 %v9647, %v9655
  %v9658 = vmul.f32 %v9656, %v9656
  %v9659 = vmul.f32 %v9657, %v9657
  %9660 = vadd.xlane.f32.xlu0 %v9658
  %v9661 = vpop.xlane.xlu0 %9660
  %9662 = vadd.xlane.f32.xlu0 %v9659
  %v9663 = vpop.xlane.xlu0 %9662
  %v9664 = vmul.f32 %v9661, %v1554
  %v9665 = vmul.f32 %v9663, %v1554
  %v9666 = vadd.f32 %v9664, 1e-05
  %v9667 = vadd.f32 %v9665, 1e-05
  %v9668 = vrsqrt.pop %v9666
  %v9669 = vrsqrt.pop %v9667
  %v9670 = vmul.f32 %v9656, %v9668
  %v9671 = vmul.f32 %v9657, %v9669
  %v9672 = vlaneseq
  %v9673 = vshrl.u32 %v9672, 7
  %v9674 = vsub.s32 0, %v9673
  %v9675 = vrot.slane %v9648, %v9674
  %v9676 = vmul.f32 %v9670, %v9675
  %v9677 = vmul.f32 %v9671, %v9675
  %v9678 = vlaneseq
  %v9679 = vshrl.u32 %v9678, 7
  %v9680 = vsub.s32 0, %v9679
  %v9681 = vrot.slane %v9649, %v9680
  %v9682 = vadd.f32 %v9676, %v9681
  %v9683 = vadd.f32 %v9677, %v9681
  %v9684 = vld [vmem:[%s6752 + $0x20] sm:$0xff]
  %v9685 = vld [vmem:[%s6752 + $0x48] sm:$0xff]
  %v9686 = vld [vmem:[%s6752 + $0x70] sm:$0xff]
  %v9687 = vld [vmem:[%s6752 + $0x98] sm:$0xff]
  %v9688 = vld [vmem:[%s6752 + $0xc0] sm:$0xff]
  %v9689 = vld [vmem:[%s6752 + $0xe8] sm:$0xff]
  %v9690 = vld [vmem:[%s6752 + $0x110] sm:$0xff]
  %v9691 = vld [vmem:[%s6752 + $0x138] sm:$0xff]
  %v9692 = vld [vmem:[%s6752 + $0x160] sm:$0xff]
  %v9693 = vld [vmem:[%s6752 + $0x188] sm:$0xff]
  %v9694 = vld [vmem:[%s6752 + $0x1b0] sm:$0xff]
  %v9695 = vld [vmem:[%s6752 + $0x1d8] sm:$0xff]
  %v9696 = vld [vmem:[%s6752 + $0x200] sm:$0xff]
  %v9697 = vld [vmem:[%s6752 + $0x228] sm:$0xff]
  %v9698 = vld [vmem:[%s6752 + $0x250] sm:$0xff]
  %v9699 = vld [vmem:[%s6752 + $0x278] sm:$0xff]
  %v9700 = vpack.c.bf16 %v9683, %v9682
  %s9701 = scalar_lea.vmem %s7, 34
  %v9702 = vld [vmem:[%s9701] ss:$4 sm:$0x3]
  %v9704 = vlaneseq
  %v9705 = vshrl.u32 %v9704, 7
  %v9706 = vsub.s32 0, %v9705
  %v9707 = vrot.slane %v9702, %v9706
  %v9708 = vlaneseq
  %v9709 = vshrl.u32 %v9708, 7
  %v9710 = vsub.s32 1, %v9709
  %v9711 = vrot.slane %v9702, %v9710
  %v9730 = vunpack.c.l.b16 %v9684
  %v9731 = vunpack.c.h.b16 %v9684
  %v9732 = vunpack.c.l.b16 %v9685
  %v9733 = vunpack.c.h.b16 %v9685
  %v9734 = vunpack.c.l.b16 %v9686
  %v9735 = vunpack.c.h.b16 %v9686
  %v9736 = vunpack.c.l.b16 %v9687
  %v9737 = vunpack.c.h.b16 %v9687
  %v9738 = vunpack.c.l.b16 %v9688
  %v9739 = vunpack.c.h.b16 %v9688
  %v9740 = vunpack.c.l.b16 %v9689
  %v9741 = vunpack.c.h.b16 %v9689
  %v9742 = vunpack.c.l.b16 %v9690
  %v9743 = vunpack.c.h.b16 %v9690
  %v9744 = vunpack.c.l.b16 %v9691
  %v9745 = vunpack.c.h.b16 %v9691
  %v9746 = vunpack.c.l.b16 %v9692
  %v9747 = vunpack.c.h.b16 %v9692
  %v9748 = vunpack.c.l.b16 %v9693
  %v9749 = vunpack.c.h.b16 %v9693
  %v9750 = vunpack.c.l.b16 %v9694
  %v9751 = vunpack.c.h.b16 %v9694
  %v9752 = vunpack.c.l.b16 %v9695
  %v9753 = vunpack.c.h.b16 %v9695
  %v9754 = vunpack.c.l.b16 %v9696
  %v9755 = vunpack.c.h.b16 %v9696
  %v9756 = vunpack.c.l.b16 %v9697
  %v9757 = vunpack.c.h.b16 %v9697
  %v9758 = vunpack.c.l.b16 %v9698
  %v9759 = vunpack.c.h.b16 %v9698
  %v9760 = vunpack.c.l.b16 %v9699
  %v9761 = vunpack.c.h.b16 %v9699
  %v9762 = vpack.c.b16 %v9732, %v9730
  %v9763 = vpack.c.b16 %v9733, %v9731
  %v9764 = vpack.c.b16 %v9736, %v9734
  %v9765 = vpack.c.b16 %v9737, %v9735
  %v9766 = vpack.c.b16 %v9740, %v9738
  %v9767 = vpack.c.b16 %v9741, %v9739
  %v9768 = vpack.c.b16 %v9744, %v9742
  %v9769 = vpack.c.b16 %v9745, %v9743
  %v9770 = vpack.c.b16 %v9748, %v9746
  %v9771 = vpack.c.b16 %v9749, %v9747
  %v9772 = vpack.c.b16 %v9752, %v9750
  %v9773 = vpack.c.b16 %v9753, %v9751
  %v9774 = vpack.c.b16 %v9756, %v9754
  %v9775 = vpack.c.b16 %v9757, %v9755
  %v9776 = vpack.c.b16 %v9760, %v9758
  %v9777 = vpack.c.b16 %v9761, %v9759
  %9794 = vmatprep.subr.bf16.mxu0 %v9763
  %9795 = vmatpush1.bf16.msra.mxu0 %v9762
  %9796 = vmatprep.subr.bf16.mxu0 %v9765
  %9797 = vmatpush1.bf16.msra.mxu0 %v9764
  %9798 = vmatprep.subr.bf16.mxu0 %v9767
  %9799 = vmatpush1.bf16.msra.mxu0 %v9766
  %9800 = vmatprep.subr.bf16.mxu0 %v9769
  %9801 = vmatpush1.bf16.msra.mxu0 %v9768
  %9802 = vmatprep.subr.bf16.mxu0 %v9771
  %9803 = vmatpush1.bf16.msra.mxu0 %v9770
  %9804 = vmatprep.subr.bf16.mxu0 %v9773
  %9805 = vmatpush1.bf16.msra.mxu0 %v9772
  %9806 = vmatprep.subr.bf16.mxu0 %v9775
  %9807 = vmatpush1.bf16.msra.mxu0 %v9774
  %9808 = vmatprep.subr.bf16.mxu0 %v9777
  %9809 = vmatpush1.bf16.msra.mxu0 %v9776
  %9810 = vmatprep.subr.bf16.mxu0 0
  %9811 = vmatpush1.bf16.msra.mxu0 0
  %9812 = vmatprep.subr.bf16.mxu0 0
  %9813 = vmatpush1.bf16.msra.mxu0 0
  %9814 = vmatprep.subr.bf16.mxu0 0
  %9815 = vmatpush1.bf16.msra.mxu0 0
  %9816 = vmatprep.subr.bf16.mxu0 0
  %9817 = vmatpush1.bf16.msra.mxu0 0
  %9818 = vmatprep.subr.bf16.mxu0 0
  %9819 = vmatpush1.bf16.msra.mxu0 0
  %9820 = vmatprep.subr.bf16.mxu0 0
  %9821 = vmatpush1.bf16.msra.mxu0 0
  %9822 = vmatprep.subr.bf16.mxu0 0
  %9823 = vmatpush1.bf16.msra.mxu0 0
  %9824 = vmatprep.subr.bf16.mxu0 0
  %9825 = vmatpush1.bf16.msra.mxu0 0
  %9826 = vmatprep.mubr.bf16.mxu0 0
  %9827 = vmatmul.mubr.bf16.gmra.mrb[0].mxu0 %v9700
  %v9828 = vpop.f32.mrb[0].mxu0
  %v9829 = vadd.f32 %v9707, %v9828
  %v9830 = vpop.f32.mrb[0].mxu0
  %v9831 = vadd.f32 %v9711, %v9830
  %v9832 = vpop.f32.mrb[0].mxu0
  %v9833 = vadd.f32 %v9707, %v9832
  %v9834 = vpop.f32.mrb[0].mxu0
  %v9835 = vadd.f32 %v9711, %v9834
  %9836 = vdwg.mxu0
  %v9837 = vmax.f32 %v9829, 0.0
  %v9838 = vmax.f32 %v9831, 0.0
  %v9839 = vmax.f32 %v9833, 0.0
  %v9840 = vmax.f32 %v9835, 0.0
  %s9841 = scalar_lea.vmem %s6, 256
  %v9842 = vld [vmem:[%s9841] sm:$0xf]
  %v9843 = vld [vmem:[%s9841 + $0x4] sm:$0xf]
  %v9844 = vld [vmem:[%s9841 + $0x8] sm:$0xf]
  %v9845 = vld [vmem:[%s9841 + $0xc] sm:$0xf]
  %v9846 = vld [vmem:[%s9841 + $0x10] sm:$0xf]
  %v9847 = vld [vmem:[%s9841 + $0x14] sm:$0xf]
  %v9848 = vld [vmem:[%s9841 + $0x18] sm:$0xf]
  %v9849 = vld [vmem:[%s9841 + $0x1c] sm:$0xf]
  %v9850 = vld [vmem:[%s9841 + $0x20] sm:$0xf]
  %v9851 = vld [vmem:[%s9841 + $0x24] sm:$0xf]
  %v9852 = vld [vmem:[%s9841 + $0x28] sm:$0xf]
  %v9853 = vld [vmem:[%s9841 + $0x2c] sm:$0xf]
  %v9854 = vld [vmem:[%s9841 + $0x30] sm:$0xf]
  %v9855 = vld [vmem:[%s9841 + $0x34] sm:$0xf]
  %v9856 = vld [vmem:[%s9841 + $0x38] sm:$0xf]
  %v9857 = vld [vmem:[%s9841 + $0x3c] sm:$0xf]
  %v9858 = vld [vmem:[%s9841 + $0x40] sm:$0xf]
  %v9859 = vld [vmem:[%s9841 + $0x44] sm:$0xf]
  %v9860 = vld [vmem:[%s9841 + $0x48] sm:$0xf]
  %v9861 = vld [vmem:[%s9841 + $0x4c] sm:$0xf]
  %v9862 = vld [vmem:[%s9841 + $0x50] sm:$0xf]
  %v9863 = vld [vmem:[%s9841 + $0x54] sm:$0xf]
  %v9864 = vld [vmem:[%s9841 + $0x58] sm:$0xf]
  %v9865 = vld [vmem:[%s9841 + $0x5c] sm:$0xf]
  %v9866 = vld [vmem:[%s9841 + $0x60] sm:$0xf]
  %v9867 = vld [vmem:[%s9841 + $0x64] sm:$0xf]
  %v9868 = vld [vmem:[%s9841 + $0x68] sm:$0xf]
  %v9869 = vld [vmem:[%s9841 + $0x6c] sm:$0xf]
  %v9870 = vld [vmem:[%s9841 + $0x70] sm:$0xf]
  %v9871 = vld [vmem:[%s9841 + $0x74] sm:$0xf]
  %v9872 = vld [vmem:[%s9841 + $0x78] sm:$0xf]
  %v9873 = vld [vmem:[%s9841 + $0x7c] sm:$0xf]
  %v9874 = vpack.c.bf16 %v9839, %v9837
  %v9875 = vpack.c.bf16 %v9840, %v9838
  %v9876 = vld [vmem:[%s7 + $0x2a] sm:$0x1]
  %v9877 = vlaneseq
  %v9878 = vshrl.u32 %v9877, 7
  %v9879 = vsub.s32 0, %v9878
  %v9880 = vrot.slane %v9876, %v9879
  %v9913 = vunpack.c.l.b16 %v9842
  %v9914 = vunpack.c.l.b16 %v9843
  %v9915 = vunpack.c.l.b16 %v9844
  %v9916 = vunpack.c.l.b16 %v9845
  %v9917 = vunpack.c.l.b16 %v9846
  %v9918 = vunpack.c.l.b16 %v9847
  %v9919 = vunpack.c.l.b16 %v9848
  %v9920 = vunpack.c.l.b16 %v9849
  %v9921 = vunpack.c.l.b16 %v9850
  %v9922 = vunpack.c.l.b16 %v9851
  %v9923 = vunpack.c.l.b16 %v9852
  %v9924 = vunpack.c.l.b16 %v9853
  %v9925 = vunpack.c.l.b16 %v9854
  %v9926 = vunpack.c.l.b16 %v9855
  %v9927 = vunpack.c.l.b16 %v9856
  %v9928 = vunpack.c.l.b16 %v9857
  %v9929 = vunpack.c.l.b16 %v9858
  %v9930 = vunpack.c.l.b16 %v9859
  %v9931 = vunpack.c.l.b16 %v9860
  %v9932 = vunpack.c.l.b16 %v9861
  %v9933 = vunpack.c.l.b16 %v9862
  %v9934 = vunpack.c.l.b16 %v9863
  %v9935 = vunpack.c.l.b16 %v9864
  %v9936 = vunpack.c.l.b16 %v9865
  %v9937 = vunpack.c.l.b16 %v9866
  %v9938 = vunpack.c.l.b16 %v9867
  %v9939 = vunpack.c.l.b16 %v9868
  %v9940 = vunpack.c.l.b16 %v9869
  %v9941 = vunpack.c.l.b16 %v9870
  %v9942 = vunpack.c.l.b16 %v9871
  %v9943 = vunpack.c.l.b16 %v9872
  %v9944 = vunpack.c.l.b16 %v9873
  %v9945 = vpack.c.b16 %v9914, %v9913
  %v9946 = vpack.c.b16 %v9916, %v9915
  %v9947 = vpack.c.b16 %v9918, %v9917
  %v9948 = vpack.c.b16 %v9920, %v9919
  %v9949 = vpack.c.b16 %v9922, %v9921
  %v9950 = vpack.c.b16 %v9924, %v9923
  %v9951 = vpack.c.b16 %v9926, %v9925
  %v9952 = vpack.c.b16 %v9928, %v9927
  %v9953 = vpack.c.b16 %v9930, %v9929
  %v9954 = vpack.c.b16 %v9932, %v9931
  %v9955 = vpack.c.b16 %v9934, %v9933
  %v9956 = vpack.c.b16 %v9936, %v9935
  %v9957 = vpack.c.b16 %v9938, %v9937
  %v9958 = vpack.c.b16 %v9940, %v9939
  %v9959 = vpack.c.b16 %v9942, %v9941
  %v9960 = vpack.c.b16 %v9944, %v9943
  %9977 = vmatprep.subr.bf16.mxu0 0
  %9978 = vmatpush1.bf16.msra.mxu0 %v9945
  %9979 = vmatprep.subr.bf16.mxu0 0
  %9980 = vmatpush1.bf16.msra.mxu0 %v9946
  %9981 = vmatprep.subr.bf16.mxu0 0
  %9982 = vmatpush1.bf16.msra.mxu0 %v9947
  %9983 = vmatprep.subr.bf16.mxu0 0
  %9984 = vmatpush1.bf16.msra.mxu0 %v9948
  %9985 = vmatprep.subr.bf16.mxu0 0
  %9986 = vmatpush1.bf16.msra.mxu0 %v9949
  %9987 = vmatprep.subr.bf16.mxu0 0
  %9988 = vmatpush1.bf16.msra.mxu0 %v9950
  %9989 = vmatprep.subr.bf16.mxu0 0
  %9990 = vmatpush1.bf16.msra.mxu0 %v9951
  %9991 = vmatprep.subr.bf16.mxu0 0
  %9992 = vmatpush1.bf16.msra.mxu0 %v9952
  %9993 = vmatprep.subr.bf16.mxu0 0
  %9994 = vmatpush1.bf16.msra.mxu0 %v9953
  %9995 = vmatprep.subr.bf16.mxu0 0
  %9996 = vmatpush1.bf16.msra.mxu0 %v9954
  %9997 = vmatprep.subr.bf16.mxu0 0
  %9998 = vmatpush1.bf16.msra.mxu0 %v9955
  %9999 = vmatprep.subr.bf16.mxu0 0
  %10000 = vmatpush1.bf16.msra.mxu0 %v9956
  %10001 = vmatprep.subr.bf16.mxu0 0
  %10002 = vmatpush1.bf16.msra.mxu0 %v9957
  %10003 = vmatprep.subr.bf16.mxu0 0
  %10004 = vmatpush1.bf16.msra.mxu0 %v9958
  %10005 = vmatprep.subr.bf16.mxu0 0
  %10006 = vmatpush1.bf16.msra.mxu0 %v9959
  %10007 = vmatprep.subr.bf16.mxu0 0
  %10008 = vmatpush1.bf16.msra.mxu0 %v9960
  %10009 = vmatprep.mubr.bf16.mxu0 %v9875
  %10010 = vmatmul.mubr.bf16.gmra.mrb[0].mxu0 %v9874
  %v10011 = vpop.f32.mrb[0].mxu0
  %v10012 = vadd.f32 %v9880, %v10011
  %v10013 = vpop.f32.mrb[0].mxu0
  %v10014 = vpop.f32.mrb[0].mxu0
  %v10015 = vadd.f32 %v9880, %v10014
  %v10016 = vpop.f32.mrb[0].mxu0
  %10017 = vdwg.mxu0
  %v10018 = vadd.f32 %v9682, %v10012
  %v10019 = vadd.f32 %v9683, %v10015
  %v10020 = vld [vmem:[%s7 + $0x3e] sm:$0x1]
  %v10021 = vld [vmem:[%s7 + $0x42] sm:$0x1]
  %10022 = vadd.xlane.f32.xlu0 %v10018
  %v10023 = vpop.xlane.xlu0 %10022
  %10024 = vadd.xlane.f32.xlu0 %v10019
  %v10025 = vpop.xlane.xlu0 %10024
  %v10026 = vmul.f32 %v10023, %v1554
  %v10027 = vmul.f32 %v10025, %v1554
  %v10028 = vsub.f32 %v10018, %v10026
  %v10029 = vsub.f32 %v10019, %v10027
  %v10030 = vmul.f32 %v10028, %v10028
  %v10031 = vmul.f32 %v10029, %v10029
  %10032 = vadd.xlane.f32.xlu0 %v10030
  %v10033 = vpop.xlane.xlu0 %10032
  %10034 = vadd.xlane.f32.xlu0 %v10031
  %v10035 = vpop.xlane.xlu0 %10034
  %v10036 = vmul.f32 %v10033, %v1554
  %v10037 = vmul.f32 %v10035, %v1554
  %v10038 = vadd.f32 %v10036, 1e-05
  %v10039 = vadd.f32 %v10037, 1e-05
  %v10040 = vrsqrt.pop %v10038
  %v10041 = vrsqrt.pop %v10039
  %v10042 = vmul.f32 %v10028, %v10040
  %v10043 = vmul.f32 %v10029, %v10041
  %v10044 = vlaneseq
  %v10045 = vshrl.u32 %v10044, 7
  %v10046 = vsub.s32 0, %v10045
  %v10047 = vrot.slane %v10020, %v10046
  %v10048 = vmul.f32 %v10042, %v10047
  %v10049 = vmul.f32 %v10043, %v10047
  %v10050 = vlaneseq
  %v10051 = vshrl.u32 %v10050, 7
  %v10052 = vsub.s32 0, %v10051
  %v10053 = vrot.slane %v10021, %v10052
  %v10054 = vadd.f32 %v10048, %v10053
  %v10055 = vadd.f32 %v10049, %v10053
  %v10056 = vld [vmem:[%s8] sm:$0xf]
  %v10057 = vld [vmem:[%s8 + $0x4] sm:$0xf]
  %v10058 = vld [vmem:[%s8 + $0x8] sm:$0xf]
  %v10059 = vld [vmem:[%s8 + $0xc] sm:$0xf]
  %v10060 = vld [vmem:[%s8 + $0x10] sm:$0xf]
  %v10061 = vld [vmem:[%s8 + $0x14] sm:$0xf]
  %v10062 = vld [vmem:[%s8 + $0x18] sm:$0xf]
  %v10063 = vld [vmem:[%s8 + $0x1c] sm:$0xf]
  %v10064 = vld [vmem:[%s8 + $0x20] sm:$0xf]
  %v10065 = vld [vmem:[%s8 + $0x24] sm:$0xf]
  %v10066 = vld [vmem:[%s8 + $0x28] sm:$0xf]
  %v10067 = vld [vmem:[%s8 + $0x2c] sm:$0xf]
  %v10068 = vld [vmem:[%s8 + $0x30] sm:$0xf]
  %v10069 = vld [vmem:[%s8 + $0x34] sm:$0xf]
  %v10070 = vld [vmem:[%s8 + $0x38] sm:$0xf]
  %v10071 = vld [vmem:[%s8 + $0x3c] sm:$0xf]
  %v10072 = vpack.c.bf16 %v10055, %v10054
  %v10073 = vld [vmem:[%s9] sm:$0x1]
  %v10075 = vlaneseq
  %v10076 = vshrl.u32 %v10075, 7
  %v10077 = vsub.s32 0, %v10076
  %v10078 = vrot.slane %v10073, %v10077
  %v10096 = vunpack.c.l.b16 %v10056
  %v10097 = vunpack.c.l.b16 %v10057
  %v10098 = vunpack.c.l.b16 %v10058
  %v10099 = vunpack.c.l.b16 %v10059
  %v10100 = vunpack.c.l.b16 %v10060
  %v10101 = vunpack.c.l.b16 %v10061
  %v10102 = vunpack.c.l.b16 %v10062
  %v10103 = vunpack.c.l.b16 %v10063
  %v10104 = vunpack.c.l.b16 %v10064
  %v10105 = vunpack.c.l.b16 %v10065
  %v10106 = vunpack.c.l.b16 %v10066
  %v10107 = vunpack.c.l.b16 %v10067
  %v10108 = vunpack.c.l.b16 %v10068
  %v10109 = vunpack.c.l.b16 %v10069
  %v10110 = vunpack.c.l.b16 %v10070
  %v10111 = vunpack.c.l.b16 %v10071
  %v10112 = vpack.c.b16 %v10097, %v10096
  %v10113 = vpack.c.b16 %v10099, %v10098
  %v10114 = vpack.c.b16 %v10101, %v10100
  %v10115 = vpack.c.b16 %v10103, %v10102
  %v10116 = vpack.c.b16 %v10105, %v10104
  %v10117 = vpack.c.b16 %v10107, %v10106
  %v10118 = vpack.c.b16 %v10109, %v10108
  %v10119 = vpack.c.b16 %v10111, %v10110
  %10128 = vmatprep.subr.bf16.mxu0 0
  %10129 = vmatpush1.bf16.msra.mxu0 %v10112
  %10130 = vmatprep.subr.bf16.mxu0 0
  %10131 = vmatpush1.bf16.msra.mxu0 %v10113
  %10132 = vmatprep.subr.bf16.mxu0 0
  %10133 = vmatpush1.bf16.msra.mxu0 %v10114
  %10134 = vmatprep.subr.bf16.mxu0 0
  %10135 = vmatpush1.bf16.msra.mxu0 %v10115
  %10136 = vmatprep.subr.bf16.mxu0 0
  %10137 = vmatpush1.bf16.msra.mxu0 %v10116
  %10138 = vmatprep.subr.bf16.mxu0 0
  %10139 = vmatpush1.bf16.msra.mxu0 %v10117
  %10140 = vmatprep.subr.bf16.mxu0 0
  %10141 = vmatpush1.bf16.msra.mxu0 %v10118
  %10142 = vmatprep.subr.bf16.mxu0 0
  %10143 = vmatpush1.bf16.msra.mxu0 %v10119
  %10144 = vmatprep.subr.bf16.mxu0 0
  %10145 = vmatpush1.bf16.msra.mxu0 0
  %10146 = vmatprep.subr.bf16.mxu0 0
  %10147 = vmatpush1.bf16.msra.mxu0 0
  %10148 = vmatprep.subr.bf16.mxu0 0
  %10149 = vmatpush1.bf16.msra.mxu0 0
  %10150 = vmatprep.subr.bf16.mxu0 0
  %10151 = vmatpush1.bf16.msra.mxu0 0
  %10152 = vmatprep.subr.bf16.mxu0 0
  %10153 = vmatpush1.bf16.msra.mxu0 0
  %10154 = vmatprep.subr.bf16.mxu0 0
  %10155 = vmatpush1.bf16.msra.mxu0 0
  %10156 = vmatprep.subr.bf16.mxu0 0
  %10157 = vmatpush1.bf16.msra.mxu0 0
  %10158 = vmatprep.subr.bf16.mxu0 0
  %10159 = vmatpush1.bf16.msra.mxu0 0
  %10160 = vmatprep.mubr.bf16.mxu0 0
  %10161 = vmatmul.mubr.bf16.gmra.mrb[0].mxu0 %v10072
  %v10162 = vpop.f32.mrb[0].mxu0
  %v10163 = vadd.f32 %v10078, %v10162
  %v10164 = vpop.f32.mrb[0].mxu0
  %v10165 = vpop.f32.mrb[0].mxu0
  %v10166 = vadd.f32 %v10078, %v10165
  %v10167 = vpop.f32.mrb[0].mxu0
  %10168 = vdwg.mxu0
  %10169 = vst [vmem:[%s10] sm:$0xff] %v10163
  %10170 = vst [vmem:[%s10 + $0x8] sm:$0xff] %v10166
  // Predicated region
  $region42: #{forward.1} parent=0 // pred_check
    _
  $region43: #{forward.1} parent=0 // pred_check_branch
    %10172 = sbr.rel (0) target = $region45
  $region44: #{forward.1} parent=0 // pred_region
    _
  $region45: #{forward.1} parent=0 // pred_fallthru
    _
  // Predicated region
  $region46: #{forward.1} parent=0 // pred_check
    _
  $region47: #{forward.1} parent=0 // pred_check_branch
    %10174 = sbr.rel (0) target = $region49
  $region48: #{forward.1} parent=0 // pred_region
    _
  $region49: #{forward.1} parent=0 // pred_fallthru
    _

</llo_original>
